<compile_context>
chip_gen: v5e
topology: v5e:2x2
jax: 0.10.0
libtpu: 0.0.40
codegen_flags: <defaults>
</compile_context>

<pallas_src>
import jax
import jax.numpy as jnp
from jax import lax
from jax.experimental import pallas as pl
from jax.experimental.pallas import tpu as pltpu

# ----------------------------- small config --------------------------------
MODEL_DIM = 64
NUM_HEADS = 2
HEAD_DIM = MODEL_DIM // NUM_HEADS          # 32
MINI_BATCH = 8                             # mini_batch_size
TTT_BASE_LR = 1.0
ROPE_THETA = 10000.0
LATENT_H, LATENT_W, NUM_FRAMES = 4, 7, 2   # 4*7*2 = 56 video tokens
SEQ_TEXT_LEN = 8
SEQ_LEN = SEQ_TEXT_LEN + LATENT_H * LATENT_W * NUM_FRAMES   # 64
BATCH = 2
EPS_LN_INNER = 1e-6
EPS_RECON = 1e-8
EPS_POST_NORM = 1e-6


# ----------------------------- Pallas kernel --------------------------------
def _ttt_linear_kernel(nw_ref, nb_ref, w1_ref, b1_ref,
                       xq_ref, xk_ref, xv_ref, lr_ref, out_ref):
    """TTT-Linear dual-form scan for one batch element.

    grid = (B,).  The whole (NC, C, H*HD) slab is resident in VMEM; the
    mini-batch scan over NC is fully unrolled in-kernel (NC is static & small,
    equivalent to lax.fori_loop(..., unroll=True)) with the fast-weight state
    (per-head W1, b1) carried in vector registers between mini-batches.
    """
    NC, C = xq_ref.shape[1], xq_ref.shape[2]
    H, HD = w1_ref.shape[0], w1_ref.shape[2]

    # Hoisted constants (causal mask / identity) and per-head LN params / state.
    row = lax.broadcasted_iota(jnp.int32, (C, C), 0)
    col = lax.broadcasted_iota(jnp.int32, (C, C), 1)
    tril = row >= col
    eye = row == col

    ln_w = [nw_ref[h:h + 1, :] for h in range(H)]     # each (1, HD)
    ln_b = [nb_ref[h:h + 1, :] for h in range(H)]
    W1 = [w1_ref[h] for h in range(H)]                # each (HD, HD)
    b1 = [b1_ref[h] for h in range(H)]                # each (1, HD)

    for i in range(NC):
        XQ_mb = xq_ref[0, i]                          # (C, H*HD)
        XK_mb = xk_ref[0, i]
        XV_mb = xv_ref[0, i]

        outs = []
        for h in range(H):
            sl = slice(h * HD, (h + 1) * HD)          # static lane slice
            XQ, XK, XV = XQ_mb[:, sl], XK_mb[:, sl], XV_mb[:, sl]
            W1_h, b1_h = W1[h], b1[h]
            # Per-token TTT lr row (already scaled by base_lr/(HD*C)); every
            # row of the dual-form eta matrix equals this row.
            lr_row = lr_ref[0, h, i:i + 1, :]         # (1, C)

            # Stage 1: forward through the fast weights.
            Z1 = jnp.dot(XK, W1_h, preferred_element_type=jnp.float32) + b1_h
            target = XV - XK

            # Stage 2: fused LayerNorm + L2 backward -> grad wrt Z1 (rsqrt form).
            mu = jnp.mean(Z1, axis=-1, keepdims=True)
            var = jnp.mean((Z1 - mu) ** 2, axis=-1, keepdims=True)
            inv_std = lax.rsqrt(var + EPS_LN_INNER)
            x_hat = (Z1 - mu) * inv_std
            y = ln_w[h] * x_hat + ln_b[h]
            grad_out = y - target
            grad_x_hat = ln_w[h] * grad_out
            grad_Z1 = ((HD * grad_x_hat
                        - jnp.sum(grad_x_hat, axis=-1, keepdims=True)
                        - x_hat * jnp.sum(grad_x_hat * x_hat, axis=-1,
                                          keepdims=True))
                       * (inv_std * (1.0 / HD)))

            # Stage 3: dual form, b1_bar fused into Z1_bar:
            #   Z1_bar = XQ@W1 + b1 - [tril(eta * (XQ XK^T + 1))] @ grad_Z1
            A = lax.dot_general(XQ, XK, (((1,), (1,)), ((), ())),
                                preferred_element_type=jnp.float32)   # (C, C)
            eta_rows = jnp.broadcast_to(lr_row, (C, C))               # eta[i,j]=lr[j]
            M = jnp.where(tril, eta_rows * (A + 1.0), 0.0)
            Z1_bar = (jnp.dot(XQ, W1_h, preferred_element_type=jnp.float32)
                      + b1_h
                      - jnp.dot(M, grad_Z1, preferred_element_type=jnp.float32))

            # State update carried to the next mini-batch.  last_eta == lr_row,
            # applied via diag(lr) @ grad (keeps everything lane-dense, no (C,1)).
            scaled_grad = jnp.dot(jnp.where(eye, eta_rows, 0.0), grad_Z1,
                                  preferred_element_type=jnp.float32)  # (C, HD)
            W1[h] = W1_h - lax.dot_general(XK, scaled_grad,
                                           (((0,), (0,)), ((), ())),
                                           preferred_element_type=jnp.float32)
            b1[h] = b1_h - jnp.sum(scaled_grad, axis=0, keepdims=True)

            # Stage 4: output LayerNorm + residual.
            mu2 = jnp.mean(Z1_bar, axis=-1, keepdims=True)
            var2 = jnp.mean((Z1_bar - mu2) ** 2, axis=-1, keepdims=True)
            x_hat2 = (Z1_bar - mu2) * lax.rsqrt(var2 + EPS_LN_INNER)
            outs.append(XQ + ln_w[h] * x_hat2 + ln_b[h])

        # Lane-dense (C, H*HD) store.
        out_ref[0, i] = jnp.concatenate(outs, axis=-1)


def ttt_linear_scan(ttt_norm_w, ttt_norm_b, W1, b1, XQ, XK, XV, lr_rows):
    """Pallas wrapper for the TTT-Linear scan.

    XQ/XK/XV: (B, NC, C, H*HD)   lr_rows: (B, H, NC, C)
    W1: (H, HD, HD)  b1: (H, 1, HD)  ttt_norm_{w,b}: (H, HD)
    Returns (B, NC, C, H*HD) float32.
    """
    B, NC, C, D = XQ.shape
    H, HD = W1.shape[0], W1.shape[2]

    head_full2 = lambda b: (0, 0)
    head_full3 = lambda b: (0, 0, 0)
    batch_map = lambda b: (b, 0, 0, 0)

    return pl.pallas_call(
        _ttt_linear_kernel,
        out_shape=jax.ShapeDtypeStruct((B, NC, C, D), jnp.float32),
        grid_spec=pltpu.PrefetchScalarGridSpec(
            num_scalar_prefetch=0,
            grid=(B,),
            in_specs=[
                pl.BlockSpec((H, HD), head_full2),        # ttt_norm_weight
                pl.BlockSpec((H, HD), head_full2),        # ttt_norm_bias
                pl.BlockSpec((H, HD, HD), head_full3),    # W1
                pl.BlockSpec((H, 1, HD), head_full3),     # b1
                pl.BlockSpec((1, NC, C, D), batch_map),   # XQ
                pl.BlockSpec((1, NC, C, D), batch_map),   # XK
                pl.BlockSpec((1, NC, C, D), batch_map),   # XV
                pl.BlockSpec((1, H, NC, C), batch_map),   # per-token lr rows
            ],
            out_specs=pl.BlockSpec((1, NC, C, D), batch_map),
        ),
        compiler_params=pltpu.CompilerParams(
            # B stays parallel so v7x's two TensorCores each take one batch.
            dimension_semantics=("parallel",)),
    )(ttt_norm_w.astype(jnp.float32), ttt_norm_b.astype(jnp.float32),
      W1.astype(jnp.float32), b1.astype(jnp.float32),
      XQ.astype(jnp.float32), XK.astype(jnp.float32),
      XV.astype(jnp.float32), lr_rows.astype(jnp.float32))


# ------------------- pure-JAX reference (self-check only) -------------------
def ttt_linear_scan_ref(ttt_norm_w, ttt_norm_b, W1, b1, XQ, XK, XV, lr_rows):
    """Direct transcription of the original (unfused) dual-form recurrence."""
    B, NC, C, D = XQ.shape
    H, HD = W1.shape[0], W1.shape[2]
    mm = lambda a, b_: jnp.matmul(a, b_, precision=lax.Precision.HIGHEST)

    q = XQ.reshape(B, NC, C, H, HD).transpose(0, 3, 1, 2, 4)   # (B,H,NC,C,HD)
    k = XK.reshape(B, NC, C, H, HD).transpose(0, 3, 1, 2, 4)
    v = XV.reshape(B, NC, C, H, HD).transpose(0, 3, 1, 2, 4)
    eta = jnp.tile(lr_rows[:, :, :, None, :], (1, 1, 1, C, 1))  # (B,H,NC,C,C)

    def per_head(W, bvec, lw, lb, qh, kh, vh, etah):
        lw, lb = lw[None], lb[None]

        def step(carry, inp):
            W1_, b1_ = carry
            xq, xk, xv, et = inp
            Z1 = mm(xk, W1_) + b1_
            target = xv - xk
            mu = Z1.mean(-1, keepdims=True)
            std = jnp.sqrt(((Z1 - mu) ** 2).mean(-1, keepdims=True) + EPS_LN_INNER)
            xh = (Z1 - mu) / std
            go = lw * xh + lb - target
            gx = lw * go
            gZ = (HD * gx - gx.sum(-1, keepdims=True)
                  - xh * (gx * xh).sum(-1, keepdims=True)) / (HD * std)
            A = jnp.tril(mm(xq, xk.T))
            b1_bar = b1_ - mm(jnp.tril(et), gZ)
            Z1_bar = mm(xq, W1_) - mm(et * A, gZ) + b1_bar
            last = et[-1, :, None]
            W_new = W1_ - mm((last * xk).T, gZ)
            b_new = b1_ - (last * gZ).sum(0, keepdims=True)
            mu2 = Z1_bar.mean(-1, keepdims=True)
            xh2 = (Z1_bar - mu2) / jnp.sqrt(((Z1_bar - mu2) ** 2).mean(-1, keepdims=True)
                                            + EPS_LN_INNER)
            return (W_new, b_new), xq + lw * xh2 + lb

        _, outs = lax.scan(step, (W, bvec), (qh, kh, vh, etah))
        return outs                                             # (NC, C, HD)

    f = jax.vmap(jax.vmap(per_head, in_axes=(0,) * 8),
                 in_axes=(None, None, None, None, 0, 0, 0, 0))
    out = f(W1, b1, ttt_norm_w, ttt_norm_b, q, k, v, eta)       # (B,H,NC,C,HD)
    return out.transpose(0, 2, 3, 1, 4).reshape(B, NC, C, D)


# ----------------------------- plain-JAX glue --------------------------------
def precompute_freqs_cis_3d(dim, height, width, num_frames, theta):
    """3D RoPE table. Returns (T*H*W, dim//2, 2) real array of (cos, sin).

    # TODO(synk): the exact head-dim split of the repo's precompute_freqs_cis_3d
    # is not public here; we use the common dim//4 (t) + 3*dim//8 (h) + 3*dim//8 (w).
    """
    dim_t = dim // 4
    dim_h = (dim - dim_t) // 2
    dim_w = dim - dim_t - dim_h

    def inv_freq(d):
        return 1.0 / (theta ** (jnp.arange(0, d, 2, dtype=jnp.float32) / d))

    ft = jnp.outer(jnp.arange(num_frames, dtype=jnp.float32), inv_freq(dim_t))
    fh = jnp.outer(jnp.arange(height, dtype=jnp.float32), inv_freq(dim_h))
    fw = jnp.outer(jnp.arange(width, dtype=jnp.float32), inv_freq(dim_w))

    ft_b = jnp.broadcast_to(ft[:, None, None, :], (num_frames, height, width, dim_t // 2))
    fh_b = jnp.broadcast_to(fh[None, :, None, :], (num_frames, height, width, dim_h // 2))
    fw_b = jnp.broadcast_to(fw[None, None, :, :], (num_frames, height, width, dim_w // 2))

    angles = jnp.concatenate([ft_b, fh_b, fw_b], axis=-1).reshape(-1, dim // 2)
    return jnp.stack([jnp.cos(angles), jnp.sin(angles)], axis=-1)   # (L, dim/2, 2)


def apply_rotary_emb(xq, xk, freqs_cs):
    """xq/xk: (B, Lv, H, HD); freqs_cs: (Lv, HD//2, 2) with (cos, sin)."""
    cos = freqs_cs[None, :, None, :, 0]
    sin = freqs_cs[None, :, None, :, 1]

    def rot(x):
        x2 = x.reshape(*x.shape[:-1], x.shape[-1] // 2, 2)
        xr, xi = x2[..., 0], x2[..., 1]
        out_r = xr * cos - xi * sin
        out_i = xr * sin + xi * cos
        return jnp.stack([out_r, out_i], axis=-1).reshape(x.shape)

    return rot(xq), rot(xk)


def l2_normalize(x, eps=1e-12):
    n = jnp.sqrt(jnp.sum(x * x, axis=-1, keepdims=True))
    return x / jnp.maximum(n, eps)


def process_input(params, x, freqs_cis, seq_text_length):
    """QKV + RoPE + reconstruction target; returns kernel-layout tensors."""
    B, L, Dm = x.shape
    H, HD, C = NUM_HEADS, HEAD_DIM, MINI_BATCH
    NC = L // C

    XQ = x @ params['wq_w'].T + params['wq_b']
    XK = x @ params['wk_w'].T + params['wk_b']
    XV = x @ params['wv_w'].T + params['wv_b']
    XQ = XQ.reshape(B, L, H, HD)
    XK = XK.reshape(B, L, H, HD)
    XV = XV.reshape(B, L, H, HD)

    XQ = l2_normalize(XQ)
    XK = l2_normalize(XK)

    # RoPE on the video part of the sequence.
    XQ_text, XQ_vid = XQ[:, :seq_text_length], XQ[:, seq_text_length:]
    XK_text, XK_vid = XK[:, :seq_text_length], XK[:, seq_text_length:]
    pad_vid = XQ_vid.shape[1]
    if freqs_cis.shape[0] < pad_vid:
        # Identity rotation (cos=1, sin=0) for padded tokens; never triggers with
        # 4*7*2 = 56 video tokens (the torch ref pads with complex zeros).
        n_pad = pad_vid - freqs_cis.shape[0]
        pad = jnp.stack([jnp.ones((n_pad, freqs_cis.shape[1]), freqs_cis.dtype),
                         jnp.zeros((n_pad, freqs_cis.shape[1]), freqs_cis.dtype)],
                        axis=-1)
        freqs_cis = jnp.concatenate([freqs_cis, pad], axis=0)
    XQ_vid, XK_vid = apply_rotary_emb(XQ_vid, XK_vid, freqs_cis[:pad_vid])
    XQ = jnp.concatenate([XQ_text, XQ_vid], axis=1)
    XK = jnp.concatenate([XK_text, XK_vid], axis=1)

    # ln_reconstruction_target (unbiased std + eps matches torch .std(); the
    # in-kernel LayerNorms use biased var + eps, matching ln_fwd/ln_fused_l2_bwd).
    XVr = XV - XK
    mean = jnp.mean(XVr, axis=-1, keepdims=True)
    std = jnp.std(XVr, axis=-1, keepdims=True, ddof=1)
    XVr = (XVr - mean) / (std + EPS_RECON)
    XVr = params['ttt_norm_w'][None, None] * XVr + params['ttt_norm_b'][None, None]
    XV = XVr + XK

    # Mini-batch layout, heads folded onto the lane axis: (B, NC, C, H*HD).
    X_mb = x.reshape(B, NC, C, Dm)
    XQ = XQ.reshape(B, L, Dm).reshape(B, NC, C, Dm)
    XK = XK.reshape(B, L, Dm).reshape(B, NC, C, Dm)
    XV = XV.reshape(B, L, Dm).reshape(B, NC, C, Dm)

    # Per-token TTT learning-rate row (all C rows of eta equal this row), with
    # the base_lr / head_dim / (1/mini_batch) factors folded in.
    ttt_lr = (jnp.einsum('bnkc,hdc->bhnkd', X_mb, params['ttt_lr_w'])
              + params['ttt_lr_b'].reshape(1, H, 1, 1, 1))
    ttt_lr = jax.nn.sigmoid(ttt_lr)[..., 0]                    # (B, H, NC, C)
    lr_rows = (TTT_BASE_LR / (HD * C)) * ttt_lr

    return XQ, XK, XV, lr_rows


def ttt_wrapper_forward(params, x, freqs_cis, seq_text_length):
    B, L, Dm = x.shape

    XQ, XK, XV, lr_rows = process_input(params, x, freqs_cis, seq_text_length)

    # Pallas TTT-Linear scan (the hot path).
    # checkpoint_group_size only affects grad checkpointing, not forward values.
    XQW = ttt_linear_scan(params['ttt_norm_w'], params['ttt_norm_b'],
                          params['W1'], params['b1'], XQ, XK, XV, lr_rows)
    XQW = XQW.reshape(B, L, Dm)

    # post_norm LayerNorm(width, eps=1e-6)
    mu = jnp.mean(XQW, axis=-1, keepdims=True)
    var = jnp.mean((XQW - mu) ** 2, axis=-1, keepdims=True)
    h = (XQW - mu) / jnp.sqrt(var + EPS_POST_NORM)
    h = h * params['post_norm_w'] + params['post_norm_b']

    # output projection
    return h @ params['wo_w'].T + params['wo_b']


# ----------------------------- parameter init --------------------------------
def init_params(key):
    ks = jax.random.split(key, 8)
    std = 0.02
    p = {}
    p['wq_w'] = std * jax.random.normal(ks[0], (MODEL_DIM, MODEL_DIM), jnp.float32)
    p['wq_b'] = jnp.zeros((MODEL_DIM,), jnp.float32)
    p['wk_w'] = std * jax.random.normal(ks[1], (MODEL_DIM, MODEL_DIM), jnp.float32)
    p['wk_b'] = jnp.zeros((MODEL_DIM,), jnp.float32)
    p['wv_w'] = std * jax.random.normal(ks[2], (MODEL_DIM, MODEL_DIM), jnp.float32)
    p['wv_b'] = jnp.zeros((MODEL_DIM,), jnp.float32)
    p['wo_w'] = std * jax.random.normal(ks[3], (MODEL_DIM, MODEL_DIM), jnp.float32)
    p['wo_b'] = jnp.zeros((MODEL_DIM,), jnp.float32)

    p['ttt_norm_w'] = jnp.ones((NUM_HEADS, HEAD_DIM), jnp.float32)
    p['ttt_norm_b'] = jnp.zeros((NUM_HEADS, HEAD_DIM), jnp.float32)

    p['ttt_lr_w'] = std * jax.random.normal(ks[4], (NUM_HEADS, 1, MODEL_DIM), jnp.float32)
    p['ttt_lr_b'] = jnp.zeros((NUM_HEADS, 1), jnp.float32)

    limit = (6.0 / (2 * HEAD_DIM)) ** 0.5                       # xavier_uniform
    p['W1'] = jax.random.uniform(ks[5], (NUM_HEADS, HEAD_DIM, HEAD_DIM),
                                 jnp.float32, -limit, limit)
    p['b1'] = jnp.zeros((NUM_HEADS, 1, HEAD_DIM), jnp.float32)

    p['post_norm_w'] = jnp.ones((MODEL_DIM,), jnp.float32)
    p['post_norm_b'] = jnp.zeros((MODEL_DIM,), jnp.float32)
    return p


# ----------------------------- main -------------------------------------------
if __name__ == "__main__":
    key = jax.random.PRNGKey(0)
    k_param, k_x = jax.random.split(key)

    params = init_params(k_param)
    freqs_cis = precompute_freqs_cis_3d(HEAD_DIM, LATENT_H, LATENT_W,
                                        NUM_FRAMES, ROPE_THETA)
    x = jax.random.normal(k_x, (BATCH, SEQ_LEN, MODEL_DIM), jnp.float32)

    # Numerical self-check of the fused Pallas scan vs. the unfused reference.
    XQ, XK, XV, lr_rows = process_input(params, x, freqs_cis, SEQ_TEXT_LEN)
    got = jax.block_until_ready(
        ttt_linear_scan(params['ttt_norm_w'], params['ttt_norm_b'],
                        params['W1'], params['b1'], XQ, XK, XV, lr_rows))
    want = ttt_linear_scan_ref(params['ttt_norm_w'], params['ttt_norm_b'],
                               params['W1'], params['b1'], XQ, XK, XV, lr_rows)
    assert bool(jnp.allclose(got, want, atol=1e-2, rtol=1e-2)), \
        f"max abs diff {float(jnp.max(jnp.abs(got - want)))}"

    fwd = jax.jit(ttt_wrapper_forward, static_argnums=3)
    out = jax.block_until_ready(fwd(params, x, freqs_cis, SEQ_TEXT_LEN))
    assert out.shape == (BATCH, SEQ_LEN, MODEL_DIM)
    assert bool(jnp.all(jnp.isfinite(out)))
    print("KERNEL_OK")
</pallas_src>

<mosaic_0001>
module attributes {stable_mosaic.version = 11 : i64} {
  func.func @_ttt_linear_kernel(%arg0: i32, %arg1: memref<2x32xf32, #tpu.memory_space<vmem>>, %arg2: memref<2x32xf32, #tpu.memory_space<vmem>>, %arg3: memref<2x32x32xf32, #tpu.memory_space<vmem>>, %arg4: memref<2x1x32xf32, #tpu.memory_space<vmem>>, %arg5: memref<1x8x8x64xf32, #tpu.memory_space<vmem>>, %arg6: memref<1x8x8x64xf32, #tpu.memory_space<vmem>>, %arg7: memref<1x8x8x64xf32, #tpu.memory_space<vmem>>, %arg8: memref<1x2x8x8xf32, #tpu.memory_space<vmem>>, %arg9: memref<1x8x8x64xf32, #tpu.memory_space<vmem>>) attributes {dimension_semantics = [#tpu.dimension_semantics<parallel>], iteration_bounds = array<i64: 2>, scalar_prefetch = 0 : i64, scratch_operands = 0 : i64, tpu.core_type = #tpu.core_type<tc>, window_params = [{pipeline_mode = #tpu.pipeline_mode<synchronous>, transform_indices = @transform_0, window_bounds = array<i64: 2, 32>}, {pipeline_mode = #tpu.pipeline_mode<synchronous>, transform_indices = @transform_1, window_bounds = array<i64: 2, 32>}, {pipeline_mode = #tpu.pipeline_mode<synchronous>, transform_indices = @transform_2, window_bounds = array<i64: 2, 32, 32>}, {pipeline_mode = #tpu.pipeline_mode<synchronous>, transform_indices = @transform_3, window_bounds = array<i64: 2, 1, 32>}, {transform_indices = @transform_4, window_bounds = array<i64: 1, 8, 8, 64>}, {transform_indices = @transform_5, window_bounds = array<i64: 1, 8, 8, 64>}, {transform_indices = @transform_6, window_bounds = array<i64: 1, 8, 8, 64>}, {transform_indices = @transform_7, window_bounds = array<i64: 1, 2, 8, 8>}, {transform_indices = @transform_8, window_bounds = array<i64: 1, 8, 8, 64>}]} {
    %0 = tpu.iota {dimensions = array<i32: 0>} : vector<8x8xi32>
    %1 = tpu.iota {dimensions = array<i32: 1>} : vector<8x8xi32>
    %2 = arith.cmpi sge, %0, %1 : vector<8x8xi32>
    %3 = arith.cmpi eq, %0, %1 : vector<8x8xi32>
    %c0 = arith.constant 0 : index
    %c0_0 = arith.constant 0 : index
    %4 = vector.load %arg1[%c0, %c0_0] : memref<2x32xf32, #tpu.memory_space<vmem>>, vector<1x32xf32>
    %c1 = arith.constant 1 : index
    %c0_1 = arith.constant 0 : index
    %5 = vector.load %arg1[%c1, %c0_1] : memref<2x32xf32, #tpu.memory_space<vmem>>, vector<1x32xf32>
    %c0_2 = arith.constant 0 : index
    %c0_3 = arith.constant 0 : index
    %6 = vector.load %arg2[%c0_2, %c0_3] : memref<2x32xf32, #tpu.memory_space<vmem>>, vector<1x32xf32>
    %c1_4 = arith.constant 1 : index
    %c0_5 = arith.constant 0 : index
    %7 = vector.load %arg2[%c1_4, %c0_5] : memref<2x32xf32, #tpu.memory_space<vmem>>, vector<1x32xf32>
    %c0_6 = arith.constant 0 : index
    %c0_7 = arith.constant 0 : index
    %c0_8 = arith.constant 0 : index
    %8 = vector.load %arg3[%c0_6, %c0_7, %c0_8] : memref<2x32x32xf32, #tpu.memory_space<vmem>>, vector<1x32x32xf32>
    %9 = vector.shape_cast %8 : vector<1x32x32xf32> to vector<32x32xf32>
    %c1_9 = arith.constant 1 : index
    %c0_10 = arith.constant 0 : index
    %c0_11 = arith.constant 0 : index
    %10 = vector.load %arg3[%c1_9, %c0_10, %c0_11] : memref<2x32x32xf32, #tpu.memory_space<vmem>>, vector<1x32x32xf32>
    %11 = vector.shape_cast %10 : vector<1x32x32xf32> to vector<32x32xf32>
    %c0_12 = arith.constant 0 : index
    %c0_13 = arith.constant 0 : index
    %c0_14 = arith.constant 0 : index
    %12 = vector.load %arg4[%c0_12, %c0_13, %c0_14] : memref<2x1x32xf32, #tpu.memory_space<vmem>>, vector<1x1x32xf32>
    %13 = vector.shape_cast %12 : vector<1x1x32xf32> to vector<1x32xf32>
    %c1_15 = arith.constant 1 : index
    %c0_16 = arith.constant 0 : index
    %c0_17 = arith.constant 0 : index
    %14 = vector.load %arg4[%c1_15, %c0_16, %c0_17] : memref<2x1x32xf32, #tpu.memory_space<vmem>>, vector<1x1x32xf32>
    %15 = vector.shape_cast %14 : vector<1x1x32xf32> to vector<1x32xf32>
    %c0_18 = arith.constant 0 : index
    %c0_19 = arith.constant 0 : index
    %c0_20 = arith.constant 0 : index
    %c0_21 = arith.constant 0 : index
    %16 = vector.load %arg5[%c0_18, %c0_19, %c0_20, %c0_21] : memref<1x8x8x64xf32, #tpu.memory_space<vmem>>, vector<1x1x8x64xf32>
    %17 = vector.shape_cast %16 : vector<1x1x8x64xf32> to vector<8x64xf32>
    %c0_22 = arith.constant 0 : index
    %c0_23 = arith.constant 0 : index
    %c0_24 = arith.constant 0 : index
    %c0_25 = arith.constant 0 : index
    %18 = vector.load %arg6[%c0_22, %c0_23, %c0_24, %c0_25] : memref<1x8x8x64xf32, #tpu.memory_space<vmem>>, vector<1x1x8x64xf32>
    %19 = vector.shape_cast %18 : vector<1x1x8x64xf32> to vector<8x64xf32>
    %c0_26 = arith.constant 0 : index
    %c0_27 = arith.constant 0 : index
    %c0_28 = arith.constant 0 : index
    %c0_29 = arith.constant 0 : index
    %20 = vector.load %arg7[%c0_26, %c0_27, %c0_28, %c0_29] : memref<1x8x8x64xf32, #tpu.memory_space<vmem>>, vector<1x1x8x64xf32>
    %21 = vector.shape_cast %20 : vector<1x1x8x64xf32> to vector<8x64xf32>
    %22 = vector.extract_strided_slice %17 {offsets = [0, 0], sizes = [8, 32], strides = [1, 1]} : vector<8x64xf32> to vector<8x32xf32>
    %23 = vector.extract_strided_slice %19 {offsets = [0, 0], sizes = [8, 32], strides = [1, 1]} : vector<8x64xf32> to vector<8x32xf32>
    %24 = vector.extract_strided_slice %21 {offsets = [0, 0], sizes = [8, 32], strides = [1, 1]} : vector<8x64xf32> to vector<8x32xf32>
    %c0_30 = arith.constant 0 : index
    %c0_31 = arith.constant 0 : index
    %c0_32 = arith.constant 0 : index
    %c0_33 = arith.constant 0 : index
    %25 = vector.load %arg8[%c0_30, %c0_31, %c0_32, %c0_33] : memref<1x2x8x8xf32, #tpu.memory_space<vmem>>, vector<1x1x1x8xf32>
    %26 = vector.shape_cast %25 : vector<1x1x1x8xf32> to vector<1x8xf32>
    %cst = arith.constant dense<0.000000e+00> : vector<8x32xf32>
    %27 = tpu.matmul %23, %9, %cst {dimension_numbers = #tpu.dot_dimension_numbers<[1], [0], [0], [1], [0, 0, 1, 1], [], []>} : vector<8x32xf32>, vector<32x32xf32>, vector<8x32xf32> -> vector<8x32xf32>
    %28 = vector.broadcast %13 : vector<1x32xf32> to vector<8x32xf32>
    %29 = arith.addf %27, %28 : vector<8x32xf32>
    %30 = arith.subf %24, %23 : vector<8x32xf32>
    %cst_34 = arith.constant dense<0.000000e+00> : vector<8xf32>
    %31 = vector.multi_reduction <add>, %29, %cst_34 [1] : vector<8x32xf32> to vector<8xf32>
    %32 = vector.shape_cast %31 : vector<8xf32> to vector<8x1xf32>
    %cst_35 = arith.constant 3.200000e+01 : f32
    %33 = vector.broadcast %cst_35 : f32 to vector<8x1xf32>
    %34 = arith.divf %32, %33 : vector<8x1xf32>
    %35 = vector.broadcast %34 : vector<8x1xf32> to vector<8x32xf32>
    %36 = arith.subf %29, %35 : vector<8x32xf32>
    %37 = arith.mulf %36, %36 : vector<8x32xf32>
    %cst_36 = arith.constant dense<0.000000e+00> : vector<8xf32>
    %38 = vector.multi_reduction <add>, %37, %cst_36 [1] : vector<8x32xf32> to vector<8xf32>
    %39 = vector.shape_cast %38 : vector<8xf32> to vector<8x1xf32>
    %cst_37 = arith.constant 3.200000e+01 : f32
    %40 = vector.broadcast %cst_37 : f32 to vector<8x1xf32>
    %41 = arith.divf %39, %40 : vector<8x1xf32>
    %cst_38 = arith.constant 9.99999997E-7 : f32
    %42 = vector.broadcast %cst_38 : f32 to vector<8x1xf32>
    %43 = arith.addf %41, %42 : vector<8x1xf32>
    %44 = math.rsqrt %43 : vector<8x1xf32>
    %45 = vector.broadcast %34 : vector<8x1xf32> to vector<8x32xf32>
    %46 = arith.subf %29, %45 : vector<8x32xf32>
    %47 = vector.broadcast %44 : vector<8x1xf32> to vector<8x32xf32>
    %48 = arith.mulf %46, %47 : vector<8x32xf32>
    %49 = vector.broadcast %4 : vector<1x32xf32> to vector<8x32xf32>
    %50 = arith.mulf %49, %48 : vector<8x32xf32>
    %51 = vector.broadcast %6 : vector<1x32xf32> to vector<8x32xf32>
    %52 = arith.addf %50, %51 : vector<8x32xf32>
    %53 = arith.subf %52, %30 : vector<8x32xf32>
    %54 = vector.broadcast %4 : vector<1x32xf32> to vector<8x32xf32>
    %55 = arith.mulf %54, %53 : vector<8x32xf32>
    %cst_39 = arith.constant 3.200000e+01 : f32
    %56 = vector.broadcast %cst_39 : f32 to vector<8x32xf32>
    %57 = arith.mulf %56, %55 : vector<8x32xf32>
    %cst_40 = arith.constant dense<0.000000e+00> : vector<8xf32>
    %58 = vector.multi_reduction <add>, %55, %cst_40 [1] : vector<8x32xf32> to vector<8xf32>
    %59 = vector.shape_cast %58 : vector<8xf32> to vector<8x1xf32>
    %60 = vector.broadcast %59 : vector<8x1xf32> to vector<8x32xf32>
    %61 = arith.subf %57, %60 : vector<8x32xf32>
    %62 = arith.mulf %55, %48 : vector<8x32xf32>
    %cst_41 = arith.constant dense<0.000000e+00> : vector<8xf32>
    %63 = vector.multi_reduction <add>, %62, %cst_41 [1] : vector<8x32xf32> to vector<8xf32>
    %64 = vector.shape_cast %63 : vector<8xf32> to vector<8x1xf32>
    %65 = vector.broadcast %64 : vector<8x1xf32> to vector<8x32xf32>
    %66 = arith.mulf %48, %65 : vector<8x32xf32>
    %67 = arith.subf %61, %66 : vector<8x32xf32>
    %cst_42 = arith.constant 3.125000e-02 : f32
    %68 = vector.broadcast %cst_42 : f32 to vector<8x1xf32>
    %69 = arith.mulf %44, %68 : vector<8x1xf32>
    %70 = vector.broadcast %69 : vector<8x1xf32> to vector<8x32xf32>
    %71 = arith.mulf %67, %70 : vector<8x32xf32>
    %cst_43 = arith.constant dense<0.000000e+00> : vector<8x8xf32>
    %72 = tpu.matmul %22, %23, %cst_43 {dimension_numbers = #tpu.dot_dimension_numbers<[1], [1], [0], [0], [0, 0, 1, 0], [], []>} : vector<8x32xf32>, vector<8x32xf32>, vector<8x8xf32> -> vector<8x8xf32>
    %73 = vector.shape_cast %26 : vector<1x8xf32> to vector<1x8xf32>
    %74 = vector.broadcast %73 : vector<1x8xf32> to vector<8x8xf32>
    %cst_44 = arith.constant 1.000000e+00 : f32
    %75 = vector.broadcast %cst_44 : f32 to vector<8x8xf32>
    %76 = arith.addf %72, %75 : vector<8x8xf32>
    %77 = arith.mulf %74, %76 : vector<8x8xf32>
    %cst_45 = arith.constant 0.000000e+00 : f32
    %78 = vector.broadcast %cst_45 : f32 to vector<8x8xf32>
    %79 = arith.select %2, %77, %78 : vector<8x8xi1>, vector<8x8xf32>
    %cst_46 = arith.constant dense<0.000000e+00> : vector<8x32xf32>
    %80 = tpu.matmul %22, %9, %cst_46 {dimension_numbers = #tpu.dot_dimension_numbers<[1], [0], [0], [1], [0, 0, 1, 1], [], []>} : vector<8x32xf32>, vector<32x32xf32>, vector<8x32xf32> -> vector<8x32xf32>
    %81 = vector.broadcast %13 : vector<1x32xf32> to vector<8x32xf32>
    %82 = arith.addf %80, %81 : vector<8x32xf32>
    %cst_47 = arith.constant dense<0.000000e+00> : vector<8x32xf32>
    %83 = tpu.matmul %79, %71, %cst_47 {dimension_numbers = #tpu.dot_dimension_numbers<[1], [0], [0], [1], [0, 0, 1, 1], [], []>} : vector<8x8xf32>, vector<8x32xf32>, vector<8x32xf32> -> vector<8x32xf32>
    %84 = arith.subf %82, %83 : vector<8x32xf32>
    %cst_48 = arith.constant 0.000000e+00 : f32
    %85 = vector.broadcast %cst_48 : f32 to vector<8x8xf32>
    %86 = arith.select %3, %74, %85 : vector<8x8xi1>, vector<8x8xf32>
    %cst_49 = arith.constant dense<0.000000e+00> : vector<8x32xf32>
    %87 = tpu.matmul %86, %71, %cst_49 {dimension_numbers = #tpu.dot_dimension_numbers<[1], [0], [0], [1], [0, 0, 1, 1], [], []>} : vector<8x8xf32>, vector<8x32xf32>, vector<8x32xf32> -> vector<8x32xf32>
    %cst_50 = arith.constant dense<0.000000e+00> : vector<32x32xf32>
    %88 = tpu.matmul %23, %87, %cst_50 {dimension_numbers = #tpu.dot_dimension_numbers<[0], [0], [1], [1], [0, 1, 1, 1], [], []>} : vector<8x32xf32>, vector<8x32xf32>, vector<32x32xf32> -> vector<32x32xf32>
    %89 = arith.subf %9, %88 : vector<32x32xf32>
    %cst_51 = arith.constant dense<0.000000e+00> : vector<32xf32>
    %90 = vector.multi_reduction <add>, %87, %cst_51 [0] : vector<8x32xf32> to vector<32xf32>
    %91 = vector.shape_cast %90 : vector<32xf32> to vector<1x32xf32>
    %92 = arith.subf %13, %91 : vector<1x32xf32>
    %cst_52 = arith.constant dense<0.000000e+00> : vector<8xf32>
    %93 = vector.multi_reduction <add>, %84, %cst_52 [1] : vector<8x32xf32> to vector<8xf32>
    %94 = vector.shape_cast %93 : vector<8xf32> to vector<8x1xf32>
    %cst_53 = arith.constant 3.200000e+01 : f32
    %95 = vector.broadcast %cst_53 : f32 to vector<8x1xf32>
    %96 = arith.divf %94, %95 : vector<8x1xf32>
    %97 = vector.broadcast %96 : vector<8x1xf32> to vector<8x32xf32>
    %98 = arith.subf %84, %97 : vector<8x32xf32>
    %99 = arith.mulf %98, %98 : vector<8x32xf32>
    %cst_54 = arith.constant dense<0.000000e+00> : vector<8xf32>
    %100 = vector.multi_reduction <add>, %99, %cst_54 [1] : vector<8x32xf32> to vector<8xf32>
    %101 = vector.shape_cast %100 : vector<8xf32> to vector<8x1xf32>
    %cst_55 = arith.constant 3.200000e+01 : f32
    %102 = vector.broadcast %cst_55 : f32 to vector<8x1xf32>
    %103 = arith.divf %101, %102 : vector<8x1xf32>
    %104 = vector.broadcast %96 : vector<8x1xf32> to vector<8x32xf32>
    %105 = arith.subf %84, %104 : vector<8x32xf32>
    %cst_56 = arith.constant 9.99999997E-7 : f32
    %106 = vector.broadcast %cst_56 : f32 to vector<8x1xf32>
    %107 = arith.addf %103, %106 : vector<8x1xf32>
    %108 = math.rsqrt %107 : vector<8x1xf32>
    %109 = vector.broadcast %108 : vector<8x1xf32> to vector<8x32xf32>
    %110 = arith.mulf %105, %109 : vector<8x32xf32>
    %111 = vector.broadcast %4 : vector<1x32xf32> to vector<8x32xf32>
    %112 = arith.mulf %111, %110 : vector<8x32xf32>
    %113 = arith.addf %22, %112 : vector<8x32xf32>
    %114 = vector.broadcast %6 : vector<1x32xf32> to vector<8x32xf32>
    %115 = arith.addf %113, %114 : vector<8x32xf32>
    %116 = vector.extract_strided_slice %17 {offsets = [0, 32], sizes = [8, 32], strides = [1, 1]} : vector<8x64xf32> to vector<8x32xf32>
    %117 = vector.extract_strided_slice %19 {offsets = [0, 32], sizes = [8, 32], strides = [1, 1]} : vector<8x64xf32> to vector<8x32xf32>
    %118 = vector.extract_strided_slice %21 {offsets = [0, 32], sizes = [8, 32], strides = [1, 1]} : vector<8x64xf32> to vector<8x32xf32>
    %c0_57 = arith.constant 0 : index
    %c1_58 = arith.constant 1 : index
    %c0_59 = arith.constant 0 : index
    %c0_60 = arith.constant 0 : index
    %119 = vector.load %arg8[%c0_57, %c1_58, %c0_59, %c0_60] : memref<1x2x8x8xf32, #tpu.memory_space<vmem>>, vector<1x1x1x8xf32>
    %120 = vector.shape_cast %119 : vector<1x1x1x8xf32> to vector<1x8xf32>
    %cst_61 = arith.constant dense<0.000000e+00> : vector<8x32xf32>
    %121 = tpu.matmul %117, %11, %cst_61 {dimension_numbers = #tpu.dot_dimension_numbers<[1], [0], [0], [1], [0, 0, 1, 1], [], []>} : vector<8x32xf32>, vector<32x32xf32>, vector<8x32xf32> -> vector<8x32xf32>
    %122 = vector.broadcast %15 : vector<1x32xf32> to vector<8x32xf32>
    %123 = arith.addf %121, %122 : vector<8x32xf32>
    %124 = arith.subf %118, %117 : vector<8x32xf32>
    %cst_62 = arith.constant dense<0.000000e+00> : vector<8xf32>
    %125 = vector.multi_reduction <add>, %123, %cst_62 [1] : vector<8x32xf32> to vector<8xf32>
    %126 = vector.shape_cast %125 : vector<8xf32> to vector<8x1xf32>
    %cst_63 = arith.constant 3.200000e+01 : f32
    %127 = vector.broadcast %cst_63 : f32 to vector<8x1xf32>
    %128 = arith.divf %126, %127 : vector<8x1xf32>
    %129 = vector.broadcast %128 : vector<8x1xf32> to vector<8x32xf32>
    %130 = arith.subf %123, %129 : vector<8x32xf32>
    %131 = arith.mulf %130, %130 : vector<8x32xf32>
    %cst_64 = arith.constant dense<0.000000e+00> : vector<8xf32>
    %132 = vector.multi_reduction <add>, %131, %cst_64 [1] : vector<8x32xf32> to vector<8xf32>
    %133 = vector.shape_cast %132 : vector<8xf32> to vector<8x1xf32>
    %cst_65 = arith.constant 3.200000e+01 : f32
    %134 = vector.broadcast %cst_65 : f32 to vector<8x1xf32>
    %135 = arith.divf %133, %134 : vector<8x1xf32>
    %cst_66 = arith.constant 9.99999997E-7 : f32
    %136 = vector.broadcast %cst_66 : f32 to vector<8x1xf32>
    %137 = arith.addf %135, %136 : vector<8x1xf32>
    %138 = math.rsqrt %137 : vector<8x1xf32>
    %139 = vector.broadcast %128 : vector<8x1xf32> to vector<8x32xf32>
    %140 = arith.subf %123, %139 : vector<8x32xf32>
    %141 = vector.broadcast %138 : vector<8x1xf32> to vector<8x32xf32>
    %142 = arith.mulf %140, %141 : vector<8x32xf32>
    %143 = vector.broadcast %5 : vector<1x32xf32> to vector<8x32xf32>
    %144 = arith.mulf %143, %142 : vector<8x32xf32>
    %145 = vector.broadcast %7 : vector<1x32xf32> to vector<8x32xf32>
    %146 = arith.addf %144, %145 : vector<8x32xf32>
    %147 = arith.subf %146, %124 : vector<8x32xf32>
    %148 = vector.broadcast %5 : vector<1x32xf32> to vector<8x32xf32>
    %149 = arith.mulf %148, %147 : vector<8x32xf32>
    %cst_67 = arith.constant 3.200000e+01 : f32
    %150 = vector.broadcast %cst_67 : f32 to vector<8x32xf32>
    %151 = arith.mulf %150, %149 : vector<8x32xf32>
    %cst_68 = arith.constant dense<0.000000e+00> : vector<8xf32>
    %152 = vector.multi_reduction <add>, %149, %cst_68 [1] : vector<8x32xf32> to vector<8xf32>
    %153 = vector.shape_cast %152 : vector<8xf32> to vector<8x1xf32>
    %154 = vector.broadcast %153 : vector<8x1xf32> to vector<8x32xf32>
    %155 = arith.subf %151, %154 : vector<8x32xf32>
    %156 = arith.mulf %149, %142 : vector<8x32xf32>
    %cst_69 = arith.constant dense<0.000000e+00> : vector<8xf32>
    %157 = vector.multi_reduction <add>, %156, %cst_69 [1] : vector<8x32xf32> to vector<8xf32>
    %158 = vector.shape_cast %157 : vector<8xf32> to vector<8x1xf32>
    %159 = vector.broadcast %158 : vector<8x1xf32> to vector<8x32xf32>
    %160 = arith.mulf %142, %159 : vector<8x32xf32>
    %161 = arith.subf %155, %160 : vector<8x32xf32>
    %cst_70 = arith.constant 3.125000e-02 : f32
    %162 = vector.broadcast %cst_70 : f32 to vector<8x1xf32>
    %163 = arith.mulf %138, %162 : vector<8x1xf32>
    %164 = vector.broadcast %163 : vector<8x1xf32> to vector<8x32xf32>
    %165 = arith.mulf %161, %164 : vector<8x32xf32>
    %cst_71 = arith.constant dense<0.000000e+00> : vector<8x8xf32>
    %166 = tpu.matmul %116, %117, %cst_71 {dimension_numbers = #tpu.dot_dimension_numbers<[1], [1], [0], [0], [0, 0, 1, 0], [], []>} : vector<8x32xf32>, vector<8x32xf32>, vector<8x8xf32> -> vector<8x8xf32>
    %167 = vector.shape_cast %120 : vector<1x8xf32> to vector<1x8xf32>
    %168 = vector.broadcast %167 : vector<1x8xf32> to vector<8x8xf32>
    %cst_72 = arith.constant 1.000000e+00 : f32
    %169 = vector.broadcast %cst_72 : f32 to vector<8x8xf32>
    %170 = arith.addf %166, %169 : vector<8x8xf32>
    %171 = arith.mulf %168, %170 : vector<8x8xf32>
    %cst_73 = arith.constant 0.000000e+00 : f32
    %172 = vector.broadcast %cst_73 : f32 to vector<8x8xf32>
    %173 = arith.select %2, %171, %172 : vector<8x8xi1>, vector<8x8xf32>
    %cst_74 = arith.constant dense<0.000000e+00> : vector<8x32xf32>
    %174 = tpu.matmul %116, %11, %cst_74 {dimension_numbers = #tpu.dot_dimension_numbers<[1], [0], [0], [1], [0, 0, 1, 1], [], []>} : vector<8x32xf32>, vector<32x32xf32>, vector<8x32xf32> -> vector<8x32xf32>
    %175 = vector.broadcast %15 : vector<1x32xf32> to vector<8x32xf32>
    %176 = arith.addf %174, %175 : vector<8x32xf32>
    %cst_75 = arith.constant dense<0.000000e+00> : vector<8x32xf32>
    %177 = tpu.matmul %173, %165, %cst_75 {dimension_numbers = #tpu.dot_dimension_numbers<[1], [0], [0], [1], [0, 0, 1, 1], [], []>} : vector<8x8xf32>, vector<8x32xf32>, vector<8x32xf32> -> vector<8x32xf32>
    %178 = arith.subf %176, %177 : vector<8x32xf32>
    %cst_76 = arith.constant 0.000000e+00 : f32
    %179 = vector.broadcast %cst_76 : f32 to vector<8x8xf32>
    %180 = arith.select %3, %168, %179 : vector<8x8xi1>, vector<8x8xf32>
    %cst_77 = arith.constant dense<0.000000e+00> : vector<8x32xf32>
    %181 = tpu.matmul %180, %165, %cst_77 {dimension_numbers = #tpu.dot_dimension_numbers<[1], [0], [0], [1], [0, 0, 1, 1], [], []>} : vector<8x8xf32>, vector<8x32xf32>, vector<8x32xf32> -> vector<8x32xf32>
    %cst_78 = arith.constant dense<0.000000e+00> : vector<32x32xf32>
    %182 = tpu.matmul %117, %181, %cst_78 {dimension_numbers = #tpu.dot_dimension_numbers<[0], [0], [1], [1], [0, 1, 1, 1], [], []>} : vector<8x32xf32>, vector<8x32xf32>, vector<32x32xf32> -> vector<32x32xf32>
    %183 = arith.subf %11, %182 : vector<32x32xf32>
    %cst_79 = arith.constant dense<0.000000e+00> : vector<32xf32>
    %184 = vector.multi_reduction <add>, %181, %cst_79 [0] : vector<8x32xf32> to vector<32xf32>
    %185 = vector.shape_cast %184 : vector<32xf32> to vector<1x32xf32>
    %186 = arith.subf %15, %185 : vector<1x32xf32>
    %cst_80 = arith.constant dense<0.000000e+00> : vector<8xf32>
    %187 = vector.multi_reduction <add>, %178, %cst_80 [1] : vector<8x32xf32> to vector<8xf32>
    %188 = vector.shape_cast %187 : vector<8xf32> to vector<8x1xf32>
    %cst_81 = arith.constant 3.200000e+01 : f32
    %189 = vector.broadcast %cst_81 : f32 to vector<8x1xf32>
    %190 = arith.divf %188, %189 : vector<8x1xf32>
    %191 = vector.broadcast %190 : vector<8x1xf32> to vector<8x32xf32>
    %192 = arith.subf %178, %191 : vector<8x32xf32>
    %193 = arith.mulf %192, %192 : vector<8x32xf32>
    %cst_82 = arith.constant dense<0.000000e+00> : vector<8xf32>
    %194 = vector.multi_reduction <add>, %193, %cst_82 [1] : vector<8x32xf32> to vector<8xf32>
    %195 = vector.shape_cast %194 : vector<8xf32> to vector<8x1xf32>
    %cst_83 = arith.constant 3.200000e+01 : f32
    %196 = vector.broadcast %cst_83 : f32 to vector<8x1xf32>
    %197 = arith.divf %195, %196 : vector<8x1xf32>
    %198 = vector.broadcast %190 : vector<8x1xf32> to vector<8x32xf32>
    %199 = arith.subf %178, %198 : vector<8x32xf32>
    %cst_84 = arith.constant 9.99999997E-7 : f32
    %200 = vector.broadcast %cst_84 : f32 to vector<8x1xf32>
    %201 = arith.addf %197, %200 : vector<8x1xf32>
    %202 = math.rsqrt %201 : vector<8x1xf32>
    %203 = vector.broadcast %202 : vector<8x1xf32> to vector<8x32xf32>
    %204 = arith.mulf %199, %203 : vector<8x32xf32>
    %205 = vector.broadcast %5 : vector<1x32xf32> to vector<8x32xf32>
    %206 = arith.mulf %205, %204 : vector<8x32xf32>
    %207 = arith.addf %116, %206 : vector<8x32xf32>
    %208 = vector.broadcast %7 : vector<1x32xf32> to vector<8x32xf32>
    %209 = arith.addf %207, %208 : vector<8x32xf32>
    %210 = tpu.concatenate %115, %209 in 1 : vector<8x32xf32>, vector<8x32xf32> -> vector<8x64xf32>
    %c0_85 = arith.constant 0 : index
    %c0_86 = arith.constant 0 : index
    %c0_87 = arith.constant 0 : index
    %c0_88 = arith.constant 0 : index
    %211 = vector.load %arg9[%c0_85, %c0_86, %c0_87, %c0_88] : memref<1x8x8x64xf32, #tpu.memory_space<vmem>>, vector<1x1x8x64xf32>
    %212 = vector.shape_cast %211 : vector<1x1x8x64xf32> to vector<8x64xf32>
    %213 = vector.shape_cast %210 : vector<8x64xf32> to vector<1x1x8x64xf32>
    tpu.vector_store %arg9[%c0_85, %c0_86, %c0_87, %c0_88], %213 {strides = array<i32>} : memref<1x8x8x64xf32, #tpu.memory_space<vmem>>, vector<1x1x8x64xf32>,
    %c0_89 = arith.constant 0 : index
    %c1_90 = arith.constant 1 : index
    %c0_91 = arith.constant 0 : index
    %c0_92 = arith.constant 0 : index
    %214 = vector.load %arg5[%c0_89, %c1_90, %c0_91, %c0_92] : memref<1x8x8x64xf32, #tpu.memory_space<vmem>>, vector<1x1x8x64xf32>
    %215 = vector.shape_cast %214 : vector<1x1x8x64xf32> to vector<8x64xf32>
    %c0_93 = arith.constant 0 : index
    %c1_94 = arith.constant 1 : index
    %c0_95 = arith.constant 0 : index
    %c0_96 = arith.constant 0 : index
    %216 = vector.load %arg6[%c0_93, %c1_94, %c0_95, %c0_96] : memref<1x8x8x64xf32, #tpu.memory_space<vmem>>, vector<1x1x8x64xf32>
    %217 = vector.shape_cast %216 : vector<1x1x8x64xf32> to vector<8x64xf32>
    %c0_97 = arith.constant 0 : index
    %c1_98 = arith.constant 1 : index
    %c0_99 = arith.constant 0 : index
    %c0_100 = arith.constant 0 : index
    %218 = vector.load %arg7[%c0_97, %c1_98, %c0_99, %c0_100] : memref<1x8x8x64xf32, #tpu.memory_space<vmem>>, vector<1x1x8x64xf32>
    %219 = vector.shape_cast %218 : vector<1x1x8x64xf32> to vector<8x64xf32>
    %220 = vector.extract_strided_slice %215 {offsets = [0, 0], sizes = [8, 32], strides = [1, 1]} : vector<8x64xf32> to vector<8x32xf32>
    %221 = vector.extract_strided_slice %217 {offsets = [0, 0], sizes = [8, 32], strides = [1, 1]} : vector<8x64xf32> to vector<8x32xf32>
    %222 = vector.extract_strided_slice %219 {offsets = [0, 0], sizes = [8, 32], strides = [1, 1]} : vector<8x64xf32> to vector<8x32xf32>
    %c0_101 = arith.constant 0 : index
    %c0_102 = arith.constant 0 : index
    %c1_103 = arith.constant 1 : index
    %c0_104 = arith.constant 0 : index
    %223 = vector.load %arg8[%c0_101, %c0_102, %c1_103, %c0_104] : memref<1x2x8x8xf32, #tpu.memory_space<vmem>>, vector<1x1x1x8xf32>
    %224 = vector.shape_cast %223 : vector<1x1x1x8xf32> to vector<1x8xf32>
    %cst_105 = arith.constant dense<0.000000e+00> : vector<8x32xf32>
    %225 = tpu.matmul %221, %89, %cst_105 {dimension_numbers = #tpu.dot_dimension_numbers<[1], [0], [0], [1], [0, 0, 1, 1], [], []>} : vector<8x32xf32>, vector<32x32xf32>, vector<8x32xf32> -> vector<8x32xf32>
    %226 = vector.broadcast %92 : vector<1x32xf32> to vector<8x32xf32>
    %227 = arith.addf %225, %226 : vector<8x32xf32>
    %228 = arith.subf %222, %221 : vector<8x32xf32>
    %cst_106 = arith.constant dense<0.000000e+00> : vector<8xf32>
    %229 = vector.multi_reduction <add>, %227, %cst_106 [1] : vector<8x32xf32> to vector<8xf32>
    %230 = vector.shape_cast %229 : vector<8xf32> to vector<8x1xf32>
    %cst_107 = arith.constant 3.200000e+01 : f32
    %231 = vector.broadcast %cst_107 : f32 to vector<8x1xf32>
    %232 = arith.divf %230, %231 : vector<8x1xf32>
    %233 = vector.broadcast %232 : vector<8x1xf32> to vector<8x32xf32>
    %234 = arith.subf %227, %233 : vector<8x32xf32>
    %235 = arith.mulf %234, %234 : vector<8x32xf32>
    %cst_108 = arith.constant dense<0.000000e+00> : vector<8xf32>
    %236 = vector.multi_reduction <add>, %235, %cst_108 [1] : vector<8x32xf32> to vector<8xf32>
    %237 = vector.shape_cast %236 : vector<8xf32> to vector<8x1xf32>
    %cst_109 = arith.constant 3.200000e+01 : f32
    %238 = vector.broadcast %cst_109 : f32 to vector<8x1xf32>
    %239 = arith.divf %237, %238 : vector<8x1xf32>
    %cst_110 = arith.constant 9.99999997E-7 : f32
    %240 = vector.broadcast %cst_110 : f32 to vector<8x1xf32>
    %241 = arith.addf %239, %240 : vector<8x1xf32>
    %242 = math.rsqrt %241 : vector<8x1xf32>
    %243 = vector.broadcast %232 : vector<8x1xf32> to vector<8x32xf32>
    %244 = arith.subf %227, %243 : vector<8x32xf32>
    %245 = vector.broadcast %242 : vector<8x1xf32> to vector<8x32xf32>
    %246 = arith.mulf %244, %245 : vector<8x32xf32>
    %247 = vector.broadcast %4 : vector<1x32xf32> to vector<8x32xf32>
    %248 = arith.mulf %247, %246 : vector<8x32xf32>
    %249 = vector.broadcast %6 : vector<1x32xf32> to vector<8x32xf32>
    %250 = arith.addf %248, %249 : vector<8x32xf32>
    %251 = arith.subf %250, %228 : vector<8x32xf32>
    %252 = vector.broadcast %4 : vector<1x32xf32> to vector<8x32xf32>
    %253 = arith.mulf %252, %251 : vector<8x32xf32>
    %cst_111 = arith.constant 3.200000e+01 : f32
    %254 = vector.broadcast %cst_111 : f32 to vector<8x32xf32>
    %255 = arith.mulf %254, %253 : vector<8x32xf32>
    %cst_112 = arith.constant dense<0.000000e+00> : vector<8xf32>
    %256 = vector.multi_reduction <add>, %253, %cst_112 [1] : vector<8x32xf32> to vector<8xf32>
    %257 = vector.shape_cast %256 : vector<8xf32> to vector<8x1xf32>
    %258 = vector.broadcast %257 : vector<8x1xf32> to vector<8x32xf32>
    %259 = arith.subf %255, %258 : vector<8x32xf32>
    %260 = arith.mulf %253, %246 : vector<8x32xf32>
    %cst_113 = arith.constant dense<0.000000e+00> : vector<8xf32>
    %261 = vector.multi_reduction <add>, %260, %cst_113 [1] : vector<8x32xf32> to vector<8xf32>
    %262 = vector.shape_cast %261 : vector<8xf32> to vector<8x1xf32>
    %263 = vector.broadcast %262 : vector<8x1xf32> to vector<8x32xf32>
    %264 = arith.mulf %246, %263 : vector<8x32xf32>
    %265 = arith.subf %259, %264 : vector<8x32xf32>
    %cst_114 = arith.constant 3.125000e-02 : f32
    %266 = vector.broadcast %cst_114 : f32 to vector<8x1xf32>
    %267 = arith.mulf %242, %266 : vector<8x1xf32>
    %268 = vector.broadcast %267 : vector<8x1xf32> to vector<8x32xf32>
    %269 = arith.mulf %265, %268 : vector<8x32xf32>
    %cst_115 = arith.constant dense<0.000000e+00> : vector<8x8xf32>
    %270 = tpu.matmul %220, %221, %cst_115 {dimension_numbers = #tpu.dot_dimension_numbers<[1], [1], [0], [0], [0, 0, 1, 0], [], []>} : vector<8x32xf32>, vector<8x32xf32>, vector<8x8xf32> -> vector<8x8xf32>
    %271 = vector.shape_cast %224 : vector<1x8xf32> to vector<1x8xf32>
    %272 = vector.broadcast %271 : vector<1x8xf32> to vector<8x8xf32>
    %cst_116 = arith.constant 1.000000e+00 : f32
    %273 = vector.broadcast %cst_116 : f32 to vector<8x8xf32>
    %274 = arith.addf %270, %273 : vector<8x8xf32>
    %275 = arith.mulf %272, %274 : vector<8x8xf32>
    %cst_117 = arith.constant 0.000000e+00 : f32
    %276 = vector.broadcast %cst_117 : f32 to vector<8x8xf32>
    %277 = arith.select %2, %275, %276 : vector<8x8xi1>, vector<8x8xf32>
    %cst_118 = arith.constant dense<0.000000e+00> : vector<8x32xf32>
    %278 = tpu.matmul %220, %89, %cst_118 {dimension_numbers = #tpu.dot_dimension_numbers<[1], [0], [0], [1], [0, 0, 1, 1], [], []>} : vector<8x32xf32>, vector<32x32xf32>, vector<8x32xf32> -> vector<8x32xf32>
    %279 = vector.broadcast %92 : vector<1x32xf32> to vector<8x32xf32>
    %280 = arith.addf %278, %279 : vector<8x32xf32>
    %cst_119 = arith.constant dense<0.000000e+00> : vector<8x32xf32>
    %281 = tpu.matmul %277, %269, %cst_119 {dimension_numbers = #tpu.dot_dimension_numbers<[1], [0], [0], [1], [0, 0, 1, 1], [], []>} : vector<8x8xf32>, vector<8x32xf32>, vector<8x32xf32> -> vector<8x32xf32>
    %282 = arith.subf %280, %281 : vector<8x32xf32>
    %cst_120 = arith.constant 0.000000e+00 : f32
    %283 = vector.broadcast %cst_120 : f32 to vector<8x8xf32>
    %284 = arith.select %3, %272, %283 : vector<8x8xi1>, vector<8x8xf32>
    %cst_121 = arith.constant dense<0.000000e+00> : vector<8x32xf32>
    %285 = tpu.matmul %284, %269, %cst_121 {dimension_numbers = #tpu.dot_dimension_numbers<[1], [0], [0], [1], [0, 0, 1, 1], [], []>} : vector<8x8xf32>, vector<8x32xf32>, vector<8x32xf32> -> vector<8x32xf32>
    %cst_122 = arith.constant dense<0.000000e+00> : vector<32x32xf32>
    %286 = tpu.matmul %221, %285, %cst_122 {dimension_numbers = #tpu.dot_dimension_numbers<[0], [0], [1], [1], [0, 1, 1, 1], [], []>} : vector<8x32xf32>, vector<8x32xf32>, vector<32x32xf32> -> vector<32x32xf32>
    %287 = arith.subf %89, %286 : vector<32x32xf32>
    %cst_123 = arith.constant dense<0.000000e+00> : vector<32xf32>
    %288 = vector.multi_reduction <add>, %285, %cst_123 [0] : vector<8x32xf32> to vector<32xf32>
    %289 = vector.shape_cast %288 : vector<32xf32> to vector<1x32xf32>
    %290 = arith.subf %92, %289 : vector<1x32xf32>
    %cst_124 = arith.constant dense<0.000000e+00> : vector<8xf32>
    %291 = vector.multi_reduction <add>, %282, %cst_124 [1] : vector<8x32xf32> to vector<8xf32>
    %292 = vector.shape_cast %291 : vector<8xf32> to vector<8x1xf32>
    %cst_125 = arith.constant 3.200000e+01 : f32
    %293 = vector.broadcast %cst_125 : f32 to vector<8x1xf32>
    %294 = arith.divf %292, %293 : vector<8x1xf32>
    %295 = vector.broadcast %294 : vector<8x1xf32> to vector<8x32xf32>
    %296 = arith.subf %282, %295 : vector<8x32xf32>
    %297 = arith.mulf %296, %296 : vector<8x32xf32>
    %cst_126 = arith.constant dense<0.000000e+00> : vector<8xf32>
    %298 = vector.multi_reduction <add>, %297, %cst_126 [1] : vector<8x32xf32> to vector<8xf32>
    %299 = vector.shape_cast %298 : vector<8xf32> to vector<8x1xf32>
    %cst_127 = arith.constant 3.200000e+01 : f32
    %300 = vector.broadcast %cst_127 : f32 to vector<8x1xf32>
    %301 = arith.divf %299, %300 : vector<8x1xf32>
    %302 = vector.broadcast %294 : vector<8x1xf32> to vector<8x32xf32>
    %303 = arith.subf %282, %302 : vector<8x32xf32>
    %cst_128 = arith.constant 9.99999997E-7 : f32
    %304 = vector.broadcast %cst_128 : f32 to vector<8x1xf32>
    %305 = arith.addf %301, %304 : vector<8x1xf32>
    %306 = math.rsqrt %305 : vector<8x1xf32>
    %307 = vector.broadcast %306 : vector<8x1xf32> to vector<8x32xf32>
    %308 = arith.mulf %303, %307 : vector<8x32xf32>
    %309 = vector.broadcast %4 : vector<1x32xf32> to vector<8x32xf32>
    %310 = arith.mulf %309, %308 : vector<8x32xf32>
    %311 = arith.addf %220, %310 : vector<8x32xf32>
    %312 = vector.broadcast %6 : vector<1x32xf32> to vector<8x32xf32>
    %313 = arith.addf %311, %312 : vector<8x32xf32>
    %314 = vector.extract_strided_slice %215 {offsets = [0, 32], sizes = [8, 32], strides = [1, 1]} : vector<8x64xf32> to vector<8x32xf32>
    %315 = vector.extract_strided_slice %217 {offsets = [0, 32], sizes = [8, 32], strides = [1, 1]} : vector<8x64xf32> to vector<8x32xf32>
    %316 = vector.extract_strided_slice %219 {offsets = [0, 32], sizes = [8, 32], strides = [1, 1]} : vector<8x64xf32> to vector<8x32xf32>
    %c0_129 = arith.constant 0 : index
    %c1_130 = arith.constant 1 : index
    %c1_131 = arith.constant 1 : index
    %c0_132 = arith.constant 0 : index
    %317 = vector.load %arg8[%c0_129, %c1_130, %c1_131, %c0_132] : memref<1x2x8x8xf32, #tpu.memory_space<vmem>>, vector<1x1x1x8xf32>
    %318 = vector.shape_cast %317 : vector<1x1x1x8xf32> to vector<1x8xf32>
    %cst_133 = arith.constant dense<0.000000e+00> : vector<8x32xf32>
    %319 = tpu.matmul %315, %183, %cst_133 {dimension_numbers = #tpu.dot_dimension_numbers<[1], [0], [0], [1], [0, 0, 1, 1], [], []>} : vector<8x32xf32>, vector<32x32xf32>, vector<8x32xf32> -> vector<8x32xf32>
    %320 = vector.broadcast %186 : vector<1x32xf32> to vector<8x32xf32>
    %321 = arith.addf %319, %320 : vector<8x32xf32>
    %322 = arith.subf %316, %315 : vector<8x32xf32>
    %cst_134 = arith.constant dense<0.000000e+00> : vector<8xf32>
    %323 = vector.multi_reduction <add>, %321, %cst_134 [1] : vector<8x32xf32> to vector<8xf32>
    %324 = vector.shape_cast %323 : vector<8xf32> to vector<8x1xf32>
    %cst_135 = arith.constant 3.200000e+01 : f32
    %325 = vector.broadcast %cst_135 : f32 to vector<8x1xf32>
    %326 = arith.divf %324, %325 : vector<8x1xf32>
    %327 = vector.broadcast %326 : vector<8x1xf32> to vector<8x32xf32>
    %328 = arith.subf %321, %327 : vector<8x32xf32>
    %329 = arith.mulf %328, %328 : vector<8x32xf32>
    %cst_136 = arith.constant dense<0.000000e+00> : vector<8xf32>
    %330 = vector.multi_reduction <add>, %329, %cst_136 [1] : vector<8x32xf32> to vector<8xf32>
    %331 = vector.shape_cast %330 : vector<8xf32> to vector<8x1xf32>
    %cst_137 = arith.constant 3.200000e+01 : f32
    %332 = vector.broadcast %cst_137 : f32 to vector<8x1xf32>
    %333 = arith.divf %331, %332 : vector<8x1xf32>
    %cst_138 = arith.constant 9.99999997E-7 : f32
    %334 = vector.broadcast %cst_138 : f32 to vector<8x1xf32>
    %335 = arith.addf %333, %334 : vector<8x1xf32>
    %336 = math.rsqrt %335 : vector<8x1xf32>
    %337 = vector.broadcast %326 : vector<8x1xf32> to vector<8x32xf32>
    %338 = arith.subf %321, %337 : vector<8x32xf32>
    %339 = vector.broadcast %336 : vector<8x1xf32> to vector<8x32xf32>
    %340 = arith.mulf %338, %339 : vector<8x32xf32>
    %341 = vector.broadcast %5 : vector<1x32xf32> to vector<8x32xf32>
    %342 = arith.mulf %341, %340 : vector<8x32xf32>
    %343 = vector.broadcast %7 : vector<1x32xf32> to vector<8x32xf32>
    %344 = arith.addf %342, %343 : vector<8x32xf32>
    %345 = arith.subf %344, %322 : vector<8x32xf32>
    %346 = vector.broadcast %5 : vector<1x32xf32> to vector<8x32xf32>
    %347 = arith.mulf %346, %345 : vector<8x32xf32>
    %cst_139 = arith.constant 3.200000e+01 : f32
    %348 = vector.broadcast %cst_139 : f32 to vector<8x32xf32>
    %349 = arith.mulf %348, %347 : vector<8x32xf32>
    %cst_140 = arith.constant dense<0.000000e+00> : vector<8xf32>
    %350 = vector.multi_reduction <add>, %347, %cst_140 [1] : vector<8x32xf32> to vector<8xf32>
    %351 = vector.shape_cast %350 : vector<8xf32> to vector<8x1xf32>
    %352 = vector.broadcast %351 : vector<8x1xf32> to vector<8x32xf32>
    %353 = arith.subf %349, %352 : vector<8x32xf32>
    %354 = arith.mulf %347, %340 : vector<8x32xf32>
    %cst_141 = arith.constant dense<0.000000e+00> : vector<8xf32>
    %355 = vector.multi_reduction <add>, %354, %cst_141 [1] : vector<8x32xf32> to vector<8xf32>
    %356 = vector.shape_cast %355 : vector<8xf32> to vector<8x1xf32>
    %357 = vector.broadcast %356 : vector<8x1xf32> to vector<8x32xf32>
    %358 = arith.mulf %340, %357 : vector<8x32xf32>
    %359 = arith.subf %353, %358 : vector<8x32xf32>
    %cst_142 = arith.constant 3.125000e-02 : f32
    %360 = vector.broadcast %cst_142 : f32 to vector<8x1xf32>
    %361 = arith.mulf %336, %360 : vector<8x1xf32>
    %362 = vector.broadcast %361 : vector<8x1xf32> to vector<8x32xf32>
    %363 = arith.mulf %359, %362 : vector<8x32xf32>
    %cst_143 = arith.constant dense<0.000000e+00> : vector<8x8xf32>
    %364 = tpu.matmul %314, %315, %cst_143 {dimension_numbers = #tpu.dot_dimension_numbers<[1], [1], [0], [0], [0, 0, 1, 0], [], []>} : vector<8x32xf32>, vector<8x32xf32>, vector<8x8xf32> -> vector<8x8xf32>
    %365 = vector.shape_cast %318 : vector<1x8xf32> to vector<1x8xf32>
    %366 = vector.broadcast %365 : vector<1x8xf32> to vector<8x8xf32>
    %cst_144 = arith.constant 1.000000e+00 : f32
    %367 = vector.broadcast %cst_144 : f32 to vector<8x8xf32>
    %368 = arith.addf %364, %367 : vector<8x8xf32>
    %369 = arith.mulf %366, %368 : vector<8x8xf32>
    %cst_145 = arith.constant 0.000000e+00 : f32
    %370 = vector.broadcast %cst_145 : f32 to vector<8x8xf32>
    %371 = arith.select %2, %369, %370 : vector<8x8xi1>, vector<8x8xf32>
    %cst_146 = arith.constant dense<0.000000e+00> : vector<8x32xf32>
    %372 = tpu.matmul %314, %183, %cst_146 {dimension_numbers = #tpu.dot_dimension_numbers<[1], [0], [0], [1], [0, 0, 1, 1], [], []>} : vector<8x32xf32>, vector<32x32xf32>, vector<8x32xf32> -> vector<8x32xf32>
    %373 = vector.broadcast %186 : vector<1x32xf32> to vector<8x32xf32>
    %374 = arith.addf %372, %373 : vector<8x32xf32>
    %cst_147 = arith.constant dense<0.000000e+00> : vector<8x32xf32>
    %375 = tpu.matmul %371, %363, %cst_147 {dimension_numbers = #tpu.dot_dimension_numbers<[1], [0], [0], [1], [0, 0, 1, 1], [], []>} : vector<8x8xf32>, vector<8x32xf32>, vector<8x32xf32> -> vector<8x32xf32>
    %376 = arith.subf %374, %375 : vector<8x32xf32>
    %cst_148 = arith.constant 0.000000e+00 : f32
    %377 = vector.broadcast %cst_148 : f32 to vector<8x8xf32>
    %378 = arith.select %3, %366, %377 : vector<8x8xi1>, vector<8x8xf32>
    %cst_149 = arith.constant dense<0.000000e+00> : vector<8x32xf32>
    %379 = tpu.matmul %378, %363, %cst_149 {dimension_numbers = #tpu.dot_dimension_numbers<[1], [0], [0], [1], [0, 0, 1, 1], [], []>} : vector<8x8xf32>, vector<8x32xf32>, vector<8x32xf32> -> vector<8x32xf32>
    %cst_150 = arith.constant dense<0.000000e+00> : vector<32x32xf32>
    %380 = tpu.matmul %315, %379, %cst_150 {dimension_numbers = #tpu.dot_dimension_numbers<[0], [0], [1], [1], [0, 1, 1, 1], [], []>} : vector<8x32xf32>, vector<8x32xf32>, vector<32x32xf32> -> vector<32x32xf32>
    %381 = arith.subf %183, %380 : vector<32x32xf32>
    %cst_151 = arith.constant dense<0.000000e+00> : vector<32xf32>
    %382 = vector.multi_reduction <add>, %379, %cst_151 [0] : vector<8x32xf32> to vector<32xf32>
    %383 = vector.shape_cast %382 : vector<32xf32> to vector<1x32xf32>
    %384 = arith.subf %186, %383 : vector<1x32xf32>
    %cst_152 = arith.constant dense<0.000000e+00> : vector<8xf32>
    %385 = vector.multi_reduction <add>, %376, %cst_152 [1] : vector<8x32xf32> to vector<8xf32>
    %386 = vector.shape_cast %385 : vector<8xf32> to vector<8x1xf32>
    %cst_153 = arith.constant 3.200000e+01 : f32
    %387 = vector.broadcast %cst_153 : f32 to vector<8x1xf32>
    %388 = arith.divf %386, %387 : vector<8x1xf32>
    %389 = vector.broadcast %388 : vector<8x1xf32> to vector<8x32xf32>
    %390 = arith.subf %376, %389 : vector<8x32xf32>
    %391 = arith.mulf %390, %390 : vector<8x32xf32>
    %cst_154 = arith.constant dense<0.000000e+00> : vector<8xf32>
    %392 = vector.multi_reduction <add>, %391, %cst_154 [1] : vector<8x32xf32> to vector<8xf32>
    %393 = vector.shape_cast %392 : vector<8xf32> to vector<8x1xf32>
    %cst_155 = arith.constant 3.200000e+01 : f32
    %394 = vector.broadcast %cst_155 : f32 to vector<8x1xf32>
    %395 = arith.divf %393, %394 : vector<8x1xf32>
    %396 = vector.broadcast %388 : vector<8x1xf32> to vector<8x32xf32>
    %397 = arith.subf %376, %396 : vector<8x32xf32>
    %cst_156 = arith.constant 9.99999997E-7 : f32
    %398 = vector.broadcast %cst_156 : f32 to vector<8x1xf32>
    %399 = arith.addf %395, %398 : vector<8x1xf32>
    %400 = math.rsqrt %399 : vector<8x1xf32>
    %401 = vector.broadcast %400 : vector<8x1xf32> to vector<8x32xf32>
    %402 = arith.mulf %397, %401 : vector<8x32xf32>
    %403 = vector.broadcast %5 : vector<1x32xf32> to vector<8x32xf32>
    %404 = arith.mulf %403, %402 : vector<8x32xf32>
    %405 = arith.addf %314, %404 : vector<8x32xf32>
    %406 = vector.broadcast %7 : vector<1x32xf32> to vector<8x32xf32>
    %407 = arith.addf %405, %406 : vector<8x32xf32>
    %408 = tpu.concatenate %313, %407 in 1 : vector<8x32xf32>, vector<8x32xf32> -> vector<8x64xf32>
    %c0_157 = arith.constant 0 : index
    %c1_158 = arith.constant 1 : index
    %c0_159 = arith.constant 0 : index
    %c0_160 = arith.constant 0 : index
    %409 = vector.load %arg9[%c0_157, %c1_158, %c0_159, %c0_160] : memref<1x8x8x64xf32, #tpu.memory_space<vmem>>, vector<1x1x8x64xf32>
    %410 = vector.shape_cast %409 : vector<1x1x8x64xf32> to vector<8x64xf32>
    %411 = vector.shape_cast %408 : vector<8x64xf32> to vector<1x1x8x64xf32>
    tpu.vector_store %arg9[%c0_157, %c1_158, %c0_159, %c0_160], %411 {strides = array<i32>} : memref<1x8x8x64xf32, #tpu.memory_space<vmem>>, vector<1x1x8x64xf32>,
    %c0_161 = arith.constant 0 : index
    %c2 = arith.constant 2 : index
    %c0_162 = arith.constant 0 : index
    %c0_163 = arith.constant 0 : index
    %412 = vector.load %arg5[%c0_161, %c2, %c0_162, %c0_163] : memref<1x8x8x64xf32, #tpu.memory_space<vmem>>, vector<1x1x8x64xf32>
    %413 = vector.shape_cast %412 : vector<1x1x8x64xf32> to vector<8x64xf32>
    %c0_164 = arith.constant 0 : index
    %c2_165 = arith.constant 2 : index
    %c0_166 = arith.constant 0 : index
    %c0_167 = arith.constant 0 : index
    %414 = vector.load %arg6[%c0_164, %c2_165, %c0_166, %c0_167] : memref<1x8x8x64xf32, #tpu.memory_space<vmem>>, vector<1x1x8x64xf32>
    %415 = vector.shape_cast %414 : vector<1x1x8x64xf32> to vector<8x64xf32>
    %c0_168 = arith.constant 0 : index
    %c2_169 = arith.constant 2 : index
    %c0_170 = arith.constant 0 : index
    %c0_171 = arith.constant 0 : index
    %416 = vector.load %arg7[%c0_168, %c2_169, %c0_170, %c0_171] : memref<1x8x8x64xf32, #tpu.memory_space<vmem>>, vector<1x1x8x64xf32>
    %417 = vector.shape_cast %416 : vector<1x1x8x64xf32> to vector<8x64xf32>
    %418 = vector.extract_strided_slice %413 {offsets = [0, 0], sizes = [8, 32], strides = [1, 1]} : vector<8x64xf32> to vector<8x32xf32>
    %419 = vector.extract_strided_slice %415 {offsets = [0, 0], sizes = [8, 32], strides = [1, 1]} : vector<8x64xf32> to vector<8x32xf32>
    %420 = vector.extract_strided_slice %417 {offsets = [0, 0], sizes = [8, 32], strides = [1, 1]} : vector<8x64xf32> to vector<8x32xf32>
    %c0_172 = arith.constant 0 : index
    %c0_173 = arith.constant 0 : index
    %c2_174 = arith.constant 2 : index
    %c0_175 = arith.constant 0 : index
    %421 = vector.load %arg8[%c0_172, %c0_173, %c2_174, %c0_175] : memref<1x2x8x8xf32, #tpu.memory_space<vmem>>, vector<1x1x1x8xf32>
    %422 = vector.shape_cast %421 : vector<1x1x1x8xf32> to vector<1x8xf32>
    %cst_176 = arith.constant dense<0.000000e+00> : vector<8x32xf32>
    %423 = tpu.matmul %419, %287, %cst_176 {dimension_numbers = #tpu.dot_dimension_numbers<[1], [0], [0], [1], [0, 0, 1, 1], [], []>} : vector<8x32xf32>, vector<32x32xf32>, vector<8x32xf32> -> vector<8x32xf32>
    %424 = vector.broadcast %290 : vector<1x32xf32> to vector<8x32xf32>
    %425 = arith.addf %423, %424 : vector<8x32xf32>
    %426 = arith.subf %420, %419 : vector<8x32xf32>
    %cst_177 = arith.constant dense<0.000000e+00> : vector<8xf32>
    %427 = vector.multi_reduction <add>, %425, %cst_177 [1] : vector<8x32xf32> to vector<8xf32>
    %428 = vector.shape_cast %427 : vector<8xf32> to vector<8x1xf32>
    %cst_178 = arith.constant 3.200000e+01 : f32
    %429 = vector.broadcast %cst_178 : f32 to vector<8x1xf32>
    %430 = arith.divf %428, %429 : vector<8x1xf32>
    %431 = vector.broadcast %430 : vector<8x1xf32> to vector<8x32xf32>
    %432 = arith.subf %425, %431 : vector<8x32xf32>
    %433 = arith.mulf %432, %432 : vector<8x32xf32>
    %cst_179 = arith.constant dense<0.000000e+00> : vector<8xf32>
    %434 = vector.multi_reduction <add>, %433, %cst_179 [1] : vector<8x32xf32> to vector<8xf32>
    %435 = vector.shape_cast %434 : vector<8xf32> to vector<8x1xf32>
    %cst_180 = arith.constant 3.200000e+01 : f32
    %436 = vector.broadcast %cst_180 : f32 to vector<8x1xf32>
    %437 = arith.divf %435, %436 : vector<8x1xf32>
    %cst_181 = arith.constant 9.99999997E-7 : f32
    %438 = vector.broadcast %cst_181 : f32 to vector<8x1xf32>
    %439 = arith.addf %437, %438 : vector<8x1xf32>
    %440 = math.rsqrt %439 : vector<8x1xf32>
    %441 = vector.broadcast %430 : vector<8x1xf32> to vector<8x32xf32>
    %442 = arith.subf %425, %441 : vector<8x32xf32>
    %443 = vector.broadcast %440 : vector<8x1xf32> to vector<8x32xf32>
    %444 = arith.mulf %442, %443 : vector<8x32xf32>
    %445 = vector.broadcast %4 : vector<1x32xf32> to vector<8x32xf32>
    %446 = arith.mulf %445, %444 : vector<8x32xf32>
    %447 = vector.broadcast %6 : vector<1x32xf32> to vector<8x32xf32>
    %448 = arith.addf %446, %447 : vector<8x32xf32>
    %449 = arith.subf %448, %426 : vector<8x32xf32>
    %450 = vector.broadcast %4 : vector<1x32xf32> to vector<8x32xf32>
    %451 = arith.mulf %450, %449 : vector<8x32xf32>
    %cst_182 = arith.constant 3.200000e+01 : f32
    %452 = vector.broadcast %cst_182 : f32 to vector<8x32xf32>
    %453 = arith.mulf %452, %451 : vector<8x32xf32>
    %cst_183 = arith.constant dense<0.000000e+00> : vector<8xf32>
    %454 = vector.multi_reduction <add>, %451, %cst_183 [1] : vector<8x32xf32> to vector<8xf32>
    %455 = vector.shape_cast %454 : vector<8xf32> to vector<8x1xf32>
    %456 = vector.broadcast %455 : vector<8x1xf32> to vector<8x32xf32>
    %457 = arith.subf %453, %456 : vector<8x32xf32>
    %458 = arith.mulf %451, %444 : vector<8x32xf32>
    %cst_184 = arith.constant dense<0.000000e+00> : vector<8xf32>
    %459 = vector.multi_reduction <add>, %458, %cst_184 [1] : vector<8x32xf32> to vector<8xf32>
    %460 = vector.shape_cast %459 : vector<8xf32> to vector<8x1xf32>
    %461 = vector.broadcast %460 : vector<8x1xf32> to vector<8x32xf32>
    %462 = arith.mulf %444, %461 : vector<8x32xf32>
    %463 = arith.subf %457, %462 : vector<8x32xf32>
    %cst_185 = arith.constant 3.125000e-02 : f32
    %464 = vector.broadcast %cst_185 : f32 to vector<8x1xf32>
    %465 = arith.mulf %440, %464 : vector<8x1xf32>
    %466 = vector.broadcast %465 : vector<8x1xf32> to vector<8x32xf32>
    %467 = arith.mulf %463, %466 : vector<8x32xf32>
    %cst_186 = arith.constant dense<0.000000e+00> : vector<8x8xf32>
    %468 = tpu.matmul %418, %419, %cst_186 {dimension_numbers = #tpu.dot_dimension_numbers<[1], [1], [0], [0], [0, 0, 1, 0], [], []>} : vector<8x32xf32>, vector<8x32xf32>, vector<8x8xf32> -> vector<8x8xf32>
    %469 = vector.shape_cast %422 : vector<1x8xf32> to vector<1x8xf32>
    %470 = vector.broadcast %469 : vector<1x8xf32> to vector<8x8xf32>
    %cst_187 = arith.constant 1.000000e+00 : f32
    %471 = vector.broadcast %cst_187 : f32 to vector<8x8xf32>
    %472 = arith.addf %468, %471 : vector<8x8xf32>
    %473 = arith.mulf %470, %472 : vector<8x8xf32>
    %cst_188 = arith.constant 0.000000e+00 : f32
    %474 = vector.broadcast %cst_188 : f32 to vector<8x8xf32>
    %475 = arith.select %2, %473, %474 : vector<8x8xi1>, vector<8x8xf32>
    %cst_189 = arith.constant dense<0.000000e+00> : vector<8x32xf32>
    %476 = tpu.matmul %418, %287, %cst_189 {dimension_numbers = #tpu.dot_dimension_numbers<[1], [0], [0], [1], [0, 0, 1, 1], [], []>} : vector<8x32xf32>, vector<32x32xf32>, vector<8x32xf32> -> vector<8x32xf32>
    %477 = vector.broadcast %290 : vector<1x32xf32> to vector<8x32xf32>
    %478 = arith.addf %476, %477 : vector<8x32xf32>
    %cst_190 = arith.constant dense<0.000000e+00> : vector<8x32xf32>
    %479 = tpu.matmul %475, %467, %cst_190 {dimension_numbers = #tpu.dot_dimension_numbers<[1], [0], [0], [1], [0, 0, 1, 1], [], []>} : vector<8x8xf32>, vector<8x32xf32>, vector<8x32xf32> -> vector<8x32xf32>
    %480 = arith.subf %478, %479 : vector<8x32xf32>
    %cst_191 = arith.constant 0.000000e+00 : f32
    %481 = vector.broadcast %cst_191 : f32 to vector<8x8xf32>
    %482 = arith.select %3, %470, %481 : vector<8x8xi1>, vector<8x8xf32>
    %cst_192 = arith.constant dense<0.000000e+00> : vector<8x32xf32>
    %483 = tpu.matmul %482, %467, %cst_192 {dimension_numbers = #tpu.dot_dimension_numbers<[1], [0], [0], [1], [0, 0, 1, 1], [], []>} : vector<8x8xf32>, vector<8x32xf32>, vector<8x32xf32> -> vector<8x32xf32>
    %cst_193 = arith.constant dense<0.000000e+00> : vector<32x32xf32>
    %484 = tpu.matmul %419, %483, %cst_193 {dimension_numbers = #tpu.dot_dimension_numbers<[0], [0], [1], [1], [0, 1, 1, 1], [], []>} : vector<8x32xf32>, vector<8x32xf32>, vector<32x32xf32> -> vector<32x32xf32>
    %485 = arith.subf %287, %484 : vector<32x32xf32>
    %cst_194 = arith.constant dense<0.000000e+00> : vector<32xf32>
    %486 = vector.multi_reduction <add>, %483, %cst_194 [0] : vector<8x32xf32> to vector<32xf32>
    %487 = vector.shape_cast %486 : vector<32xf32> to vector<1x32xf32>
    %488 = arith.subf %290, %487 : vector<1x32xf32>
    %cst_195 = arith.constant dense<0.000000e+00> : vector<8xf32>
    %489 = vector.multi_reduction <add>, %480, %cst_195 [1] : vector<8x32xf32> to vector<8xf32>
    %490 = vector.shape_cast %489 : vector<8xf32> to vector<8x1xf32>
    %cst_196 = arith.constant 3.200000e+01 : f32
    %491 = vector.broadcast %cst_196 : f32 to vector<8x1xf32>
    %492 = arith.divf %490, %491 : vector<8x1xf32>
    %493 = vector.broadcast %492 : vector<8x1xf32> to vector<8x32xf32>
    %494 = arith.subf %480, %493 : vector<8x32xf32>
    %495 = arith.mulf %494, %494 : vector<8x32xf32>
    %cst_197 = arith.constant dense<0.000000e+00> : vector<8xf32>
    %496 = vector.multi_reduction <add>, %495, %cst_197 [1] : vector<8x32xf32> to vector<8xf32>
    %497 = vector.shape_cast %496 : vector<8xf32> to vector<8x1xf32>
    %cst_198 = arith.constant 3.200000e+01 : f32
    %498 = vector.broadcast %cst_198 : f32 to vector<8x1xf32>
    %499 = arith.divf %497, %498 : vector<8x1xf32>
    %500 = vector.broadcast %492 : vector<8x1xf32> to vector<8x32xf32>
    %501 = arith.subf %480, %500 : vector<8x32xf32>
    %cst_199 = arith.constant 9.99999997E-7 : f32
    %502 = vector.broadcast %cst_199 : f32 to vector<8x1xf32>
    %503 = arith.addf %499, %502 : vector<8x1xf32>
    %504 = math.rsqrt %503 : vector<8x1xf32>
    %505 = vector.broadcast %504 : vector<8x1xf32> to vector<8x32xf32>
    %506 = arith.mulf %501, %505 : vector<8x32xf32>
    %507 = vector.broadcast %4 : vector<1x32xf32> to vector<8x32xf32>
    %508 = arith.mulf %507, %506 : vector<8x32xf32>
    %509 = arith.addf %418, %508 : vector<8x32xf32>
    %510 = vector.broadcast %6 : vector<1x32xf32> to vector<8x32xf32>
    %511 = arith.addf %509, %510 : vector<8x32xf32>
    %512 = vector.extract_strided_slice %413 {offsets = [0, 32], sizes = [8, 32], strides = [1, 1]} : vector<8x64xf32> to vector<8x32xf32>
    %513 = vector.extract_strided_slice %415 {offsets = [0, 32], sizes = [8, 32], strides = [1, 1]} : vector<8x64xf32> to vector<8x32xf32>
    %514 = vector.extract_strided_slice %417 {offsets = [0, 32], sizes = [8, 32], strides = [1, 1]} : vector<8x64xf32> to vector<8x32xf32>
    %c0_200 = arith.constant 0 : index
    %c1_201 = arith.constant 1 : index
    %c2_202 = arith.constant 2 : index
    %c0_203 = arith.constant 0 : index
    %515 = vector.load %arg8[%c0_200, %c1_201, %c2_202, %c0_203] : memref<1x2x8x8xf32, #tpu.memory_space<vmem>>, vector<1x1x1x8xf32>
    %516 = vector.shape_cast %515 : vector<1x1x1x8xf32> to vector<1x8xf32>
    %cst_204 = arith.constant dense<0.000000e+00> : vector<8x32xf32>
    %517 = tpu.matmul %513, %381, %cst_204 {dimension_numbers = #tpu.dot_dimension_numbers<[1], [0], [0], [1], [0, 0, 1, 1], [], []>} : vector<8x32xf32>, vector<32x32xf32>, vector<8x32xf32> -> vector<8x32xf32>
    %518 = vector.broadcast %384 : vector<1x32xf32> to vector<8x32xf32>
    %519 = arith.addf %517, %518 : vector<8x32xf32>
    %520 = arith.subf %514, %513 : vector<8x32xf32>
    %cst_205 = arith.constant dense<0.000000e+00> : vector<8xf32>
    %521 = vector.multi_reduction <add>, %519, %cst_205 [1] : vector<8x32xf32> to vector<8xf32>
    %522 = vector.shape_cast %521 : vector<8xf32> to vector<8x1xf32>
    %cst_206 = arith.constant 3.200000e+01 : f32
    %523 = vector.broadcast %cst_206 : f32 to vector<8x1xf32>
    %524 = arith.divf %522, %523 : vector<8x1xf32>
    %525 = vector.broadcast %524 : vector<8x1xf32> to vector<8x32xf32>
    %526 = arith.subf %519, %525 : vector<8x32xf32>
    %527 = arith.mulf %526, %526 : vector<8x32xf32>
    %cst_207 = arith.constant dense<0.000000e+00> : vector<8xf32>
    %528 = vector.multi_reduction <add>, %527, %cst_207 [1] : vector<8x32xf32> to vector<8xf32>
    %529 = vector.shape_cast %528 : vector<8xf32> to vector<8x1xf32>
    %cst_208 = arith.constant 3.200000e+01 : f32
    %530 = vector.broadcast %cst_208 : f32 to vector<8x1xf32>
    %531 = arith.divf %529, %530 : vector<8x1xf32>
    %cst_209 = arith.constant 9.99999997E-7 : f32
    %532 = vector.broadcast %cst_209 : f32 to vector<8x1xf32>
    %533 = arith.addf %531, %532 : vector<8x1xf32>
    %534 = math.rsqrt %533 : vector<8x1xf32>
    %535 = vector.broadcast %524 : vector<8x1xf32> to vector<8x32xf32>
    %536 = arith.subf %519, %535 : vector<8x32xf32>
    %537 = vector.broadcast %534 : vector<8x1xf32> to vector<8x32xf32>
    %538 = arith.mulf %536, %537 : vector<8x32xf32>
    %539 = vector.broadcast %5 : vector<1x32xf32> to vector<8x32xf32>
    %540 = arith.mulf %539, %538 : vector<8x32xf32>
    %541 = vector.broadcast %7 : vector<1x32xf32> to vector<8x32xf32>
    %542 = arith.addf %540, %541 : vector<8x32xf32>
    %543 = arith.subf %542, %520 : vector<8x32xf32>
    %544 = vector.broadcast %5 : vector<1x32xf32> to vector<8x32xf32>
    %545 = arith.mulf %544, %543 : vector<8x32xf32>
    %cst_210 = arith.constant 3.200000e+01 : f32
    %546 = vector.broadcast %cst_210 : f32 to vector<8x32xf32>
    %547 = arith.mulf %546, %545 : vector<8x32xf32>
    %cst_211 = arith.constant dense<0.000000e+00> : vector<8xf32>
    %548 = vector.multi_reduction <add>, %545, %cst_211 [1] : vector<8x32xf32> to vector<8xf32>
    %549 = vector.shape_cast %548 : vector<8xf32> to vector<8x1xf32>
    %550 = vector.broadcast %549 : vector<8x1xf32> to vector<8x32xf32>
    %551 = arith.subf %547, %550 : vector<8x32xf32>
    %552 = arith.mulf %545, %538 : vector<8x32xf32>
    %cst_212 = arith.constant dense<0.000000e+00> : vector<8xf32>
    %553 = vector.multi_reduction <add>, %552, %cst_212 [1] : vector<8x32xf32> to vector<8xf32>
    %554 = vector.shape_cast %553 : vector<8xf32> to vector<8x1xf32>
    %555 = vector.broadcast %554 : vector<8x1xf32> to vector<8x32xf32>
    %556 = arith.mulf %538, %555 : vector<8x32xf32>
    %557 = arith.subf %551, %556 : vector<8x32xf32>
    %cst_213 = arith.constant 3.125000e-02 : f32
    %558 = vector.broadcast %cst_213 : f32 to vector<8x1xf32>
    %559 = arith.mulf %534, %558 : vector<8x1xf32>
    %560 = vector.broadcast %559 : vector<8x1xf32> to vector<8x32xf32>
    %561 = arith.mulf %557, %560 : vector<8x32xf32>
    %cst_214 = arith.constant dense<0.000000e+00> : vector<8x8xf32>
    %562 = tpu.matmul %512, %513, %cst_214 {dimension_numbers = #tpu.dot_dimension_numbers<[1], [1], [0], [0], [0, 0, 1, 0], [], []>} : vector<8x32xf32>, vector<8x32xf32>, vector<8x8xf32> -> vector<8x8xf32>
    %563 = vector.shape_cast %516 : vector<1x8xf32> to vector<1x8xf32>
    %564 = vector.broadcast %563 : vector<1x8xf32> to vector<8x8xf32>
    %cst_215 = arith.constant 1.000000e+00 : f32
    %565 = vector.broadcast %cst_215 : f32 to vector<8x8xf32>
    %566 = arith.addf %562, %565 : vector<8x8xf32>
    %567 = arith.mulf %564, %566 : vector<8x8xf32>
    %cst_216 = arith.constant 0.000000e+00 : f32
    %568 = vector.broadcast %cst_216 : f32 to vector<8x8xf32>
    %569 = arith.select %2, %567, %568 : vector<8x8xi1>, vector<8x8xf32>
    %cst_217 = arith.constant dense<0.000000e+00> : vector<8x32xf32>
    %570 = tpu.matmul %512, %381, %cst_217 {dimension_numbers = #tpu.dot_dimension_numbers<[1], [0], [0], [1], [0, 0, 1, 1], [], []>} : vector<8x32xf32>, vector<32x32xf32>, vector<8x32xf32> -> vector<8x32xf32>
    %571 = vector.broadcast %384 : vector<1x32xf32> to vector<8x32xf32>
    %572 = arith.addf %570, %571 : vector<8x32xf32>
    %cst_218 = arith.constant dense<0.000000e+00> : vector<8x32xf32>
    %573 = tpu.matmul %569, %561, %cst_218 {dimension_numbers = #tpu.dot_dimension_numbers<[1], [0], [0], [1], [0, 0, 1, 1], [], []>} : vector<8x8xf32>, vector<8x32xf32>, vector<8x32xf32> -> vector<8x32xf32>
    %574 = arith.subf %572, %573 : vector<8x32xf32>
    %cst_219 = arith.constant 0.000000e+00 : f32
    %575 = vector.broadcast %cst_219 : f32 to vector<8x8xf32>
    %576 = arith.select %3, %564, %575 : vector<8x8xi1>, vector<8x8xf32>
    %cst_220 = arith.constant dense<0.000000e+00> : vector<8x32xf32>
    %577 = tpu.matmul %576, %561, %cst_220 {dimension_numbers = #tpu.dot_dimension_numbers<[1], [0], [0], [1], [0, 0, 1, 1], [], []>} : vector<8x8xf32>, vector<8x32xf32>, vector<8x32xf32> -> vector<8x32xf32>
    %cst_221 = arith.constant dense<0.000000e+00> : vector<32x32xf32>
    %578 = tpu.matmul %513, %577, %cst_221 {dimension_numbers = #tpu.dot_dimension_numbers<[0], [0], [1], [1], [0, 1, 1, 1], [], []>} : vector<8x32xf32>, vector<8x32xf32>, vector<32x32xf32> -> vector<32x32xf32>
    %579 = arith.subf %381, %578 : vector<32x32xf32>
    %cst_222 = arith.constant dense<0.000000e+00> : vector<32xf32>
    %580 = vector.multi_reduction <add>, %577, %cst_222 [0] : vector<8x32xf32> to vector<32xf32>
    %581 = vector.shape_cast %580 : vector<32xf32> to vector<1x32xf32>
    %582 = arith.subf %384, %581 : vector<1x32xf32>
    %cst_223 = arith.constant dense<0.000000e+00> : vector<8xf32>
    %583 = vector.multi_reduction <add>, %574, %cst_223 [1] : vector<8x32xf32> to vector<8xf32>
    %584 = vector.shape_cast %583 : vector<8xf32> to vector<8x1xf32>
    %cst_224 = arith.constant 3.200000e+01 : f32
    %585 = vector.broadcast %cst_224 : f32 to vector<8x1xf32>
    %586 = arith.divf %584, %585 : vector<8x1xf32>
    %587 = vector.broadcast %586 : vector<8x1xf32> to vector<8x32xf32>
    %588 = arith.subf %574, %587 : vector<8x32xf32>
    %589 = arith.mulf %588, %588 : vector<8x32xf32>
    %cst_225 = arith.constant dense<0.000000e+00> : vector<8xf32>
    %590 = vector.multi_reduction <add>, %589, %cst_225 [1] : vector<8x32xf32> to vector<8xf32>
    %591 = vector.shape_cast %590 : vector<8xf32> to vector<8x1xf32>
    %cst_226 = arith.constant 3.200000e+01 : f32
    %592 = vector.broadcast %cst_226 : f32 to vector<8x1xf32>
    %593 = arith.divf %591, %592 : vector<8x1xf32>
    %594 = vector.broadcast %586 : vector<8x1xf32> to vector<8x32xf32>
    %595 = arith.subf %574, %594 : vector<8x32xf32>
    %cst_227 = arith.constant 9.99999997E-7 : f32
    %596 = vector.broadcast %cst_227 : f32 to vector<8x1xf32>
    %597 = arith.addf %593, %596 : vector<8x1xf32>
    %598 = math.rsqrt %597 : vector<8x1xf32>
    %599 = vector.broadcast %598 : vector<8x1xf32> to vector<8x32xf32>
    %600 = arith.mulf %595, %599 : vector<8x32xf32>
    %601 = vector.broadcast %5 : vector<1x32xf32> to vector<8x32xf32>
    %602 = arith.mulf %601, %600 : vector<8x32xf32>
    %603 = arith.addf %512, %602 : vector<8x32xf32>
    %604 = vector.broadcast %7 : vector<1x32xf32> to vector<8x32xf32>
    %605 = arith.addf %603, %604 : vector<8x32xf32>
    %606 = tpu.concatenate %511, %605 in 1 : vector<8x32xf32>, vector<8x32xf32> -> vector<8x64xf32>
    %c0_228 = arith.constant 0 : index
    %c2_229 = arith.constant 2 : index
    %c0_230 = arith.constant 0 : index
    %c0_231 = arith.constant 0 : index
    %607 = vector.load %arg9[%c0_228, %c2_229, %c0_230, %c0_231] : memref<1x8x8x64xf32, #tpu.memory_space<vmem>>, vector<1x1x8x64xf32>
    %608 = vector.shape_cast %607 : vector<1x1x8x64xf32> to vector<8x64xf32>
    %609 = vector.shape_cast %606 : vector<8x64xf32> to vector<1x1x8x64xf32>
    tpu.vector_store %arg9[%c0_228, %c2_229, %c0_230, %c0_231], %609 {strides = array<i32>} : memref<1x8x8x64xf32, #tpu.memory_space<vmem>>, vector<1x1x8x64xf32>,
    %c0_232 = arith.constant 0 : index
    %c3 = arith.constant 3 : index
    %c0_233 = arith.constant 0 : index
    %c0_234 = arith.constant 0 : index
    %610 = vector.load %arg5[%c0_232, %c3, %c0_233, %c0_234] : memref<1x8x8x64xf32, #tpu.memory_space<vmem>>, vector<1x1x8x64xf32>
    %611 = vector.shape_cast %610 : vector<1x1x8x64xf32> to vector<8x64xf32>
    %c0_235 = arith.constant 0 : index
    %c3_236 = arith.constant 3 : index
    %c0_237 = arith.constant 0 : index
    %c0_238 = arith.constant 0 : index
    %612 = vector.load %arg6[%c0_235, %c3_236, %c0_237, %c0_238] : memref<1x8x8x64xf32, #tpu.memory_space<vmem>>, vector<1x1x8x64xf32>
    %613 = vector.shape_cast %612 : vector<1x1x8x64xf32> to vector<8x64xf32>
    %c0_239 = arith.constant 0 : index
    %c3_240 = arith.constant 3 : index
    %c0_241 = arith.constant 0 : index
    %c0_242 = arith.constant 0 : index
    %614 = vector.load %arg7[%c0_239, %c3_240, %c0_241, %c0_242] : memref<1x8x8x64xf32, #tpu.memory_space<vmem>>, vector<1x1x8x64xf32>
    %615 = vector.shape_cast %614 : vector<1x1x8x64xf32> to vector<8x64xf32>
    %616 = vector.extract_strided_slice %611 {offsets = [0, 0], sizes = [8, 32], strides = [1, 1]} : vector<8x64xf32> to vector<8x32xf32>
    %617 = vector.extract_strided_slice %613 {offsets = [0, 0], sizes = [8, 32], strides = [1, 1]} : vector<8x64xf32> to vector<8x32xf32>
    %618 = vector.extract_strided_slice %615 {offsets = [0, 0], sizes = [8, 32], strides = [1, 1]} : vector<8x64xf32> to vector<8x32xf32>
    %c0_243 = arith.constant 0 : index
    %c0_244 = arith.constant 0 : index
    %c3_245 = arith.constant 3 : index
    %c0_246 = arith.constant 0 : index
    %619 = vector.load %arg8[%c0_243, %c0_244, %c3_245, %c0_246] : memref<1x2x8x8xf32, #tpu.memory_space<vmem>>, vector<1x1x1x8xf32>
    %620 = vector.shape_cast %619 : vector<1x1x1x8xf32> to vector<1x8xf32>
    %cst_247 = arith.constant dense<0.000000e+00> : vector<8x32xf32>
    %621 = tpu.matmul %617, %485, %cst_247 {dimension_numbers = #tpu.dot_dimension_numbers<[1], [0], [0], [1], [0, 0, 1, 1], [], []>} : vector<8x32xf32>, vector<32x32xf32>, vector<8x32xf32> -> vector<8x32xf32>
    %622 = vector.broadcast %488 : vector<1x32xf32> to vector<8x32xf32>
    %623 = arith.addf %621, %622 : vector<8x32xf32>
    %624 = arith.subf %618, %617 : vector<8x32xf32>
    %cst_248 = arith.constant dense<0.000000e+00> : vector<8xf32>
    %625 = vector.multi_reduction <add>, %623, %cst_248 [1] : vector<8x32xf32> to vector<8xf32>
    %626 = vector.shape_cast %625 : vector<8xf32> to vector<8x1xf32>
    %cst_249 = arith.constant 3.200000e+01 : f32
    %627 = vector.broadcast %cst_249 : f32 to vector<8x1xf32>
    %628 = arith.divf %626, %627 : vector<8x1xf32>
    %629 = vector.broadcast %628 : vector<8x1xf32> to vector<8x32xf32>
    %630 = arith.subf %623, %629 : vector<8x32xf32>
    %631 = arith.mulf %630, %630 : vector<8x32xf32>
    %cst_250 = arith.constant dense<0.000000e+00> : vector<8xf32>
    %632 = vector.multi_reduction <add>, %631, %cst_250 [1] : vector<8x32xf32> to vector<8xf32>
    %633 = vector.shape_cast %632 : vector<8xf32> to vector<8x1xf32>
    %cst_251 = arith.constant 3.200000e+01 : f32
    %634 = vector.broadcast %cst_251 : f32 to vector<8x1xf32>
    %635 = arith.divf %633, %634 : vector<8x1xf32>
    %cst_252 = arith.constant 9.99999997E-7 : f32
    %636 = vector.broadcast %cst_252 : f32 to vector<8x1xf32>
    %637 = arith.addf %635, %636 : vector<8x1xf32>
    %638 = math.rsqrt %637 : vector<8x1xf32>
    %639 = vector.broadcast %628 : vector<8x1xf32> to vector<8x32xf32>
    %640 = arith.subf %623, %639 : vector<8x32xf32>
    %641 = vector.broadcast %638 : vector<8x1xf32> to vector<8x32xf32>
    %642 = arith.mulf %640, %641 : vector<8x32xf32>
    %643 = vector.broadcast %4 : vector<1x32xf32> to vector<8x32xf32>
    %644 = arith.mulf %643, %642 : vector<8x32xf32>
    %645 = vector.broadcast %6 : vector<1x32xf32> to vector<8x32xf32>
    %646 = arith.addf %644, %645 : vector<8x32xf32>
    %647 = arith.subf %646, %624 : vector<8x32xf32>
    %648 = vector.broadcast %4 : vector<1x32xf32> to vector<8x32xf32>
    %649 = arith.mulf %648, %647 : vector<8x32xf32>
    %cst_253 = arith.constant 3.200000e+01 : f32
    %650 = vector.broadcast %cst_253 : f32 to vector<8x32xf32>
    %651 = arith.mulf %650, %649 : vector<8x32xf32>
    %cst_254 = arith.constant dense<0.000000e+00> : vector<8xf32>
    %652 = vector.multi_reduction <add>, %649, %cst_254 [1] : vector<8x32xf32> to vector<8xf32>
    %653 = vector.shape_cast %652 : vector<8xf32> to vector<8x1xf32>
    %654 = vector.broadcast %653 : vector<8x1xf32> to vector<8x32xf32>
    %655 = arith.subf %651, %654 : vector<8x32xf32>
    %656 = arith.mulf %649, %642 : vector<8x32xf32>
    %cst_255 = arith.constant dense<0.000000e+00> : vector<8xf32>
    %657 = vector.multi_reduction <add>, %656, %cst_255 [1] : vector<8x32xf32> to vector<8xf32>
    %658 = vector.shape_cast %657 : vector<8xf32> to vector<8x1xf32>
    %659 = vector.broadcast %658 : vector<8x1xf32> to vector<8x32xf32>
    %660 = arith.mulf %642, %659 : vector<8x32xf32>
    %661 = arith.subf %655, %660 : vector<8x32xf32>
    %cst_256 = arith.constant 3.125000e-02 : f32
    %662 = vector.broadcast %cst_256 : f32 to vector<8x1xf32>
    %663 = arith.mulf %638, %662 : vector<8x1xf32>
    %664 = vector.broadcast %663 : vector<8x1xf32> to vector<8x32xf32>
    %665 = arith.mulf %661, %664 : vector<8x32xf32>
    %cst_257 = arith.constant dense<0.000000e+00> : vector<8x8xf32>
    %666 = tpu.matmul %616, %617, %cst_257 {dimension_numbers = #tpu.dot_dimension_numbers<[1], [1], [0], [0], [0, 0, 1, 0], [], []>} : vector<8x32xf32>, vector<8x32xf32>, vector<8x8xf32> -> vector<8x8xf32>
    %667 = vector.shape_cast %620 : vector<1x8xf32> to vector<1x8xf32>
    %668 = vector.broadcast %667 : vector<1x8xf32> to vector<8x8xf32>
    %cst_258 = arith.constant 1.000000e+00 : f32
    %669 = vector.broadcast %cst_258 : f32 to vector<8x8xf32>
    %670 = arith.addf %666, %669 : vector<8x8xf32>
    %671 = arith.mulf %668, %670 : vector<8x8xf32>
    %cst_259 = arith.constant 0.000000e+00 : f32
    %672 = vector.broadcast %cst_259 : f32 to vector<8x8xf32>
    %673 = arith.select %2, %671, %672 : vector<8x8xi1>, vector<8x8xf32>
    %cst_260 = arith.constant dense<0.000000e+00> : vector<8x32xf32>
    %674 = tpu.matmul %616, %485, %cst_260 {dimension_numbers = #tpu.dot_dimension_numbers<[1], [0], [0], [1], [0, 0, 1, 1], [], []>} : vector<8x32xf32>, vector<32x32xf32>, vector<8x32xf32> -> vector<8x32xf32>
    %675 = vector.broadcast %488 : vector<1x32xf32> to vector<8x32xf32>
    %676 = arith.addf %674, %675 : vector<8x32xf32>
    %cst_261 = arith.constant dense<0.000000e+00> : vector<8x32xf32>
    %677 = tpu.matmul %673, %665, %cst_261 {dimension_numbers = #tpu.dot_dimension_numbers<[1], [0], [0], [1], [0, 0, 1, 1], [], []>} : vector<8x8xf32>, vector<8x32xf32>, vector<8x32xf32> -> vector<8x32xf32>
    %678 = arith.subf %676, %677 : vector<8x32xf32>
    %cst_262 = arith.constant 0.000000e+00 : f32
    %679 = vector.broadcast %cst_262 : f32 to vector<8x8xf32>
    %680 = arith.select %3, %668, %679 : vector<8x8xi1>, vector<8x8xf32>
    %cst_263 = arith.constant dense<0.000000e+00> : vector<8x32xf32>
    %681 = tpu.matmul %680, %665, %cst_263 {dimension_numbers = #tpu.dot_dimension_numbers<[1], [0], [0], [1], [0, 0, 1, 1], [], []>} : vector<8x8xf32>, vector<8x32xf32>, vector<8x32xf32> -> vector<8x32xf32>
    %cst_264 = arith.constant dense<0.000000e+00> : vector<32x32xf32>
    %682 = tpu.matmul %617, %681, %cst_264 {dimension_numbers = #tpu.dot_dimension_numbers<[0], [0], [1], [1], [0, 1, 1, 1], [], []>} : vector<8x32xf32>, vector<8x32xf32>, vector<32x32xf32> -> vector<32x32xf32>
    %683 = arith.subf %485, %682 : vector<32x32xf32>
    %cst_265 = arith.constant dense<0.000000e+00> : vector<32xf32>
    %684 = vector.multi_reduction <add>, %681, %cst_265 [0] : vector<8x32xf32> to vector<32xf32>
    %685 = vector.shape_cast %684 : vector<32xf32> to vector<1x32xf32>
    %686 = arith.subf %488, %685 : vector<1x32xf32>
    %cst_266 = arith.constant dense<0.000000e+00> : vector<8xf32>
    %687 = vector.multi_reduction <add>, %678, %cst_266 [1] : vector<8x32xf32> to vector<8xf32>
    %688 = vector.shape_cast %687 : vector<8xf32> to vector<8x1xf32>
    %cst_267 = arith.constant 3.200000e+01 : f32
    %689 = vector.broadcast %cst_267 : f32 to vector<8x1xf32>
    %690 = arith.divf %688, %689 : vector<8x1xf32>
    %691 = vector.broadcast %690 : vector<8x1xf32> to vector<8x32xf32>
    %692 = arith.subf %678, %691 : vector<8x32xf32>
    %693 = arith.mulf %692, %692 : vector<8x32xf32>
    %cst_268 = arith.constant dense<0.000000e+00> : vector<8xf32>
    %694 = vector.multi_reduction <add>, %693, %cst_268 [1] : vector<8x32xf32> to vector<8xf32>
    %695 = vector.shape_cast %694 : vector<8xf32> to vector<8x1xf32>
    %cst_269 = arith.constant 3.200000e+01 : f32
    %696 = vector.broadcast %cst_269 : f32 to vector<8x1xf32>
    %697 = arith.divf %695, %696 : vector<8x1xf32>
    %698 = vector.broadcast %690 : vector<8x1xf32> to vector<8x32xf32>
    %699 = arith.subf %678, %698 : vector<8x32xf32>
    %cst_270 = arith.constant 9.99999997E-7 : f32
    %700 = vector.broadcast %cst_270 : f32 to vector<8x1xf32>
    %701 = arith.addf %697, %700 : vector<8x1xf32>
    %702 = math.rsqrt %701 : vector<8x1xf32>
    %703 = vector.broadcast %702 : vector<8x1xf32> to vector<8x32xf32>
    %704 = arith.mulf %699, %703 : vector<8x32xf32>
    %705 = vector.broadcast %4 : vector<1x32xf32> to vector<8x32xf32>
    %706 = arith.mulf %705, %704 : vector<8x32xf32>
    %707 = arith.addf %616, %706 : vector<8x32xf32>
    %708 = vector.broadcast %6 : vector<1x32xf32> to vector<8x32xf32>
    %709 = arith.addf %707, %708 : vector<8x32xf32>
    %710 = vector.extract_strided_slice %611 {offsets = [0, 32], sizes = [8, 32], strides = [1, 1]} : vector<8x64xf32> to vector<8x32xf32>
    %711 = vector.extract_strided_slice %613 {offsets = [0, 32], sizes = [8, 32], strides = [1, 1]} : vector<8x64xf32> to vector<8x32xf32>
    %712 = vector.extract_strided_slice %615 {offsets = [0, 32], sizes = [8, 32], strides = [1, 1]} : vector<8x64xf32> to vector<8x32xf32>
    %c0_271 = arith.constant 0 : index
    %c1_272 = arith.constant 1 : index
    %c3_273 = arith.constant 3 : index
    %c0_274 = arith.constant 0 : index
    %713 = vector.load %arg8[%c0_271, %c1_272, %c3_273, %c0_274] : memref<1x2x8x8xf32, #tpu.memory_space<vmem>>, vector<1x1x1x8xf32>
    %714 = vector.shape_cast %713 : vector<1x1x1x8xf32> to vector<1x8xf32>
    %cst_275 = arith.constant dense<0.000000e+00> : vector<8x32xf32>
    %715 = tpu.matmul %711, %579, %cst_275 {dimension_numbers = #tpu.dot_dimension_numbers<[1], [0], [0], [1], [0, 0, 1, 1], [], []>} : vector<8x32xf32>, vector<32x32xf32>, vector<8x32xf32> -> vector<8x32xf32>
    %716 = vector.broadcast %582 : vector<1x32xf32> to vector<8x32xf32>
    %717 = arith.addf %715, %716 : vector<8x32xf32>
    %718 = arith.subf %712, %711 : vector<8x32xf32>
    %cst_276 = arith.constant dense<0.000000e+00> : vector<8xf32>
    %719 = vector.multi_reduction <add>, %717, %cst_276 [1] : vector<8x32xf32> to vector<8xf32>
    %720 = vector.shape_cast %719 : vector<8xf32> to vector<8x1xf32>
    %cst_277 = arith.constant 3.200000e+01 : f32
    %721 = vector.broadcast %cst_277 : f32 to vector<8x1xf32>
    %722 = arith.divf %720, %721 : vector<8x1xf32>
    %723 = vector.broadcast %722 : vector<8x1xf32> to vector<8x32xf32>
    %724 = arith.subf %717, %723 : vector<8x32xf32>
    %725 = arith.mulf %724, %724 : vector<8x32xf32>
    %cst_278 = arith.constant dense<0.000000e+00> : vector<8xf32>
    %726 = vector.multi_reduction <add>, %725, %cst_278 [1] : vector<8x32xf32> to vector<8xf32>
    %727 = vector.shape_cast %726 : vector<8xf32> to vector<8x1xf32>
    %cst_279 = arith.constant 3.200000e+01 : f32
    %728 = vector.broadcast %cst_279 : f32 to vector<8x1xf32>
    %729 = arith.divf %727, %728 : vector<8x1xf32>
    %cst_280 = arith.constant 9.99999997E-7 : f32
    %730 = vector.broadcast %cst_280 : f32 to vector<8x1xf32>
    %731 = arith.addf %729, %730 : vector<8x1xf32>
    %732 = math.rsqrt %731 : vector<8x1xf32>
    %733 = vector.broadcast %722 : vector<8x1xf32> to vector<8x32xf32>
    %734 = arith.subf %717, %733 : vector<8x32xf32>
    %735 = vector.broadcast %732 : vector<8x1xf32> to vector<8x32xf32>
    %736 = arith.mulf %734, %735 : vector<8x32xf32>
    %737 = vector.broadcast %5 : vector<1x32xf32> to vector<8x32xf32>
    %738 = arith.mulf %737, %736 : vector<8x32xf32>
    %739 = vector.broadcast %7 : vector<1x32xf32> to vector<8x32xf32>
    %740 = arith.addf %738, %739 : vector<8x32xf32>
    %741 = arith.subf %740, %718 : vector<8x32xf32>
    %742 = vector.broadcast %5 : vector<1x32xf32> to vector<8x32xf32>
    %743 = arith.mulf %742, %741 : vector<8x32xf32>
    %cst_281 = arith.constant 3.200000e+01 : f32
    %744 = vector.broadcast %cst_281 : f32 to vector<8x32xf32>
    %745 = arith.mulf %744, %743 : vector<8x32xf32>
    %cst_282 = arith.constant dense<0.000000e+00> : vector<8xf32>
    %746 = vector.multi_reduction <add>, %743, %cst_282 [1] : vector<8x32xf32> to vector<8xf32>
    %747 = vector.shape_cast %746 : vector<8xf32> to vector<8x1xf32>
    %748 = vector.broadcast %747 : vector<8x1xf32> to vector<8x32xf32>
    %749 = arith.subf %745, %748 : vector<8x32xf32>
    %750 = arith.mulf %743, %736 : vector<8x32xf32>
    %cst_283 = arith.constant dense<0.000000e+00> : vector<8xf32>
    %751 = vector.multi_reduction <add>, %750, %cst_283 [1] : vector<8x32xf32> to vector<8xf32>
    %752 = vector.shape_cast %751 : vector<8xf32> to vector<8x1xf32>
    %753 = vector.broadcast %752 : vector<8x1xf32> to vector<8x32xf32>
    %754 = arith.mulf %736, %753 : vector<8x32xf32>
    %755 = arith.subf %749, %754 : vector<8x32xf32>
    %cst_284 = arith.constant 3.125000e-02 : f32
    %756 = vector.broadcast %cst_284 : f32 to vector<8x1xf32>
    %757 = arith.mulf %732, %756 : vector<8x1xf32>
    %758 = vector.broadcast %757 : vector<8x1xf32> to vector<8x32xf32>
    %759 = arith.mulf %755, %758 : vector<8x32xf32>
    %cst_285 = arith.constant dense<0.000000e+00> : vector<8x8xf32>
    %760 = tpu.matmul %710, %711, %cst_285 {dimension_numbers = #tpu.dot_dimension_numbers<[1], [1], [0], [0], [0, 0, 1, 0], [], []>} : vector<8x32xf32>, vector<8x32xf32>, vector<8x8xf32> -> vector<8x8xf32>
    %761 = vector.shape_cast %714 : vector<1x8xf32> to vector<1x8xf32>
    %762 = vector.broadcast %761 : vector<1x8xf32> to vector<8x8xf32>
    %cst_286 = arith.constant 1.000000e+00 : f32
    %763 = vector.broadcast %cst_286 : f32 to vector<8x8xf32>
    %764 = arith.addf %760, %763 : vector<8x8xf32>
    %765 = arith.mulf %762, %764 : vector<8x8xf32>
    %cst_287 = arith.constant 0.000000e+00 : f32
    %766 = vector.broadcast %cst_287 : f32 to vector<8x8xf32>
    %767 = arith.select %2, %765, %766 : vector<8x8xi1>, vector<8x8xf32>
    %cst_288 = arith.constant dense<0.000000e+00> : vector<8x32xf32>
    %768 = tpu.matmul %710, %579, %cst_288 {dimension_numbers = #tpu.dot_dimension_numbers<[1], [0], [0], [1], [0, 0, 1, 1], [], []>} : vector<8x32xf32>, vector<32x32xf32>, vector<8x32xf32> -> vector<8x32xf32>
    %769 = vector.broadcast %582 : vector<1x32xf32> to vector<8x32xf32>
    %770 = arith.addf %768, %769 : vector<8x32xf32>
    %cst_289 = arith.constant dense<0.000000e+00> : vector<8x32xf32>
    %771 = tpu.matmul %767, %759, %cst_289 {dimension_numbers = #tpu.dot_dimension_numbers<[1], [0], [0], [1], [0, 0, 1, 1], [], []>} : vector<8x8xf32>, vector<8x32xf32>, vector<8x32xf32> -> vector<8x32xf32>
    %772 = arith.subf %770, %771 : vector<8x32xf32>
    %cst_290 = arith.constant 0.000000e+00 : f32
    %773 = vector.broadcast %cst_290 : f32 to vector<8x8xf32>
    %774 = arith.select %3, %762, %773 : vector<8x8xi1>, vector<8x8xf32>
    %cst_291 = arith.constant dense<0.000000e+00> : vector<8x32xf32>
    %775 = tpu.matmul %774, %759, %cst_291 {dimension_numbers = #tpu.dot_dimension_numbers<[1], [0], [0], [1], [0, 0, 1, 1], [], []>} : vector<8x8xf32>, vector<8x32xf32>, vector<8x32xf32> -> vector<8x32xf32>
    %cst_292 = arith.constant dense<0.000000e+00> : vector<32x32xf32>
    %776 = tpu.matmul %711, %775, %cst_292 {dimension_numbers = #tpu.dot_dimension_numbers<[0], [0], [1], [1], [0, 1, 1, 1], [], []>} : vector<8x32xf32>, vector<8x32xf32>, vector<32x32xf32> -> vector<32x32xf32>
    %777 = arith.subf %579, %776 : vector<32x32xf32>
    %cst_293 = arith.constant dense<0.000000e+00> : vector<32xf32>
    %778 = vector.multi_reduction <add>, %775, %cst_293 [0] : vector<8x32xf32> to vector<32xf32>
    %779 = vector.shape_cast %778 : vector<32xf32> to vector<1x32xf32>
    %780 = arith.subf %582, %779 : vector<1x32xf32>
    %cst_294 = arith.constant dense<0.000000e+00> : vector<8xf32>
    %781 = vector.multi_reduction <add>, %772, %cst_294 [1] : vector<8x32xf32> to vector<8xf32>
    %782 = vector.shape_cast %781 : vector<8xf32> to vector<8x1xf32>
    %cst_295 = arith.constant 3.200000e+01 : f32
    %783 = vector.broadcast %cst_295 : f32 to vector<8x1xf32>
    %784 = arith.divf %782, %783 : vector<8x1xf32>
    %785 = vector.broadcast %784 : vector<8x1xf32> to vector<8x32xf32>
    %786 = arith.subf %772, %785 : vector<8x32xf32>
    %787 = arith.mulf %786, %786 : vector<8x32xf32>
    %cst_296 = arith.constant dense<0.000000e+00> : vector<8xf32>
    %788 = vector.multi_reduction <add>, %787, %cst_296 [1] : vector<8x32xf32> to vector<8xf32>
    %789 = vector.shape_cast %788 : vector<8xf32> to vector<8x1xf32>
    %cst_297 = arith.constant 3.200000e+01 : f32
    %790 = vector.broadcast %cst_297 : f32 to vector<8x1xf32>
    %791 = arith.divf %789, %790 : vector<8x1xf32>
    %792 = vector.broadcast %784 : vector<8x1xf32> to vector<8x32xf32>
    %793 = arith.subf %772, %792 : vector<8x32xf32>
    %cst_298 = arith.constant 9.99999997E-7 : f32
    %794 = vector.broadcast %cst_298 : f32 to vector<8x1xf32>
    %795 = arith.addf %791, %794 : vector<8x1xf32>
    %796 = math.rsqrt %795 : vector<8x1xf32>
    %797 = vector.broadcast %796 : vector<8x1xf32> to vector<8x32xf32>
    %798 = arith.mulf %793, %797 : vector<8x32xf32>
    %799 = vector.broadcast %5 : vector<1x32xf32> to vector<8x32xf32>
    %800 = arith.mulf %799, %798 : vector<8x32xf32>
    %801 = arith.addf %710, %800 : vector<8x32xf32>
    %802 = vector.broadcast %7 : vector<1x32xf32> to vector<8x32xf32>
    %803 = arith.addf %801, %802 : vector<8x32xf32>
    %804 = tpu.concatenate %709, %803 in 1 : vector<8x32xf32>, vector<8x32xf32> -> vector<8x64xf32>
    %c0_299 = arith.constant 0 : index
    %c3_300 = arith.constant 3 : index
    %c0_301 = arith.constant 0 : index
    %c0_302 = arith.constant 0 : index
    %805 = vector.load %arg9[%c0_299, %c3_300, %c0_301, %c0_302] : memref<1x8x8x64xf32, #tpu.memory_space<vmem>>, vector<1x1x8x64xf32>
    %806 = vector.shape_cast %805 : vector<1x1x8x64xf32> to vector<8x64xf32>
    %807 = vector.shape_cast %804 : vector<8x64xf32> to vector<1x1x8x64xf32>
    tpu.vector_store %arg9[%c0_299, %c3_300, %c0_301, %c0_302], %807 {strides = array<i32>} : memref<1x8x8x64xf32, #tpu.memory_space<vmem>>, vector<1x1x8x64xf32>,
    %c0_303 = arith.constant 0 : index
    %c4 = arith.constant 4 : index
    %c0_304 = arith.constant 0 : index
    %c0_305 = arith.constant 0 : index
    %808 = vector.load %arg5[%c0_303, %c4, %c0_304, %c0_305] : memref<1x8x8x64xf32, #tpu.memory_space<vmem>>, vector<1x1x8x64xf32>
    %809 = vector.shape_cast %808 : vector<1x1x8x64xf32> to vector<8x64xf32>
    %c0_306 = arith.constant 0 : index
    %c4_307 = arith.constant 4 : index
    %c0_308 = arith.constant 0 : index
    %c0_309 = arith.constant 0 : index
    %810 = vector.load %arg6[%c0_306, %c4_307, %c0_308, %c0_309] : memref<1x8x8x64xf32, #tpu.memory_space<vmem>>, vector<1x1x8x64xf32>
    %811 = vector.shape_cast %810 : vector<1x1x8x64xf32> to vector<8x64xf32>
    %c0_310 = arith.constant 0 : index
    %c4_311 = arith.constant 4 : index
    %c0_312 = arith.constant 0 : index
    %c0_313 = arith.constant 0 : index
    %812 = vector.load %arg7[%c0_310, %c4_311, %c0_312, %c0_313] : memref<1x8x8x64xf32, #tpu.memory_space<vmem>>, vector<1x1x8x64xf32>
    %813 = vector.shape_cast %812 : vector<1x1x8x64xf32> to vector<8x64xf32>
    %814 = vector.extract_strided_slice %809 {offsets = [0, 0], sizes = [8, 32], strides = [1, 1]} : vector<8x64xf32> to vector<8x32xf32>
    %815 = vector.extract_strided_slice %811 {offsets = [0, 0], sizes = [8, 32], strides = [1, 1]} : vector<8x64xf32> to vector<8x32xf32>
    %816 = vector.extract_strided_slice %813 {offsets = [0, 0], sizes = [8, 32], strides = [1, 1]} : vector<8x64xf32> to vector<8x32xf32>
    %c0_314 = arith.constant 0 : index
    %c0_315 = arith.constant 0 : index
    %c4_316 = arith.constant 4 : index
    %c0_317 = arith.constant 0 : index
    %817 = vector.load %arg8[%c0_314, %c0_315, %c4_316, %c0_317] : memref<1x2x8x8xf32, #tpu.memory_space<vmem>>, vector<1x1x1x8xf32>
    %818 = vector.shape_cast %817 : vector<1x1x1x8xf32> to vector<1x8xf32>
    %cst_318 = arith.constant dense<0.000000e+00> : vector<8x32xf32>
    %819 = tpu.matmul %815, %683, %cst_318 {dimension_numbers = #tpu.dot_dimension_numbers<[1], [0], [0], [1], [0, 0, 1, 1], [], []>} : vector<8x32xf32>, vector<32x32xf32>, vector<8x32xf32> -> vector<8x32xf32>
    %820 = vector.broadcast %686 : vector<1x32xf32> to vector<8x32xf32>
    %821 = arith.addf %819, %820 : vector<8x32xf32>
    %822 = arith.subf %816, %815 : vector<8x32xf32>
    %cst_319 = arith.constant dense<0.000000e+00> : vector<8xf32>
    %823 = vector.multi_reduction <add>, %821, %cst_319 [1] : vector<8x32xf32> to vector<8xf32>
    %824 = vector.shape_cast %823 : vector<8xf32> to vector<8x1xf32>
    %cst_320 = arith.constant 3.200000e+01 : f32
    %825 = vector.broadcast %cst_320 : f32 to vector<8x1xf32>
    %826 = arith.divf %824, %825 : vector<8x1xf32>
    %827 = vector.broadcast %826 : vector<8x1xf32> to vector<8x32xf32>
    %828 = arith.subf %821, %827 : vector<8x32xf32>
    %829 = arith.mulf %828, %828 : vector<8x32xf32>
    %cst_321 = arith.constant dense<0.000000e+00> : vector<8xf32>
    %830 = vector.multi_reduction <add>, %829, %cst_321 [1] : vector<8x32xf32> to vector<8xf32>
    %831 = vector.shape_cast %830 : vector<8xf32> to vector<8x1xf32>
    %cst_322 = arith.constant 3.200000e+01 : f32
    %832 = vector.broadcast %cst_322 : f32 to vector<8x1xf32>
    %833 = arith.divf %831, %832 : vector<8x1xf32>
    %cst_323 = arith.constant 9.99999997E-7 : f32
    %834 = vector.broadcast %cst_323 : f32 to vector<8x1xf32>
    %835 = arith.addf %833, %834 : vector<8x1xf32>
    %836 = math.rsqrt %835 : vector<8x1xf32>
    %837 = vector.broadcast %826 : vector<8x1xf32> to vector<8x32xf32>
    %838 = arith.subf %821, %837 : vector<8x32xf32>
    %839 = vector.broadcast %836 : vector<8x1xf32> to vector<8x32xf32>
    %840 = arith.mulf %838, %839 : vector<8x32xf32>
    %841 = vector.broadcast %4 : vector<1x32xf32> to vector<8x32xf32>
    %842 = arith.mulf %841, %840 : vector<8x32xf32>
    %843 = vector.broadcast %6 : vector<1x32xf32> to vector<8x32xf32>
    %844 = arith.addf %842, %843 : vector<8x32xf32>
    %845 = arith.subf %844, %822 : vector<8x32xf32>
    %846 = vector.broadcast %4 : vector<1x32xf32> to vector<8x32xf32>
    %847 = arith.mulf %846, %845 : vector<8x32xf32>
    %cst_324 = arith.constant 3.200000e+01 : f32
    %848 = vector.broadcast %cst_324 : f32 to vector<8x32xf32>
    %849 = arith.mulf %848, %847 : vector<8x32xf32>
    %cst_325 = arith.constant dense<0.000000e+00> : vector<8xf32>
    %850 = vector.multi_reduction <add>, %847, %cst_325 [1] : vector<8x32xf32> to vector<8xf32>
    %851 = vector.shape_cast %850 : vector<8xf32> to vector<8x1xf32>
    %852 = vector.broadcast %851 : vector<8x1xf32> to vector<8x32xf32>
    %853 = arith.subf %849, %852 : vector<8x32xf32>
    %854 = arith.mulf %847, %840 : vector<8x32xf32>
    %cst_326 = arith.constant dense<0.000000e+00> : vector<8xf32>
    %855 = vector.multi_reduction <add>, %854, %cst_326 [1] : vector<8x32xf32> to vector<8xf32>
    %856 = vector.shape_cast %855 : vector<8xf32> to vector<8x1xf32>
    %857 = vector.broadcast %856 : vector<8x1xf32> to vector<8x32xf32>
    %858 = arith.mulf %840, %857 : vector<8x32xf32>
    %859 = arith.subf %853, %858 : vector<8x32xf32>
    %cst_327 = arith.constant 3.125000e-02 : f32
    %860 = vector.broadcast %cst_327 : f32 to vector<8x1xf32>
    %861 = arith.mulf %836, %860 : vector<8x1xf32>
    %862 = vector.broadcast %861 : vector<8x1xf32> to vector<8x32xf32>
    %863 = arith.mulf %859, %862 : vector<8x32xf32>
    %cst_328 = arith.constant dense<0.000000e+00> : vector<8x8xf32>
    %864 = tpu.matmul %814, %815, %cst_328 {dimension_numbers = #tpu.dot_dimension_numbers<[1], [1], [0], [0], [0, 0, 1, 0], [], []>} : vector<8x32xf32>, vector<8x32xf32>, vector<8x8xf32> -> vector<8x8xf32>
    %865 = vector.shape_cast %818 : vector<1x8xf32> to vector<1x8xf32>
    %866 = vector.broadcast %865 : vector<1x8xf32> to vector<8x8xf32>
    %cst_329 = arith.constant 1.000000e+00 : f32
    %867 = vector.broadcast %cst_329 : f32 to vector<8x8xf32>
    %868 = arith.addf %864, %867 : vector<8x8xf32>
    %869 = arith.mulf %866, %868 : vector<8x8xf32>
    %cst_330 = arith.constant 0.000000e+00 : f32
    %870 = vector.broadcast %cst_330 : f32 to vector<8x8xf32>
    %871 = arith.select %2, %869, %870 : vector<8x8xi1>, vector<8x8xf32>
    %cst_331 = arith.constant dense<0.000000e+00> : vector<8x32xf32>
    %872 = tpu.matmul %814, %683, %cst_331 {dimension_numbers = #tpu.dot_dimension_numbers<[1], [0], [0], [1], [0, 0, 1, 1], [], []>} : vector<8x32xf32>, vector<32x32xf32>, vector<8x32xf32> -> vector<8x32xf32>
    %873 = vector.broadcast %686 : vector<1x32xf32> to vector<8x32xf32>
    %874 = arith.addf %872, %873 : vector<8x32xf32>
    %cst_332 = arith.constant dense<0.000000e+00> : vector<8x32xf32>
    %875 = tpu.matmul %871, %863, %cst_332 {dimension_numbers = #tpu.dot_dimension_numbers<[1], [0], [0], [1], [0, 0, 1, 1], [], []>} : vector<8x8xf32>, vector<8x32xf32>, vector<8x32xf32> -> vector<8x32xf32>
    %876 = arith.subf %874, %875 : vector<8x32xf32>
    %cst_333 = arith.constant 0.000000e+00 : f32
    %877 = vector.broadcast %cst_333 : f32 to vector<8x8xf32>
    %878 = arith.select %3, %866, %877 : vector<8x8xi1>, vector<8x8xf32>
    %cst_334 = arith.constant dense<0.000000e+00> : vector<8x32xf32>
    %879 = tpu.matmul %878, %863, %cst_334 {dimension_numbers = #tpu.dot_dimension_numbers<[1], [0], [0], [1], [0, 0, 1, 1], [], []>} : vector<8x8xf32>, vector<8x32xf32>, vector<8x32xf32> -> vector<8x32xf32>
    %cst_335 = arith.constant dense<0.000000e+00> : vector<32x32xf32>
    %880 = tpu.matmul %815, %879, %cst_335 {dimension_numbers = #tpu.dot_dimension_numbers<[0], [0], [1], [1], [0, 1, 1, 1], [], []>} : vector<8x32xf32>, vector<8x32xf32>, vector<32x32xf32> -> vector<32x32xf32>
    %881 = arith.subf %683, %880 : vector<32x32xf32>
    %cst_336 = arith.constant dense<0.000000e+00> : vector<32xf32>
    %882 = vector.multi_reduction <add>, %879, %cst_336 [0] : vector<8x32xf32> to vector<32xf32>
    %883 = vector.shape_cast %882 : vector<32xf32> to vector<1x32xf32>
    %884 = arith.subf %686, %883 : vector<1x32xf32>
    %cst_337 = arith.constant dense<0.000000e+00> : vector<8xf32>
    %885 = vector.multi_reduction <add>, %876, %cst_337 [1] : vector<8x32xf32> to vector<8xf32>
    %886 = vector.shape_cast %885 : vector<8xf32> to vector<8x1xf32>
    %cst_338 = arith.constant 3.200000e+01 : f32
    %887 = vector.broadcast %cst_338 : f32 to vector<8x1xf32>
    %888 = arith.divf %886, %887 : vector<8x1xf32>
    %889 = vector.broadcast %888 : vector<8x1xf32> to vector<8x32xf32>
    %890 = arith.subf %876, %889 : vector<8x32xf32>
    %891 = arith.mulf %890, %890 : vector<8x32xf32>
    %cst_339 = arith.constant dense<0.000000e+00> : vector<8xf32>
    %892 = vector.multi_reduction <add>, %891, %cst_339 [1] : vector<8x32xf32> to vector<8xf32>
    %893 = vector.shape_cast %892 : vector<8xf32> to vector<8x1xf32>
    %cst_340 = arith.constant 3.200000e+01 : f32
    %894 = vector.broadcast %cst_340 : f32 to vector<8x1xf32>
    %895 = arith.divf %893, %894 : vector<8x1xf32>
    %896 = vector.broadcast %888 : vector<8x1xf32> to vector<8x32xf32>
    %897 = arith.subf %876, %896 : vector<8x32xf32>
    %cst_341 = arith.constant 9.99999997E-7 : f32
    %898 = vector.broadcast %cst_341 : f32 to vector<8x1xf32>
    %899 = arith.addf %895, %898 : vector<8x1xf32>
    %900 = math.rsqrt %899 : vector<8x1xf32>
    %901 = vector.broadcast %900 : vector<8x1xf32> to vector<8x32xf32>
    %902 = arith.mulf %897, %901 : vector<8x32xf32>
    %903 = vector.broadcast %4 : vector<1x32xf32> to vector<8x32xf32>
    %904 = arith.mulf %903, %902 : vector<8x32xf32>
    %905 = arith.addf %814, %904 : vector<8x32xf32>
    %906 = vector.broadcast %6 : vector<1x32xf32> to vector<8x32xf32>
    %907 = arith.addf %905, %906 : vector<8x32xf32>
    %908 = vector.extract_strided_slice %809 {offsets = [0, 32], sizes = [8, 32], strides = [1, 1]} : vector<8x64xf32> to vector<8x32xf32>
    %909 = vector.extract_strided_slice %811 {offsets = [0, 32], sizes = [8, 32], strides = [1, 1]} : vector<8x64xf32> to vector<8x32xf32>
    %910 = vector.extract_strided_slice %813 {offsets = [0, 32], sizes = [8, 32], strides = [1, 1]} : vector<8x64xf32> to vector<8x32xf32>
    %c0_342 = arith.constant 0 : index
    %c1_343 = arith.constant 1 : index
    %c4_344 = arith.constant 4 : index
    %c0_345 = arith.constant 0 : index
    %911 = vector.load %arg8[%c0_342, %c1_343, %c4_344, %c0_345] : memref<1x2x8x8xf32, #tpu.memory_space<vmem>>, vector<1x1x1x8xf32>
    %912 = vector.shape_cast %911 : vector<1x1x1x8xf32> to vector<1x8xf32>
    %cst_346 = arith.constant dense<0.000000e+00> : vector<8x32xf32>
    %913 = tpu.matmul %909, %777, %cst_346 {dimension_numbers = #tpu.dot_dimension_numbers<[1], [0], [0], [1], [0, 0, 1, 1], [], []>} : vector<8x32xf32>, vector<32x32xf32>, vector<8x32xf32> -> vector<8x32xf32>
    %914 = vector.broadcast %780 : vector<1x32xf32> to vector<8x32xf32>
    %915 = arith.addf %913, %914 : vector<8x32xf32>
    %916 = arith.subf %910, %909 : vector<8x32xf32>
    %cst_347 = arith.constant dense<0.000000e+00> : vector<8xf32>
    %917 = vector.multi_reduction <add>, %915, %cst_347 [1] : vector<8x32xf32> to vector<8xf32>
    %918 = vector.shape_cast %917 : vector<8xf32> to vector<8x1xf32>
    %cst_348 = arith.constant 3.200000e+01 : f32
    %919 = vector.broadcast %cst_348 : f32 to vector<8x1xf32>
    %920 = arith.divf %918, %919 : vector<8x1xf32>
    %921 = vector.broadcast %920 : vector<8x1xf32> to vector<8x32xf32>
    %922 = arith.subf %915, %921 : vector<8x32xf32>
    %923 = arith.mulf %922, %922 : vector<8x32xf32>
    %cst_349 = arith.constant dense<0.000000e+00> : vector<8xf32>
    %924 = vector.multi_reduction <add>, %923, %cst_349 [1] : vector<8x32xf32> to vector<8xf32>
    %925 = vector.shape_cast %924 : vector<8xf32> to vector<8x1xf32>
    %cst_350 = arith.constant 3.200000e+01 : f32
    %926 = vector.broadcast %cst_350 : f32 to vector<8x1xf32>
    %927 = arith.divf %925, %926 : vector<8x1xf32>
    %cst_351 = arith.constant 9.99999997E-7 : f32
    %928 = vector.broadcast %cst_351 : f32 to vector<8x1xf32>
    %929 = arith.addf %927, %928 : vector<8x1xf32>
    %930 = math.rsqrt %929 : vector<8x1xf32>
    %931 = vector.broadcast %920 : vector<8x1xf32> to vector<8x32xf32>
    %932 = arith.subf %915, %931 : vector<8x32xf32>
    %933 = vector.broadcast %930 : vector<8x1xf32> to vector<8x32xf32>
    %934 = arith.mulf %932, %933 : vector<8x32xf32>
    %935 = vector.broadcast %5 : vector<1x32xf32> to vector<8x32xf32>
    %936 = arith.mulf %935, %934 : vector<8x32xf32>
    %937 = vector.broadcast %7 : vector<1x32xf32> to vector<8x32xf32>
    %938 = arith.addf %936, %937 : vector<8x32xf32>
    %939 = arith.subf %938, %916 : vector<8x32xf32>
    %940 = vector.broadcast %5 : vector<1x32xf32> to vector<8x32xf32>
    %941 = arith.mulf %940, %939 : vector<8x32xf32>
    %cst_352 = arith.constant 3.200000e+01 : f32
    %942 = vector.broadcast %cst_352 : f32 to vector<8x32xf32>
    %943 = arith.mulf %942, %941 : vector<8x32xf32>
    %cst_353 = arith.constant dense<0.000000e+00> : vector<8xf32>
    %944 = vector.multi_reduction <add>, %941, %cst_353 [1] : vector<8x32xf32> to vector<8xf32>
    %945 = vector.shape_cast %944 : vector<8xf32> to vector<8x1xf32>
    %946 = vector.broadcast %945 : vector<8x1xf32> to vector<8x32xf32>
    %947 = arith.subf %943, %946 : vector<8x32xf32>
    %948 = arith.mulf %941, %934 : vector<8x32xf32>
    %cst_354 = arith.constant dense<0.000000e+00> : vector<8xf32>
    %949 = vector.multi_reduction <add>, %948, %cst_354 [1] : vector<8x32xf32> to vector<8xf32>
    %950 = vector.shape_cast %949 : vector<8xf32> to vector<8x1xf32>
    %951 = vector.broadcast %950 : vector<8x1xf32> to vector<8x32xf32>
    %952 = arith.mulf %934, %951 : vector<8x32xf32>
    %953 = arith.subf %947, %952 : vector<8x32xf32>
    %cst_355 = arith.constant 3.125000e-02 : f32
    %954 = vector.broadcast %cst_355 : f32 to vector<8x1xf32>
    %955 = arith.mulf %930, %954 : vector<8x1xf32>
    %956 = vector.broadcast %955 : vector<8x1xf32> to vector<8x32xf32>
    %957 = arith.mulf %953, %956 : vector<8x32xf32>
    %cst_356 = arith.constant dense<0.000000e+00> : vector<8x8xf32>
    %958 = tpu.matmul %908, %909, %cst_356 {dimension_numbers = #tpu.dot_dimension_numbers<[1], [1], [0], [0], [0, 0, 1, 0], [], []>} : vector<8x32xf32>, vector<8x32xf32>, vector<8x8xf32> -> vector<8x8xf32>
    %959 = vector.shape_cast %912 : vector<1x8xf32> to vector<1x8xf32>
    %960 = vector.broadcast %959 : vector<1x8xf32> to vector<8x8xf32>
    %cst_357 = arith.constant 1.000000e+00 : f32
    %961 = vector.broadcast %cst_357 : f32 to vector<8x8xf32>
    %962 = arith.addf %958, %961 : vector<8x8xf32>
    %963 = arith.mulf %960, %962 : vector<8x8xf32>
    %cst_358 = arith.constant 0.000000e+00 : f32
    %964 = vector.broadcast %cst_358 : f32 to vector<8x8xf32>
    %965 = arith.select %2, %963, %964 : vector<8x8xi1>, vector<8x8xf32>
    %cst_359 = arith.constant dense<0.000000e+00> : vector<8x32xf32>
    %966 = tpu.matmul %908, %777, %cst_359 {dimension_numbers = #tpu.dot_dimension_numbers<[1], [0], [0], [1], [0, 0, 1, 1], [], []>} : vector<8x32xf32>, vector<32x32xf32>, vector<8x32xf32> -> vector<8x32xf32>
    %967 = vector.broadcast %780 : vector<1x32xf32> to vector<8x32xf32>
    %968 = arith.addf %966, %967 : vector<8x32xf32>
    %cst_360 = arith.constant dense<0.000000e+00> : vector<8x32xf32>
    %969 = tpu.matmul %965, %957, %cst_360 {dimension_numbers = #tpu.dot_dimension_numbers<[1], [0], [0], [1], [0, 0, 1, 1], [], []>} : vector<8x8xf32>, vector<8x32xf32>, vector<8x32xf32> -> vector<8x32xf32>
    %970 = arith.subf %968, %969 : vector<8x32xf32>
    %cst_361 = arith.constant 0.000000e+00 : f32
    %971 = vector.broadcast %cst_361 : f32 to vector<8x8xf32>
    %972 = arith.select %3, %960, %971 : vector<8x8xi1>, vector<8x8xf32>
    %cst_362 = arith.constant dense<0.000000e+00> : vector<8x32xf32>
    %973 = tpu.matmul %972, %957, %cst_362 {dimension_numbers = #tpu.dot_dimension_numbers<[1], [0], [0], [1], [0, 0, 1, 1], [], []>} : vector<8x8xf32>, vector<8x32xf32>, vector<8x32xf32> -> vector<8x32xf32>
    %cst_363 = arith.constant dense<0.000000e+00> : vector<32x32xf32>
    %974 = tpu.matmul %909, %973, %cst_363 {dimension_numbers = #tpu.dot_dimension_numbers<[0], [0], [1], [1], [0, 1, 1, 1], [], []>} : vector<8x32xf32>, vector<8x32xf32>, vector<32x32xf32> -> vector<32x32xf32>
    %975 = arith.subf %777, %974 : vector<32x32xf32>
    %cst_364 = arith.constant dense<0.000000e+00> : vector<32xf32>
    %976 = vector.multi_reduction <add>, %973, %cst_364 [0] : vector<8x32xf32> to vector<32xf32>
    %977 = vector.shape_cast %976 : vector<32xf32> to vector<1x32xf32>
    %978 = arith.subf %780, %977 : vector<1x32xf32>
    %cst_365 = arith.constant dense<0.000000e+00> : vector<8xf32>
    %979 = vector.multi_reduction <add>, %970, %cst_365 [1] : vector<8x32xf32> to vector<8xf32>
    %980 = vector.shape_cast %979 : vector<8xf32> to vector<8x1xf32>
    %cst_366 = arith.constant 3.200000e+01 : f32
    %981 = vector.broadcast %cst_366 : f32 to vector<8x1xf32>
    %982 = arith.divf %980, %981 : vector<8x1xf32>
    %983 = vector.broadcast %982 : vector<8x1xf32> to vector<8x32xf32>
    %984 = arith.subf %970, %983 : vector<8x32xf32>
    %985 = arith.mulf %984, %984 : vector<8x32xf32>
    %cst_367 = arith.constant dense<0.000000e+00> : vector<8xf32>
    %986 = vector.multi_reduction <add>, %985, %cst_367 [1] : vector<8x32xf32> to vector<8xf32>
    %987 = vector.shape_cast %986 : vector<8xf32> to vector<8x1xf32>
    %cst_368 = arith.constant 3.200000e+01 : f32
    %988 = vector.broadcast %cst_368 : f32 to vector<8x1xf32>
    %989 = arith.divf %987, %988 : vector<8x1xf32>
    %990 = vector.broadcast %982 : vector<8x1xf32> to vector<8x32xf32>
    %991 = arith.subf %970, %990 : vector<8x32xf32>
    %cst_369 = arith.constant 9.99999997E-7 : f32
    %992 = vector.broadcast %cst_369 : f32 to vector<8x1xf32>
    %993 = arith.addf %989, %992 : vector<8x1xf32>
    %994 = math.rsqrt %993 : vector<8x1xf32>
    %995 = vector.broadcast %994 : vector<8x1xf32> to vector<8x32xf32>
    %996 = arith.mulf %991, %995 : vector<8x32xf32>
    %997 = vector.broadcast %5 : vector<1x32xf32> to vector<8x32xf32>
    %998 = arith.mulf %997, %996 : vector<8x32xf32>
    %999 = arith.addf %908, %998 : vector<8x32xf32>
    %1000 = vector.broadcast %7 : vector<1x32xf32> to vector<8x32xf32>
    %1001 = arith.addf %999, %1000 : vector<8x32xf32>
    %1002 = tpu.concatenate %907, %1001 in 1 : vector<8x32xf32>, vector<8x32xf32> -> vector<8x64xf32>
    %c0_370 = arith.constant 0 : index
    %c4_371 = arith.constant 4 : index
    %c0_372 = arith.constant 0 : index
    %c0_373 = arith.constant 0 : index
    %1003 = vector.load %arg9[%c0_370, %c4_371, %c0_372, %c0_373] : memref<1x8x8x64xf32, #tpu.memory_space<vmem>>, vector<1x1x8x64xf32>
    %1004 = vector.shape_cast %1003 : vector<1x1x8x64xf32> to vector<8x64xf32>
    %1005 = vector.shape_cast %1002 : vector<8x64xf32> to vector<1x1x8x64xf32>
    tpu.vector_store %arg9[%c0_370, %c4_371, %c0_372, %c0_373], %1005 {strides = array<i32>} : memref<1x8x8x64xf32, #tpu.memory_space<vmem>>, vector<1x1x8x64xf32>,
    %c0_374 = arith.constant 0 : index
    %c5 = arith.constant 5 : index
    %c0_375 = arith.constant 0 : index
    %c0_376 = arith.constant 0 : index
    %1006 = vector.load %arg5[%c0_374, %c5, %c0_375, %c0_376] : memref<1x8x8x64xf32, #tpu.memory_space<vmem>>, vector<1x1x8x64xf32>
    %1007 = vector.shape_cast %1006 : vector<1x1x8x64xf32> to vector<8x64xf32>
    %c0_377 = arith.constant 0 : index
    %c5_378 = arith.constant 5 : index
    %c0_379 = arith.constant 0 : index
    %c0_380 = arith.constant 0 : index
    %1008 = vector.load %arg6[%c0_377, %c5_378, %c0_379, %c0_380] : memref<1x8x8x64xf32, #tpu.memory_space<vmem>>, vector<1x1x8x64xf32>
    %1009 = vector.shape_cast %1008 : vector<1x1x8x64xf32> to vector<8x64xf32>
    %c0_381 = arith.constant 0 : index
    %c5_382 = arith.constant 5 : index
    %c0_383 = arith.constant 0 : index
    %c0_384 = arith.constant 0 : index
    %1010 = vector.load %arg7[%c0_381, %c5_382, %c0_383, %c0_384] : memref<1x8x8x64xf32, #tpu.memory_space<vmem>>, vector<1x1x8x64xf32>
    %1011 = vector.shape_cast %1010 : vector<1x1x8x64xf32> to vector<8x64xf32>
    %1012 = vector.extract_strided_slice %1007 {offsets = [0, 0], sizes = [8, 32], strides = [1, 1]} : vector<8x64xf32> to vector<8x32xf32>
    %1013 = vector.extract_strided_slice %1009 {offsets = [0, 0], sizes = [8, 32], strides = [1, 1]} : vector<8x64xf32> to vector<8x32xf32>
    %1014 = vector.extract_strided_slice %1011 {offsets = [0, 0], sizes = [8, 32], strides = [1, 1]} : vector<8x64xf32> to vector<8x32xf32>
    %c0_385 = arith.constant 0 : index
    %c0_386 = arith.constant 0 : index
    %c5_387 = arith.constant 5 : index
    %c0_388 = arith.constant 0 : index
    %1015 = vector.load %arg8[%c0_385, %c0_386, %c5_387, %c0_388] : memref<1x2x8x8xf32, #tpu.memory_space<vmem>>, vector<1x1x1x8xf32>
    %1016 = vector.shape_cast %1015 : vector<1x1x1x8xf32> to vector<1x8xf32>
    %cst_389 = arith.constant dense<0.000000e+00> : vector<8x32xf32>
    %1017 = tpu.matmul %1013, %881, %cst_389 {dimension_numbers = #tpu.dot_dimension_numbers<[1], [0], [0], [1], [0, 0, 1, 1], [], []>} : vector<8x32xf32>, vector<32x32xf32>, vector<8x32xf32> -> vector<8x32xf32>
    %1018 = vector.broadcast %884 : vector<1x32xf32> to vector<8x32xf32>
    %1019 = arith.addf %1017, %1018 : vector<8x32xf32>
    %1020 = arith.subf %1014, %1013 : vector<8x32xf32>
    %cst_390 = arith.constant dense<0.000000e+00> : vector<8xf32>
    %1021 = vector.multi_reduction <add>, %1019, %cst_390 [1] : vector<8x32xf32> to vector<8xf32>
    %1022 = vector.shape_cast %1021 : vector<8xf32> to vector<8x1xf32>
    %cst_391 = arith.constant 3.200000e+01 : f32
    %1023 = vector.broadcast %cst_391 : f32 to vector<8x1xf32>
    %1024 = arith.divf %1022, %1023 : vector<8x1xf32>
    %1025 = vector.broadcast %1024 : vector<8x1xf32> to vector<8x32xf32>
    %1026 = arith.subf %1019, %1025 : vector<8x32xf32>
    %1027 = arith.mulf %1026, %1026 : vector<8x32xf32>
    %cst_392 = arith.constant dense<0.000000e+00> : vector<8xf32>
    %1028 = vector.multi_reduction <add>, %1027, %cst_392 [1] : vector<8x32xf32> to vector<8xf32>
    %1029 = vector.shape_cast %1028 : vector<8xf32> to vector<8x1xf32>
    %cst_393 = arith.constant 3.200000e+01 : f32
    %1030 = vector.broadcast %cst_393 : f32 to vector<8x1xf32>
    %1031 = arith.divf %1029, %1030 : vector<8x1xf32>
    %cst_394 = arith.constant 9.99999997E-7 : f32
    %1032 = vector.broadcast %cst_394 : f32 to vector<8x1xf32>
    %1033 = arith.addf %1031, %1032 : vector<8x1xf32>
    %1034 = math.rsqrt %1033 : vector<8x1xf32>
    %1035 = vector.broadcast %1024 : vector<8x1xf32> to vector<8x32xf32>
    %1036 = arith.subf %1019, %1035 : vector<8x32xf32>
    %1037 = vector.broadcast %1034 : vector<8x1xf32> to vector<8x32xf32>
    %1038 = arith.mulf %1036, %1037 : vector<8x32xf32>
    %1039 = vector.broadcast %4 : vector<1x32xf32> to vector<8x32xf32>
    %1040 = arith.mulf %1039, %1038 : vector<8x32xf32>
    %1041 = vector.broadcast %6 : vector<1x32xf32> to vector<8x32xf32>
    %1042 = arith.addf %1040, %1041 : vector<8x32xf32>
    %1043 = arith.subf %1042, %1020 : vector<8x32xf32>
    %1044 = vector.broadcast %4 : vector<1x32xf32> to vector<8x32xf32>
    %1045 = arith.mulf %1044, %1043 : vector<8x32xf32>
    %cst_395 = arith.constant 3.200000e+01 : f32
    %1046 = vector.broadcast %cst_395 : f32 to vector<8x32xf32>
    %1047 = arith.mulf %1046, %1045 : vector<8x32xf32>
    %cst_396 = arith.constant dense<0.000000e+00> : vector<8xf32>
    %1048 = vector.multi_reduction <add>, %1045, %cst_396 [1] : vector<8x32xf32> to vector<8xf32>
    %1049 = vector.shape_cast %1048 : vector<8xf32> to vector<8x1xf32>
    %1050 = vector.broadcast %1049 : vector<8x1xf32> to vector<8x32xf32>
    %1051 = arith.subf %1047, %1050 : vector<8x32xf32>
    %1052 = arith.mulf %1045, %1038 : vector<8x32xf32>
    %cst_397 = arith.constant dense<0.000000e+00> : vector<8xf32>
    %1053 = vector.multi_reduction <add>, %1052, %cst_397 [1] : vector<8x32xf32> to vector<8xf32>
    %1054 = vector.shape_cast %1053 : vector<8xf32> to vector<8x1xf32>
    %1055 = vector.broadcast %1054 : vector<8x1xf32> to vector<8x32xf32>
    %1056 = arith.mulf %1038, %1055 : vector<8x32xf32>
    %1057 = arith.subf %1051, %1056 : vector<8x32xf32>
    %cst_398 = arith.constant 3.125000e-02 : f32
    %1058 = vector.broadcast %cst_398 : f32 to vector<8x1xf32>
    %1059 = arith.mulf %1034, %1058 : vector<8x1xf32>
    %1060 = vector.broadcast %1059 : vector<8x1xf32> to vector<8x32xf32>
    %1061 = arith.mulf %1057, %1060 : vector<8x32xf32>
    %cst_399 = arith.constant dense<0.000000e+00> : vector<8x8xf32>
    %1062 = tpu.matmul %1012, %1013, %cst_399 {dimension_numbers = #tpu.dot_dimension_numbers<[1], [1], [0], [0], [0, 0, 1, 0], [], []>} : vector<8x32xf32>, vector<8x32xf32>, vector<8x8xf32> -> vector<8x8xf32>
    %1063 = vector.shape_cast %1016 : vector<1x8xf32> to vector<1x8xf32>
    %1064 = vector.broadcast %1063 : vector<1x8xf32> to vector<8x8xf32>
    %cst_400 = arith.constant 1.000000e+00 : f32
    %1065 = vector.broadcast %cst_400 : f32 to vector<8x8xf32>
    %1066 = arith.addf %1062, %1065 : vector<8x8xf32>
    %1067 = arith.mulf %1064, %1066 : vector<8x8xf32>
    %cst_401 = arith.constant 0.000000e+00 : f32
    %1068 = vector.broadcast %cst_401 : f32 to vector<8x8xf32>
    %1069 = arith.select %2, %1067, %1068 : vector<8x8xi1>, vector<8x8xf32>
    %cst_402 = arith.constant dense<0.000000e+00> : vector<8x32xf32>
    %1070 = tpu.matmul %1012, %881, %cst_402 {dimension_numbers = #tpu.dot_dimension_numbers<[1], [0], [0], [1], [0, 0, 1, 1], [], []>} : vector<8x32xf32>, vector<32x32xf32>, vector<8x32xf32> -> vector<8x32xf32>
    %1071 = vector.broadcast %884 : vector<1x32xf32> to vector<8x32xf32>
    %1072 = arith.addf %1070, %1071 : vector<8x32xf32>
    %cst_403 = arith.constant dense<0.000000e+00> : vector<8x32xf32>
    %1073 = tpu.matmul %1069, %1061, %cst_403 {dimension_numbers = #tpu.dot_dimension_numbers<[1], [0], [0], [1], [0, 0, 1, 1], [], []>} : vector<8x8xf32>, vector<8x32xf32>, vector<8x32xf32> -> vector<8x32xf32>
    %1074 = arith.subf %1072, %1073 : vector<8x32xf32>
    %cst_404 = arith.constant 0.000000e+00 : f32
    %1075 = vector.broadcast %cst_404 : f32 to vector<8x8xf32>
    %1076 = arith.select %3, %1064, %1075 : vector<8x8xi1>, vector<8x8xf32>
    %cst_405 = arith.constant dense<0.000000e+00> : vector<8x32xf32>
    %1077 = tpu.matmul %1076, %1061, %cst_405 {dimension_numbers = #tpu.dot_dimension_numbers<[1], [0], [0], [1], [0, 0, 1, 1], [], []>} : vector<8x8xf32>, vector<8x32xf32>, vector<8x32xf32> -> vector<8x32xf32>
    %cst_406 = arith.constant dense<0.000000e+00> : vector<32x32xf32>
    %1078 = tpu.matmul %1013, %1077, %cst_406 {dimension_numbers = #tpu.dot_dimension_numbers<[0], [0], [1], [1], [0, 1, 1, 1], [], []>} : vector<8x32xf32>, vector<8x32xf32>, vector<32x32xf32> -> vector<32x32xf32>
    %1079 = arith.subf %881, %1078 : vector<32x32xf32>
    %cst_407 = arith.constant dense<0.000000e+00> : vector<32xf32>
    %1080 = vector.multi_reduction <add>, %1077, %cst_407 [0] : vector<8x32xf32> to vector<32xf32>
    %1081 = vector.shape_cast %1080 : vector<32xf32> to vector<1x32xf32>
    %1082 = arith.subf %884, %1081 : vector<1x32xf32>
    %cst_408 = arith.constant dense<0.000000e+00> : vector<8xf32>
    %1083 = vector.multi_reduction <add>, %1074, %cst_408 [1] : vector<8x32xf32> to vector<8xf32>
    %1084 = vector.shape_cast %1083 : vector<8xf32> to vector<8x1xf32>
    %cst_409 = arith.constant 3.200000e+01 : f32
    %1085 = vector.broadcast %cst_409 : f32 to vector<8x1xf32>
    %1086 = arith.divf %1084, %1085 : vector<8x1xf32>
    %1087 = vector.broadcast %1086 : vector<8x1xf32> to vector<8x32xf32>
    %1088 = arith.subf %1074, %1087 : vector<8x32xf32>
    %1089 = arith.mulf %1088, %1088 : vector<8x32xf32>
    %cst_410 = arith.constant dense<0.000000e+00> : vector<8xf32>
    %1090 = vector.multi_reduction <add>, %1089, %cst_410 [1] : vector<8x32xf32> to vector<8xf32>
    %1091 = vector.shape_cast %1090 : vector<8xf32> to vector<8x1xf32>
    %cst_411 = arith.constant 3.200000e+01 : f32
    %1092 = vector.broadcast %cst_411 : f32 to vector<8x1xf32>
    %1093 = arith.divf %1091, %1092 : vector<8x1xf32>
    %1094 = vector.broadcast %1086 : vector<8x1xf32> to vector<8x32xf32>
    %1095 = arith.subf %1074, %1094 : vector<8x32xf32>
    %cst_412 = arith.constant 9.99999997E-7 : f32
    %1096 = vector.broadcast %cst_412 : f32 to vector<8x1xf32>
    %1097 = arith.addf %1093, %1096 : vector<8x1xf32>
    %1098 = math.rsqrt %1097 : vector<8x1xf32>
    %1099 = vector.broadcast %1098 : vector<8x1xf32> to vector<8x32xf32>
    %1100 = arith.mulf %1095, %1099 : vector<8x32xf32>
    %1101 = vector.broadcast %4 : vector<1x32xf32> to vector<8x32xf32>
    %1102 = arith.mulf %1101, %1100 : vector<8x32xf32>
    %1103 = arith.addf %1012, %1102 : vector<8x32xf32>
    %1104 = vector.broadcast %6 : vector<1x32xf32> to vector<8x32xf32>
    %1105 = arith.addf %1103, %1104 : vector<8x32xf32>
    %1106 = vector.extract_strided_slice %1007 {offsets = [0, 32], sizes = [8, 32], strides = [1, 1]} : vector<8x64xf32> to vector<8x32xf32>
    %1107 = vector.extract_strided_slice %1009 {offsets = [0, 32], sizes = [8, 32], strides = [1, 1]} : vector<8x64xf32> to vector<8x32xf32>
    %1108 = vector.extract_strided_slice %1011 {offsets = [0, 32], sizes = [8, 32], strides = [1, 1]} : vector<8x64xf32> to vector<8x32xf32>
    %c0_413 = arith.constant 0 : index
    %c1_414 = arith.constant 1 : index
    %c5_415 = arith.constant 5 : index
    %c0_416 = arith.constant 0 : index
    %1109 = vector.load %arg8[%c0_413, %c1_414, %c5_415, %c0_416] : memref<1x2x8x8xf32, #tpu.memory_space<vmem>>, vector<1x1x1x8xf32>
    %1110 = vector.shape_cast %1109 : vector<1x1x1x8xf32> to vector<1x8xf32>
    %cst_417 = arith.constant dense<0.000000e+00> : vector<8x32xf32>
    %1111 = tpu.matmul %1107, %975, %cst_417 {dimension_numbers = #tpu.dot_dimension_numbers<[1], [0], [0], [1], [0, 0, 1, 1], [], []>} : vector<8x32xf32>, vector<32x32xf32>, vector<8x32xf32> -> vector<8x32xf32>
    %1112 = vector.broadcast %978 : vector<1x32xf32> to vector<8x32xf32>
    %1113 = arith.addf %1111, %1112 : vector<8x32xf32>
    %1114 = arith.subf %1108, %1107 : vector<8x32xf32>
    %cst_418 = arith.constant dense<0.000000e+00> : vector<8xf32>
    %1115 = vector.multi_reduction <add>, %1113, %cst_418 [1] : vector<8x32xf32> to vector<8xf32>
    %1116 = vector.shape_cast %1115 : vector<8xf32> to vector<8x1xf32>
    %cst_419 = arith.constant 3.200000e+01 : f32
    %1117 = vector.broadcast %cst_419 : f32 to vector<8x1xf32>
    %1118 = arith.divf %1116, %1117 : vector<8x1xf32>
    %1119 = vector.broadcast %1118 : vector<8x1xf32> to vector<8x32xf32>
    %1120 = arith.subf %1113, %1119 : vector<8x32xf32>
    %1121 = arith.mulf %1120, %1120 : vector<8x32xf32>
    %cst_420 = arith.constant dense<0.000000e+00> : vector<8xf32>
    %1122 = vector.multi_reduction <add>, %1121, %cst_420 [1] : vector<8x32xf32> to vector<8xf32>
    %1123 = vector.shape_cast %1122 : vector<8xf32> to vector<8x1xf32>
    %cst_421 = arith.constant 3.200000e+01 : f32
    %1124 = vector.broadcast %cst_421 : f32 to vector<8x1xf32>
    %1125 = arith.divf %1123, %1124 : vector<8x1xf32>
    %cst_422 = arith.constant 9.99999997E-7 : f32
    %1126 = vector.broadcast %cst_422 : f32 to vector<8x1xf32>
    %1127 = arith.addf %1125, %1126 : vector<8x1xf32>
    %1128 = math.rsqrt %1127 : vector<8x1xf32>
    %1129 = vector.broadcast %1118 : vector<8x1xf32> to vector<8x32xf32>
    %1130 = arith.subf %1113, %1129 : vector<8x32xf32>
    %1131 = vector.broadcast %1128 : vector<8x1xf32> to vector<8x32xf32>
    %1132 = arith.mulf %1130, %1131 : vector<8x32xf32>
    %1133 = vector.broadcast %5 : vector<1x32xf32> to vector<8x32xf32>
    %1134 = arith.mulf %1133, %1132 : vector<8x32xf32>
    %1135 = vector.broadcast %7 : vector<1x32xf32> to vector<8x32xf32>
    %1136 = arith.addf %1134, %1135 : vector<8x32xf32>
    %1137 = arith.subf %1136, %1114 : vector<8x32xf32>
    %1138 = vector.broadcast %5 : vector<1x32xf32> to vector<8x32xf32>
    %1139 = arith.mulf %1138, %1137 : vector<8x32xf32>
    %cst_423 = arith.constant 3.200000e+01 : f32
    %1140 = vector.broadcast %cst_423 : f32 to vector<8x32xf32>
    %1141 = arith.mulf %1140, %1139 : vector<8x32xf32>
    %cst_424 = arith.constant dense<0.000000e+00> : vector<8xf32>
    %1142 = vector.multi_reduction <add>, %1139, %cst_424 [1] : vector<8x32xf32> to vector<8xf32>
    %1143 = vector.shape_cast %1142 : vector<8xf32> to vector<8x1xf32>
    %1144 = vector.broadcast %1143 : vector<8x1xf32> to vector<8x32xf32>
    %1145 = arith.subf %1141, %1144 : vector<8x32xf32>
    %1146 = arith.mulf %1139, %1132 : vector<8x32xf32>
    %cst_425 = arith.constant dense<0.000000e+00> : vector<8xf32>
    %1147 = vector.multi_reduction <add>, %1146, %cst_425 [1] : vector<8x32xf32> to vector<8xf32>
    %1148 = vector.shape_cast %1147 : vector<8xf32> to vector<8x1xf32>
    %1149 = vector.broadcast %1148 : vector<8x1xf32> to vector<8x32xf32>
    %1150 = arith.mulf %1132, %1149 : vector<8x32xf32>
    %1151 = arith.subf %1145, %1150 : vector<8x32xf32>
    %cst_426 = arith.constant 3.125000e-02 : f32
    %1152 = vector.broadcast %cst_426 : f32 to vector<8x1xf32>
    %1153 = arith.mulf %1128, %1152 : vector<8x1xf32>
    %1154 = vector.broadcast %1153 : vector<8x1xf32> to vector<8x32xf32>
    %1155 = arith.mulf %1151, %1154 : vector<8x32xf32>
    %cst_427 = arith.constant dense<0.000000e+00> : vector<8x8xf32>
    %1156 = tpu.matmul %1106, %1107, %cst_427 {dimension_numbers = #tpu.dot_dimension_numbers<[1], [1], [0], [0], [0, 0, 1, 0], [], []>} : vector<8x32xf32>, vector<8x32xf32>, vector<8x8xf32> -> vector<8x8xf32>
    %1157 = vector.shape_cast %1110 : vector<1x8xf32> to vector<1x8xf32>
    %1158 = vector.broadcast %1157 : vector<1x8xf32> to vector<8x8xf32>
    %cst_428 = arith.constant 1.000000e+00 : f32
    %1159 = vector.broadcast %cst_428 : f32 to vector<8x8xf32>
    %1160 = arith.addf %1156, %1159 : vector<8x8xf32>
    %1161 = arith.mulf %1158, %1160 : vector<8x8xf32>
    %cst_429 = arith.constant 0.000000e+00 : f32
    %1162 = vector.broadcast %cst_429 : f32 to vector<8x8xf32>
    %1163 = arith.select %2, %1161, %1162 : vector<8x8xi1>, vector<8x8xf32>
    %cst_430 = arith.constant dense<0.000000e+00> : vector<8x32xf32>
    %1164 = tpu.matmul %1106, %975, %cst_430 {dimension_numbers = #tpu.dot_dimension_numbers<[1], [0], [0], [1], [0, 0, 1, 1], [], []>} : vector<8x32xf32>, vector<32x32xf32>, vector<8x32xf32> -> vector<8x32xf32>
    %1165 = vector.broadcast %978 : vector<1x32xf32> to vector<8x32xf32>
    %1166 = arith.addf %1164, %1165 : vector<8x32xf32>
    %cst_431 = arith.constant dense<0.000000e+00> : vector<8x32xf32>
    %1167 = tpu.matmul %1163, %1155, %cst_431 {dimension_numbers = #tpu.dot_dimension_numbers<[1], [0], [0], [1], [0, 0, 1, 1], [], []>} : vector<8x8xf32>, vector<8x32xf32>, vector<8x32xf32> -> vector<8x32xf32>
    %1168 = arith.subf %1166, %1167 : vector<8x32xf32>
    %cst_432 = arith.constant 0.000000e+00 : f32
    %1169 = vector.broadcast %cst_432 : f32 to vector<8x8xf32>
    %1170 = arith.select %3, %1158, %1169 : vector<8x8xi1>, vector<8x8xf32>
    %cst_433 = arith.constant dense<0.000000e+00> : vector<8x32xf32>
    %1171 = tpu.matmul %1170, %1155, %cst_433 {dimension_numbers = #tpu.dot_dimension_numbers<[1], [0], [0], [1], [0, 0, 1, 1], [], []>} : vector<8x8xf32>, vector<8x32xf32>, vector<8x32xf32> -> vector<8x32xf32>
    %cst_434 = arith.constant dense<0.000000e+00> : vector<32x32xf32>
    %1172 = tpu.matmul %1107, %1171, %cst_434 {dimension_numbers = #tpu.dot_dimension_numbers<[0], [0], [1], [1], [0, 1, 1, 1], [], []>} : vector<8x32xf32>, vector<8x32xf32>, vector<32x32xf32> -> vector<32x32xf32>
    %1173 = arith.subf %975, %1172 : vector<32x32xf32>
    %cst_435 = arith.constant dense<0.000000e+00> : vector<32xf32>
    %1174 = vector.multi_reduction <add>, %1171, %cst_435 [0] : vector<8x32xf32> to vector<32xf32>
    %1175 = vector.shape_cast %1174 : vector<32xf32> to vector<1x32xf32>
    %1176 = arith.subf %978, %1175 : vector<1x32xf32>
    %cst_436 = arith.constant dense<0.000000e+00> : vector<8xf32>
    %1177 = vector.multi_reduction <add>, %1168, %cst_436 [1] : vector<8x32xf32> to vector<8xf32>
    %1178 = vector.shape_cast %1177 : vector<8xf32> to vector<8x1xf32>
    %cst_437 = arith.constant 3.200000e+01 : f32
    %1179 = vector.broadcast %cst_437 : f32 to vector<8x1xf32>
    %1180 = arith.divf %1178, %1179 : vector<8x1xf32>
    %1181 = vector.broadcast %1180 : vector<8x1xf32> to vector<8x32xf32>
    %1182 = arith.subf %1168, %1181 : vector<8x32xf32>
    %1183 = arith.mulf %1182, %1182 : vector<8x32xf32>
    %cst_438 = arith.constant dense<0.000000e+00> : vector<8xf32>
    %1184 = vector.multi_reduction <add>, %1183, %cst_438 [1] : vector<8x32xf32> to vector<8xf32>
    %1185 = vector.shape_cast %1184 : vector<8xf32> to vector<8x1xf32>
    %cst_439 = arith.constant 3.200000e+01 : f32
    %1186 = vector.broadcast %cst_439 : f32 to vector<8x1xf32>
    %1187 = arith.divf %1185, %1186 : vector<8x1xf32>
    %1188 = vector.broadcast %1180 : vector<8x1xf32> to vector<8x32xf32>
    %1189 = arith.subf %1168, %1188 : vector<8x32xf32>
    %cst_440 = arith.constant 9.99999997E-7 : f32
    %1190 = vector.broadcast %cst_440 : f32 to vector<8x1xf32>
    %1191 = arith.addf %1187, %1190 : vector<8x1xf32>
    %1192 = math.rsqrt %1191 : vector<8x1xf32>
    %1193 = vector.broadcast %1192 : vector<8x1xf32> to vector<8x32xf32>
    %1194 = arith.mulf %1189, %1193 : vector<8x32xf32>
    %1195 = vector.broadcast %5 : vector<1x32xf32> to vector<8x32xf32>
    %1196 = arith.mulf %1195, %1194 : vector<8x32xf32>
    %1197 = arith.addf %1106, %1196 : vector<8x32xf32>
    %1198 = vector.broadcast %7 : vector<1x32xf32> to vector<8x32xf32>
    %1199 = arith.addf %1197, %1198 : vector<8x32xf32>
    %1200 = tpu.concatenate %1105, %1199 in 1 : vector<8x32xf32>, vector<8x32xf32> -> vector<8x64xf32>
    %c0_441 = arith.constant 0 : index
    %c5_442 = arith.constant 5 : index
    %c0_443 = arith.constant 0 : index
    %c0_444 = arith.constant 0 : index
    %1201 = vector.load %arg9[%c0_441, %c5_442, %c0_443, %c0_444] : memref<1x8x8x64xf32, #tpu.memory_space<vmem>>, vector<1x1x8x64xf32>
    %1202 = vector.shape_cast %1201 : vector<1x1x8x64xf32> to vector<8x64xf32>
    %1203 = vector.shape_cast %1200 : vector<8x64xf32> to vector<1x1x8x64xf32>
    tpu.vector_store %arg9[%c0_441, %c5_442, %c0_443, %c0_444], %1203 {strides = array<i32>} : memref<1x8x8x64xf32, #tpu.memory_space<vmem>>, vector<1x1x8x64xf32>,
    %c0_445 = arith.constant 0 : index
    %c6 = arith.constant 6 : index
    %c0_446 = arith.constant 0 : index
    %c0_447 = arith.constant 0 : index
    %1204 = vector.load %arg5[%c0_445, %c6, %c0_446, %c0_447] : memref<1x8x8x64xf32, #tpu.memory_space<vmem>>, vector<1x1x8x64xf32>
    %1205 = vector.shape_cast %1204 : vector<1x1x8x64xf32> to vector<8x64xf32>
    %c0_448 = arith.constant 0 : index
    %c6_449 = arith.constant 6 : index
    %c0_450 = arith.constant 0 : index
    %c0_451 = arith.constant 0 : index
    %1206 = vector.load %arg6[%c0_448, %c6_449, %c0_450, %c0_451] : memref<1x8x8x64xf32, #tpu.memory_space<vmem>>, vector<1x1x8x64xf32>
    %1207 = vector.shape_cast %1206 : vector<1x1x8x64xf32> to vector<8x64xf32>
    %c0_452 = arith.constant 0 : index
    %c6_453 = arith.constant 6 : index
    %c0_454 = arith.constant 0 : index
    %c0_455 = arith.constant 0 : index
    %1208 = vector.load %arg7[%c0_452, %c6_453, %c0_454, %c0_455] : memref<1x8x8x64xf32, #tpu.memory_space<vmem>>, vector<1x1x8x64xf32>
    %1209 = vector.shape_cast %1208 : vector<1x1x8x64xf32> to vector<8x64xf32>
    %1210 = vector.extract_strided_slice %1205 {offsets = [0, 0], sizes = [8, 32], strides = [1, 1]} : vector<8x64xf32> to vector<8x32xf32>
    %1211 = vector.extract_strided_slice %1207 {offsets = [0, 0], sizes = [8, 32], strides = [1, 1]} : vector<8x64xf32> to vector<8x32xf32>
    %1212 = vector.extract_strided_slice %1209 {offsets = [0, 0], sizes = [8, 32], strides = [1, 1]} : vector<8x64xf32> to vector<8x32xf32>
    %c0_456 = arith.constant 0 : index
    %c0_457 = arith.constant 0 : index
    %c6_458 = arith.constant 6 : index
    %c0_459 = arith.constant 0 : index
    %1213 = vector.load %arg8[%c0_456, %c0_457, %c6_458, %c0_459] : memref<1x2x8x8xf32, #tpu.memory_space<vmem>>, vector<1x1x1x8xf32>
    %1214 = vector.shape_cast %1213 : vector<1x1x1x8xf32> to vector<1x8xf32>
    %cst_460 = arith.constant dense<0.000000e+00> : vector<8x32xf32>
    %1215 = tpu.matmul %1211, %1079, %cst_460 {dimension_numbers = #tpu.dot_dimension_numbers<[1], [0], [0], [1], [0, 0, 1, 1], [], []>} : vector<8x32xf32>, vector<32x32xf32>, vector<8x32xf32> -> vector<8x32xf32>
    %1216 = vector.broadcast %1082 : vector<1x32xf32> to vector<8x32xf32>
    %1217 = arith.addf %1215, %1216 : vector<8x32xf32>
    %1218 = arith.subf %1212, %1211 : vector<8x32xf32>
    %cst_461 = arith.constant dense<0.000000e+00> : vector<8xf32>
    %1219 = vector.multi_reduction <add>, %1217, %cst_461 [1] : vector<8x32xf32> to vector<8xf32>
    %1220 = vector.shape_cast %1219 : vector<8xf32> to vector<8x1xf32>
    %cst_462 = arith.constant 3.200000e+01 : f32
    %1221 = vector.broadcast %cst_462 : f32 to vector<8x1xf32>
    %1222 = arith.divf %1220, %1221 : vector<8x1xf32>
    %1223 = vector.broadcast %1222 : vector<8x1xf32> to vector<8x32xf32>
    %1224 = arith.subf %1217, %1223 : vector<8x32xf32>
    %1225 = arith.mulf %1224, %1224 : vector<8x32xf32>
    %cst_463 = arith.constant dense<0.000000e+00> : vector<8xf32>
    %1226 = vector.multi_reduction <add>, %1225, %cst_463 [1] : vector<8x32xf32> to vector<8xf32>
    %1227 = vector.shape_cast %1226 : vector<8xf32> to vector<8x1xf32>
    %cst_464 = arith.constant 3.200000e+01 : f32
    %1228 = vector.broadcast %cst_464 : f32 to vector<8x1xf32>
    %1229 = arith.divf %1227, %1228 : vector<8x1xf32>
    %cst_465 = arith.constant 9.99999997E-7 : f32
    %1230 = vector.broadcast %cst_465 : f32 to vector<8x1xf32>
    %1231 = arith.addf %1229, %1230 : vector<8x1xf32>
    %1232 = math.rsqrt %1231 : vector<8x1xf32>
    %1233 = vector.broadcast %1222 : vector<8x1xf32> to vector<8x32xf32>
    %1234 = arith.subf %1217, %1233 : vector<8x32xf32>
    %1235 = vector.broadcast %1232 : vector<8x1xf32> to vector<8x32xf32>
    %1236 = arith.mulf %1234, %1235 : vector<8x32xf32>
    %1237 = vector.broadcast %4 : vector<1x32xf32> to vector<8x32xf32>
    %1238 = arith.mulf %1237, %1236 : vector<8x32xf32>
    %1239 = vector.broadcast %6 : vector<1x32xf32> to vector<8x32xf32>
    %1240 = arith.addf %1238, %1239 : vector<8x32xf32>
    %1241 = arith.subf %1240, %1218 : vector<8x32xf32>
    %1242 = vector.broadcast %4 : vector<1x32xf32> to vector<8x32xf32>
    %1243 = arith.mulf %1242, %1241 : vector<8x32xf32>
    %cst_466 = arith.constant 3.200000e+01 : f32
    %1244 = vector.broadcast %cst_466 : f32 to vector<8x32xf32>
    %1245 = arith.mulf %1244, %1243 : vector<8x32xf32>
    %cst_467 = arith.constant dense<0.000000e+00> : vector<8xf32>
    %1246 = vector.multi_reduction <add>, %1243, %cst_467 [1] : vector<8x32xf32> to vector<8xf32>
    %1247 = vector.shape_cast %1246 : vector<8xf32> to vector<8x1xf32>
    %1248 = vector.broadcast %1247 : vector<8x1xf32> to vector<8x32xf32>
    %1249 = arith.subf %1245, %1248 : vector<8x32xf32>
    %1250 = arith.mulf %1243, %1236 : vector<8x32xf32>
    %cst_468 = arith.constant dense<0.000000e+00> : vector<8xf32>
    %1251 = vector.multi_reduction <add>, %1250, %cst_468 [1] : vector<8x32xf32> to vector<8xf32>
    %1252 = vector.shape_cast %1251 : vector<8xf32> to vector<8x1xf32>
    %1253 = vector.broadcast %1252 : vector<8x1xf32> to vector<8x32xf32>
    %1254 = arith.mulf %1236, %1253 : vector<8x32xf32>
    %1255 = arith.subf %1249, %1254 : vector<8x32xf32>
    %cst_469 = arith.constant 3.125000e-02 : f32
    %1256 = vector.broadcast %cst_469 : f32 to vector<8x1xf32>
    %1257 = arith.mulf %1232, %1256 : vector<8x1xf32>
    %1258 = vector.broadcast %1257 : vector<8x1xf32> to vector<8x32xf32>
    %1259 = arith.mulf %1255, %1258 : vector<8x32xf32>
    %cst_470 = arith.constant dense<0.000000e+00> : vector<8x8xf32>
    %1260 = tpu.matmul %1210, %1211, %cst_470 {dimension_numbers = #tpu.dot_dimension_numbers<[1], [1], [0], [0], [0, 0, 1, 0], [], []>} : vector<8x32xf32>, vector<8x32xf32>, vector<8x8xf32> -> vector<8x8xf32>
    %1261 = vector.shape_cast %1214 : vector<1x8xf32> to vector<1x8xf32>
    %1262 = vector.broadcast %1261 : vector<1x8xf32> to vector<8x8xf32>
    %cst_471 = arith.constant 1.000000e+00 : f32
    %1263 = vector.broadcast %cst_471 : f32 to vector<8x8xf32>
    %1264 = arith.addf %1260, %1263 : vector<8x8xf32>
    %1265 = arith.mulf %1262, %1264 : vector<8x8xf32>
    %cst_472 = arith.constant 0.000000e+00 : f32
    %1266 = vector.broadcast %cst_472 : f32 to vector<8x8xf32>
    %1267 = arith.select %2, %1265, %1266 : vector<8x8xi1>, vector<8x8xf32>
    %cst_473 = arith.constant dense<0.000000e+00> : vector<8x32xf32>
    %1268 = tpu.matmul %1210, %1079, %cst_473 {dimension_numbers = #tpu.dot_dimension_numbers<[1], [0], [0], [1], [0, 0, 1, 1], [], []>} : vector<8x32xf32>, vector<32x32xf32>, vector<8x32xf32> -> vector<8x32xf32>
    %1269 = vector.broadcast %1082 : vector<1x32xf32> to vector<8x32xf32>
    %1270 = arith.addf %1268, %1269 : vector<8x32xf32>
    %cst_474 = arith.constant dense<0.000000e+00> : vector<8x32xf32>
    %1271 = tpu.matmul %1267, %1259, %cst_474 {dimension_numbers = #tpu.dot_dimension_numbers<[1], [0], [0], [1], [0, 0, 1, 1], [], []>} : vector<8x8xf32>, vector<8x32xf32>, vector<8x32xf32> -> vector<8x32xf32>
    %1272 = arith.subf %1270, %1271 : vector<8x32xf32>
    %cst_475 = arith.constant 0.000000e+00 : f32
    %1273 = vector.broadcast %cst_475 : f32 to vector<8x8xf32>
    %1274 = arith.select %3, %1262, %1273 : vector<8x8xi1>, vector<8x8xf32>
    %cst_476 = arith.constant dense<0.000000e+00> : vector<8x32xf32>
    %1275 = tpu.matmul %1274, %1259, %cst_476 {dimension_numbers = #tpu.dot_dimension_numbers<[1], [0], [0], [1], [0, 0, 1, 1], [], []>} : vector<8x8xf32>, vector<8x32xf32>, vector<8x32xf32> -> vector<8x32xf32>
    %cst_477 = arith.constant dense<0.000000e+00> : vector<32x32xf32>
    %1276 = tpu.matmul %1211, %1275, %cst_477 {dimension_numbers = #tpu.dot_dimension_numbers<[0], [0], [1], [1], [0, 1, 1, 1], [], []>} : vector<8x32xf32>, vector<8x32xf32>, vector<32x32xf32> -> vector<32x32xf32>
    %1277 = arith.subf %1079, %1276 : vector<32x32xf32>
    %cst_478 = arith.constant dense<0.000000e+00> : vector<32xf32>
    %1278 = vector.multi_reduction <add>, %1275, %cst_478 [0] : vector<8x32xf32> to vector<32xf32>
    %1279 = vector.shape_cast %1278 : vector<32xf32> to vector<1x32xf32>
    %1280 = arith.subf %1082, %1279 : vector<1x32xf32>
    %cst_479 = arith.constant dense<0.000000e+00> : vector<8xf32>
    %1281 = vector.multi_reduction <add>, %1272, %cst_479 [1] : vector<8x32xf32> to vector<8xf32>
    %1282 = vector.shape_cast %1281 : vector<8xf32> to vector<8x1xf32>
    %cst_480 = arith.constant 3.200000e+01 : f32
    %1283 = vector.broadcast %cst_480 : f32 to vector<8x1xf32>
    %1284 = arith.divf %1282, %1283 : vector<8x1xf32>
    %1285 = vector.broadcast %1284 : vector<8x1xf32> to vector<8x32xf32>
    %1286 = arith.subf %1272, %1285 : vector<8x32xf32>
    %1287 = arith.mulf %1286, %1286 : vector<8x32xf32>
    %cst_481 = arith.constant dense<0.000000e+00> : vector<8xf32>
    %1288 = vector.multi_reduction <add>, %1287, %cst_481 [1] : vector<8x32xf32> to vector<8xf32>
    %1289 = vector.shape_cast %1288 : vector<8xf32> to vector<8x1xf32>
    %cst_482 = arith.constant 3.200000e+01 : f32
    %1290 = vector.broadcast %cst_482 : f32 to vector<8x1xf32>
    %1291 = arith.divf %1289, %1290 : vector<8x1xf32>
    %1292 = vector.broadcast %1284 : vector<8x1xf32> to vector<8x32xf32>
    %1293 = arith.subf %1272, %1292 : vector<8x32xf32>
    %cst_483 = arith.constant 9.99999997E-7 : f32
    %1294 = vector.broadcast %cst_483 : f32 to vector<8x1xf32>
    %1295 = arith.addf %1291, %1294 : vector<8x1xf32>
    %1296 = math.rsqrt %1295 : vector<8x1xf32>
    %1297 = vector.broadcast %1296 : vector<8x1xf32> to vector<8x32xf32>
    %1298 = arith.mulf %1293, %1297 : vector<8x32xf32>
    %1299 = vector.broadcast %4 : vector<1x32xf32> to vector<8x32xf32>
    %1300 = arith.mulf %1299, %1298 : vector<8x32xf32>
    %1301 = arith.addf %1210, %1300 : vector<8x32xf32>
    %1302 = vector.broadcast %6 : vector<1x32xf32> to vector<8x32xf32>
    %1303 = arith.addf %1301, %1302 : vector<8x32xf32>
    %1304 = vector.extract_strided_slice %1205 {offsets = [0, 32], sizes = [8, 32], strides = [1, 1]} : vector<8x64xf32> to vector<8x32xf32>
    %1305 = vector.extract_strided_slice %1207 {offsets = [0, 32], sizes = [8, 32], strides = [1, 1]} : vector<8x64xf32> to vector<8x32xf32>
    %1306 = vector.extract_strided_slice %1209 {offsets = [0, 32], sizes = [8, 32], strides = [1, 1]} : vector<8x64xf32> to vector<8x32xf32>
    %c0_484 = arith.constant 0 : index
    %c1_485 = arith.constant 1 : index
    %c6_486 = arith.constant 6 : index
    %c0_487 = arith.constant 0 : index
    %1307 = vector.load %arg8[%c0_484, %c1_485, %c6_486, %c0_487] : memref<1x2x8x8xf32, #tpu.memory_space<vmem>>, vector<1x1x1x8xf32>
    %1308 = vector.shape_cast %1307 : vector<1x1x1x8xf32> to vector<1x8xf32>
    %cst_488 = arith.constant dense<0.000000e+00> : vector<8x32xf32>
    %1309 = tpu.matmul %1305, %1173, %cst_488 {dimension_numbers = #tpu.dot_dimension_numbers<[1], [0], [0], [1], [0, 0, 1, 1], [], []>} : vector<8x32xf32>, vector<32x32xf32>, vector<8x32xf32> -> vector<8x32xf32>
    %1310 = vector.broadcast %1176 : vector<1x32xf32> to vector<8x32xf32>
    %1311 = arith.addf %1309, %1310 : vector<8x32xf32>
    %1312 = arith.subf %1306, %1305 : vector<8x32xf32>
    %cst_489 = arith.constant dense<0.000000e+00> : vector<8xf32>
    %1313 = vector.multi_reduction <add>, %1311, %cst_489 [1] : vector<8x32xf32> to vector<8xf32>
    %1314 = vector.shape_cast %1313 : vector<8xf32> to vector<8x1xf32>
    %cst_490 = arith.constant 3.200000e+01 : f32
    %1315 = vector.broadcast %cst_490 : f32 to vector<8x1xf32>
    %1316 = arith.divf %1314, %1315 : vector<8x1xf32>
    %1317 = vector.broadcast %1316 : vector<8x1xf32> to vector<8x32xf32>
    %1318 = arith.subf %1311, %1317 : vector<8x32xf32>
    %1319 = arith.mulf %1318, %1318 : vector<8x32xf32>
    %cst_491 = arith.constant dense<0.000000e+00> : vector<8xf32>
    %1320 = vector.multi_reduction <add>, %1319, %cst_491 [1] : vector<8x32xf32> to vector<8xf32>
    %1321 = vector.shape_cast %1320 : vector<8xf32> to vector<8x1xf32>
    %cst_492 = arith.constant 3.200000e+01 : f32
    %1322 = vector.broadcast %cst_492 : f32 to vector<8x1xf32>
    %1323 = arith.divf %1321, %1322 : vector<8x1xf32>
    %cst_493 = arith.constant 9.99999997E-7 : f32
    %1324 = vector.broadcast %cst_493 : f32 to vector<8x1xf32>
    %1325 = arith.addf %1323, %1324 : vector<8x1xf32>
    %1326 = math.rsqrt %1325 : vector<8x1xf32>
    %1327 = vector.broadcast %1316 : vector<8x1xf32> to vector<8x32xf32>
    %1328 = arith.subf %1311, %1327 : vector<8x32xf32>
    %1329 = vector.broadcast %1326 : vector<8x1xf32> to vector<8x32xf32>
    %1330 = arith.mulf %1328, %1329 : vector<8x32xf32>
    %1331 = vector.broadcast %5 : vector<1x32xf32> to vector<8x32xf32>
    %1332 = arith.mulf %1331, %1330 : vector<8x32xf32>
    %1333 = vector.broadcast %7 : vector<1x32xf32> to vector<8x32xf32>
    %1334 = arith.addf %1332, %1333 : vector<8x32xf32>
    %1335 = arith.subf %1334, %1312 : vector<8x32xf32>
    %1336 = vector.broadcast %5 : vector<1x32xf32> to vector<8x32xf32>
    %1337 = arith.mulf %1336, %1335 : vector<8x32xf32>
    %cst_494 = arith.constant 3.200000e+01 : f32
    %1338 = vector.broadcast %cst_494 : f32 to vector<8x32xf32>
    %1339 = arith.mulf %1338, %1337 : vector<8x32xf32>
    %cst_495 = arith.constant dense<0.000000e+00> : vector<8xf32>
    %1340 = vector.multi_reduction <add>, %1337, %cst_495 [1] : vector<8x32xf32> to vector<8xf32>
    %1341 = vector.shape_cast %1340 : vector<8xf32> to vector<8x1xf32>
    %1342 = vector.broadcast %1341 : vector<8x1xf32> to vector<8x32xf32>
    %1343 = arith.subf %1339, %1342 : vector<8x32xf32>
    %1344 = arith.mulf %1337, %1330 : vector<8x32xf32>
    %cst_496 = arith.constant dense<0.000000e+00> : vector<8xf32>
    %1345 = vector.multi_reduction <add>, %1344, %cst_496 [1] : vector<8x32xf32> to vector<8xf32>
    %1346 = vector.shape_cast %1345 : vector<8xf32> to vector<8x1xf32>
    %1347 = vector.broadcast %1346 : vector<8x1xf32> to vector<8x32xf32>
    %1348 = arith.mulf %1330, %1347 : vector<8x32xf32>
    %1349 = arith.subf %1343, %1348 : vector<8x32xf32>
    %cst_497 = arith.constant 3.125000e-02 : f32
    %1350 = vector.broadcast %cst_497 : f32 to vector<8x1xf32>
    %1351 = arith.mulf %1326, %1350 : vector<8x1xf32>
    %1352 = vector.broadcast %1351 : vector<8x1xf32> to vector<8x32xf32>
    %1353 = arith.mulf %1349, %1352 : vector<8x32xf32>
    %cst_498 = arith.constant dense<0.000000e+00> : vector<8x8xf32>
    %1354 = tpu.matmul %1304, %1305, %cst_498 {dimension_numbers = #tpu.dot_dimension_numbers<[1], [1], [0], [0], [0, 0, 1, 0], [], []>} : vector<8x32xf32>, vector<8x32xf32>, vector<8x8xf32> -> vector<8x8xf32>
    %1355 = vector.shape_cast %1308 : vector<1x8xf32> to vector<1x8xf32>
    %1356 = vector.broadcast %1355 : vector<1x8xf32> to vector<8x8xf32>
    %cst_499 = arith.constant 1.000000e+00 : f32
    %1357 = vector.broadcast %cst_499 : f32 to vector<8x8xf32>
    %1358 = arith.addf %1354, %1357 : vector<8x8xf32>
    %1359 = arith.mulf %1356, %1358 : vector<8x8xf32>
    %cst_500 = arith.constant 0.000000e+00 : f32
    %1360 = vector.broadcast %cst_500 : f32 to vector<8x8xf32>
    %1361 = arith.select %2, %1359, %1360 : vector<8x8xi1>, vector<8x8xf32>
    %cst_501 = arith.constant dense<0.000000e+00> : vector<8x32xf32>
    %1362 = tpu.matmul %1304, %1173, %cst_501 {dimension_numbers = #tpu.dot_dimension_numbers<[1], [0], [0], [1], [0, 0, 1, 1], [], []>} : vector<8x32xf32>, vector<32x32xf32>, vector<8x32xf32> -> vector<8x32xf32>
    %1363 = vector.broadcast %1176 : vector<1x32xf32> to vector<8x32xf32>
    %1364 = arith.addf %1362, %1363 : vector<8x32xf32>
    %cst_502 = arith.constant dense<0.000000e+00> : vector<8x32xf32>
    %1365 = tpu.matmul %1361, %1353, %cst_502 {dimension_numbers = #tpu.dot_dimension_numbers<[1], [0], [0], [1], [0, 0, 1, 1], [], []>} : vector<8x8xf32>, vector<8x32xf32>, vector<8x32xf32> -> vector<8x32xf32>
    %1366 = arith.subf %1364, %1365 : vector<8x32xf32>
    %cst_503 = arith.constant 0.000000e+00 : f32
    %1367 = vector.broadcast %cst_503 : f32 to vector<8x8xf32>
    %1368 = arith.select %3, %1356, %1367 : vector<8x8xi1>, vector<8x8xf32>
    %cst_504 = arith.constant dense<0.000000e+00> : vector<8x32xf32>
    %1369 = tpu.matmul %1368, %1353, %cst_504 {dimension_numbers = #tpu.dot_dimension_numbers<[1], [0], [0], [1], [0, 0, 1, 1], [], []>} : vector<8x8xf32>, vector<8x32xf32>, vector<8x32xf32> -> vector<8x32xf32>
    %cst_505 = arith.constant dense<0.000000e+00> : vector<32x32xf32>
    %1370 = tpu.matmul %1305, %1369, %cst_505 {dimension_numbers = #tpu.dot_dimension_numbers<[0], [0], [1], [1], [0, 1, 1, 1], [], []>} : vector<8x32xf32>, vector<8x32xf32>, vector<32x32xf32> -> vector<32x32xf32>
    %1371 = arith.subf %1173, %1370 : vector<32x32xf32>
    %cst_506 = arith.constant dense<0.000000e+00> : vector<32xf32>
    %1372 = vector.multi_reduction <add>, %1369, %cst_506 [0] : vector<8x32xf32> to vector<32xf32>
    %1373 = vector.shape_cast %1372 : vector<32xf32> to vector<1x32xf32>
    %1374 = arith.subf %1176, %1373 : vector<1x32xf32>
    %cst_507 = arith.constant dense<0.000000e+00> : vector<8xf32>
    %1375 = vector.multi_reduction <add>, %1366, %cst_507 [1] : vector<8x32xf32> to vector<8xf32>
    %1376 = vector.shape_cast %1375 : vector<8xf32> to vector<8x1xf32>
    %cst_508 = arith.constant 3.200000e+01 : f32
    %1377 = vector.broadcast %cst_508 : f32 to vector<8x1xf32>
    %1378 = arith.divf %1376, %1377 : vector<8x1xf32>
    %1379 = vector.broadcast %1378 : vector<8x1xf32> to vector<8x32xf32>
    %1380 = arith.subf %1366, %1379 : vector<8x32xf32>
    %1381 = arith.mulf %1380, %1380 : vector<8x32xf32>
    %cst_509 = arith.constant dense<0.000000e+00> : vector<8xf32>
    %1382 = vector.multi_reduction <add>, %1381, %cst_509 [1] : vector<8x32xf32> to vector<8xf32>
    %1383 = vector.shape_cast %1382 : vector<8xf32> to vector<8x1xf32>
    %cst_510 = arith.constant 3.200000e+01 : f32
    %1384 = vector.broadcast %cst_510 : f32 to vector<8x1xf32>
    %1385 = arith.divf %1383, %1384 : vector<8x1xf32>
    %1386 = vector.broadcast %1378 : vector<8x1xf32> to vector<8x32xf32>
    %1387 = arith.subf %1366, %1386 : vector<8x32xf32>
    %cst_511 = arith.constant 9.99999997E-7 : f32
    %1388 = vector.broadcast %cst_511 : f32 to vector<8x1xf32>
    %1389 = arith.addf %1385, %1388 : vector<8x1xf32>
    %1390 = math.rsqrt %1389 : vector<8x1xf32>
    %1391 = vector.broadcast %1390 : vector<8x1xf32> to vector<8x32xf32>
    %1392 = arith.mulf %1387, %1391 : vector<8x32xf32>
    %1393 = vector.broadcast %5 : vector<1x32xf32> to vector<8x32xf32>
    %1394 = arith.mulf %1393, %1392 : vector<8x32xf32>
    %1395 = arith.addf %1304, %1394 : vector<8x32xf32>
    %1396 = vector.broadcast %7 : vector<1x32xf32> to vector<8x32xf32>
    %1397 = arith.addf %1395, %1396 : vector<8x32xf32>
    %1398 = tpu.concatenate %1303, %1397 in 1 : vector<8x32xf32>, vector<8x32xf32> -> vector<8x64xf32>
    %c0_512 = arith.constant 0 : index
    %c6_513 = arith.constant 6 : index
    %c0_514 = arith.constant 0 : index
    %c0_515 = arith.constant 0 : index
    %1399 = vector.load %arg9[%c0_512, %c6_513, %c0_514, %c0_515] : memref<1x8x8x64xf32, #tpu.memory_space<vmem>>, vector<1x1x8x64xf32>
    %1400 = vector.shape_cast %1399 : vector<1x1x8x64xf32> to vector<8x64xf32>
    %1401 = vector.shape_cast %1398 : vector<8x64xf32> to vector<1x1x8x64xf32>
    tpu.vector_store %arg9[%c0_512, %c6_513, %c0_514, %c0_515], %1401 {strides = array<i32>} : memref<1x8x8x64xf32, #tpu.memory_space<vmem>>, vector<1x1x8x64xf32>,
    %c0_516 = arith.constant 0 : index
    %c7 = arith.constant 7 : index
    %c0_517 = arith.constant 0 : index
    %c0_518 = arith.constant 0 : index
    %1402 = vector.load %arg5[%c0_516, %c7, %c0_517, %c0_518] : memref<1x8x8x64xf32, #tpu.memory_space<vmem>>, vector<1x1x8x64xf32>
    %1403 = vector.shape_cast %1402 : vector<1x1x8x64xf32> to vector<8x64xf32>
    %c0_519 = arith.constant 0 : index
    %c7_520 = arith.constant 7 : index
    %c0_521 = arith.constant 0 : index
    %c0_522 = arith.constant 0 : index
    %1404 = vector.load %arg6[%c0_519, %c7_520, %c0_521, %c0_522] : memref<1x8x8x64xf32, #tpu.memory_space<vmem>>, vector<1x1x8x64xf32>
    %1405 = vector.shape_cast %1404 : vector<1x1x8x64xf32> to vector<8x64xf32>
    %c0_523 = arith.constant 0 : index
    %c7_524 = arith.constant 7 : index
    %c0_525 = arith.constant 0 : index
    %c0_526 = arith.constant 0 : index
    %1406 = vector.load %arg7[%c0_523, %c7_524, %c0_525, %c0_526] : memref<1x8x8x64xf32, #tpu.memory_space<vmem>>, vector<1x1x8x64xf32>
    %1407 = vector.shape_cast %1406 : vector<1x1x8x64xf32> to vector<8x64xf32>
    %1408 = vector.extract_strided_slice %1403 {offsets = [0, 0], sizes = [8, 32], strides = [1, 1]} : vector<8x64xf32> to vector<8x32xf32>
    %1409 = vector.extract_strided_slice %1405 {offsets = [0, 0], sizes = [8, 32], strides = [1, 1]} : vector<8x64xf32> to vector<8x32xf32>
    %1410 = vector.extract_strided_slice %1407 {offsets = [0, 0], sizes = [8, 32], strides = [1, 1]} : vector<8x64xf32> to vector<8x32xf32>
    %c0_527 = arith.constant 0 : index
    %c0_528 = arith.constant 0 : index
    %c7_529 = arith.constant 7 : index
    %c0_530 = arith.constant 0 : index
    %1411 = vector.load %arg8[%c0_527, %c0_528, %c7_529, %c0_530] : memref<1x2x8x8xf32, #tpu.memory_space<vmem>>, vector<1x1x1x8xf32>
    %1412 = vector.shape_cast %1411 : vector<1x1x1x8xf32> to vector<1x8xf32>
    %cst_531 = arith.constant dense<0.000000e+00> : vector<8x32xf32>
    %1413 = tpu.matmul %1409, %1277, %cst_531 {dimension_numbers = #tpu.dot_dimension_numbers<[1], [0], [0], [1], [0, 0, 1, 1], [], []>} : vector<8x32xf32>, vector<32x32xf32>, vector<8x32xf32> -> vector<8x32xf32>
    %1414 = vector.broadcast %1280 : vector<1x32xf32> to vector<8x32xf32>
    %1415 = arith.addf %1413, %1414 : vector<8x32xf32>
    %1416 = arith.subf %1410, %1409 : vector<8x32xf32>
    %cst_532 = arith.constant dense<0.000000e+00> : vector<8xf32>
    %1417 = vector.multi_reduction <add>, %1415, %cst_532 [1] : vector<8x32xf32> to vector<8xf32>
    %1418 = vector.shape_cast %1417 : vector<8xf32> to vector<8x1xf32>
    %cst_533 = arith.constant 3.200000e+01 : f32
    %1419 = vector.broadcast %cst_533 : f32 to vector<8x1xf32>
    %1420 = arith.divf %1418, %1419 : vector<8x1xf32>
    %1421 = vector.broadcast %1420 : vector<8x1xf32> to vector<8x32xf32>
    %1422 = arith.subf %1415, %1421 : vector<8x32xf32>
    %1423 = arith.mulf %1422, %1422 : vector<8x32xf32>
    %cst_534 = arith.constant dense<0.000000e+00> : vector<8xf32>
    %1424 = vector.multi_reduction <add>, %1423, %cst_534 [1] : vector<8x32xf32> to vector<8xf32>
    %1425 = vector.shape_cast %1424 : vector<8xf32> to vector<8x1xf32>
    %cst_535 = arith.constant 3.200000e+01 : f32
    %1426 = vector.broadcast %cst_535 : f32 to vector<8x1xf32>
    %1427 = arith.divf %1425, %1426 : vector<8x1xf32>
    %cst_536 = arith.constant 9.99999997E-7 : f32
    %1428 = vector.broadcast %cst_536 : f32 to vector<8x1xf32>
    %1429 = arith.addf %1427, %1428 : vector<8x1xf32>
    %1430 = math.rsqrt %1429 : vector<8x1xf32>
    %1431 = vector.broadcast %1420 : vector<8x1xf32> to vector<8x32xf32>
    %1432 = arith.subf %1415, %1431 : vector<8x32xf32>
    %1433 = vector.broadcast %1430 : vector<8x1xf32> to vector<8x32xf32>
    %1434 = arith.mulf %1432, %1433 : vector<8x32xf32>
    %1435 = vector.broadcast %4 : vector<1x32xf32> to vector<8x32xf32>
    %1436 = arith.mulf %1435, %1434 : vector<8x32xf32>
    %1437 = vector.broadcast %6 : vector<1x32xf32> to vector<8x32xf32>
    %1438 = arith.addf %1436, %1437 : vector<8x32xf32>
    %1439 = arith.subf %1438, %1416 : vector<8x32xf32>
    %1440 = vector.broadcast %4 : vector<1x32xf32> to vector<8x32xf32>
    %1441 = arith.mulf %1440, %1439 : vector<8x32xf32>
    %cst_537 = arith.constant 3.200000e+01 : f32
    %1442 = vector.broadcast %cst_537 : f32 to vector<8x32xf32>
    %1443 = arith.mulf %1442, %1441 : vector<8x32xf32>
    %cst_538 = arith.constant dense<0.000000e+00> : vector<8xf32>
    %1444 = vector.multi_reduction <add>, %1441, %cst_538 [1] : vector<8x32xf32> to vector<8xf32>
    %1445 = vector.shape_cast %1444 : vector<8xf32> to vector<8x1xf32>
    %1446 = vector.broadcast %1445 : vector<8x1xf32> to vector<8x32xf32>
    %1447 = arith.subf %1443, %1446 : vector<8x32xf32>
    %1448 = arith.mulf %1441, %1434 : vector<8x32xf32>
    %cst_539 = arith.constant dense<0.000000e+00> : vector<8xf32>
    %1449 = vector.multi_reduction <add>, %1448, %cst_539 [1] : vector<8x32xf32> to vector<8xf32>
    %1450 = vector.shape_cast %1449 : vector<8xf32> to vector<8x1xf32>
    %1451 = vector.broadcast %1450 : vector<8x1xf32> to vector<8x32xf32>
    %1452 = arith.mulf %1434, %1451 : vector<8x32xf32>
    %1453 = arith.subf %1447, %1452 : vector<8x32xf32>
    %cst_540 = arith.constant 3.125000e-02 : f32
    %1454 = vector.broadcast %cst_540 : f32 to vector<8x1xf32>
    %1455 = arith.mulf %1430, %1454 : vector<8x1xf32>
    %1456 = vector.broadcast %1455 : vector<8x1xf32> to vector<8x32xf32>
    %1457 = arith.mulf %1453, %1456 : vector<8x32xf32>
    %cst_541 = arith.constant dense<0.000000e+00> : vector<8x8xf32>
    %1458 = tpu.matmul %1408, %1409, %cst_541 {dimension_numbers = #tpu.dot_dimension_numbers<[1], [1], [0], [0], [0, 0, 1, 0], [], []>} : vector<8x32xf32>, vector<8x32xf32>, vector<8x8xf32> -> vector<8x8xf32>
    %1459 = vector.shape_cast %1412 : vector<1x8xf32> to vector<1x8xf32>
    %1460 = vector.broadcast %1459 : vector<1x8xf32> to vector<8x8xf32>
    %cst_542 = arith.constant 1.000000e+00 : f32
    %1461 = vector.broadcast %cst_542 : f32 to vector<8x8xf32>
    %1462 = arith.addf %1458, %1461 : vector<8x8xf32>
    %1463 = arith.mulf %1460, %1462 : vector<8x8xf32>
    %cst_543 = arith.constant 0.000000e+00 : f32
    %1464 = vector.broadcast %cst_543 : f32 to vector<8x8xf32>
    %1465 = arith.select %2, %1463, %1464 : vector<8x8xi1>, vector<8x8xf32>
    %cst_544 = arith.constant dense<0.000000e+00> : vector<8x32xf32>
    %1466 = tpu.matmul %1408, %1277, %cst_544 {dimension_numbers = #tpu.dot_dimension_numbers<[1], [0], [0], [1], [0, 0, 1, 1], [], []>} : vector<8x32xf32>, vector<32x32xf32>, vector<8x32xf32> -> vector<8x32xf32>
    %1467 = vector.broadcast %1280 : vector<1x32xf32> to vector<8x32xf32>
    %1468 = arith.addf %1466, %1467 : vector<8x32xf32>
    %cst_545 = arith.constant dense<0.000000e+00> : vector<8x32xf32>
    %1469 = tpu.matmul %1465, %1457, %cst_545 {dimension_numbers = #tpu.dot_dimension_numbers<[1], [0], [0], [1], [0, 0, 1, 1], [], []>} : vector<8x8xf32>, vector<8x32xf32>, vector<8x32xf32> -> vector<8x32xf32>
    %1470 = arith.subf %1468, %1469 : vector<8x32xf32>
    %cst_546 = arith.constant dense<0.000000e+00> : vector<8xf32>
    %1471 = vector.multi_reduction <add>, %1470, %cst_546 [1] : vector<8x32xf32> to vector<8xf32>
    %1472 = vector.shape_cast %1471 : vector<8xf32> to vector<8x1xf32>
    %cst_547 = arith.constant 3.200000e+01 : f32
    %1473 = vector.broadcast %cst_547 : f32 to vector<8x1xf32>
    %1474 = arith.divf %1472, %1473 : vector<8x1xf32>
    %1475 = vector.broadcast %1474 : vector<8x1xf32> to vector<8x32xf32>
    %1476 = arith.subf %1470, %1475 : vector<8x32xf32>
    %1477 = arith.mulf %1476, %1476 : vector<8x32xf32>
    %cst_548 = arith.constant dense<0.000000e+00> : vector<8xf32>
    %1478 = vector.multi_reduction <add>, %1477, %cst_548 [1] : vector<8x32xf32> to vector<8xf32>
    %1479 = vector.shape_cast %1478 : vector<8xf32> to vector<8x1xf32>
    %cst_549 = arith.constant 3.200000e+01 : f32
    %1480 = vector.broadcast %cst_549 : f32 to vector<8x1xf32>
    %1481 = arith.divf %1479, %1480 : vector<8x1xf32>
    %1482 = vector.broadcast %1474 : vector<8x1xf32> to vector<8x32xf32>
    %1483 = arith.subf %1470, %1482 : vector<8x32xf32>
    %cst_550 = arith.constant 9.99999997E-7 : f32
    %1484 = vector.broadcast %cst_550 : f32 to vector<8x1xf32>
    %1485 = arith.addf %1481, %1484 : vector<8x1xf32>
    %1486 = math.rsqrt %1485 : vector<8x1xf32>
    %1487 = vector.broadcast %1486 : vector<8x1xf32> to vector<8x32xf32>
    %1488 = arith.mulf %1483, %1487 : vector<8x32xf32>
    %1489 = vector.broadcast %4 : vector<1x32xf32> to vector<8x32xf32>
    %1490 = arith.mulf %1489, %1488 : vector<8x32xf32>
    %1491 = arith.addf %1408, %1490 : vector<8x32xf32>
    %1492 = vector.broadcast %6 : vector<1x32xf32> to vector<8x32xf32>
    %1493 = arith.addf %1491, %1492 : vector<8x32xf32>
    %1494 = vector.extract_strided_slice %1403 {offsets = [0, 32], sizes = [8, 32], strides = [1, 1]} : vector<8x64xf32> to vector<8x32xf32>
    %1495 = vector.extract_strided_slice %1405 {offsets = [0, 32], sizes = [8, 32], strides = [1, 1]} : vector<8x64xf32> to vector<8x32xf32>
    %1496 = vector.extract_strided_slice %1407 {offsets = [0, 32], sizes = [8, 32], strides = [1, 1]} : vector<8x64xf32> to vector<8x32xf32>
    %c0_551 = arith.constant 0 : index
    %c1_552 = arith.constant 1 : index
    %c7_553 = arith.constant 7 : index
    %c0_554 = arith.constant 0 : index
    %1497 = vector.load %arg8[%c0_551, %c1_552, %c7_553, %c0_554] : memref<1x2x8x8xf32, #tpu.memory_space<vmem>>, vector<1x1x1x8xf32>
    %1498 = vector.shape_cast %1497 : vector<1x1x1x8xf32> to vector<1x8xf32>
    %cst_555 = arith.constant dense<0.000000e+00> : vector<8x32xf32>
    %1499 = tpu.matmul %1495, %1371, %cst_555 {dimension_numbers = #tpu.dot_dimension_numbers<[1], [0], [0], [1], [0, 0, 1, 1], [], []>} : vector<8x32xf32>, vector<32x32xf32>, vector<8x32xf32> -> vector<8x32xf32>
    %1500 = vector.broadcast %1374 : vector<1x32xf32> to vector<8x32xf32>
    %1501 = arith.addf %1499, %1500 : vector<8x32xf32>
    %1502 = arith.subf %1496, %1495 : vector<8x32xf32>
    %cst_556 = arith.constant dense<0.000000e+00> : vector<8xf32>
    %1503 = vector.multi_reduction <add>, %1501, %cst_556 [1] : vector<8x32xf32> to vector<8xf32>
    %1504 = vector.shape_cast %1503 : vector<8xf32> to vector<8x1xf32>
    %cst_557 = arith.constant 3.200000e+01 : f32
    %1505 = vector.broadcast %cst_557 : f32 to vector<8x1xf32>
    %1506 = arith.divf %1504, %1505 : vector<8x1xf32>
    %1507 = vector.broadcast %1506 : vector<8x1xf32> to vector<8x32xf32>
    %1508 = arith.subf %1501, %1507 : vector<8x32xf32>
    %1509 = arith.mulf %1508, %1508 : vector<8x32xf32>
    %cst_558 = arith.constant dense<0.000000e+00> : vector<8xf32>
    %1510 = vector.multi_reduction <add>, %1509, %cst_558 [1] : vector<8x32xf32> to vector<8xf32>
    %1511 = vector.shape_cast %1510 : vector<8xf32> to vector<8x1xf32>
    %cst_559 = arith.constant 3.200000e+01 : f32
    %1512 = vector.broadcast %cst_559 : f32 to vector<8x1xf32>
    %1513 = arith.divf %1511, %1512 : vector<8x1xf32>
    %cst_560 = arith.constant 9.99999997E-7 : f32
    %1514 = vector.broadcast %cst_560 : f32 to vector<8x1xf32>
    %1515 = arith.addf %1513, %1514 : vector<8x1xf32>
    %1516 = math.rsqrt %1515 : vector<8x1xf32>
    %1517 = vector.broadcast %1506 : vector<8x1xf32> to vector<8x32xf32>
    %1518 = arith.subf %1501, %1517 : vector<8x32xf32>
    %1519 = vector.broadcast %1516 : vector<8x1xf32> to vector<8x32xf32>
    %1520 = arith.mulf %1518, %1519 : vector<8x32xf32>
    %1521 = vector.broadcast %5 : vector<1x32xf32> to vector<8x32xf32>
    %1522 = arith.mulf %1521, %1520 : vector<8x32xf32>
    %1523 = vector.broadcast %7 : vector<1x32xf32> to vector<8x32xf32>
    %1524 = arith.addf %1522, %1523 : vector<8x32xf32>
    %1525 = arith.subf %1524, %1502 : vector<8x32xf32>
    %1526 = vector.broadcast %5 : vector<1x32xf32> to vector<8x32xf32>
    %1527 = arith.mulf %1526, %1525 : vector<8x32xf32>
    %cst_561 = arith.constant 3.200000e+01 : f32
    %1528 = vector.broadcast %cst_561 : f32 to vector<8x32xf32>
    %1529 = arith.mulf %1528, %1527 : vector<8x32xf32>
    %cst_562 = arith.constant dense<0.000000e+00> : vector<8xf32>
    %1530 = vector.multi_reduction <add>, %1527, %cst_562 [1] : vector<8x32xf32> to vector<8xf32>
    %1531 = vector.shape_cast %1530 : vector<8xf32> to vector<8x1xf32>
    %1532 = vector.broadcast %1531 : vector<8x1xf32> to vector<8x32xf32>
    %1533 = arith.subf %1529, %1532 : vector<8x32xf32>
    %1534 = arith.mulf %1527, %1520 : vector<8x32xf32>
    %cst_563 = arith.constant dense<0.000000e+00> : vector<8xf32>
    %1535 = vector.multi_reduction <add>, %1534, %cst_563 [1] : vector<8x32xf32> to vector<8xf32>
    %1536 = vector.shape_cast %1535 : vector<8xf32> to vector<8x1xf32>
    %1537 = vector.broadcast %1536 : vector<8x1xf32> to vector<8x32xf32>
    %1538 = arith.mulf %1520, %1537 : vector<8x32xf32>
    %1539 = arith.subf %1533, %1538 : vector<8x32xf32>
    %cst_564 = arith.constant 3.125000e-02 : f32
    %1540 = vector.broadcast %cst_564 : f32 to vector<8x1xf32>
    %1541 = arith.mulf %1516, %1540 : vector<8x1xf32>
    %1542 = vector.broadcast %1541 : vector<8x1xf32> to vector<8x32xf32>
    %1543 = arith.mulf %1539, %1542 : vector<8x32xf32>
    %cst_565 = arith.constant dense<0.000000e+00> : vector<8x8xf32>
    %1544 = tpu.matmul %1494, %1495, %cst_565 {dimension_numbers = #tpu.dot_dimension_numbers<[1], [1], [0], [0], [0, 0, 1, 0], [], []>} : vector<8x32xf32>, vector<8x32xf32>, vector<8x8xf32> -> vector<8x8xf32>
    %1545 = vector.shape_cast %1498 : vector<1x8xf32> to vector<1x8xf32>
    %1546 = vector.broadcast %1545 : vector<1x8xf32> to vector<8x8xf32>
    %cst_566 = arith.constant 1.000000e+00 : f32
    %1547 = vector.broadcast %cst_566 : f32 to vector<8x8xf32>
    %1548 = arith.addf %1544, %1547 : vector<8x8xf32>
    %1549 = arith.mulf %1546, %1548 : vector<8x8xf32>
    %cst_567 = arith.constant 0.000000e+00 : f32
    %1550 = vector.broadcast %cst_567 : f32 to vector<8x8xf32>
    %1551 = arith.select %2, %1549, %1550 : vector<8x8xi1>, vector<8x8xf32>
    %cst_568 = arith.constant dense<0.000000e+00> : vector<8x32xf32>
    %1552 = tpu.matmul %1494, %1371, %cst_568 {dimension_numbers = #tpu.dot_dimension_numbers<[1], [0], [0], [1], [0, 0, 1, 1], [], []>} : vector<8x32xf32>, vector<32x32xf32>, vector<8x32xf32> -> vector<8x32xf32>
    %1553 = vector.broadcast %1374 : vector<1x32xf32> to vector<8x32xf32>
    %1554 = arith.addf %1552, %1553 : vector<8x32xf32>
    %cst_569 = arith.constant dense<0.000000e+00> : vector<8x32xf32>
    %1555 = tpu.matmul %1551, %1543, %cst_569 {dimension_numbers = #tpu.dot_dimension_numbers<[1], [0], [0], [1], [0, 0, 1, 1], [], []>} : vector<8x8xf32>, vector<8x32xf32>, vector<8x32xf32> -> vector<8x32xf32>
    %1556 = arith.subf %1554, %1555 : vector<8x32xf32>
    %cst_570 = arith.constant dense<0.000000e+00> : vector<8xf32>
    %1557 = vector.multi_reduction <add>, %1556, %cst_570 [1] : vector<8x32xf32> to vector<8xf32>
    %1558 = vector.shape_cast %1557 : vector<8xf32> to vector<8x1xf32>
    %cst_571 = arith.constant 3.200000e+01 : f32
    %1559 = vector.broadcast %cst_571 : f32 to vector<8x1xf32>
    %1560 = arith.divf %1558, %1559 : vector<8x1xf32>
    %1561 = vector.broadcast %1560 : vector<8x1xf32> to vector<8x32xf32>
    %1562 = arith.subf %1556, %1561 : vector<8x32xf32>
    %1563 = arith.mulf %1562, %1562 : vector<8x32xf32>
    %cst_572 = arith.constant dense<0.000000e+00> : vector<8xf32>
    %1564 = vector.multi_reduction <add>, %1563, %cst_572 [1] : vector<8x32xf32> to vector<8xf32>
    %1565 = vector.shape_cast %1564 : vector<8xf32> to vector<8x1xf32>
    %cst_573 = arith.constant 3.200000e+01 : f32
    %1566 = vector.broadcast %cst_573 : f32 to vector<8x1xf32>
    %1567 = arith.divf %1565, %1566 : vector<8x1xf32>
    %1568 = vector.broadcast %1560 : vector<8x1xf32> to vector<8x32xf32>
    %1569 = arith.subf %1556, %1568 : vector<8x32xf32>
    %cst_574 = arith.constant 9.99999997E-7 : f32
    %1570 = vector.broadcast %cst_574 : f32 to vector<8x1xf32>
    %1571 = arith.addf %1567, %1570 : vector<8x1xf32>
    %1572 = math.rsqrt %1571 : vector<8x1xf32>
    %1573 = vector.broadcast %1572 : vector<8x1xf32> to vector<8x32xf32>
    %1574 = arith.mulf %1569, %1573 : vector<8x32xf32>
    %1575 = vector.broadcast %5 : vector<1x32xf32> to vector<8x32xf32>
    %1576 = arith.mulf %1575, %1574 : vector<8x32xf32>
    %1577 = arith.addf %1494, %1576 : vector<8x32xf32>
    %1578 = vector.broadcast %7 : vector<1x32xf32> to vector<8x32xf32>
    %1579 = arith.addf %1577, %1578 : vector<8x32xf32>
    %1580 = tpu.concatenate %1493, %1579 in 1 : vector<8x32xf32>, vector<8x32xf32> -> vector<8x64xf32>
    %c0_575 = arith.constant 0 : index
    %c7_576 = arith.constant 7 : index
    %c0_577 = arith.constant 0 : index
    %c0_578 = arith.constant 0 : index
    %1581 = vector.load %arg9[%c0_575, %c7_576, %c0_577, %c0_578] : memref<1x8x8x64xf32, #tpu.memory_space<vmem>>, vector<1x1x8x64xf32>
    %1582 = vector.shape_cast %1581 : vector<1x1x8x64xf32> to vector<8x64xf32>
    %1583 = vector.shape_cast %1580 : vector<8x64xf32> to vector<1x1x8x64xf32>
    tpu.vector_store %arg9[%c0_575, %c7_576, %c0_577, %c0_578], %1583 {strides = array<i32>} : memref<1x8x8x64xf32, #tpu.memory_space<vmem>>, vector<1x1x8x64xf32>,
    return
  }
  func.func @transform_0(%arg0: i32) -> (i32, i32) {
    %c0_i32 = arith.constant 0 : i32
    %c0_i32_0 = arith.constant 0 : i32
    %c0_i32_1 = arith.constant 0 : i32
    return %c0_i32, %c0_i32_0 : i32, i32
  }
  func.func @transform_1(%arg0: i32) -> (i32, i32) {
    %c0_i32 = arith.constant 0 : i32
    %c0_i32_0 = arith.constant 0 : i32
    %c0_i32_1 = arith.constant 0 : i32
    return %c0_i32, %c0_i32_0 : i32, i32
  }
  func.func @transform_2(%arg0: i32) -> (i32, i32, i32) {
    %c0_i32 = arith.constant 0 : i32
    %c0_i32_0 = arith.constant 0 : i32
    %c0_i32_1 = arith.constant 0 : i32
    %c0_i32_2 = arith.constant 0 : i32
    return %c0_i32, %c0_i32_0, %c0_i32_1 : i32, i32, i32
  }
  func.func @transform_3(%arg0: i32) -> (i32, i32, i32) {
    %c0_i32 = arith.constant 0 : i32
    %c0_i32_0 = arith.constant 0 : i32
    %c0_i32_1 = arith.constant 0 : i32
    %c0_i32_2 = arith.constant 0 : i32
    return %c0_i32, %c0_i32_0, %c0_i32_1 : i32, i32, i32
  }
  func.func @transform_4(%arg0: i32) -> (i32, i32, i32, i32) {
    %c0_i32 = arith.constant 0 : i32
    %c0_i32_0 = arith.constant 0 : i32
    %c0_i32_1 = arith.constant 0 : i32
    %c0_i32_2 = arith.constant 0 : i32
    return %arg0, %c0_i32, %c0_i32_0, %c0_i32_1 : i32, i32, i32, i32
  }
  func.func @transform_5(%arg0: i32) -> (i32, i32, i32, i32) {
    %c0_i32 = arith.constant 0 : i32
    %c0_i32_0 = arith.constant 0 : i32
    %c0_i32_1 = arith.constant 0 : i32
    %c0_i32_2 = arith.constant 0 : i32
    return %arg0, %c0_i32, %c0_i32_0, %c0_i32_1 : i32, i32, i32, i32
  }
  func.func @transform_6(%arg0: i32) -> (i32, i32, i32, i32) {
    %c0_i32 = arith.constant 0 : i32
    %c0_i32_0 = arith.constant 0 : i32
    %c0_i32_1 = arith.constant 0 : i32
    %c0_i32_2 = arith.constant 0 : i32
    return %arg0, %c0_i32, %c0_i32_0, %c0_i32_1 : i32, i32, i32, i32
  }
  func.func @transform_7(%arg0: i32) -> (i32, i32, i32, i32) {
    %c0_i32 = arith.constant 0 : i32
    %c0_i32_0 = arith.constant 0 : i32
    %c0_i32_1 = arith.constant 0 : i32
    %c0_i32_2 = arith.constant 0 : i32
    return %arg0, %c0_i32, %c0_i32_0, %c0_i32_1 : i32, i32, i32, i32
  }
  func.func @transform_8(%arg0: i32) -> (i32, i32, i32, i32) {
    %c0_i32 = arith.constant 0 : i32
    %c0_i32_0 = arith.constant 0 : i32
    %c0_i32_1 = arith.constant 0 : i32
    %c0_i32_2 = arith.constant 0 : i32
    return %arg0, %c0_i32, %c0_i32_0, %c0_i32_1 : i32, i32, i32, i32
  }
}

</mosaic_0001>

<llo_original>
// kernel: tpu_custom_call.1
$region0: #{tpu_custom_call.1}
  #allocation0 [shape = 'u32[]', space=smem, size = 0x4, offset = 0x4, fixed_abs, tag = 'smem constant byte address 0x4 - core index']
  #allocation1 [shape = 'u32[72,128]{1,0:T(1,128)}', space=vmem, size = 0x9000, scoped, tag = 'internal scratch']
  %s0 = inlined_call_operand.hbm [shape: f32[2,32], index: 0, kind: input, shape index: {}]
  %s1 = inlined_call_operand.hbm [shape: f32[2,32], index: 1, kind: input, shape index: {}]
  %s2 = inlined_call_operand.hbm [shape: f32[2,32,32], index: 2, kind: input, shape index: {}]
  %s3 = inlined_call_operand.vmem [shape: f32[2,1,32], index: 3, kind: input, shape index: {}]
  %s4 = inlined_call_operand.hbm [shape: f32[2,8,8,64], index: 4, kind: input, shape index: {}]
  %s5 = inlined_call_operand.hbm [shape: f32[2,8,8,64], index: 5, kind: input, shape index: {}]
  %s6 = inlined_call_operand.hbm [shape: f32[2,8,8,64], index: 6, kind: input, shape index: {}]
  %s7 = inlined_call_operand.hbm [shape: f32[2,2,8,8], index: 7, kind: input, shape index: {}]
  %s8 = inlined_call_operand.hbm [shape: f32[2,8,8,64], index: 8, kind: output, shape index: {}]
  %s9 = sld [smem:[#allocation0]]
  $region93: #{tpu_custom_call.1} parent=0
    _
  %s11 = ssub.s32 1, %s9
  %s12 = scalar_select 0, %s11, %s9
  $region1: #{tpu_custom_call.1} parent=0
    #allocation2 [shape = 'u8[1024]{0}', space=vmem, size = 0x400, scoped, tag = 'input window, operand 0, single buffered']
    #allocation3 [shape = 's32[2]{0}', space=sflag, size = 0x8, scoped, tag = 'scoped memory for tpu_custom_call.1']
    #allocation4 [shape = 's32[2]{0}', space=sflag, size = 0x8, scoped, tag = 'scoped memory for tpu_custom_call.1']
    #allocation5 [shape = 'u8[1024]{0}', space=vmem, size = 0x400, scoped, tag = 'input window, operand 1, single buffered']
    #allocation6 [shape = 's32[1]{0}', space=sflag, size = 0x4, scoped, tag = 'scoped memory for tpu_custom_call.1']
    #allocation7 [shape = 'u8[32768]{0}', space=vmem, size = 0x8000, scoped, tag = 'input window, operand 2, single buffered']
    #allocation8 [shape = 'u8[65536]{0}', space=vmem, size = 0x10000, scoped, tag = 'input window, operand 4']
    #allocation9 [shape = 's32[2]{0}', space=sflag, size = 0x8, scoped, tag = 'scoped memory for tpu_custom_call.1']
    #allocation10 [shape = 'u8[65536]{0}', space=vmem, size = 0x10000, scoped, tag = 'input window, operand 5']
    #allocation11 [shape = 'u8[65536]{0}', space=vmem, size = 0x10000, scoped, tag = 'input window, operand 6']
    #allocation12 [shape = 's32[2]{0}', space=sflag, size = 0x8, scoped, tag = 'scoped memory for tpu_custom_call.1']
    #allocation13 [shape = 'u8[16384]{0}', space=vmem, size = 0x4000, scoped, tag = 'input window, operand 7']
    #allocation14 [shape = 'u8[65536]{0}', space=vmem, size = 0x10000, scoped, tag = 'output window, operand 0']
    %13 = vsyncpa [#allocation3], 0
    %14 = vsyncpa [#allocation6], 0
    %15 = vsyncpa [#allocation9], 0
    %s16 = scalar_lea.sflag [#allocation9], 1
    %17 = vsyncpa %s16, 0
    %18 = vsyncpa [#allocation12], 0
    %s19 = scalar_lea.sflag [#allocation12], 1
    %20 = vsyncpa %s19, 0
    %21 = vsyncpa [#allocation4], 0
    %s22 = scalar_lea.sflag [#allocation4], 1
    %23 = vsyncpa %s22, 0
    loop: start=0, step=1, limit=4
    $region2: #{tpu_custom_call.1} parent=1 // loop_pre_header
      _
    $region3: #{tpu_custom_call.1} parent=1 // loop_header
      %s25 = sphi 0, %s29
      %p26 = scmp.ge.s32.totalorder %s25, 4
      %s33 = sphi 0, %s33
      %s35 = sphi 0, %s33
      %s36 = sphi 0, %s35
      %s50 = sphi 0, %s36
      %s54 = sphi 0, %s54
      %s56 = sphi 0, %s54
      %s57 = sphi 0, %s56
      %s71 = sphi 0, %s57
      %s75 = sphi 0, %s75
      %s77 = sphi 0, %s75
      %s78 = sphi 0, %s77
      %s92 = sphi 0, %s78
      %s96 = sphi 0, %s96
      %s98 = sphi 0, %s96
      %s99 = sphi 0, %s98
      %s113 = sphi 0, %s99
      %s119 = sphi 0, %s121
      %s122 = sphi 0, %s119
      %s123 = sphi 0, %s122
      %s139 = sphi 0, %s123
      %s145 = sphi 0, %s147
      %s148 = sphi 0, %s145
      %s149 = sphi 0, %s148
      %s165 = sphi 0, %s149
      %s171 = sphi 0, %s173
      %s174 = sphi 0, %s171
      %s175 = sphi 0, %s174
      %s191 = sphi 0, %s175
      %s197 = sphi 0, %s199
      %s200 = sphi 0, %s197
      %s201 = sphi 0, %s200
      %s217 = sphi 0, %s201
      %s223 = sphi 0, %s225
      %s226 = sphi 0, %s223
      %s227 = sphi 0, %s226
      %s243 = sphi 0, %s227
    $region4: #{tpu_custom_call.1} parent=1 // loop_header_branch
      %28 = sbr.rel (%p26) target = $region8
    $region5: #{tpu_custom_call.1} parent=1 // loop_body
      %s30 = ssub.s32 %s25, 1
      %s31 = ssub.s32 %s25, 2
      %s32 = sadd.s32 %s25, 1
      %s34 = sadd.s32 %s33, 1
      %p37 = scmp.eq.s32.totalorder %s25, 1
      %p38 = scmp.ne.s32.totalorder %s33, %s35
      %p39 = scmp.eq.s32.totalorder %s25, 0
      %p40 = por %p38, %p39
      %p41 = scmp.ne.s32.totalorder %s33, %s35
      %p42 = scmp.eq.s32.totalorder %s30, 1
      %p43 = por %p41, %p42
      %p44 = scmp.ne.s32.totalorder %s35, %s36
      %p45 = scmp.eq.s32.totalorder %s30, 0
      %p46 = por %p44, %p45
      %p47 = scmp.ne.s32.totalorder %s35, %s36
      %p48 = scmp.eq.s32.totalorder %s31, 1
      %p49 = por %p47, %p48
      %p51 = scmp.ne.s32.totalorder %s36, %s50
      %p52 = scmp.eq.s32.totalorder %s31, 0
      %p53 = por %p51, %p52
      %s55 = sadd.s32 %s54, 1
      %p58 = scmp.eq.s32.totalorder %s25, 1
      %p59 = scmp.ne.s32.totalorder %s54, %s56
      %p60 = scmp.eq.s32.totalorder %s25, 0
      %p61 = por %p59, %p60
      %p62 = scmp.ne.s32.totalorder %s54, %s56
      %p63 = scmp.eq.s32.totalorder %s30, 1
      %p64 = por %p62, %p63
      %p65 = scmp.ne.s32.totalorder %s56, %s57
      %p66 = scmp.eq.s32.totalorder %s30, 0
      %p67 = por %p65, %p66
      %p68 = scmp.ne.s32.totalorder %s56, %s57
      %p69 = scmp.eq.s32.totalorder %s31, 1
      %p70 = por %p68, %p69
      %p72 = scmp.ne.s32.totalorder %s57, %s71
      %p73 = scmp.eq.s32.totalorder %s31, 0
      %p74 = por %p72, %p73
      %s76 = sadd.s32 %s75, 1
      %p79 = scmp.eq.s32.totalorder %s25, 1
      %p80 = scmp.ne.s32.totalorder %s75, %s77
      %p81 = scmp.eq.s32.totalorder %s25, 0
      %p82 = por %p80, %p81
      %p83 = scmp.ne.s32.totalorder %s75, %s77
      %p84 = scmp.eq.s32.totalorder %s30, 1
      %p85 = por %p83, %p84
      %p86 = scmp.ne.s32.totalorder %s77, %s78
      %p87 = scmp.eq.s32.totalorder %s30, 0
      %p88 = por %p86, %p87
      %p89 = scmp.ne.s32.totalorder %s77, %s78
      %p90 = scmp.eq.s32.totalorder %s31, 1
      %p91 = por %p89, %p90
      %p93 = scmp.ne.s32.totalorder %s78, %s92
      %p94 = scmp.eq.s32.totalorder %s31, 0
      %p95 = por %p93, %p94
      %s97 = sadd.s32 %s96, 1
      %p100 = scmp.eq.s32.totalorder %s25, 1
      %p101 = scmp.ne.s32.totalorder %s96, %s98
      %p102 = scmp.eq.s32.totalorder %s25, 0
      %p103 = por %p101, %p102
      %p104 = scmp.ne.s32.totalorder %s96, %s98
      %p105 = scmp.eq.s32.totalorder %s30, 1
      %p106 = por %p104, %p105
      %p107 = scmp.ne.s32.totalorder %s98, %s99
      %p108 = scmp.eq.s32.totalorder %s30, 0
      %p109 = por %p107, %p108
      %p110 = scmp.ne.s32.totalorder %s98, %s99
      %p111 = scmp.eq.s32.totalorder %s31, 1
      %p112 = por %p110, %p111
      %p114 = scmp.ne.s32.totalorder %s99, %s113
      %p115 = scmp.eq.s32.totalorder %s31, 0
      %p116 = por %p114, %p115
      %s117 = ssub.s32 %s25, %s32
      %p118 = scmp.eq.s32.totalorder %s117, 0
      %s120 = sadd.s32 %s119, 1
      %s121 = scalar_select %p118, %s119, %s120
      %p124 = pneg %p118
      %p125 = scmp.eq.s32.totalorder %s25, 1
      %p126 = por %p124, %p125
      %p127 = scmp.ne.s32.totalorder %s119, %s122
      %p128 = scmp.eq.s32.totalorder %s25, 0
      %p129 = por %p127, %p128
      %p130 = scmp.ne.s32.totalorder %s119, %s122
      %p131 = scmp.eq.s32.totalorder %s30, 1
      %p132 = por %p130, %p131
      %p133 = scmp.ne.s32.totalorder %s122, %s123
      %p134 = scmp.eq.s32.totalorder %s30, 0
      %p135 = por %p133, %p134
      %p136 = scmp.ne.s32.totalorder %s122, %s123
      %p137 = scmp.eq.s32.totalorder %s31, 1
      %p138 = por %p136, %p137
      %p140 = scmp.ne.s32.totalorder %s123, %s139
      %p141 = scmp.eq.s32.totalorder %s31, 0
      %p142 = por %p140, %p141
      %s143 = ssub.s32 %s25, %s32
      %p144 = scmp.eq.s32.totalorder %s143, 0
      %s146 = sadd.s32 %s145, 1
      %s147 = scalar_select %p144, %s145, %s146
      %p150 = pneg %p144
      %p151 = scmp.eq.s32.totalorder %s25, 1
      %p152 = por %p150, %p151
      %p153 = scmp.ne.s32.totalorder %s145, %s148
      %p154 = scmp.eq.s32.totalorder %s25, 0
      %p155 = por %p153, %p154
      %p156 = scmp.ne.s32.totalorder %s145, %s148
      %p157 = scmp.eq.s32.totalorder %s30, 1
      %p158 = por %p156, %p157
      %p159 = scmp.ne.s32.totalorder %s148, %s149
      %p160 = scmp.eq.s32.totalorder %s30, 0
      %p161 = por %p159, %p160
      %p162 = scmp.ne.s32.totalorder %s148, %s149
      %p163 = scmp.eq.s32.totalorder %s31, 1
      %p164 = por %p162, %p163
      %p166 = scmp.ne.s32.totalorder %s149, %s165
      %p167 = scmp.eq.s32.totalorder %s31, 0
      %p168 = por %p166, %p167
      %s169 = ssub.s32 %s25, %s32
      %p170 = scmp.eq.s32.totalorder %s169, 0
      %s172 = sadd.s32 %s171, 1
      %s173 = scalar_select %p170, %s171, %s172
      %p176 = pneg %p170
      %p177 = scmp.eq.s32.totalorder %s25, 1
      %p178 = por %p176, %p177
      %p179 = scmp.ne.s32.totalorder %s171, %s174
      %p180 = scmp.eq.s32.totalorder %s25, 0
      %p181 = por %p179, %p180
      %p182 = scmp.ne.s32.totalorder %s171, %s174
      %p183 = scmp.eq.s32.totalorder %s30, 1
      %p184 = por %p182, %p183
      %p185 = scmp.ne.s32.totalorder %s174, %s175
      %p186 = scmp.eq.s32.totalorder %s30, 0
      %p187 = por %p185, %p186
      %p188 = scmp.ne.s32.totalorder %s174, %s175
      %p189 = scmp.eq.s32.totalorder %s31, 1
      %p190 = por %p188, %p189
      %p192 = scmp.ne.s32.totalorder %s175, %s191
      %p193 = scmp.eq.s32.totalorder %s31, 0
      %p194 = por %p192, %p193
      %s195 = ssub.s32 %s25, %s32
      %p196 = scmp.eq.s32.totalorder %s195, 0
      %s198 = sadd.s32 %s197, 1
      %s199 = scalar_select %p196, %s197, %s198
      %p202 = pneg %p196
      %p203 = scmp.eq.s32.totalorder %s25, 1
      %p204 = por %p202, %p203
      %p205 = scmp.ne.s32.totalorder %s197, %s200
      %p206 = scmp.eq.s32.totalorder %s25, 0
      %p207 = por %p205, %p206
      %p208 = scmp.ne.s32.totalorder %s197, %s200
      %p209 = scmp.eq.s32.totalorder %s30, 1
      %p210 = por %p208, %p209
      %p211 = scmp.ne.s32.totalorder %s200, %s201
      %p212 = scmp.eq.s32.totalorder %s30, 0
      %p213 = por %p211, %p212
      %p214 = scmp.ne.s32.totalorder %s200, %s201
      %p215 = scmp.eq.s32.totalorder %s31, 1
      %p216 = por %p214, %p215
      %p218 = scmp.ne.s32.totalorder %s201, %s217
      %p219 = scmp.eq.s32.totalorder %s31, 0
      %p220 = por %p218, %p219
      %s221 = ssub.s32 %s25, %s32
      %p222 = scmp.eq.s32.totalorder %s221, 0
      %s224 = sadd.s32 %s223, 1
      %s225 = scalar_select %p222, %s223, %s224
      %p228 = pneg %p222
      %p229 = scmp.eq.s32.totalorder %s25, 1
      %p230 = por %p228, %p229
      %p231 = scmp.ne.s32.totalorder %s223, %s226
      %p232 = scmp.eq.s32.totalorder %s25, 0
      %p233 = por %p231, %p232
      %p234 = scmp.ne.s32.totalorder %s223, %s226
      %p235 = scmp.eq.s32.totalorder %s30, 1
      %p236 = por %p234, %p235
      %p237 = scmp.ne.s32.totalorder %s226, %s227
      %p238 = scmp.eq.s32.totalorder %s30, 0
      %p239 = por %p237, %p238
      %p240 = scmp.ne.s32.totalorder %s226, %s227
      %p241 = scmp.eq.s32.totalorder %s31, 1
      %p242 = por %p240, %p241
      %p244 = scmp.ne.s32.totalorder %s227, %s243
      %p245 = scmp.eq.s32.totalorder %s31, 0
      %p246 = por %p244, %p245
      %p247 = scmp.le.s32.totalorder 1, %s25
      %p248 = scmp.lt.s32.totalorder %s25, 3
      %p249 = pnand %p247, %p248
      %p250 = pneg %p249
      // Predicated region
      $region9: #{tpu_custom_call.1} parent=5 // pred_check
        _
      $region10: #{tpu_custom_call.1} parent=5 // pred_check_branch
        %252 = sbr.rel (%p249) target = $region12
      $region11: #{tpu_custom_call.1} parent=5 // pred_region
        %s253 = ssub.s32 %s25, 1
        // Predicated region
        $region13: #{tpu_custom_call.1} parent=11 // pred_check
          %p254 = pneg %p46
        $region14: #{tpu_custom_call.1} parent=11 // pred_check_branch
          %256 = sbr.rel (%p254) target = $region16
        $region15: #{tpu_custom_call.1} parent=11 // pred_region
          %258 = vsyncadd [#allocation3], 0
          %s260 = sshll.u32 %s0, 4
          %s261 = int_to_ptr.hbm [resolvable:$true] %s260
          %s262 = sshll.u32 [#allocation2], 4
          %s263 = int_to_ptr.vmem [resolvable:$true] %s262
          %265 = dma.hbm_to_vmem [thread:$0]  %s261, 32, %s263, [#allocation3]
        $region16: #{tpu_custom_call.1} parent=11 // pred_fallthru
          _
        // Predicated region
        $region17: #{tpu_custom_call.1} parent=11 // pred_check
          %p266 = pneg %p67
        $region18: #{tpu_custom_call.1} parent=11 // pred_check_branch
          %268 = sbr.rel (%p266) target = $region20
        $region19: #{tpu_custom_call.1} parent=11 // pred_region
          %270 = vsyncadd [#allocation6], 0
          %s272 = sshll.u32 %s1, 4
          %s273 = int_to_ptr.hbm [resolvable:$true] %s272
          %s274 = sshll.u32 [#allocation5], 4
          %s275 = int_to_ptr.vmem [resolvable:$true] %s274
          %277 = dma.hbm_to_vmem [thread:$0]  %s273, 32, %s275, [#allocation6]
        $region20: #{tpu_custom_call.1} parent=11 // pred_fallthru
          _
        // Predicated region
        $region21: #{tpu_custom_call.1} parent=11 // pred_check
          %p278 = pneg %p88
        $region22: #{tpu_custom_call.1} parent=11 // pred_check_branch
          %280 = sbr.rel (%p278) target = $region24
        $region23: #{tpu_custom_call.1} parent=11 // pred_region
          %282 = vsyncadd [#allocation6], 0
          %s283 = sshll.u32 %s2, 4
          %s284 = int_to_ptr.hbm [resolvable:$true] %s283
          %s285 = sshll.u32 [#allocation7], 4
          %s286 = int_to_ptr.vmem [resolvable:$true] %s285
          %291 = dma.hbm_to_vmem [thread:$0]  %s284, 1024, %s286, [#allocation6], 128, 128, 8
        $region24: #{tpu_custom_call.1} parent=11 // pred_fallthru
          _
        // Predicated region
        $region25: #{tpu_custom_call.1} parent=11 // pred_check
          %p292 = pneg %p109
        $region26: #{tpu_custom_call.1} parent=11 // pred_check_branch
          %294 = sbr.rel (%p292) target = $region28
        $region27: #{tpu_custom_call.1} parent=11 // pred_region
          _
        $region28: #{tpu_custom_call.1} parent=11 // pred_fallthru
          _
      $region12: #{tpu_custom_call.1} parent=5 // pred_fallthru
        _
      %p295 = scmp.lt.s32.totalorder %s25, 2
      // Predicated region
      $region29: #{tpu_custom_call.1} parent=5 // pred_check
        %p296 = pneg %p295
      $region30: #{tpu_custom_call.1} parent=5 // pred_check_branch
        %298 = sbr.rel (%p296) target = $region32
      $region31: #{tpu_custom_call.1} parent=5 // pred_region
        // Predicated region
        $region33: #{tpu_custom_call.1} parent=31 // pred_check
          %p299 = pneg %p129
        $region34: #{tpu_custom_call.1} parent=31 // pred_check_branch
          %301 = sbr.rel (%p299) target = $region36
        $region35: #{tpu_custom_call.1} parent=31 // pred_region
          %s302 = sand.u32 %s25, 1
          %s303 = scalar_lea.sflag [#allocation9], %s302
          %s304 = sand.u32 %s119, 1
          %s305 = smul.addr %s304, 64
          %s306 = scalar_lea.vmem [#allocation8], %s305
          %308 = vsyncadd %s303, 0
          %s309 = smul.addr %s25, 8
          %s310 = smul.addr %s309, 8
          %s311 = scalar_lea.hbm %s4, %s310
          %s312 = sshll.u32 %s311, 4
          %s313 = int_to_ptr.hbm [resolvable:$true] %s312
          %s314 = sshll.u32 %s306, 4
          %s315 = int_to_ptr.vmem [resolvable:$true] %s314
          %320 = dma.hbm_to_vmem [thread:$0]  %s313, 1024, %s315, %s303, 128, 128, 8
        $region36: #{tpu_custom_call.1} parent=31 // pred_fallthru
          _
        // Predicated region
        $region37: #{tpu_custom_call.1} parent=31 // pred_check
          %p321 = pneg %p155
        $region38: #{tpu_custom_call.1} parent=31 // pred_check_branch
          %323 = sbr.rel (%p321) target = $region40
        $region39: #{tpu_custom_call.1} parent=31 // pred_region
          %s324 = sand.u32 %s25, 1
          %s325 = scalar_lea.sflag [#allocation9], %s324
          %s326 = sand.u32 %s145, 1
          %s327 = smul.addr %s326, 64
          %s328 = scalar_lea.vmem [#allocation10], %s327
          %330 = vsyncadd %s325, 0
          %s331 = smul.addr %s25, 8
          %s332 = smul.addr %s331, 8
          %s333 = scalar_lea.hbm %s5, %s332
          %s334 = sshll.u32 %s333, 4
          %s335 = int_to_ptr.hbm [resolvable:$true] %s334
          %s336 = sshll.u32 %s328, 4
          %s337 = int_to_ptr.vmem [resolvable:$true] %s336
          %342 = dma.hbm_to_vmem [thread:$0]  %s335, 1024, %s337, %s325, 128, 128, 8
        $region40: #{tpu_custom_call.1} parent=31 // pred_fallthru
          _
        // Predicated region
        $region41: #{tpu_custom_call.1} parent=31 // pred_check
          %p343 = pneg %p181
        $region42: #{tpu_custom_call.1} parent=31 // pred_check_branch
          %345 = sbr.rel (%p343) target = $region44
        $region43: #{tpu_custom_call.1} parent=31 // pred_region
          %s346 = sand.u32 %s25, 1
          %s347 = scalar_lea.sflag [#allocation12], %s346
          %s348 = sand.u32 %s171, 1
          %s349 = smul.addr %s348, 64
          %s350 = scalar_lea.vmem [#allocation11], %s349
          %352 = vsyncadd %s347, 0
          %s353 = smul.addr %s25, 8
          %s354 = smul.addr %s353, 8
          %s355 = scalar_lea.hbm %s6, %s354
          %s356 = sshll.u32 %s355, 4
          %s357 = int_to_ptr.hbm [resolvable:$true] %s356
          %s358 = sshll.u32 %s350, 4
          %s359 = int_to_ptr.vmem [resolvable:$true] %s358
          %364 = dma.hbm_to_vmem [thread:$0]  %s357, 1024, %s359, %s347, 128, 128, 8
        $region44: #{tpu_custom_call.1} parent=31 // pred_fallthru
          _
        // Predicated region
        $region45: #{tpu_custom_call.1} parent=31 // pred_check
          %p365 = pneg %p207
        $region46: #{tpu_custom_call.1} parent=31 // pred_check_branch
          %367 = sbr.rel (%p365) target = $region48
        $region47: #{tpu_custom_call.1} parent=31 // pred_region
          %s368 = sand.u32 %s25, 1
          %s369 = scalar_lea.sflag [#allocation12], %s368
          %s370 = sand.u32 %s197, 1
          %s371 = smul.addr %s370, 16
          %s372 = scalar_lea.vmem [#allocation13], %s371
          %374 = vsyncadd %s369, 0
          %s375 = smul.addr %s25, 2
          %s376 = smul.addr %s375, 8
          %s377 = scalar_lea.hbm %s7, %s376
          %s378 = sshll.u32 %s377, 4
          %s379 = int_to_ptr.hbm [resolvable:$true] %s378
          %s380 = sshll.u32 %s372, 4
          %s381 = int_to_ptr.vmem [resolvable:$true] %s380
          %386 = dma.hbm_to_vmem [thread:$0]  %s379, 256, %s381, %s369, 128, 128, 8
        $region48: #{tpu_custom_call.1} parent=31 // pred_fallthru
          _
      $region32: #{tpu_custom_call.1} parent=5 // pred_fallthru
        _
      %p387 = scmp.le.s32.totalorder 1, %s25
      %p388 = scmp.lt.s32.totalorder %s25, 3
      %p389 = pnand %p387, %p388
      %p390 = pneg %p389
      // Predicated region
      $region49: #{tpu_custom_call.1} parent=5 // pred_check
        _
      $region50: #{tpu_custom_call.1} parent=5 // pred_check_branch
        %392 = sbr.rel (%p389) target = $region52
      $region51: #{tpu_custom_call.1} parent=5 // pred_region
        %s393 = ssub.s32 %s25, 1
        // Predicated region
        $region53: #{tpu_custom_call.1} parent=51 // pred_check
          %p394 = pneg %p46
        $region54: #{tpu_custom_call.1} parent=51 // pred_check_branch
          %396 = sbr.rel (%p394) target = $region56
        $region55: #{tpu_custom_call.1} parent=51 // pred_region
          %398 = dma.done [#allocation3], 32
        $region56: #{tpu_custom_call.1} parent=51 // pred_fallthru
          _
        // Predicated region
        $region57: #{tpu_custom_call.1} parent=51 // pred_check
          %p399 = pneg %p67
        $region58: #{tpu_custom_call.1} parent=51 // pred_check_branch
          %401 = sbr.rel (%p399) target = $region60
        $region59: #{tpu_custom_call.1} parent=51 // pred_region
          %403 = dma.done [#allocation6], 32
        $region60: #{tpu_custom_call.1} parent=51 // pred_fallthru
          _
        // Predicated region
        $region61: #{tpu_custom_call.1} parent=51 // pred_check
          %p404 = pneg %p88
        $region62: #{tpu_custom_call.1} parent=51 // pred_check_branch
          %406 = sbr.rel (%p404) target = $region64
        $region63: #{tpu_custom_call.1} parent=51 // pred_region
          %408 = dma.done [#allocation6], 1024
        $region64: #{tpu_custom_call.1} parent=51 // pred_fallthru
          _
        %s409 = sand.u32 %s30, 1
        %s410 = scalar_lea.sflag [#allocation9], %s409
        %s411 = sand.u32 %s122, 1
        %s412 = smul.addr %s411, 64
        %s413 = scalar_lea.vmem [#allocation8], %s412
        // Predicated region
        $region65: #{tpu_custom_call.1} parent=51 // pred_check
          %p414 = pneg %p135
        $region66: #{tpu_custom_call.1} parent=51 // pred_check_branch
          %416 = sbr.rel (%p414) target = $region68
        $region67: #{tpu_custom_call.1} parent=51 // pred_region
          %418 = dma.done %s410, 1024
        $region68: #{tpu_custom_call.1} parent=51 // pred_fallthru
          _
        %s419 = sand.u32 %s30, 1
        %s420 = scalar_lea.sflag [#allocation9], %s419
        %s421 = sand.u32 %s148, 1
        %s422 = smul.addr %s421, 64
        %s423 = scalar_lea.vmem [#allocation10], %s422
        // Predicated region
        $region69: #{tpu_custom_call.1} parent=51 // pred_check
          %p424 = pneg %p161
        $region70: #{tpu_custom_call.1} parent=51 // pred_check_branch
          %426 = sbr.rel (%p424) target = $region72
        $region71: #{tpu_custom_call.1} parent=51 // pred_region
          %428 = dma.done %s420, 1024
        $region72: #{tpu_custom_call.1} parent=51 // pred_fallthru
          _
        %s429 = sand.u32 %s30, 1
        %s430 = scalar_lea.sflag [#allocation12], %s429
        %s431 = sand.u32 %s174, 1
        %s432 = smul.addr %s431, 64
        %s433 = scalar_lea.vmem [#allocation11], %s432
        // Predicated region
        $region73: #{tpu_custom_call.1} parent=51 // pred_check
          %p434 = pneg %p187
        $region74: #{tpu_custom_call.1} parent=51 // pred_check_branch
          %436 = sbr.rel (%p434) target = $region76
        $region75: #{tpu_custom_call.1} parent=51 // pred_region
          %438 = dma.done %s430, 1024
        $region76: #{tpu_custom_call.1} parent=51 // pred_fallthru
          _
        %s439 = sand.u32 %s30, 1
        %s440 = scalar_lea.sflag [#allocation12], %s439
        %s441 = sand.u32 %s200, 1
        %s442 = smul.addr %s441, 16
        %s443 = scalar_lea.vmem [#allocation13], %s442
        // Predicated region
        $region77: #{tpu_custom_call.1} parent=51 // pred_check
          %p444 = pneg %p213
        $region78: #{tpu_custom_call.1} parent=51 // pred_check_branch
          %446 = sbr.rel (%p444) target = $region80
        $region79: #{tpu_custom_call.1} parent=51 // pred_region
          %448 = dma.done %s440, 256
        $region80: #{tpu_custom_call.1} parent=51 // pred_fallthru
          _
        %p449 = pneg %p46
        %p450 = pneg %p43
        %p451 = pneg %p67
        %p452 = pneg %p64
        %p453 = pneg %p88
        %p454 = pneg %p85
        %p455 = pneg %p109
        %p456 = pneg %p106
        %s457 = sand.u32 %s30, 1
        %s458 = scalar_lea.sflag [#allocation9], %s457
        %s459 = sand.u32 %s122, 1
        %s460 = smul.addr %s459, 64
        %s461 = scalar_lea.vmem [#allocation8], %s460
        %p462 = pneg %p135
        %p463 = pneg %p132
        %s464 = sand.u32 %s30, 1
        %s465 = scalar_lea.sflag [#allocation9], %s464
        %s466 = sand.u32 %s148, 1
        %s467 = smul.addr %s466, 64
        %s468 = scalar_lea.vmem [#allocation10], %s467
        %p469 = pneg %p161
        %p470 = pneg %p158
        %s471 = sand.u32 %s30, 1
        %s472 = scalar_lea.sflag [#allocation12], %s471
        %s473 = sand.u32 %s174, 1
        %s474 = smul.addr %s473, 64
        %s475 = scalar_lea.vmem [#allocation11], %s474
        %p476 = pneg %p187
        %p477 = pneg %p184
        %s478 = sand.u32 %s30, 1
        %s479 = scalar_lea.sflag [#allocation12], %s478
        %s480 = sand.u32 %s200, 1
        %s481 = smul.addr %s480, 16
        %s482 = scalar_lea.vmem [#allocation13], %s481
        %p483 = pneg %p213
        %p484 = pneg %p210
        %p485 = pneg %p239
        %p486 = pneg %p236
        %s487 = sand.u32 %s226, 1
        %s488 = scalar_lea.sflag [#allocation4], %s487
        %s489 = sand.u32 %s226, 1
        %s490 = smul.addr %s489, 64
        %s491 = scalar_lea.vmem [#allocation14], %s490
        %v492 = vlaneseq
        %v493 = vshrl.u32 %v492, 7
        %v494 = vlaneseq
        %v495 = vand.u32 %v494, 127
        %vm496 = vcmp.ge.s32.totalorder %v493, %v495
        %vm497 = vcmp.eq.s32.totalorder %v493, %v495
        %v498 = vld [vmem:[#allocation2] sm:$0x1]
        %v499 = vld [vmem:[#allocation2 + $0x1] sm:$0x1]
        %v500 = vld [vmem:[#allocation5] sm:$0x1]
        %v501 = vld [vmem:[#allocation5 + $0x1] sm:$0x1]
        %v502 = vld [vmem:[#allocation7] sm:$0xff]
        %v503 = vld [vmem:[#allocation7 + $0x8] sm:$0xff]
        %v504 = vld [vmem:[#allocation7 + $0x10] sm:$0xff]
        %v505 = vld [vmem:[#allocation7 + $0x18] sm:$0xff]
        %s506 = scalar_lea.vmem [#allocation7], 32
        %v507 = vld [vmem:[%s506] sm:$0xff]
        %v508 = vld [vmem:[%s506 + $0x8] sm:$0xff]
        %v509 = vld [vmem:[%s506 + $0x10] sm:$0xff]
        %v510 = vld [vmem:[%s506 + $0x18] sm:$0xff]
        %v511 = vld [vmem:[%s3] sm:$0x1]
        %s512 = scalar_lea.vmem %s3, 1
        %v513 = vld [vmem:[%s512] sm:$0x1]
        %v514 = vld [vmem:[%s413] sm:$0xff]
        %v515 = vld [vmem:[%s423] sm:$0xff]
        %v516 = vld [vmem:[%s433] sm:$0xff]
        %v517 = vld [vmem:[%s443] sm:$0x1]
        %v519 = vperm.slane %v511, 0
        %vm521 = vcmask 261120
        %v523 = vsel %vm521, %v515, 0
        %525 = vmatpush.msra.mxu0 0.0
        %526 = vmatpush.msra.mxu0 0.0
        %527 = vmatpush.msra.mxu0 0.0
        %528 = vmatpush.msra.mxu0 0.0
        %529 = vmatpush.msra.mxu0 0.0
        %530 = vmatpush.msra.mxu0 0.0
        %531 = vmatpush.msra.mxu0 0.0
        %532 = vmatpush.msra.mxu0 0.0
        %533 = vmatpush.msra.mxu0 0.0
        %534 = vmatpush.msra.mxu0 0.0
        %535 = vmatpush.msra.mxu0 0.0
        %536 = vmatpush.msra.mxu0 0.0
        %537 = vmatpush.msra.mxu0 %v505
        %538 = vmatpush.msra.mxu0 %v504
        %539 = vmatpush.msra.mxu0 %v503
        %540 = vmatpush.msra.mxu0 %v502
        %541 = vmatmul.f32.gmra.mxu0 %v523
        %v542 = vpop.f32.mrf.mxu0
        %v543 = vadd.f32 %v519, %v542
        %544 = vdwg.mxu0
        %v545 = vsub.f32 %v516, %v515
        %v546 = vsel %vm521, %v543, 0.0
        %547 = vadd.xlane.f32.xlu0 %v546
        %v548 = vpop.xlane.xlu0 %547
        %v549 = vrcp.pop 32.0
        %v550 = vmul.f32 32.0, %v549
        %v551 = vsub.f32 1.0, %v550
        %v552 = vmul.f32 %v549, %v551
        %v553 = vadd.f32 %v549, %v552
        %vm554 = vweird.f32 %v549
        %v555 = vsel %vm554, %v549, %v553
        %v556 = vmul.f32 %v548, %v555
        %v557 = vsub.f32 %v543, %v556
        %v558 = vmul.f32 %v557, %v557
        %v559 = vsel %vm521, %v558, 0.0
        %560 = vadd.xlane.f32.xlu0 %v559
        %v561 = vpop.xlane.xlu0 %560
        %v562 = vmul.f32 %v561, %v555
        %v563 = vadd.f32 %v562, 1e-06
        %v564 = vrsqrt.pop %v563
        %v565 = vmul.f32 %v564, %v563
        %v566 = vmul.f32 %v565, %v564
        %v567 = vmul.f32 0.5, %v566
        %v568 = vsub.f32 1.5, %v567
        %v569 = vmul.f32 %v564, %v568
        %vm570 = vweird.f32 %v563
        %vm571 = vweird.f32 %v564
        %vm572 = vmor %vm570, %vm571
        %v573 = vsel %vm572, %v564, %v569
        %v574 = vmul.f32 %v557, %v573
        %v575 = vperm.slane %v498, 0
        %v576 = vmul.f32 %v575, %v574
        %v577 = vperm.slane %v500, 0
        %v578 = vadd.f32 %v576, %v577
        %v579 = vsub.f32 %v578, %v545
        %v580 = vmul.f32 %v575, %v579
        %v581 = vmul.f32 %v580, 32.0
        %v582 = vsel %vm521, %v580, 0.0
        %583 = vadd.xlane.f32.xlu0 %v582
        %v584 = vpop.xlane.xlu0 %583
        %v585 = vsub.f32 %v581, %v584
        %v586 = vmul.f32 %v580, %v574
        %v587 = vsel %vm521, %v586, 0.0
        %588 = vadd.xlane.f32.xlu0 %v587
        %v589 = vpop.xlane.xlu0 %588
        %v590 = vmul.f32 %v574, %v589
        %v591 = vsub.f32 %v585, %v590
        %v592 = vmul.f32 %v573, 0.03125
        %v593 = vmul.f32 %v591, %v592
        %v594 = vperm.slane %v517, 0
        %v596 = vsel %vm521, %v514, 0
        %598 = vmatpush.xpose.msra.mxu0 0.0
        %599 = vmatpush.xpose.msra.mxu0 0.0
        %600 = vmatpush.xpose.msra.mxu0 0.0
        %601 = vmatpush.xpose.msra.mxu0 0.0
        %602 = vmatpush.xpose.msra.mxu0 0.0
        %603 = vmatpush.xpose.msra.mxu0 0.0
        %604 = vmatpush.xpose.msra.mxu0 0.0
        %605 = vmatpush.xpose.msra.mxu0 0.0
        %606 = vmatpush.xpose.msra.mxu0 0.0
        %607 = vmatpush.xpose.msra.mxu0 0.0
        %608 = vmatpush.xpose.msra.mxu0 0.0
        %609 = vmatpush.xpose.msra.mxu0 0.0
        %610 = vmatpush.xpose.msra.mxu0 0.0
        %611 = vmatpush.xpose.msra.mxu0 0.0
        %612 = vmatpush.xpose.msra.mxu0 0.0
        %613 = vmatpush.xpose.msra.mxu0 %v523
        %614 = vmatmul.f32.gmra.mxu0 %v596
        %v615 = vpop.f32.mrf.mxu0
        %v616 = vadd.f32 1.0, %v615
        %617 = vdwg.mxu0
        %v618 = vmul.f32 %v594, %v616
        %v619 = vsel %vm496, %v618, 0.0
        %620 = vmatpush.msra.mxu0 0.0
        %621 = vmatpush.msra.mxu0 0.0
        %622 = vmatpush.msra.mxu0 0.0
        %623 = vmatpush.msra.mxu0 0.0
        %624 = vmatpush.msra.mxu0 0.0
        %625 = vmatpush.msra.mxu0 0.0
        %626 = vmatpush.msra.mxu0 0.0
        %627 = vmatpush.msra.mxu0 0.0
        %628 = vmatpush.msra.mxu0 0.0
        %629 = vmatpush.msra.mxu0 0.0
        %630 = vmatpush.msra.mxu0 0.0
        %631 = vmatpush.msra.mxu0 0.0
        %632 = vmatpush.msra.mxu0 %v505
        %633 = vmatpush.msra.mxu0 %v504
        %634 = vmatpush.msra.mxu0 %v503
        %635 = vmatpush.msra.mxu0 %v502
        %636 = vmatmul.f32.gmra.mxu0 %v596
        %v637 = vpop.f32.mrf.mxu0
        %v638 = vadd.f32 %v519, %v637
        %639 = vdwg.mxu0
        %vm640 = vcmask 64512
        %v642 = vsel %vm640, %v619, 0
        %644 = vmatpush.msra.mxu0 0.0
        %645 = vmatpush.msra.mxu0 0.0
        %646 = vmatpush.msra.mxu0 0.0
        %647 = vmatpush.msra.mxu0 0.0
        %648 = vmatpush.msra.mxu0 0.0
        %649 = vmatpush.msra.mxu0 0.0
        %650 = vmatpush.msra.mxu0 0.0
        %651 = vmatpush.msra.mxu0 0.0
        %652 = vmatpush.msra.mxu0 0.0
        %653 = vmatpush.msra.mxu0 0.0
        %654 = vmatpush.msra.mxu0 0.0
        %655 = vmatpush.msra.mxu0 0.0
        %656 = vmatpush.msra.mxu0 0.0
        %657 = vmatpush.msra.mxu0 0.0
        %658 = vmatpush.msra.mxu0 0.0
        %659 = vmatpush.msra.mxu0 %v593
        %660 = vmatmul.f32.gmra.mxu0 %v642
        %v661 = vpop.f32.mrf.mxu0
        %v662 = vadd.f32 0.0, %v661
        %663 = vdwg.mxu0
        %v664 = vsub.f32 %v638, %v662
        %v665 = vsel %vm497, %v594, 0.0
        %v667 = vsel %vm640, %v665, 0
        %669 = vmatpush.msra.mxu0 0.0
        %670 = vmatpush.msra.mxu0 0.0
        %671 = vmatpush.msra.mxu0 0.0
        %672 = vmatpush.msra.mxu0 0.0
        %673 = vmatpush.msra.mxu0 0.0
        %674 = vmatpush.msra.mxu0 0.0
        %675 = vmatpush.msra.mxu0 0.0
        %676 = vmatpush.msra.mxu0 0.0
        %677 = vmatpush.msra.mxu0 0.0
        %678 = vmatpush.msra.mxu0 0.0
        %679 = vmatpush.msra.mxu0 0.0
        %680 = vmatpush.msra.mxu0 0.0
        %681 = vmatpush.msra.mxu0 0.0
        %682 = vmatpush.msra.mxu0 0.0
        %683 = vmatpush.msra.mxu0 0.0
        %684 = vmatpush.msra.mxu0 %v593
        %685 = vmatmul.f32.gmra.mxu0 %v667
        %v686 = vpop.f32.mrf.mxu0
        %v687 = vadd.f32 0.0, %v686
        %688 = vdwg.mxu0
        %689 = vxpose.xlu0.b32.start [1/16] %v515, 128
        %690 = vxpose.xlu0.b32.cont [2/16] 0.0, 128
        %691 = vxpose.xlu0.b32.cont [3/16] 0.0, 128
        %692 = vxpose.xlu0.b32.cont [4/16] 0.0, 128
        %693 = vxpose.xlu0.b32.cont [5/16] 0.0, 128
        %694 = vxpose.xlu0.b32.cont [6/16] 0.0, 128
        %695 = vxpose.xlu0.b32.cont [7/16] 0.0, 128
        %696 = vxpose.xlu0.b32.cont [8/16] 0.0, 128
        %697 = vxpose.xlu0.b32.cont [9/16] 0.0, 128
        %698 = vxpose.xlu0.b32.cont [10/16] 0.0, 128
        %699 = vxpose.xlu0.b32.cont [11/16] 0.0, 128
        %700 = vxpose.xlu0.b32.cont [12/16] 0.0, 128
        %701 = vxpose.xlu0.b32.cont [13/16] 0.0, 128
        %702 = vxpose.xlu0.b32.cont [14/16] 0.0, 128
        %703 = vxpose.xlu0.b32.cont [15/16] 0.0, 128
        %704 = vxpose.xlu0.b32.end [16/16] 0.0, 128
        %v705 = vpop.trf.xlu0
        %v706 = vpop.trf.xlu0
        %v707 = vpop.trf.xlu0
        %v708 = vpop.trf.xlu0
        %v709 = vpop.trf.xlu0
        %v710 = vpop.trf.xlu0
        %v711 = vpop.trf.xlu0
        %v712 = vpop.trf.xlu0
        %v713 = vpop.trf.xlu0
        %v714 = vpop.trf.xlu0
        %v715 = vpop.trf.xlu0
        %v716 = vpop.trf.xlu0
        %v717 = vpop.trf.xlu0
        %v718 = vpop.trf.xlu0
        %v719 = vpop.trf.xlu0
        %v720 = vpop.trf.xlu0
        %v722 = vsel %vm640, %v705, 0
        %v725 = vsel %vm640, %v706, 0
        %v728 = vsel %vm640, %v707, 0
        %v731 = vsel %vm640, %v708, 0
        %733 = vmatpush.msra.mxu0 0.0
        %734 = vmatpush.msra.mxu0 0.0
        %735 = vmatpush.msra.mxu0 0.0
        %736 = vmatpush.msra.mxu0 0.0
        %737 = vmatpush.msra.mxu0 0.0
        %738 = vmatpush.msra.mxu0 0.0
        %739 = vmatpush.msra.mxu0 0.0
        %740 = vmatpush.msra.mxu0 0.0
        %741 = vmatpush.msra.mxu0 0.0
        %742 = vmatpush.msra.mxu0 0.0
        %743 = vmatpush.msra.mxu0 0.0
        %744 = vmatpush.msra.mxu0 0.0
        %745 = vmatpush.msra.mxu0 0.0
        %746 = vmatpush.msra.mxu0 0.0
        %747 = vmatpush.msra.mxu0 0.0
        %748 = vmatpush.msra.mxu0 %v687
        %749 = vmatmul.f32.gmra.mxu0 %v722
        %v750 = vpop.f32.mrf.mxu0
        %v751 = vadd.f32 0.0, %v750
        %752 = vmatmul.f32.gmra.mxu0 %v725
        %v753 = vpop.f32.mrf.mxu0
        %v754 = vadd.f32 0.0, %v753
        %755 = vmatmul.f32.gmra.mxu0 %v728
        %v756 = vpop.f32.mrf.mxu0
        %v757 = vadd.f32 0.0, %v756
        %758 = vmatmul.f32.gmra.mxu0 %v731
        %v759 = vpop.f32.mrf.mxu0
        %v760 = vadd.f32 0.0, %v759
        %761 = vdwg.mxu0
        %v762 = vsub.f32 %v502, %v751
        %v763 = vsub.f32 %v503, %v754
        %v764 = vsub.f32 %v504, %v757
        %v765 = vsub.f32 %v505, %v760
        %v766 = vsel %vm521, %v687, 0.0
        %v767 = vrot.slane %v766, 4
        %v768 = vadd.f32 %v766, %v767
        %v769 = vrot.slane %v768, 2
        %v770 = vadd.f32 %v768, %v769
        %v771 = vrot.slane %v770, 1
        %v772 = vadd.f32 %v770, %v771
        %v773 = vsub.f32 %v511, %v772
        %v774 = vsel %vm521, %v664, 0.0
        %775 = vadd.xlane.f32.xlu0 %v774
        %v776 = vpop.xlane.xlu0 %775
        %v777 = vmul.f32 %v776, %v555
        %v778 = vsub.f32 %v664, %v777
        %v779 = vmul.f32 %v778, %v778
        %v780 = vsel %vm521, %v779, 0.0
        %781 = vadd.xlane.f32.xlu0 %v780
        %v782 = vpop.xlane.xlu0 %781
        %v783 = vmul.f32 %v782, %v555
        %v784 = vadd.f32 %v783, 1e-06
        %v785 = vrsqrt.pop %v784
        %v786 = vmul.f32 %v785, %v784
        %v787 = vmul.f32 %v786, %v785
        %v788 = vmul.f32 0.5, %v787
        %v789 = vsub.f32 1.5, %v788
        %v790 = vmul.f32 %v785, %v789
        %vm791 = vweird.f32 %v784
        %vm792 = vweird.f32 %v785
        %vm793 = vmor %vm791, %vm792
        %v794 = vsel %vm793, %v785, %v790
        %v795 = vmul.f32 %v778, %v794
        %v796 = vmul.f32 %v575, %v795
        %v797 = vadd.f32 %v514, %v796
        %v798 = vadd.f32 %v797, %v577
        %s799 = scalar_lea.vmem %s443, 8 [#allocation13]
        %v800 = vld [vmem:[%s799] sm:$0x1]
        %v802 = vperm.slane %v513, 0
        %804 = vrot.lane.b32.xlu0 %v515, 96
        %v805 = vpop.permute.xlu0 %804
        %v806 = vsel %vm521, %v805, 0
        %808 = vmatpush.msra.mxu0 0.0
        %809 = vmatpush.msra.mxu0 0.0
        %810 = vmatpush.msra.mxu0 0.0
        %811 = vmatpush.msra.mxu0 0.0
        %812 = vmatpush.msra.mxu0 0.0
        %813 = vmatpush.msra.mxu0 0.0
        %814 = vmatpush.msra.mxu0 0.0
        %815 = vmatpush.msra.mxu0 0.0
        %816 = vmatpush.msra.mxu0 0.0
        %817 = vmatpush.msra.mxu0 0.0
        %818 = vmatpush.msra.mxu0 0.0
        %819 = vmatpush.msra.mxu0 0.0
        %820 = vmatpush.msra.mxu0 %v510
        %821 = vmatpush.msra.mxu0 %v509
        %822 = vmatpush.msra.mxu0 %v508
        %823 = vmatpush.msra.mxu0 %v507
        %824 = vmatmul.f32.gmra.mxu0 %v806
        %v825 = vpop.f32.mrf.mxu0
        %v826 = vadd.f32 %v802, %v825
        %827 = vdwg.mxu0
        %v828 = vsel %vm521, %v826, 0.0
        %829 = vadd.xlane.f32.xlu0 %v828
        %v830 = vpop.xlane.xlu0 %829
        %v831 = vmul.f32 %v830, %v555
        %v832 = vsub.f32 %v826, %v831
        %v833 = vmul.f32 %v832, %v832
        %v834 = vsel %vm521, %v833, 0.0
        %835 = vadd.xlane.f32.xlu0 %v834
        %v836 = vpop.xlane.xlu0 %835
        %v837 = vmul.f32 %v836, %v555
        %v838 = vadd.f32 %v837, 1e-06
        %v839 = vrsqrt.pop %v838
        %v840 = vmul.f32 %v839, %v838
        %v841 = vmul.f32 %v840, %v839
        %v842 = vmul.f32 0.5, %v841
        %v843 = vsub.f32 1.5, %v842
        %v844 = vmul.f32 %v839, %v843
        %vm845 = vweird.f32 %v838
        %vm846 = vweird.f32 %v839
        %vm847 = vmor %vm845, %vm846
        %v848 = vsel %vm847, %v839, %v844
        %v849 = vmul.f32 %v832, %v848
        %v850 = vperm.slane %v499, 0
        %v851 = vmul.f32 %v850, %v849
        %v852 = vperm.slane %v501, 0
        %v853 = vadd.f32 %v851, %v852
        %855 = vrot.lane.b32.xlu0 %v545, 96
        %v856 = vpop.permute.xlu0 %855
        %v858 = vsub.f32 %v853, %v856
        %v859 = vmul.f32 %v850, %v858
        %v860 = vmul.f32 %v859, 32.0
        %v861 = vsel %vm521, %v859, 0.0
        %862 = vadd.xlane.f32.xlu0 %v861
        %v863 = vpop.xlane.xlu0 %862
        %v864 = vsub.f32 %v860, %v863
        %v865 = vmul.f32 %v859, %v849
        %v866 = vsel %vm521, %v865, 0.0
        %867 = vadd.xlane.f32.xlu0 %v866
        %v868 = vpop.xlane.xlu0 %867
        %v869 = vmul.f32 %v849, %v868
        %v870 = vsub.f32 %v864, %v869
        %v871 = vmul.f32 %v848, 0.03125
        %v872 = vmul.f32 %v870, %v871
        %v873 = vperm.slane %v800, 0
        %874 = vrot.lane.b32.xlu0 %v514, 96
        %v875 = vpop.permute.xlu0 %874
        %v876 = vsel %vm521, %v875, 0
        %878 = vmatpush.xpose.msra.mxu0 0.0
        %879 = vmatpush.xpose.msra.mxu0 0.0
        %880 = vmatpush.xpose.msra.mxu0 0.0
        %881 = vmatpush.xpose.msra.mxu0 0.0
        %882 = vmatpush.xpose.msra.mxu0 0.0
        %883 = vmatpush.xpose.msra.mxu0 0.0
        %884 = vmatpush.xpose.msra.mxu0 0.0
        %885 = vmatpush.xpose.msra.mxu0 0.0
        %886 = vmatpush.xpose.msra.mxu0 0.0
        %887 = vmatpush.xpose.msra.mxu0 0.0
        %888 = vmatpush.xpose.msra.mxu0 0.0
        %889 = vmatpush.xpose.msra.mxu0 0.0
        %890 = vmatpush.xpose.msra.mxu0 0.0
        %891 = vmatpush.xpose.msra.mxu0 0.0
        %892 = vmatpush.xpose.msra.mxu0 0.0
        %893 = vmatpush.xpose.msra.mxu0 %v806
        %894 = vmatmul.f32.gmra.mxu0 %v876
        %v895 = vpop.f32.mrf.mxu0
        %v896 = vadd.f32 1.0, %v895
        %897 = vdwg.mxu0
        %v898 = vmul.f32 %v873, %v896
        %v899 = vsel %vm496, %v898, 0.0
        %900 = vmatpush.msra.mxu0 0.0
        %901 = vmatpush.msra.mxu0 0.0
        %902 = vmatpush.msra.mxu0 0.0
        %903 = vmatpush.msra.mxu0 0.0
        %904 = vmatpush.msra.mxu0 0.0
        %905 = vmatpush.msra.mxu0 0.0
        %906 = vmatpush.msra.mxu0 0.0
        %907 = vmatpush.msra.mxu0 0.0
        %908 = vmatpush.msra.mxu0 0.0
        %909 = vmatpush.msra.mxu0 0.0
        %910 = vmatpush.msra.mxu0 0.0
        %911 = vmatpush.msra.mxu0 0.0
        %912 = vmatpush.msra.mxu0 %v510
        %913 = vmatpush.msra.mxu0 %v509
        %914 = vmatpush.msra.mxu0 %v508
        %915 = vmatpush.msra.mxu0 %v507
        %916 = vmatmul.f32.gmra.mxu0 %v876
        %v917 = vpop.f32.mrf.mxu0
        %v918 = vadd.f32 %v802, %v917
        %919 = vdwg.mxu0
        %v921 = vsel %vm640, %v899, 0
        %923 = vmatpush.msra.mxu0 0.0
        %924 = vmatpush.msra.mxu0 0.0
        %925 = vmatpush.msra.mxu0 0.0
        %926 = vmatpush.msra.mxu0 0.0
        %927 = vmatpush.msra.mxu0 0.0
        %928 = vmatpush.msra.mxu0 0.0
        %929 = vmatpush.msra.mxu0 0.0
        %930 = vmatpush.msra.mxu0 0.0
        %931 = vmatpush.msra.mxu0 0.0
        %932 = vmatpush.msra.mxu0 0.0
        %933 = vmatpush.msra.mxu0 0.0
        %934 = vmatpush.msra.mxu0 0.0
        %935 = vmatpush.msra.mxu0 0.0
        %936 = vmatpush.msra.mxu0 0.0
        %937 = vmatpush.msra.mxu0 0.0
        %938 = vmatpush.msra.mxu0 %v872
        %939 = vmatmul.f32.gmra.mxu0 %v921
        %v940 = vpop.f32.mrf.mxu0
        %v941 = vadd.f32 0.0, %v940
        %942 = vdwg.mxu0
        %v943 = vsub.f32 %v918, %v941
        %v944 = vsel %vm497, %v873, 0.0
        %v946 = vsel %vm640, %v944, 0
        %948 = vmatpush.msra.mxu0 0.0
        %949 = vmatpush.msra.mxu0 0.0
        %950 = vmatpush.msra.mxu0 0.0
        %951 = vmatpush.msra.mxu0 0.0
        %952 = vmatpush.msra.mxu0 0.0
        %953 = vmatpush.msra.mxu0 0.0
        %954 = vmatpush.msra.mxu0 0.0
        %955 = vmatpush.msra.mxu0 0.0
        %956 = vmatpush.msra.mxu0 0.0
        %957 = vmatpush.msra.mxu0 0.0
        %958 = vmatpush.msra.mxu0 0.0
        %959 = vmatpush.msra.mxu0 0.0
        %960 = vmatpush.msra.mxu0 0.0
        %961 = vmatpush.msra.mxu0 0.0
        %962 = vmatpush.msra.mxu0 0.0
        %963 = vmatpush.msra.mxu0 %v872
        %964 = vmatmul.f32.gmra.mxu0 %v946
        %v965 = vpop.f32.mrf.mxu0
        %v966 = vadd.f32 0.0, %v965
        %967 = vdwg.mxu0
        %969 = vxpose.xlu0.b32.start [1/16] %v805, 128
        %970 = vxpose.xlu0.b32.cont [2/16] 0.0, 128
        %971 = vxpose.xlu0.b32.cont [3/16] 0.0, 128
        %972 = vxpose.xlu0.b32.cont [4/16] 0.0, 128
        %973 = vxpose.xlu0.b32.cont [5/16] 0.0, 128
        %974 = vxpose.xlu0.b32.cont [6/16] 0.0, 128
        %975 = vxpose.xlu0.b32.cont [7/16] 0.0, 128
        %976 = vxpose.xlu0.b32.cont [8/16] 0.0, 128
        %977 = vxpose.xlu0.b32.cont [9/16] 0.0, 128
        %978 = vxpose.xlu0.b32.cont [10/16] 0.0, 128
        %979 = vxpose.xlu0.b32.cont [11/16] 0.0, 128
        %980 = vxpose.xlu0.b32.cont [12/16] 0.0, 128
        %981 = vxpose.xlu0.b32.cont [13/16] 0.0, 128
        %982 = vxpose.xlu0.b32.cont [14/16] 0.0, 128
        %983 = vxpose.xlu0.b32.cont [15/16] 0.0, 128
        %984 = vxpose.xlu0.b32.end [16/16] 0.0, 128
        %v985 = vpop.trf.xlu0
        %v986 = vpop.trf.xlu0
        %v987 = vpop.trf.xlu0
        %v988 = vpop.trf.xlu0
        %v989 = vpop.trf.xlu0
        %v990 = vpop.trf.xlu0
        %v991 = vpop.trf.xlu0
        %v992 = vpop.trf.xlu0
        %v993 = vpop.trf.xlu0
        %v994 = vpop.trf.xlu0
        %v995 = vpop.trf.xlu0
        %v996 = vpop.trf.xlu0
        %v997 = vpop.trf.xlu0
        %v998 = vpop.trf.xlu0
        %v999 = vpop.trf.xlu0
        %v1000 = vpop.trf.xlu0
        %v1002 = vsel %vm640, %v985, 0
        %v1005 = vsel %vm640, %v986, 0
        %v1008 = vsel %vm640, %v987, 0
        %v1011 = vsel %vm640, %v988, 0
        %1013 = vmatpush.msra.mxu0 0.0
        %1014 = vmatpush.msra.mxu0 0.0
        %1015 = vmatpush.msra.mxu0 0.0
        %1016 = vmatpush.msra.mxu0 0.0
        %1017 = vmatpush.msra.mxu0 0.0
        %1018 = vmatpush.msra.mxu0 0.0
        %1019 = vmatpush.msra.mxu0 0.0
        %1020 = vmatpush.msra.mxu0 0.0
        %1021 = vmatpush.msra.mxu0 0.0
        %1022 = vmatpush.msra.mxu0 0.0
        %1023 = vmatpush.msra.mxu0 0.0
        %1024 = vmatpush.msra.mxu0 0.0
        %1025 = vmatpush.msra.mxu0 0.0
        %1026 = vmatpush.msra.mxu0 0.0
        %1027 = vmatpush.msra.mxu0 0.0
        %1028 = vmatpush.msra.mxu0 %v966
        %1029 = vmatmul.f32.gmra.mxu0 %v1002
        %v1030 = vpop.f32.mrf.mxu0
        %v1031 = vadd.f32 0.0, %v1030
        %1032 = vmatmul.f32.gmra.mxu0 %v1005
        %v1033 = vpop.f32.mrf.mxu0
        %v1034 = vadd.f32 0.0, %v1033
        %1035 = vmatmul.f32.gmra.mxu0 %v1008
        %v1036 = vpop.f32.mrf.mxu0
        %v1037 = vadd.f32 0.0, %v1036
        %1038 = vmatmul.f32.gmra.mxu0 %v1011
        %v1039 = vpop.f32.mrf.mxu0
        %v1040 = vadd.f32 0.0, %v1039
        %1041 = vdwg.mxu0
        %v1042 = vsub.f32 %v507, %v1031
        %v1043 = vsub.f32 %v508, %v1034
        %v1044 = vsub.f32 %v509, %v1037
        %v1045 = vsub.f32 %v510, %v1040
        %v1046 = vsel %vm521, %v966, 0.0
        %v1047 = vrot.slane %v1046, 4
        %v1048 = vadd.f32 %v1046, %v1047
        %v1049 = vrot.slane %v1048, 2
        %v1050 = vadd.f32 %v1048, %v1049
        %v1051 = vrot.slane %v1050, 1
        %v1052 = vadd.f32 %v1050, %v1051
        %v1053 = vsub.f32 %v513, %v1052
        %v1054 = vsel %vm521, %v943, 0.0
        %1055 = vadd.xlane.f32.xlu0 %v1054
        %v1056 = vpop.xlane.xlu0 %1055
        %v1057 = vmul.f32 %v1056, %v555
        %v1058 = vsub.f32 %v943, %v1057
        %v1059 = vmul.f32 %v1058, %v1058
        %v1060 = vsel %vm521, %v1059, 0.0
        %1061 = vadd.xlane.f32.xlu0 %v1060
        %v1062 = vpop.xlane.xlu0 %1061
        %v1063 = vmul.f32 %v1062, %v555
        %v1064 = vadd.f32 %v1063, 1e-06
        %v1065 = vrsqrt.pop %v1064
        %v1066 = vmul.f32 %v1065, %v1064
        %v1067 = vmul.f32 %v1066, %v1065
        %v1068 = vmul.f32 0.5, %v1067
        %v1069 = vsub.f32 1.5, %v1068
        %v1070 = vmul.f32 %v1065, %v1069
        %vm1071 = vweird.f32 %v1064
        %vm1072 = vweird.f32 %v1065
        %vm1073 = vmor %vm1071, %vm1072
        %v1074 = vsel %vm1073, %v1065, %v1070
        %v1075 = vmul.f32 %v1058, %v1074
        %v1076 = vmul.f32 %v850, %v1075
        %1078 = vrot.lane.b32.xlu0 %v1076, 32
        %v1079 = vpop.permute.xlu0 %1078
        %v1081 = vadd.f32 %v514, %v1079
        %1083 = vrot.lane.b32.xlu0 %v852, 32
        %v1084 = vpop.permute.xlu0 %1083
        %v1086 = vadd.f32 %v1081, %v1084
        %v1087 = vsel %vm521, %v798, %v1086
        %vm1088 = vcmask 523264
        %1089 = vst.msk [vmem:[%s491] sm:$0xff] %vm1088, %v1087
        %s1090 = scalar_lea.vmem %s413, 8 [#allocation8]
        %v1091 = vld [vmem:[%s1090] sm:$0xff]
        %s1092 = scalar_lea.vmem %s423, 8 [#allocation10]
        %v1093 = vld [vmem:[%s1092] sm:$0xff]
        %s1094 = scalar_lea.vmem %s433, 8 [#allocation11]
        %v1095 = vld [vmem:[%s1094] sm:$0xff]
        %v1096 = vld [vmem:[%s443 + $0x1] sm:$0x1]
        %v1098 = vperm.slane %v773, 0
        %v1101 = vsel %vm521, %v1093, 0
        %1103 = vmatpush.msra.mxu0 0.0
        %1104 = vmatpush.msra.mxu0 0.0
        %1105 = vmatpush.msra.mxu0 0.0
        %1106 = vmatpush.msra.mxu0 0.0
        %1107 = vmatpush.msra.mxu0 0.0
        %1108 = vmatpush.msra.mxu0 0.0
        %1109 = vmatpush.msra.mxu0 0.0
        %1110 = vmatpush.msra.mxu0 0.0
        %1111 = vmatpush.msra.mxu0 0.0
        %1112 = vmatpush.msra.mxu0 0.0
        %1113 = vmatpush.msra.mxu0 0.0
        %1114 = vmatpush.msra.mxu0 0.0
        %1115 = vmatpush.msra.mxu0 %v765
        %1116 = vmatpush.msra.mxu0 %v764
        %1117 = vmatpush.msra.mxu0 %v763
        %1118 = vmatpush.msra.mxu0 %v762
        %1119 = vmatmul.f32.gmra.mxu0 %v1101
        %v1120 = vpop.f32.mrf.mxu0
        %v1121 = vadd.f32 %v1098, %v1120
        %1122 = vdwg.mxu0
        %v1123 = vsub.f32 %v1095, %v1093
        %v1124 = vsel %vm521, %v1121, 0.0
        %1125 = vadd.xlane.f32.xlu0 %v1124
        %v1126 = vpop.xlane.xlu0 %1125
        %v1127 = vmul.f32 %v1126, %v555
        %v1128 = vsub.f32 %v1121, %v1127
        %v1129 = vmul.f32 %v1128, %v1128
        %v1130 = vsel %vm521, %v1129, 0.0
        %1131 = vadd.xlane.f32.xlu0 %v1130
        %v1132 = vpop.xlane.xlu0 %1131
        %v1133 = vmul.f32 %v1132, %v555
        %v1134 = vadd.f32 %v1133, 1e-06
        %v1135 = vrsqrt.pop %v1134
        %v1136 = vmul.f32 %v1135, %v1134
        %v1137 = vmul.f32 %v1136, %v1135
        %v1138 = vmul.f32 0.5, %v1137
        %v1139 = vsub.f32 1.5, %v1138
        %v1140 = vmul.f32 %v1135, %v1139
        %vm1141 = vweird.f32 %v1134
        %vm1142 = vweird.f32 %v1135
        %vm1143 = vmor %vm1141, %vm1142
        %v1144 = vsel %vm1143, %v1135, %v1140
        %v1145 = vmul.f32 %v1128, %v1144
        %v1146 = vmul.f32 %v575, %v1145
        %v1147 = vadd.f32 %v1146, %v577
        %v1148 = vsub.f32 %v1147, %v1123
        %v1149 = vmul.f32 %v575, %v1148
        %v1150 = vmul.f32 %v1149, 32.0
        %v1151 = vsel %vm521, %v1149, 0.0
        %1152 = vadd.xlane.f32.xlu0 %v1151
        %v1153 = vpop.xlane.xlu0 %1152
        %v1154 = vsub.f32 %v1150, %v1153
        %v1155 = vmul.f32 %v1149, %v1145
        %v1156 = vsel %vm521, %v1155, 0.0
        %1157 = vadd.xlane.f32.xlu0 %v1156
        %v1158 = vpop.xlane.xlu0 %1157
        %v1159 = vmul.f32 %v1145, %v1158
        %v1160 = vsub.f32 %v1154, %v1159
        %v1161 = vmul.f32 %v1144, 0.03125
        %v1162 = vmul.f32 %v1160, %v1161
        %v1163 = vperm.slane %v1096, 0
        %v1165 = vsel %vm521, %v1091, 0
        %1167 = vmatpush.xpose.msra.mxu0 0.0
        %1168 = vmatpush.xpose.msra.mxu0 0.0
        %1169 = vmatpush.xpose.msra.mxu0 0.0
        %1170 = vmatpush.xpose.msra.mxu0 0.0
        %1171 = vmatpush.xpose.msra.mxu0 0.0
        %1172 = vmatpush.xpose.msra.mxu0 0.0
        %1173 = vmatpush.xpose.msra.mxu0 0.0
        %1174 = vmatpush.xpose.msra.mxu0 0.0
        %1175 = vmatpush.xpose.msra.mxu0 0.0
        %1176 = vmatpush.xpose.msra.mxu0 0.0
        %1177 = vmatpush.xpose.msra.mxu0 0.0
        %1178 = vmatpush.xpose.msra.mxu0 0.0
        %1179 = vmatpush.xpose.msra.mxu0 0.0
        %1180 = vmatpush.xpose.msra.mxu0 0.0
        %1181 = vmatpush.xpose.msra.mxu0 0.0
        %1182 = vmatpush.xpose.msra.mxu0 %v1101
        %1183 = vmatmul.f32.gmra.mxu0 %v1165
        %v1184 = vpop.f32.mrf.mxu0
        %v1185 = vadd.f32 1.0, %v1184
        %1186 = vdwg.mxu0
        %v1187 = vmul.f32 %v1163, %v1185
        %v1188 = vsel %vm496, %v1187, 0.0
        %1189 = vmatpush.msra.mxu0 0.0
        %1190 = vmatpush.msra.mxu0 0.0
        %1191 = vmatpush.msra.mxu0 0.0
        %1192 = vmatpush.msra.mxu0 0.0
        %1193 = vmatpush.msra.mxu0 0.0
        %1194 = vmatpush.msra.mxu0 0.0
        %1195 = vmatpush.msra.mxu0 0.0
        %1196 = vmatpush.msra.mxu0 0.0
        %1197 = vmatpush.msra.mxu0 0.0
        %1198 = vmatpush.msra.mxu0 0.0
        %1199 = vmatpush.msra.mxu0 0.0
        %1200 = vmatpush.msra.mxu0 0.0
        %1201 = vmatpush.msra.mxu0 %v765
        %1202 = vmatpush.msra.mxu0 %v764
        %1203 = vmatpush.msra.mxu0 %v763
        %1204 = vmatpush.msra.mxu0 %v762
        %1205 = vmatmul.f32.gmra.mxu0 %v1165
        %v1206 = vpop.f32.mrf.mxu0
        %v1207 = vadd.f32 %v1098, %v1206
        %1208 = vdwg.mxu0
        %v1210 = vsel %vm640, %v1188, 0
        %1212 = vmatpush.msra.mxu0 0.0
        %1213 = vmatpush.msra.mxu0 0.0
        %1214 = vmatpush.msra.mxu0 0.0
        %1215 = vmatpush.msra.mxu0 0.0
        %1216 = vmatpush.msra.mxu0 0.0
        %1217 = vmatpush.msra.mxu0 0.0
        %1218 = vmatpush.msra.mxu0 0.0
        %1219 = vmatpush.msra.mxu0 0.0
        %1220 = vmatpush.msra.mxu0 0.0
        %1221 = vmatpush.msra.mxu0 0.0
        %1222 = vmatpush.msra.mxu0 0.0
        %1223 = vmatpush.msra.mxu0 0.0
        %1224 = vmatpush.msra.mxu0 0.0
        %1225 = vmatpush.msra.mxu0 0.0
        %1226 = vmatpush.msra.mxu0 0.0
        %1227 = vmatpush.msra.mxu0 %v1162
        %1228 = vmatmul.f32.gmra.mxu0 %v1210
        %v1229 = vpop.f32.mrf.mxu0
        %v1230 = vadd.f32 0.0, %v1229
        %1231 = vdwg.mxu0
        %v1232 = vsub.f32 %v1207, %v1230
        %v1233 = vsel %vm497, %v1163, 0.0
        %v1235 = vsel %vm640, %v1233, 0
        %1237 = vmatpush.msra.mxu0 0.0
        %1238 = vmatpush.msra.mxu0 0.0
        %1239 = vmatpush.msra.mxu0 0.0
        %1240 = vmatpush.msra.mxu0 0.0
        %1241 = vmatpush.msra.mxu0 0.0
        %1242 = vmatpush.msra.mxu0 0.0
        %1243 = vmatpush.msra.mxu0 0.0
        %1244 = vmatpush.msra.mxu0 0.0
        %1245 = vmatpush.msra.mxu0 0.0
        %1246 = vmatpush.msra.mxu0 0.0
        %1247 = vmatpush.msra.mxu0 0.0
        %1248 = vmatpush.msra.mxu0 0.0
        %1249 = vmatpush.msra.mxu0 0.0
        %1250 = vmatpush.msra.mxu0 0.0
        %1251 = vmatpush.msra.mxu0 0.0
        %1252 = vmatpush.msra.mxu0 %v1162
        %1253 = vmatmul.f32.gmra.mxu0 %v1235
        %v1254 = vpop.f32.mrf.mxu0
        %v1255 = vadd.f32 0.0, %v1254
        %1256 = vdwg.mxu0
        %1257 = vxpose.xlu0.b32.start [1/16] %v1093, 128
        %1258 = vxpose.xlu0.b32.cont [2/16] 0.0, 128
        %1259 = vxpose.xlu0.b32.cont [3/16] 0.0, 128
        %1260 = vxpose.xlu0.b32.cont [4/16] 0.0, 128
        %1261 = vxpose.xlu0.b32.cont [5/16] 0.0, 128
        %1262 = vxpose.xlu0.b32.cont [6/16] 0.0, 128
        %1263 = vxpose.xlu0.b32.cont [7/16] 0.0, 128
        %1264 = vxpose.xlu0.b32.cont [8/16] 0.0, 128
        %1265 = vxpose.xlu0.b32.cont [9/16] 0.0, 128
        %1266 = vxpose.xlu0.b32.cont [10/16] 0.0, 128
        %1267 = vxpose.xlu0.b32.cont [11/16] 0.0, 128
        %1268 = vxpose.xlu0.b32.cont [12/16] 0.0, 128
        %1269 = vxpose.xlu0.b32.cont [13/16] 0.0, 128
        %1270 = vxpose.xlu0.b32.cont [14/16] 0.0, 128
        %1271 = vxpose.xlu0.b32.cont [15/16] 0.0, 128
        %1272 = vxpose.xlu0.b32.end [16/16] 0.0, 128
        %v1273 = vpop.trf.xlu0
        %v1274 = vpop.trf.xlu0
        %v1275 = vpop.trf.xlu0
        %v1276 = vpop.trf.xlu0
        %v1277 = vpop.trf.xlu0
        %v1278 = vpop.trf.xlu0
        %v1279 = vpop.trf.xlu0
        %v1280 = vpop.trf.xlu0
        %v1281 = vpop.trf.xlu0
        %v1282 = vpop.trf.xlu0
        %v1283 = vpop.trf.xlu0
        %v1284 = vpop.trf.xlu0
        %v1285 = vpop.trf.xlu0
        %v1286 = vpop.trf.xlu0
        %v1287 = vpop.trf.xlu0
        %v1288 = vpop.trf.xlu0
        %v1290 = vsel %vm640, %v1273, 0
        %v1293 = vsel %vm640, %v1274, 0
        %v1296 = vsel %vm640, %v1275, 0
        %v1299 = vsel %vm640, %v1276, 0
        %1301 = vmatpush.msra.mxu0 0.0
        %1302 = vmatpush.msra.mxu0 0.0
        %1303 = vmatpush.msra.mxu0 0.0
        %1304 = vmatpush.msra.mxu0 0.0
        %1305 = vmatpush.msra.mxu0 0.0
        %1306 = vmatpush.msra.mxu0 0.0
        %1307 = vmatpush.msra.mxu0 0.0
        %1308 = vmatpush.msra.mxu0 0.0
        %1309 = vmatpush.msra.mxu0 0.0
        %1310 = vmatpush.msra.mxu0 0.0
        %1311 = vmatpush.msra.mxu0 0.0
        %1312 = vmatpush.msra.mxu0 0.0
        %1313 = vmatpush.msra.mxu0 0.0
        %1314 = vmatpush.msra.mxu0 0.0
        %1315 = vmatpush.msra.mxu0 0.0
        %1316 = vmatpush.msra.mxu0 %v1255
        %1317 = vmatmul.f32.gmra.mxu0 %v1290
        %v1318 = vpop.f32.mrf.mxu0
        %v1319 = vadd.f32 0.0, %v1318
        %1320 = vmatmul.f32.gmra.mxu0 %v1293
        %v1321 = vpop.f32.mrf.mxu0
        %v1322 = vadd.f32 0.0, %v1321
        %1323 = vmatmul.f32.gmra.mxu0 %v1296
        %v1324 = vpop.f32.mrf.mxu0
        %v1325 = vadd.f32 0.0, %v1324
        %1326 = vmatmul.f32.gmra.mxu0 %v1299
        %v1327 = vpop.f32.mrf.mxu0
        %v1328 = vadd.f32 0.0, %v1327
        %1329 = vdwg.mxu0
        %v1330 = vsub.f32 %v762, %v1319
        %v1331 = vsub.f32 %v763, %v1322
        %v1332 = vsub.f32 %v764, %v1325
        %v1333 = vsub.f32 %v765, %v1328
        %v1334 = vsel %vm521, %v1255, 0.0
        %v1335 = vrot.slane %v1334, 4
        %v1336 = vadd.f32 %v1334, %v1335
        %v1337 = vrot.slane %v1336, 2
        %v1338 = vadd.f32 %v1336, %v1337
        %v1339 = vrot.slane %v1338, 1
        %v1340 = vadd.f32 %v1338, %v1339
        %v1341 = vsub.f32 %v773, %v1340
        %v1342 = vsel %vm521, %v1232, 0.0
        %1343 = vadd.xlane.f32.xlu0 %v1342
        %v1344 = vpop.xlane.xlu0 %1343
        %v1345 = vmul.f32 %v1344, %v555
        %v1346 = vsub.f32 %v1232, %v1345
        %v1347 = vmul.f32 %v1346, %v1346
        %v1348 = vsel %vm521, %v1347, 0.0
        %1349 = vadd.xlane.f32.xlu0 %v1348
        %v1350 = vpop.xlane.xlu0 %1349
        %v1351 = vmul.f32 %v1350, %v555
        %v1352 = vadd.f32 %v1351, 1e-06
        %v1353 = vrsqrt.pop %v1352
        %v1354 = vmul.f32 %v1353, %v1352
        %v1355 = vmul.f32 %v1354, %v1353
        %v1356 = vmul.f32 0.5, %v1355
        %v1357 = vsub.f32 1.5, %v1356
        %v1358 = vmul.f32 %v1353, %v1357
        %vm1359 = vweird.f32 %v1352
        %vm1360 = vweird.f32 %v1353
        %vm1361 = vmor %vm1359, %vm1360
        %v1362 = vsel %vm1361, %v1353, %v1358
        %v1363 = vmul.f32 %v1346, %v1362
        %v1364 = vmul.f32 %v575, %v1363
        %v1365 = vadd.f32 %v1091, %v1364
        %v1366 = vadd.f32 %v1365, %v577
        %v1367 = vld [vmem:[%s799 + $0x1] sm:$0x1]
        %v1369 = vperm.slane %v1053, 0
        %1371 = vrot.lane.b32.xlu0 %v1093, 96
        %v1372 = vpop.permute.xlu0 %1371
        %v1373 = vsel %vm521, %v1372, 0
        %1375 = vmatpush.msra.mxu0 0.0
        %1376 = vmatpush.msra.mxu0 0.0
        %1377 = vmatpush.msra.mxu0 0.0
        %1378 = vmatpush.msra.mxu0 0.0
        %1379 = vmatpush.msra.mxu0 0.0
        %1380 = vmatpush.msra.mxu0 0.0
        %1381 = vmatpush.msra.mxu0 0.0
        %1382 = vmatpush.msra.mxu0 0.0
        %1383 = vmatpush.msra.mxu0 0.0
        %1384 = vmatpush.msra.mxu0 0.0
        %1385 = vmatpush.msra.mxu0 0.0
        %1386 = vmatpush.msra.mxu0 0.0
        %1387 = vmatpush.msra.mxu0 %v1045
        %1388 = vmatpush.msra.mxu0 %v1044
        %1389 = vmatpush.msra.mxu0 %v1043
        %1390 = vmatpush.msra.mxu0 %v1042
        %1391 = vmatmul.f32.gmra.mxu0 %v1373
        %v1392 = vpop.f32.mrf.mxu0
        %v1393 = vadd.f32 %v1369, %v1392
        %1394 = vdwg.mxu0
        %v1395 = vsel %vm521, %v1393, 0.0
        %1396 = vadd.xlane.f32.xlu0 %v1395
        %v1397 = vpop.xlane.xlu0 %1396
        %v1398 = vmul.f32 %v1397, %v555
        %v1399 = vsub.f32 %v1393, %v1398
        %v1400 = vmul.f32 %v1399, %v1399
        %v1401 = vsel %vm521, %v1400, 0.0
        %1402 = vadd.xlane.f32.xlu0 %v1401
        %v1403 = vpop.xlane.xlu0 %1402
        %v1404 = vmul.f32 %v1403, %v555
        %v1405 = vadd.f32 %v1404, 1e-06
        %v1406 = vrsqrt.pop %v1405
        %v1407 = vmul.f32 %v1406, %v1405
        %v1408 = vmul.f32 %v1407, %v1406
        %v1409 = vmul.f32 0.5, %v1408
        %v1410 = vsub.f32 1.5, %v1409
        %v1411 = vmul.f32 %v1406, %v1410
        %vm1412 = vweird.f32 %v1405
        %vm1413 = vweird.f32 %v1406
        %vm1414 = vmor %vm1412, %vm1413
        %v1415 = vsel %vm1414, %v1406, %v1411
        %v1416 = vmul.f32 %v1399, %v1415
        %v1417 = vmul.f32 %v850, %v1416
        %v1418 = vadd.f32 %v1417, %v852
        %1420 = vrot.lane.b32.xlu0 %v1123, 96
        %v1421 = vpop.permute.xlu0 %1420
        %v1423 = vsub.f32 %v1418, %v1421
        %v1424 = vmul.f32 %v850, %v1423
        %v1425 = vmul.f32 %v1424, 32.0
        %v1426 = vsel %vm521, %v1424, 0.0
        %1427 = vadd.xlane.f32.xlu0 %v1426
        %v1428 = vpop.xlane.xlu0 %1427
        %v1429 = vsub.f32 %v1425, %v1428
        %v1430 = vmul.f32 %v1424, %v1416
        %v1431 = vsel %vm521, %v1430, 0.0
        %1432 = vadd.xlane.f32.xlu0 %v1431
        %v1433 = vpop.xlane.xlu0 %1432
        %v1434 = vmul.f32 %v1416, %v1433
        %v1435 = vsub.f32 %v1429, %v1434
        %v1436 = vmul.f32 %v1415, 0.03125
        %v1437 = vmul.f32 %v1435, %v1436
        %v1438 = vperm.slane %v1367, 0
        %1439 = vrot.lane.b32.xlu0 %v1091, 96
        %v1440 = vpop.permute.xlu0 %1439
        %v1441 = vsel %vm521, %v1440, 0
        %1443 = vmatpush.xpose.msra.mxu0 0.0
        %1444 = vmatpush.xpose.msra.mxu0 0.0
        %1445 = vmatpush.xpose.msra.mxu0 0.0
        %1446 = vmatpush.xpose.msra.mxu0 0.0
        %1447 = vmatpush.xpose.msra.mxu0 0.0
        %1448 = vmatpush.xpose.msra.mxu0 0.0
        %1449 = vmatpush.xpose.msra.mxu0 0.0
        %1450 = vmatpush.xpose.msra.mxu0 0.0
        %1451 = vmatpush.xpose.msra.mxu0 0.0
        %1452 = vmatpush.xpose.msra.mxu0 0.0
        %1453 = vmatpush.xpose.msra.mxu0 0.0
        %1454 = vmatpush.xpose.msra.mxu0 0.0
        %1455 = vmatpush.xpose.msra.mxu0 0.0
        %1456 = vmatpush.xpose.msra.mxu0 0.0
        %1457 = vmatpush.xpose.msra.mxu0 0.0
        %1458 = vmatpush.xpose.msra.mxu0 %v1373
        %1459 = vmatmul.f32.gmra.mxu0 %v1441
        %v1460 = vpop.f32.mrf.mxu0
        %v1461 = vadd.f32 1.0, %v1460
        %1462 = vdwg.mxu0
        %v1463 = vmul.f32 %v1438, %v1461
        %v1464 = vsel %vm496, %v1463, 0.0
        %1465 = vmatpush.msra.mxu0 0.0
        %1466 = vmatpush.msra.mxu0 0.0
        %1467 = vmatpush.msra.mxu0 0.0
        %1468 = vmatpush.msra.mxu0 0.0
        %1469 = vmatpush.msra.mxu0 0.0
        %1470 = vmatpush.msra.mxu0 0.0
        %1471 = vmatpush.msra.mxu0 0.0
        %1472 = vmatpush.msra.mxu0 0.0
        %1473 = vmatpush.msra.mxu0 0.0
        %1474 = vmatpush.msra.mxu0 0.0
        %1475 = vmatpush.msra.mxu0 0.0
        %1476 = vmatpush.msra.mxu0 0.0
        %1477 = vmatpush.msra.mxu0 %v1045
        %1478 = vmatpush.msra.mxu0 %v1044
        %1479 = vmatpush.msra.mxu0 %v1043
        %1480 = vmatpush.msra.mxu0 %v1042
        %1481 = vmatmul.f32.gmra.mxu0 %v1441
        %v1482 = vpop.f32.mrf.mxu0
        %v1483 = vadd.f32 %v1369, %v1482
        %1484 = vdwg.mxu0
        %v1486 = vsel %vm640, %v1464, 0
        %1488 = vmatpush.msra.mxu0 0.0
        %1489 = vmatpush.msra.mxu0 0.0
        %1490 = vmatpush.msra.mxu0 0.0
        %1491 = vmatpush.msra.mxu0 0.0
        %1492 = vmatpush.msra.mxu0 0.0
        %1493 = vmatpush.msra.mxu0 0.0
        %1494 = vmatpush.msra.mxu0 0.0
        %1495 = vmatpush.msra.mxu0 0.0
        %1496 = vmatpush.msra.mxu0 0.0
        %1497 = vmatpush.msra.mxu0 0.0
        %1498 = vmatpush.msra.mxu0 0.0
        %1499 = vmatpush.msra.mxu0 0.0
        %1500 = vmatpush.msra.mxu0 0.0
        %1501 = vmatpush.msra.mxu0 0.0
        %1502 = vmatpush.msra.mxu0 0.0
        %1503 = vmatpush.msra.mxu0 %v1437
        %1504 = vmatmul.f32.gmra.mxu0 %v1486
        %v1505 = vpop.f32.mrf.mxu0
        %v1506 = vadd.f32 0.0, %v1505
        %1507 = vdwg.mxu0
        %v1508 = vsub.f32 %v1483, %v1506
        %v1509 = vsel %vm497, %v1438, 0.0
        %v1511 = vsel %vm640, %v1509, 0
        %1513 = vmatpush.msra.mxu0 0.0
        %1514 = vmatpush.msra.mxu0 0.0
        %1515 = vmatpush.msra.mxu0 0.0
        %1516 = vmatpush.msra.mxu0 0.0
        %1517 = vmatpush.msra.mxu0 0.0
        %1518 = vmatpush.msra.mxu0 0.0
        %1519 = vmatpush.msra.mxu0 0.0
        %1520 = vmatpush.msra.mxu0 0.0
        %1521 = vmatpush.msra.mxu0 0.0
        %1522 = vmatpush.msra.mxu0 0.0
        %1523 = vmatpush.msra.mxu0 0.0
        %1524 = vmatpush.msra.mxu0 0.0
        %1525 = vmatpush.msra.mxu0 0.0
        %1526 = vmatpush.msra.mxu0 0.0
        %1527 = vmatpush.msra.mxu0 0.0
        %1528 = vmatpush.msra.mxu0 %v1437
        %1529 = vmatmul.f32.gmra.mxu0 %v1511
        %v1530 = vpop.f32.mrf.mxu0
        %v1531 = vadd.f32 0.0, %v1530
        %1532 = vdwg.mxu0
        %1534 = vxpose.xlu0.b32.start [1/16] %v1372, 128
        %1535 = vxpose.xlu0.b32.cont [2/16] 0.0, 128
        %1536 = vxpose.xlu0.b32.cont [3/16] 0.0, 128
        %1537 = vxpose.xlu0.b32.cont [4/16] 0.0, 128
        %1538 = vxpose.xlu0.b32.cont [5/16] 0.0, 128
        %1539 = vxpose.xlu0.b32.cont [6/16] 0.0, 128
        %1540 = vxpose.xlu0.b32.cont [7/16] 0.0, 128
        %1541 = vxpose.xlu0.b32.cont [8/16] 0.0, 128
        %1542 = vxpose.xlu0.b32.cont [9/16] 0.0, 128
        %1543 = vxpose.xlu0.b32.cont [10/16] 0.0, 128
        %1544 = vxpose.xlu0.b32.cont [11/16] 0.0, 128
        %1545 = vxpose.xlu0.b32.cont [12/16] 0.0, 128
        %1546 = vxpose.xlu0.b32.cont [13/16] 0.0, 128
        %1547 = vxpose.xlu0.b32.cont [14/16] 0.0, 128
        %1548 = vxpose.xlu0.b32.cont [15/16] 0.0, 128
        %1549 = vxpose.xlu0.b32.end [16/16] 0.0, 128
        %v1550 = vpop.trf.xlu0
        %v1551 = vpop.trf.xlu0
        %v1552 = vpop.trf.xlu0
        %v1553 = vpop.trf.xlu0
        %v1554 = vpop.trf.xlu0
        %v1555 = vpop.trf.xlu0
        %v1556 = vpop.trf.xlu0
        %v1557 = vpop.trf.xlu0
        %v1558 = vpop.trf.xlu0
        %v1559 = vpop.trf.xlu0
        %v1560 = vpop.trf.xlu0
        %v1561 = vpop.trf.xlu0
        %v1562 = vpop.trf.xlu0
        %v1563 = vpop.trf.xlu0
        %v1564 = vpop.trf.xlu0
        %v1565 = vpop.trf.xlu0
        %v1567 = vsel %vm640, %v1550, 0
        %v1570 = vsel %vm640, %v1551, 0
        %v1573 = vsel %vm640, %v1552, 0
        %v1576 = vsel %vm640, %v1553, 0
        %1578 = vmatpush.msra.mxu0 0.0
        %1579 = vmatpush.msra.mxu0 0.0
        %1580 = vmatpush.msra.mxu0 0.0
        %1581 = vmatpush.msra.mxu0 0.0
        %1582 = vmatpush.msra.mxu0 0.0
        %1583 = vmatpush.msra.mxu0 0.0
        %1584 = vmatpush.msra.mxu0 0.0
        %1585 = vmatpush.msra.mxu0 0.0
        %1586 = vmatpush.msra.mxu0 0.0
        %1587 = vmatpush.msra.mxu0 0.0
        %1588 = vmatpush.msra.mxu0 0.0
        %1589 = vmatpush.msra.mxu0 0.0
        %1590 = vmatpush.msra.mxu0 0.0
        %1591 = vmatpush.msra.mxu0 0.0
        %1592 = vmatpush.msra.mxu0 0.0
        %1593 = vmatpush.msra.mxu0 %v1531
        %1594 = vmatmul.f32.gmra.mxu0 %v1567
        %v1595 = vpop.f32.mrf.mxu0
        %v1596 = vadd.f32 0.0, %v1595
        %1597 = vmatmul.f32.gmra.mxu0 %v1570
        %v1598 = vpop.f32.mrf.mxu0
        %v1599 = vadd.f32 0.0, %v1598
        %1600 = vmatmul.f32.gmra.mxu0 %v1573
        %v1601 = vpop.f32.mrf.mxu0
        %v1602 = vadd.f32 0.0, %v1601
        %1603 = vmatmul.f32.gmra.mxu0 %v1576
        %v1604 = vpop.f32.mrf.mxu0
        %v1605 = vadd.f32 0.0, %v1604
        %1606 = vdwg.mxu0
        %v1607 = vsub.f32 %v1042, %v1596
        %v1608 = vsub.f32 %v1043, %v1599
        %v1609 = vsub.f32 %v1044, %v1602
        %v1610 = vsub.f32 %v1045, %v1605
        %v1611 = vsel %vm521, %v1531, 0.0
        %v1612 = vrot.slane %v1611, 4
        %v1613 = vadd.f32 %v1611, %v1612
        %v1614 = vrot.slane %v1613, 2
        %v1615 = vadd.f32 %v1613, %v1614
        %v1616 = vrot.slane %v1615, 1
        %v1617 = vadd.f32 %v1615, %v1616
        %v1618 = vsub.f32 %v1053, %v1617
        %v1619 = vsel %vm521, %v1508, 0.0
        %1620 = vadd.xlane.f32.xlu0 %v1619
        %v1621 = vpop.xlane.xlu0 %1620
        %v1622 = vmul.f32 %v1621, %v555
        %v1623 = vsub.f32 %v1508, %v1622
        %v1624 = vmul.f32 %v1623, %v1623
        %v1625 = vsel %vm521, %v1624, 0.0
        %1626 = vadd.xlane.f32.xlu0 %v1625
        %v1627 = vpop.xlane.xlu0 %1626
        %v1628 = vmul.f32 %v1627, %v555
        %v1629 = vadd.f32 %v1628, 1e-06
        %v1630 = vrsqrt.pop %v1629
        %v1631 = vmul.f32 %v1630, %v1629
        %v1632 = vmul.f32 %v1631, %v1630
        %v1633 = vmul.f32 0.5, %v1632
        %v1634 = vsub.f32 1.5, %v1633
        %v1635 = vmul.f32 %v1630, %v1634
        %vm1636 = vweird.f32 %v1629
        %vm1637 = vweird.f32 %v1630
        %vm1638 = vmor %vm1636, %vm1637
        %v1639 = vsel %vm1638, %v1630, %v1635
        %v1640 = vmul.f32 %v1623, %v1639
        %v1641 = vmul.f32 %v850, %v1640
        %1643 = vrot.lane.b32.xlu0 %v1641, 32
        %v1644 = vpop.permute.xlu0 %1643
        %v1646 = vadd.f32 %v1091, %v1644
        %v1647 = vadd.f32 %v1646, %v1084
        %v1648 = vsel %vm521, %v1366, %v1647
        %s1649 = scalar_lea.vmem %s491, 8 [#allocation14]
        %1650 = vst.msk [vmem:[%s1649] sm:$0xff] %vm1088, %v1648
        %s1651 = scalar_lea.vmem %s413, 16 [#allocation8]
        %v1652 = vld [vmem:[%s1651] sm:$0xff]
        %s1653 = scalar_lea.vmem %s423, 16 [#allocation10]
        %v1654 = vld [vmem:[%s1653] sm:$0xff]
        %s1655 = scalar_lea.vmem %s433, 16 [#allocation11]
        %v1656 = vld [vmem:[%s1655] sm:$0xff]
        %v1657 = vld [vmem:[%s443 + $0x2] sm:$0x1]
        %v1659 = vperm.slane %v1341, 0
        %v1662 = vsel %vm521, %v1654, 0
        %1664 = vmatpush.msra.mxu0 0.0
        %1665 = vmatpush.msra.mxu0 0.0
        %1666 = vmatpush.msra.mxu0 0.0
        %1667 = vmatpush.msra.mxu0 0.0
        %1668 = vmatpush.msra.mxu0 0.0
        %1669 = vmatpush.msra.mxu0 0.0
        %1670 = vmatpush.msra.mxu0 0.0
        %1671 = vmatpush.msra.mxu0 0.0
        %1672 = vmatpush.msra.mxu0 0.0
        %1673 = vmatpush.msra.mxu0 0.0
        %1674 = vmatpush.msra.mxu0 0.0
        %1675 = vmatpush.msra.mxu0 0.0
        %1676 = vmatpush.msra.mxu0 %v1333
        %1677 = vmatpush.msra.mxu0 %v1332
        %1678 = vmatpush.msra.mxu0 %v1331
        %1679 = vmatpush.msra.mxu0 %v1330
        %1680 = vmatmul.f32.gmra.mxu0 %v1662
        %v1681 = vpop.f32.mrf.mxu0
        %v1682 = vadd.f32 %v1659, %v1681
        %1683 = vdwg.mxu0
        %v1684 = vsub.f32 %v1656, %v1654
        %v1685 = vsel %vm521, %v1682, 0.0
        %1686 = vadd.xlane.f32.xlu0 %v1685
        %v1687 = vpop.xlane.xlu0 %1686
        %v1688 = vmul.f32 %v1687, %v555
        %v1689 = vsub.f32 %v1682, %v1688
        %v1690 = vmul.f32 %v1689, %v1689
        %v1691 = vsel %vm521, %v1690, 0.0
        %1692 = vadd.xlane.f32.xlu0 %v1691
        %v1693 = vpop.xlane.xlu0 %1692
        %v1694 = vmul.f32 %v1693, %v555
        %v1695 = vadd.f32 %v1694, 1e-06
        %v1696 = vrsqrt.pop %v1695
        %v1697 = vmul.f32 %v1696, %v1695
        %v1698 = vmul.f32 %v1697, %v1696
        %v1699 = vmul.f32 0.5, %v1698
        %v1700 = vsub.f32 1.5, %v1699
        %v1701 = vmul.f32 %v1696, %v1700
        %vm1702 = vweird.f32 %v1695
        %vm1703 = vweird.f32 %v1696
        %vm1704 = vmor %vm1702, %vm1703
        %v1705 = vsel %vm1704, %v1696, %v1701
        %v1706 = vmul.f32 %v1689, %v1705
        %v1707 = vmul.f32 %v575, %v1706
        %v1708 = vadd.f32 %v1707, %v577
        %v1709 = vsub.f32 %v1708, %v1684
        %v1710 = vmul.f32 %v575, %v1709
        %v1711 = vmul.f32 %v1710, 32.0
        %v1712 = vsel %vm521, %v1710, 0.0
        %1713 = vadd.xlane.f32.xlu0 %v1712
        %v1714 = vpop.xlane.xlu0 %1713
        %v1715 = vsub.f32 %v1711, %v1714
        %v1716 = vmul.f32 %v1710, %v1706
        %v1717 = vsel %vm521, %v1716, 0.0
        %1718 = vadd.xlane.f32.xlu0 %v1717
        %v1719 = vpop.xlane.xlu0 %1718
        %v1720 = vmul.f32 %v1706, %v1719
        %v1721 = vsub.f32 %v1715, %v1720
        %v1722 = vmul.f32 %v1705, 0.03125
        %v1723 = vmul.f32 %v1721, %v1722
        %v1724 = vperm.slane %v1657, 0
        %v1726 = vsel %vm521, %v1652, 0
        %1728 = vmatpush.xpose.msra.mxu0 0.0
        %1729 = vmatpush.xpose.msra.mxu0 0.0
        %1730 = vmatpush.xpose.msra.mxu0 0.0
        %1731 = vmatpush.xpose.msra.mxu0 0.0
        %1732 = vmatpush.xpose.msra.mxu0 0.0
        %1733 = vmatpush.xpose.msra.mxu0 0.0
        %1734 = vmatpush.xpose.msra.mxu0 0.0
        %1735 = vmatpush.xpose.msra.mxu0 0.0
        %1736 = vmatpush.xpose.msra.mxu0 0.0
        %1737 = vmatpush.xpose.msra.mxu0 0.0
        %1738 = vmatpush.xpose.msra.mxu0 0.0
        %1739 = vmatpush.xpose.msra.mxu0 0.0
        %1740 = vmatpush.xpose.msra.mxu0 0.0
        %1741 = vmatpush.xpose.msra.mxu0 0.0
        %1742 = vmatpush.xpose.msra.mxu0 0.0
        %1743 = vmatpush.xpose.msra.mxu0 %v1662
        %1744 = vmatmul.f32.gmra.mxu0 %v1726
        %v1745 = vpop.f32.mrf.mxu0
        %v1746 = vadd.f32 1.0, %v1745
        %1747 = vdwg.mxu0
        %v1748 = vmul.f32 %v1724, %v1746
        %v1749 = vsel %vm496, %v1748, 0.0
        %1750 = vmatpush.msra.mxu0 0.0
        %1751 = vmatpush.msra.mxu0 0.0
        %1752 = vmatpush.msra.mxu0 0.0
        %1753 = vmatpush.msra.mxu0 0.0
        %1754 = vmatpush.msra.mxu0 0.0
        %1755 = vmatpush.msra.mxu0 0.0
        %1756 = vmatpush.msra.mxu0 0.0
        %1757 = vmatpush.msra.mxu0 0.0
        %1758 = vmatpush.msra.mxu0 0.0
        %1759 = vmatpush.msra.mxu0 0.0
        %1760 = vmatpush.msra.mxu0 0.0
        %1761 = vmatpush.msra.mxu0 0.0
        %1762 = vmatpush.msra.mxu0 %v1333
        %1763 = vmatpush.msra.mxu0 %v1332
        %1764 = vmatpush.msra.mxu0 %v1331
        %1765 = vmatpush.msra.mxu0 %v1330
        %1766 = vmatmul.f32.gmra.mxu0 %v1726
        %v1767 = vpop.f32.mrf.mxu0
        %v1768 = vadd.f32 %v1659, %v1767
        %1769 = vdwg.mxu0
        %v1771 = vsel %vm640, %v1749, 0
        %1773 = vmatpush.msra.mxu0 0.0
        %1774 = vmatpush.msra.mxu0 0.0
        %1775 = vmatpush.msra.mxu0 0.0
        %1776 = vmatpush.msra.mxu0 0.0
        %1777 = vmatpush.msra.mxu0 0.0
        %1778 = vmatpush.msra.mxu0 0.0
        %1779 = vmatpush.msra.mxu0 0.0
        %1780 = vmatpush.msra.mxu0 0.0
        %1781 = vmatpush.msra.mxu0 0.0
        %1782 = vmatpush.msra.mxu0 0.0
        %1783 = vmatpush.msra.mxu0 0.0
        %1784 = vmatpush.msra.mxu0 0.0
        %1785 = vmatpush.msra.mxu0 0.0
        %1786 = vmatpush.msra.mxu0 0.0
        %1787 = vmatpush.msra.mxu0 0.0
        %1788 = vmatpush.msra.mxu0 %v1723
        %1789 = vmatmul.f32.gmra.mxu0 %v1771
        %v1790 = vpop.f32.mrf.mxu0
        %v1791 = vadd.f32 0.0, %v1790
        %1792 = vdwg.mxu0
        %v1793 = vsub.f32 %v1768, %v1791
        %v1794 = vsel %vm497, %v1724, 0.0
        %v1796 = vsel %vm640, %v1794, 0
        %1798 = vmatpush.msra.mxu0 0.0
        %1799 = vmatpush.msra.mxu0 0.0
        %1800 = vmatpush.msra.mxu0 0.0
        %1801 = vmatpush.msra.mxu0 0.0
        %1802 = vmatpush.msra.mxu0 0.0
        %1803 = vmatpush.msra.mxu0 0.0
        %1804 = vmatpush.msra.mxu0 0.0
        %1805 = vmatpush.msra.mxu0 0.0
        %1806 = vmatpush.msra.mxu0 0.0
        %1807 = vmatpush.msra.mxu0 0.0
        %1808 = vmatpush.msra.mxu0 0.0
        %1809 = vmatpush.msra.mxu0 0.0
        %1810 = vmatpush.msra.mxu0 0.0
        %1811 = vmatpush.msra.mxu0 0.0
        %1812 = vmatpush.msra.mxu0 0.0
        %1813 = vmatpush.msra.mxu0 %v1723
        %1814 = vmatmul.f32.gmra.mxu0 %v1796
        %v1815 = vpop.f32.mrf.mxu0
        %v1816 = vadd.f32 0.0, %v1815
        %1817 = vdwg.mxu0
        %1818 = vxpose.xlu0.b32.start [1/16] %v1654, 128
        %1819 = vxpose.xlu0.b32.cont [2/16] 0.0, 128
        %1820 = vxpose.xlu0.b32.cont [3/16] 0.0, 128
        %1821 = vxpose.xlu0.b32.cont [4/16] 0.0, 128
        %1822 = vxpose.xlu0.b32.cont [5/16] 0.0, 128
        %1823 = vxpose.xlu0.b32.cont [6/16] 0.0, 128
        %1824 = vxpose.xlu0.b32.cont [7/16] 0.0, 128
        %1825 = vxpose.xlu0.b32.cont [8/16] 0.0, 128
        %1826 = vxpose.xlu0.b32.cont [9/16] 0.0, 128
        %1827 = vxpose.xlu0.b32.cont [10/16] 0.0, 128
        %1828 = vxpose.xlu0.b32.cont [11/16] 0.0, 128
        %1829 = vxpose.xlu0.b32.cont [12/16] 0.0, 128
        %1830 = vxpose.xlu0.b32.cont [13/16] 0.0, 128
        %1831 = vxpose.xlu0.b32.cont [14/16] 0.0, 128
        %1832 = vxpose.xlu0.b32.cont [15/16] 0.0, 128
        %1833 = vxpose.xlu0.b32.end [16/16] 0.0, 128
        %v1834 = vpop.trf.xlu0
        %v1835 = vpop.trf.xlu0
        %v1836 = vpop.trf.xlu0
        %v1837 = vpop.trf.xlu0
        %v1838 = vpop.trf.xlu0
        %v1839 = vpop.trf.xlu0
        %v1840 = vpop.trf.xlu0
        %v1841 = vpop.trf.xlu0
        %v1842 = vpop.trf.xlu0
        %v1843 = vpop.trf.xlu0
        %v1844 = vpop.trf.xlu0
        %v1845 = vpop.trf.xlu0
        %v1846 = vpop.trf.xlu0
        %v1847 = vpop.trf.xlu0
        %v1848 = vpop.trf.xlu0
        %v1849 = vpop.trf.xlu0
        %v1851 = vsel %vm640, %v1834, 0
        %v1854 = vsel %vm640, %v1835, 0
        %v1857 = vsel %vm640, %v1836, 0
        %v1860 = vsel %vm640, %v1837, 0
        %1862 = vmatpush.msra.mxu0 0.0
        %1863 = vmatpush.msra.mxu0 0.0
        %1864 = vmatpush.msra.mxu0 0.0
        %1865 = vmatpush.msra.mxu0 0.0
        %1866 = vmatpush.msra.mxu0 0.0
        %1867 = vmatpush.msra.mxu0 0.0
        %1868 = vmatpush.msra.mxu0 0.0
        %1869 = vmatpush.msra.mxu0 0.0
        %1870 = vmatpush.msra.mxu0 0.0
        %1871 = vmatpush.msra.mxu0 0.0
        %1872 = vmatpush.msra.mxu0 0.0
        %1873 = vmatpush.msra.mxu0 0.0
        %1874 = vmatpush.msra.mxu0 0.0
        %1875 = vmatpush.msra.mxu0 0.0
        %1876 = vmatpush.msra.mxu0 0.0
        %1877 = vmatpush.msra.mxu0 %v1816
        %1878 = vmatmul.f32.gmra.mxu0 %v1851
        %v1879 = vpop.f32.mrf.mxu0
        %v1880 = vadd.f32 0.0, %v1879
        %1881 = vmatmul.f32.gmra.mxu0 %v1854
        %v1882 = vpop.f32.mrf.mxu0
        %v1883 = vadd.f32 0.0, %v1882
        %1884 = vmatmul.f32.gmra.mxu0 %v1857
        %v1885 = vpop.f32.mrf.mxu0
        %v1886 = vadd.f32 0.0, %v1885
        %1887 = vmatmul.f32.gmra.mxu0 %v1860
        %v1888 = vpop.f32.mrf.mxu0
        %v1889 = vadd.f32 0.0, %v1888
        %1890 = vdwg.mxu0
        %v1891 = vsub.f32 %v1330, %v1880
        %v1892 = vsub.f32 %v1331, %v1883
        %v1893 = vsub.f32 %v1332, %v1886
        %v1894 = vsub.f32 %v1333, %v1889
        %v1895 = vsel %vm521, %v1816, 0.0
        %v1896 = vrot.slane %v1895, 4
        %v1897 = vadd.f32 %v1895, %v1896
        %v1898 = vrot.slane %v1897, 2
        %v1899 = vadd.f32 %v1897, %v1898
        %v1900 = vrot.slane %v1899, 1
        %v1901 = vadd.f32 %v1899, %v1900
        %v1902 = vsub.f32 %v1341, %v1901
        %v1903 = vsel %vm521, %v1793, 0.0
        %1904 = vadd.xlane.f32.xlu0 %v1903
        %v1905 = vpop.xlane.xlu0 %1904
        %v1906 = vmul.f32 %v1905, %v555
        %v1907 = vsub.f32 %v1793, %v1906
        %v1908 = vmul.f32 %v1907, %v1907
        %v1909 = vsel %vm521, %v1908, 0.0
        %1910 = vadd.xlane.f32.xlu0 %v1909
        %v1911 = vpop.xlane.xlu0 %1910
        %v1912 = vmul.f32 %v1911, %v555
        %v1913 = vadd.f32 %v1912, 1e-06
        %v1914 = vrsqrt.pop %v1913
        %v1915 = vmul.f32 %v1914, %v1913
        %v1916 = vmul.f32 %v1915, %v1914
        %v1917 = vmul.f32 0.5, %v1916
        %v1918 = vsub.f32 1.5, %v1917
        %v1919 = vmul.f32 %v1914, %v1918
        %vm1920 = vweird.f32 %v1913
        %vm1921 = vweird.f32 %v1914
        %vm1922 = vmor %vm1920, %vm1921
        %v1923 = vsel %vm1922, %v1914, %v1919
        %v1924 = vmul.f32 %v1907, %v1923
        %v1925 = vmul.f32 %v575, %v1924
        %v1926 = vadd.f32 %v1652, %v1925
        %v1927 = vadd.f32 %v1926, %v577
        %v1928 = vld [vmem:[%s799 + $0x2] sm:$0x1]
        %v1930 = vperm.slane %v1618, 0
        %1932 = vrot.lane.b32.xlu0 %v1654, 96
        %v1933 = vpop.permute.xlu0 %1932
        %v1934 = vsel %vm521, %v1933, 0
        %1936 = vmatpush.msra.mxu0 0.0
        %1937 = vmatpush.msra.mxu0 0.0
        %1938 = vmatpush.msra.mxu0 0.0
        %1939 = vmatpush.msra.mxu0 0.0
        %1940 = vmatpush.msra.mxu0 0.0
        %1941 = vmatpush.msra.mxu0 0.0
        %1942 = vmatpush.msra.mxu0 0.0
        %1943 = vmatpush.msra.mxu0 0.0
        %1944 = vmatpush.msra.mxu0 0.0
        %1945 = vmatpush.msra.mxu0 0.0
        %1946 = vmatpush.msra.mxu0 0.0
        %1947 = vmatpush.msra.mxu0 0.0
        %1948 = vmatpush.msra.mxu0 %v1610
        %1949 = vmatpush.msra.mxu0 %v1609
        %1950 = vmatpush.msra.mxu0 %v1608
        %1951 = vmatpush.msra.mxu0 %v1607
        %1952 = vmatmul.f32.gmra.mxu0 %v1934
        %v1953 = vpop.f32.mrf.mxu0
        %v1954 = vadd.f32 %v1930, %v1953
        %1955 = vdwg.mxu0
        %v1956 = vsel %vm521, %v1954, 0.0
        %1957 = vadd.xlane.f32.xlu0 %v1956
        %v1958 = vpop.xlane.xlu0 %1957
        %v1959 = vmul.f32 %v1958, %v555
        %v1960 = vsub.f32 %v1954, %v1959
        %v1961 = vmul.f32 %v1960, %v1960
        %v1962 = vsel %vm521, %v1961, 0.0
        %1963 = vadd.xlane.f32.xlu0 %v1962
        %v1964 = vpop.xlane.xlu0 %1963
        %v1965 = vmul.f32 %v1964, %v555
        %v1966 = vadd.f32 %v1965, 1e-06
        %v1967 = vrsqrt.pop %v1966
        %v1968 = vmul.f32 %v1967, %v1966
        %v1969 = vmul.f32 %v1968, %v1967
        %v1970 = vmul.f32 0.5, %v1969
        %v1971 = vsub.f32 1.5, %v1970
        %v1972 = vmul.f32 %v1967, %v1971
        %vm1973 = vweird.f32 %v1966
        %vm1974 = vweird.f32 %v1967
        %vm1975 = vmor %vm1973, %vm1974
        %v1976 = vsel %vm1975, %v1967, %v1972
        %v1977 = vmul.f32 %v1960, %v1976
        %v1978 = vmul.f32 %v850, %v1977
        %v1979 = vadd.f32 %v1978, %v852
        %1981 = vrot.lane.b32.xlu0 %v1684, 96
        %v1982 = vpop.permute.xlu0 %1981
        %v1984 = vsub.f32 %v1979, %v1982
        %v1985 = vmul.f32 %v850, %v1984
        %v1986 = vmul.f32 %v1985, 32.0
        %v1987 = vsel %vm521, %v1985, 0.0
        %1988 = vadd.xlane.f32.xlu0 %v1987
        %v1989 = vpop.xlane.xlu0 %1988
        %v1990 = vsub.f32 %v1986, %v1989
        %v1991 = vmul.f32 %v1985, %v1977
        %v1992 = vsel %vm521, %v1991, 0.0
        %1993 = vadd.xlane.f32.xlu0 %v1992
        %v1994 = vpop.xlane.xlu0 %1993
        %v1995 = vmul.f32 %v1977, %v1994
        %v1996 = vsub.f32 %v1990, %v1995
        %v1997 = vmul.f32 %v1976, 0.03125
        %v1998 = vmul.f32 %v1996, %v1997
        %v1999 = vperm.slane %v1928, 0
        %2000 = vrot.lane.b32.xlu0 %v1652, 96
        %v2001 = vpop.permute.xlu0 %2000
        %v2002 = vsel %vm521, %v2001, 0
        %2004 = vmatpush.xpose.msra.mxu0 0.0
        %2005 = vmatpush.xpose.msra.mxu0 0.0
        %2006 = vmatpush.xpose.msra.mxu0 0.0
        %2007 = vmatpush.xpose.msra.mxu0 0.0
        %2008 = vmatpush.xpose.msra.mxu0 0.0
        %2009 = vmatpush.xpose.msra.mxu0 0.0
        %2010 = vmatpush.xpose.msra.mxu0 0.0
        %2011 = vmatpush.xpose.msra.mxu0 0.0
        %2012 = vmatpush.xpose.msra.mxu0 0.0
        %2013 = vmatpush.xpose.msra.mxu0 0.0
        %2014 = vmatpush.xpose.msra.mxu0 0.0
        %2015 = vmatpush.xpose.msra.mxu0 0.0
        %2016 = vmatpush.xpose.msra.mxu0 0.0
        %2017 = vmatpush.xpose.msra.mxu0 0.0
        %2018 = vmatpush.xpose.msra.mxu0 0.0
        %2019 = vmatpush.xpose.msra.mxu0 %v1934
        %2020 = vmatmul.f32.gmra.mxu0 %v2002
        %v2021 = vpop.f32.mrf.mxu0
        %v2022 = vadd.f32 1.0, %v2021
        %2023 = vdwg.mxu0
        %v2024 = vmul.f32 %v1999, %v2022
        %v2025 = vsel %vm496, %v2024, 0.0
        %2026 = vmatpush.msra.mxu0 0.0
        %2027 = vmatpush.msra.mxu0 0.0
        %2028 = vmatpush.msra.mxu0 0.0
        %2029 = vmatpush.msra.mxu0 0.0
        %2030 = vmatpush.msra.mxu0 0.0
        %2031 = vmatpush.msra.mxu0 0.0
        %2032 = vmatpush.msra.mxu0 0.0
        %2033 = vmatpush.msra.mxu0 0.0
        %2034 = vmatpush.msra.mxu0 0.0
        %2035 = vmatpush.msra.mxu0 0.0
        %2036 = vmatpush.msra.mxu0 0.0
        %2037 = vmatpush.msra.mxu0 0.0
        %2038 = vmatpush.msra.mxu0 %v1610
        %2039 = vmatpush.msra.mxu0 %v1609
        %2040 = vmatpush.msra.mxu0 %v1608
        %2041 = vmatpush.msra.mxu0 %v1607
        %2042 = vmatmul.f32.gmra.mxu0 %v2002
        %v2043 = vpop.f32.mrf.mxu0
        %v2044 = vadd.f32 %v1930, %v2043
        %2045 = vdwg.mxu0
        %v2047 = vsel %vm640, %v2025, 0
        %2049 = vmatpush.msra.mxu0 0.0
        %2050 = vmatpush.msra.mxu0 0.0
        %2051 = vmatpush.msra.mxu0 0.0
        %2052 = vmatpush.msra.mxu0 0.0
        %2053 = vmatpush.msra.mxu0 0.0
        %2054 = vmatpush.msra.mxu0 0.0
        %2055 = vmatpush.msra.mxu0 0.0
        %2056 = vmatpush.msra.mxu0 0.0
        %2057 = vmatpush.msra.mxu0 0.0
        %2058 = vmatpush.msra.mxu0 0.0
        %2059 = vmatpush.msra.mxu0 0.0
        %2060 = vmatpush.msra.mxu0 0.0
        %2061 = vmatpush.msra.mxu0 0.0
        %2062 = vmatpush.msra.mxu0 0.0
        %2063 = vmatpush.msra.mxu0 0.0
        %2064 = vmatpush.msra.mxu0 %v1998
        %2065 = vmatmul.f32.gmra.mxu0 %v2047
        %v2066 = vpop.f32.mrf.mxu0
        %v2067 = vadd.f32 0.0, %v2066
        %2068 = vdwg.mxu0
        %v2069 = vsub.f32 %v2044, %v2067
        %v2070 = vsel %vm497, %v1999, 0.0
        %v2072 = vsel %vm640, %v2070, 0
        %2074 = vmatpush.msra.mxu0 0.0
        %2075 = vmatpush.msra.mxu0 0.0
        %2076 = vmatpush.msra.mxu0 0.0
        %2077 = vmatpush.msra.mxu0 0.0
        %2078 = vmatpush.msra.mxu0 0.0
        %2079 = vmatpush.msra.mxu0 0.0
        %2080 = vmatpush.msra.mxu0 0.0
        %2081 = vmatpush.msra.mxu0 0.0
        %2082 = vmatpush.msra.mxu0 0.0
        %2083 = vmatpush.msra.mxu0 0.0
        %2084 = vmatpush.msra.mxu0 0.0
        %2085 = vmatpush.msra.mxu0 0.0
        %2086 = vmatpush.msra.mxu0 0.0
        %2087 = vmatpush.msra.mxu0 0.0
        %2088 = vmatpush.msra.mxu0 0.0
        %2089 = vmatpush.msra.mxu0 %v1998
        %2090 = vmatmul.f32.gmra.mxu0 %v2072
        %v2091 = vpop.f32.mrf.mxu0
        %v2092 = vadd.f32 0.0, %v2091
        %2093 = vdwg.mxu0
        %2095 = vxpose.xlu0.b32.start [1/16] %v1933, 128
        %2096 = vxpose.xlu0.b32.cont [2/16] 0.0, 128
        %2097 = vxpose.xlu0.b32.cont [3/16] 0.0, 128
        %2098 = vxpose.xlu0.b32.cont [4/16] 0.0, 128
        %2099 = vxpose.xlu0.b32.cont [5/16] 0.0, 128
        %2100 = vxpose.xlu0.b32.cont [6/16] 0.0, 128
        %2101 = vxpose.xlu0.b32.cont [7/16] 0.0, 128
        %2102 = vxpose.xlu0.b32.cont [8/16] 0.0, 128
        %2103 = vxpose.xlu0.b32.cont [9/16] 0.0, 128
        %2104 = vxpose.xlu0.b32.cont [10/16] 0.0, 128
        %2105 = vxpose.xlu0.b32.cont [11/16] 0.0, 128
        %2106 = vxpose.xlu0.b32.cont [12/16] 0.0, 128
        %2107 = vxpose.xlu0.b32.cont [13/16] 0.0, 128
        %2108 = vxpose.xlu0.b32.cont [14/16] 0.0, 128
        %2109 = vxpose.xlu0.b32.cont [15/16] 0.0, 128
        %2110 = vxpose.xlu0.b32.end [16/16] 0.0, 128
        %v2111 = vpop.trf.xlu0
        %v2112 = vpop.trf.xlu0
        %v2113 = vpop.trf.xlu0
        %v2114 = vpop.trf.xlu0
        %v2115 = vpop.trf.xlu0
        %v2116 = vpop.trf.xlu0
        %v2117 = vpop.trf.xlu0
        %v2118 = vpop.trf.xlu0
        %v2119 = vpop.trf.xlu0
        %v2120 = vpop.trf.xlu0
        %v2121 = vpop.trf.xlu0
        %v2122 = vpop.trf.xlu0
        %v2123 = vpop.trf.xlu0
        %v2124 = vpop.trf.xlu0
        %v2125 = vpop.trf.xlu0
        %v2126 = vpop.trf.xlu0
        %v2128 = vsel %vm640, %v2111, 0
        %v2131 = vsel %vm640, %v2112, 0
        %v2134 = vsel %vm640, %v2113, 0
        %v2137 = vsel %vm640, %v2114, 0
        %2139 = vmatpush.msra.mxu0 0.0
        %2140 = vmatpush.msra.mxu0 0.0
        %2141 = vmatpush.msra.mxu0 0.0
        %2142 = vmatpush.msra.mxu0 0.0
        %2143 = vmatpush.msra.mxu0 0.0
        %2144 = vmatpush.msra.mxu0 0.0
        %2145 = vmatpush.msra.mxu0 0.0
        %2146 = vmatpush.msra.mxu0 0.0
        %2147 = vmatpush.msra.mxu0 0.0
        %2148 = vmatpush.msra.mxu0 0.0
        %2149 = vmatpush.msra.mxu0 0.0
        %2150 = vmatpush.msra.mxu0 0.0
        %2151 = vmatpush.msra.mxu0 0.0
        %2152 = vmatpush.msra.mxu0 0.0
        %2153 = vmatpush.msra.mxu0 0.0
        %2154 = vmatpush.msra.mxu0 %v2092
        %2155 = vmatmul.f32.gmra.mxu0 %v2128
        %v2156 = vpop.f32.mrf.mxu0
        %v2157 = vadd.f32 0.0, %v2156
        %2158 = vmatmul.f32.gmra.mxu0 %v2131
        %v2159 = vpop.f32.mrf.mxu0
        %v2160 = vadd.f32 0.0, %v2159
        %2161 = vmatmul.f32.gmra.mxu0 %v2134
        %v2162 = vpop.f32.mrf.mxu0
        %v2163 = vadd.f32 0.0, %v2162
        %2164 = vmatmul.f32.gmra.mxu0 %v2137
        %v2165 = vpop.f32.mrf.mxu0
        %v2166 = vadd.f32 0.0, %v2165
        %2167 = vdwg.mxu0
        %v2168 = vsub.f32 %v1607, %v2157
        %v2169 = vsub.f32 %v1608, %v2160
        %v2170 = vsub.f32 %v1609, %v2163
        %v2171 = vsub.f32 %v1610, %v2166
        %v2172 = vsel %vm521, %v2092, 0.0
        %v2173 = vrot.slane %v2172, 4
        %v2174 = vadd.f32 %v2172, %v2173
        %v2175 = vrot.slane %v2174, 2
        %v2176 = vadd.f32 %v2174, %v2175
        %v2177 = vrot.slane %v2176, 1
        %v2178 = vadd.f32 %v2176, %v2177
        %v2179 = vsub.f32 %v1618, %v2178
        %v2180 = vsel %vm521, %v2069, 0.0
        %2181 = vadd.xlane.f32.xlu0 %v2180
        %v2182 = vpop.xlane.xlu0 %2181
        %v2183 = vmul.f32 %v2182, %v555
        %v2184 = vsub.f32 %v2069, %v2183
        %v2185 = vmul.f32 %v2184, %v2184
        %v2186 = vsel %vm521, %v2185, 0.0
        %2187 = vadd.xlane.f32.xlu0 %v2186
        %v2188 = vpop.xlane.xlu0 %2187
        %v2189 = vmul.f32 %v2188, %v555
        %v2190 = vadd.f32 %v2189, 1e-06
        %v2191 = vrsqrt.pop %v2190
        %v2192 = vmul.f32 %v2191, %v2190
        %v2193 = vmul.f32 %v2192, %v2191
        %v2194 = vmul.f32 0.5, %v2193
        %v2195 = vsub.f32 1.5, %v2194
        %v2196 = vmul.f32 %v2191, %v2195
        %vm2197 = vweird.f32 %v2190
        %vm2198 = vweird.f32 %v2191
        %vm2199 = vmor %vm2197, %vm2198
        %v2200 = vsel %vm2199, %v2191, %v2196
        %v2201 = vmul.f32 %v2184, %v2200
        %v2202 = vmul.f32 %v850, %v2201
        %2204 = vrot.lane.b32.xlu0 %v2202, 32
        %v2205 = vpop.permute.xlu0 %2204
        %v2207 = vadd.f32 %v1652, %v2205
        %v2208 = vadd.f32 %v2207, %v1084
        %v2209 = vsel %vm521, %v1927, %v2208
        %s2210 = scalar_lea.vmem %s491, 16 [#allocation14]
        %2211 = vst.msk [vmem:[%s2210] sm:$0xff] %vm1088, %v2209
        %s2212 = scalar_lea.vmem %s413, 24 [#allocation8]
        %v2213 = vld [vmem:[%s2212] sm:$0xff]
        %s2214 = scalar_lea.vmem %s423, 24 [#allocation10]
        %v2215 = vld [vmem:[%s2214] sm:$0xff]
        %s2216 = scalar_lea.vmem %s433, 24 [#allocation11]
        %v2217 = vld [vmem:[%s2216] sm:$0xff]
        %v2218 = vld [vmem:[%s443 + $0x3] sm:$0x1]
        %v2220 = vperm.slane %v1902, 0
        %v2223 = vsel %vm521, %v2215, 0
        %2225 = vmatpush.msra.mxu0 0.0
        %2226 = vmatpush.msra.mxu0 0.0
        %2227 = vmatpush.msra.mxu0 0.0
        %2228 = vmatpush.msra.mxu0 0.0
        %2229 = vmatpush.msra.mxu0 0.0
        %2230 = vmatpush.msra.mxu0 0.0
        %2231 = vmatpush.msra.mxu0 0.0
        %2232 = vmatpush.msra.mxu0 0.0
        %2233 = vmatpush.msra.mxu0 0.0
        %2234 = vmatpush.msra.mxu0 0.0
        %2235 = vmatpush.msra.mxu0 0.0
        %2236 = vmatpush.msra.mxu0 0.0
        %2237 = vmatpush.msra.mxu0 %v1894
        %2238 = vmatpush.msra.mxu0 %v1893
        %2239 = vmatpush.msra.mxu0 %v1892
        %2240 = vmatpush.msra.mxu0 %v1891
        %2241 = vmatmul.f32.gmra.mxu0 %v2223
        %v2242 = vpop.f32.mrf.mxu0
        %v2243 = vadd.f32 %v2220, %v2242
        %2244 = vdwg.mxu0
        %v2245 = vsub.f32 %v2217, %v2215
        %v2246 = vsel %vm521, %v2243, 0.0
        %2247 = vadd.xlane.f32.xlu0 %v2246
        %v2248 = vpop.xlane.xlu0 %2247
        %v2249 = vmul.f32 %v2248, %v555
        %v2250 = vsub.f32 %v2243, %v2249
        %v2251 = vmul.f32 %v2250, %v2250
        %v2252 = vsel %vm521, %v2251, 0.0
        %2253 = vadd.xlane.f32.xlu0 %v2252
        %v2254 = vpop.xlane.xlu0 %2253
        %v2255 = vmul.f32 %v2254, %v555
        %v2256 = vadd.f32 %v2255, 1e-06
        %v2257 = vrsqrt.pop %v2256
        %v2258 = vmul.f32 %v2257, %v2256
        %v2259 = vmul.f32 %v2258, %v2257
        %v2260 = vmul.f32 0.5, %v2259
        %v2261 = vsub.f32 1.5, %v2260
        %v2262 = vmul.f32 %v2257, %v2261
        %vm2263 = vweird.f32 %v2256
        %vm2264 = vweird.f32 %v2257
        %vm2265 = vmor %vm2263, %vm2264
        %v2266 = vsel %vm2265, %v2257, %v2262
        %v2267 = vmul.f32 %v2250, %v2266
        %v2268 = vmul.f32 %v575, %v2267
        %v2269 = vadd.f32 %v2268, %v577
        %v2270 = vsub.f32 %v2269, %v2245
        %v2271 = vmul.f32 %v575, %v2270
        %v2272 = vmul.f32 %v2271, 32.0
        %v2273 = vsel %vm521, %v2271, 0.0
        %2274 = vadd.xlane.f32.xlu0 %v2273
        %v2275 = vpop.xlane.xlu0 %2274
        %v2276 = vsub.f32 %v2272, %v2275
        %v2277 = vmul.f32 %v2271, %v2267
        %v2278 = vsel %vm521, %v2277, 0.0
        %2279 = vadd.xlane.f32.xlu0 %v2278
        %v2280 = vpop.xlane.xlu0 %2279
        %v2281 = vmul.f32 %v2267, %v2280
        %v2282 = vsub.f32 %v2276, %v2281
        %v2283 = vmul.f32 %v2266, 0.03125
        %v2284 = vmul.f32 %v2282, %v2283
        %v2285 = vperm.slane %v2218, 0
        %v2287 = vsel %vm521, %v2213, 0
        %2289 = vmatpush.xpose.msra.mxu0 0.0
        %2290 = vmatpush.xpose.msra.mxu0 0.0
        %2291 = vmatpush.xpose.msra.mxu0 0.0
        %2292 = vmatpush.xpose.msra.mxu0 0.0
        %2293 = vmatpush.xpose.msra.mxu0 0.0
        %2294 = vmatpush.xpose.msra.mxu0 0.0
        %2295 = vmatpush.xpose.msra.mxu0 0.0
        %2296 = vmatpush.xpose.msra.mxu0 0.0
        %2297 = vmatpush.xpose.msra.mxu0 0.0
        %2298 = vmatpush.xpose.msra.mxu0 0.0
        %2299 = vmatpush.xpose.msra.mxu0 0.0
        %2300 = vmatpush.xpose.msra.mxu0 0.0
        %2301 = vmatpush.xpose.msra.mxu0 0.0
        %2302 = vmatpush.xpose.msra.mxu0 0.0
        %2303 = vmatpush.xpose.msra.mxu0 0.0
        %2304 = vmatpush.xpose.msra.mxu0 %v2223
        %2305 = vmatmul.f32.gmra.mxu0 %v2287
        %v2306 = vpop.f32.mrf.mxu0
        %v2307 = vadd.f32 1.0, %v2306
        %2308 = vdwg.mxu0
        %v2309 = vmul.f32 %v2285, %v2307
        %v2310 = vsel %vm496, %v2309, 0.0
        %2311 = vmatpush.msra.mxu0 0.0
        %2312 = vmatpush.msra.mxu0 0.0
        %2313 = vmatpush.msra.mxu0 0.0
        %2314 = vmatpush.msra.mxu0 0.0
        %2315 = vmatpush.msra.mxu0 0.0
        %2316 = vmatpush.msra.mxu0 0.0
        %2317 = vmatpush.msra.mxu0 0.0
        %2318 = vmatpush.msra.mxu0 0.0
        %2319 = vmatpush.msra.mxu0 0.0
        %2320 = vmatpush.msra.mxu0 0.0
        %2321 = vmatpush.msra.mxu0 0.0
        %2322 = vmatpush.msra.mxu0 0.0
        %2323 = vmatpush.msra.mxu0 %v1894
        %2324 = vmatpush.msra.mxu0 %v1893
        %2325 = vmatpush.msra.mxu0 %v1892
        %2326 = vmatpush.msra.mxu0 %v1891
        %2327 = vmatmul.f32.gmra.mxu0 %v2287
        %v2328 = vpop.f32.mrf.mxu0
        %v2329 = vadd.f32 %v2220, %v2328
        %2330 = vdwg.mxu0
        %v2332 = vsel %vm640, %v2310, 0
        %2334 = vmatpush.msra.mxu0 0.0
        %2335 = vmatpush.msra.mxu0 0.0
        %2336 = vmatpush.msra.mxu0 0.0
        %2337 = vmatpush.msra.mxu0 0.0
        %2338 = vmatpush.msra.mxu0 0.0
        %2339 = vmatpush.msra.mxu0 0.0
        %2340 = vmatpush.msra.mxu0 0.0
        %2341 = vmatpush.msra.mxu0 0.0
        %2342 = vmatpush.msra.mxu0 0.0
        %2343 = vmatpush.msra.mxu0 0.0
        %2344 = vmatpush.msra.mxu0 0.0
        %2345 = vmatpush.msra.mxu0 0.0
        %2346 = vmatpush.msra.mxu0 0.0
        %2347 = vmatpush.msra.mxu0 0.0
        %2348 = vmatpush.msra.mxu0 0.0
        %2349 = vmatpush.msra.mxu0 %v2284
        %2350 = vmatmul.f32.gmra.mxu0 %v2332
        %v2351 = vpop.f32.mrf.mxu0
        %v2352 = vadd.f32 0.0, %v2351
        %2353 = vdwg.mxu0
        %v2354 = vsub.f32 %v2329, %v2352
        %v2355 = vsel %vm497, %v2285, 0.0
        %v2357 = vsel %vm640, %v2355, 0
        %2359 = vmatpush.msra.mxu0 0.0
        %2360 = vmatpush.msra.mxu0 0.0
        %2361 = vmatpush.msra.mxu0 0.0
        %2362 = vmatpush.msra.mxu0 0.0
        %2363 = vmatpush.msra.mxu0 0.0
        %2364 = vmatpush.msra.mxu0 0.0
        %2365 = vmatpush.msra.mxu0 0.0
        %2366 = vmatpush.msra.mxu0 0.0
        %2367 = vmatpush.msra.mxu0 0.0
        %2368 = vmatpush.msra.mxu0 0.0
        %2369 = vmatpush.msra.mxu0 0.0
        %2370 = vmatpush.msra.mxu0 0.0
        %2371 = vmatpush.msra.mxu0 0.0
        %2372 = vmatpush.msra.mxu0 0.0
        %2373 = vmatpush.msra.mxu0 0.0
        %2374 = vmatpush.msra.mxu0 %v2284
        %2375 = vmatmul.f32.gmra.mxu0 %v2357
        %v2376 = vpop.f32.mrf.mxu0
        %v2377 = vadd.f32 0.0, %v2376
        %2378 = vdwg.mxu0
        %2379 = vxpose.xlu0.b32.start [1/16] %v2215, 128
        %2380 = vxpose.xlu0.b32.cont [2/16] 0.0, 128
        %2381 = vxpose.xlu0.b32.cont [3/16] 0.0, 128
        %2382 = vxpose.xlu0.b32.cont [4/16] 0.0, 128
        %2383 = vxpose.xlu0.b32.cont [5/16] 0.0, 128
        %2384 = vxpose.xlu0.b32.cont [6/16] 0.0, 128
        %2385 = vxpose.xlu0.b32.cont [7/16] 0.0, 128
        %2386 = vxpose.xlu0.b32.cont [8/16] 0.0, 128
        %2387 = vxpose.xlu0.b32.cont [9/16] 0.0, 128
        %2388 = vxpose.xlu0.b32.cont [10/16] 0.0, 128
        %2389 = vxpose.xlu0.b32.cont [11/16] 0.0, 128
        %2390 = vxpose.xlu0.b32.cont [12/16] 0.0, 128
        %2391 = vxpose.xlu0.b32.cont [13/16] 0.0, 128
        %2392 = vxpose.xlu0.b32.cont [14/16] 0.0, 128
        %2393 = vxpose.xlu0.b32.cont [15/16] 0.0, 128
        %2394 = vxpose.xlu0.b32.end [16/16] 0.0, 128
        %v2395 = vpop.trf.xlu0
        %v2396 = vpop.trf.xlu0
        %v2397 = vpop.trf.xlu0
        %v2398 = vpop.trf.xlu0
        %v2399 = vpop.trf.xlu0
        %v2400 = vpop.trf.xlu0
        %v2401 = vpop.trf.xlu0
        %v2402 = vpop.trf.xlu0
        %v2403 = vpop.trf.xlu0
        %v2404 = vpop.trf.xlu0
        %v2405 = vpop.trf.xlu0
        %v2406 = vpop.trf.xlu0
        %v2407 = vpop.trf.xlu0
        %v2408 = vpop.trf.xlu0
        %v2409 = vpop.trf.xlu0
        %v2410 = vpop.trf.xlu0
        %v2412 = vsel %vm640, %v2395, 0
        %v2415 = vsel %vm640, %v2396, 0
        %v2418 = vsel %vm640, %v2397, 0
        %v2421 = vsel %vm640, %v2398, 0
        %2423 = vmatpush.msra.mxu0 0.0
        %2424 = vmatpush.msra.mxu0 0.0
        %2425 = vmatpush.msra.mxu0 0.0
        %2426 = vmatpush.msra.mxu0 0.0
        %2427 = vmatpush.msra.mxu0 0.0
        %2428 = vmatpush.msra.mxu0 0.0
        %2429 = vmatpush.msra.mxu0 0.0
        %2430 = vmatpush.msra.mxu0 0.0
        %2431 = vmatpush.msra.mxu0 0.0
        %2432 = vmatpush.msra.mxu0 0.0
        %2433 = vmatpush.msra.mxu0 0.0
        %2434 = vmatpush.msra.mxu0 0.0
        %2435 = vmatpush.msra.mxu0 0.0
        %2436 = vmatpush.msra.mxu0 0.0
        %2437 = vmatpush.msra.mxu0 0.0
        %2438 = vmatpush.msra.mxu0 %v2377
        %2439 = vmatmul.f32.gmra.mxu0 %v2412
        %v2440 = vpop.f32.mrf.mxu0
        %v2441 = vadd.f32 0.0, %v2440
        %2442 = vmatmul.f32.gmra.mxu0 %v2415
        %v2443 = vpop.f32.mrf.mxu0
        %v2444 = vadd.f32 0.0, %v2443
        %2445 = vmatmul.f32.gmra.mxu0 %v2418
        %v2446 = vpop.f32.mrf.mxu0
        %v2447 = vadd.f32 0.0, %v2446
        %2448 = vmatmul.f32.gmra.mxu0 %v2421
        %v2449 = vpop.f32.mrf.mxu0
        %v2450 = vadd.f32 0.0, %v2449
        %2451 = vdwg.mxu0
        %v2452 = vsub.f32 %v1891, %v2441
        %v2453 = vsub.f32 %v1892, %v2444
        %v2454 = vsub.f32 %v1893, %v2447
        %v2455 = vsub.f32 %v1894, %v2450
        %v2456 = vsel %vm521, %v2377, 0.0
        %v2457 = vrot.slane %v2456, 4
        %v2458 = vadd.f32 %v2456, %v2457
        %v2459 = vrot.slane %v2458, 2
        %v2460 = vadd.f32 %v2458, %v2459
        %v2461 = vrot.slane %v2460, 1
        %v2462 = vadd.f32 %v2460, %v2461
        %v2463 = vsub.f32 %v1902, %v2462
        %v2464 = vsel %vm521, %v2354, 0.0
        %2465 = vadd.xlane.f32.xlu0 %v2464
        %v2466 = vpop.xlane.xlu0 %2465
        %v2467 = vmul.f32 %v2466, %v555
        %v2468 = vsub.f32 %v2354, %v2467
        %v2469 = vmul.f32 %v2468, %v2468
        %v2470 = vsel %vm521, %v2469, 0.0
        %2471 = vadd.xlane.f32.xlu0 %v2470
        %v2472 = vpop.xlane.xlu0 %2471
        %v2473 = vmul.f32 %v2472, %v555
        %v2474 = vadd.f32 %v2473, 1e-06
        %v2475 = vrsqrt.pop %v2474
        %v2476 = vmul.f32 %v2475, %v2474
        %v2477 = vmul.f32 %v2476, %v2475
        %v2478 = vmul.f32 0.5, %v2477
        %v2479 = vsub.f32 1.5, %v2478
        %v2480 = vmul.f32 %v2475, %v2479
        %vm2481 = vweird.f32 %v2474
        %vm2482 = vweird.f32 %v2475
        %vm2483 = vmor %vm2481, %vm2482
        %v2484 = vsel %vm2483, %v2475, %v2480
        %v2485 = vmul.f32 %v2468, %v2484
        %v2486 = vmul.f32 %v575, %v2485
        %v2487 = vadd.f32 %v2213, %v2486
        %v2488 = vadd.f32 %v2487, %v577
        %v2489 = vld [vmem:[%s799 + $0x3] sm:$0x1]
        %v2491 = vperm.slane %v2179, 0
        %2493 = vrot.lane.b32.xlu0 %v2215, 96
        %v2494 = vpop.permute.xlu0 %2493
        %v2495 = vsel %vm521, %v2494, 0
        %2497 = vmatpush.msra.mxu0 0.0
        %2498 = vmatpush.msra.mxu0 0.0
        %2499 = vmatpush.msra.mxu0 0.0
        %2500 = vmatpush.msra.mxu0 0.0
        %2501 = vmatpush.msra.mxu0 0.0
        %2502 = vmatpush.msra.mxu0 0.0
        %2503 = vmatpush.msra.mxu0 0.0
        %2504 = vmatpush.msra.mxu0 0.0
        %2505 = vmatpush.msra.mxu0 0.0
        %2506 = vmatpush.msra.mxu0 0.0
        %2507 = vmatpush.msra.mxu0 0.0
        %2508 = vmatpush.msra.mxu0 0.0
        %2509 = vmatpush.msra.mxu0 %v2171
        %2510 = vmatpush.msra.mxu0 %v2170
        %2511 = vmatpush.msra.mxu0 %v2169
        %2512 = vmatpush.msra.mxu0 %v2168
        %2513 = vmatmul.f32.gmra.mxu0 %v2495
        %v2514 = vpop.f32.mrf.mxu0
        %v2515 = vadd.f32 %v2491, %v2514
        %2516 = vdwg.mxu0
        %v2517 = vsel %vm521, %v2515, 0.0
        %2518 = vadd.xlane.f32.xlu0 %v2517
        %v2519 = vpop.xlane.xlu0 %2518
        %v2520 = vmul.f32 %v2519, %v555
        %v2521 = vsub.f32 %v2515, %v2520
        %v2522 = vmul.f32 %v2521, %v2521
        %v2523 = vsel %vm521, %v2522, 0.0
        %2524 = vadd.xlane.f32.xlu0 %v2523
        %v2525 = vpop.xlane.xlu0 %2524
        %v2526 = vmul.f32 %v2525, %v555
        %v2527 = vadd.f32 %v2526, 1e-06
        %v2528 = vrsqrt.pop %v2527
        %v2529 = vmul.f32 %v2528, %v2527
        %v2530 = vmul.f32 %v2529, %v2528
        %v2531 = vmul.f32 0.5, %v2530
        %v2532 = vsub.f32 1.5, %v2531
        %v2533 = vmul.f32 %v2528, %v2532
        %vm2534 = vweird.f32 %v2527
        %vm2535 = vweird.f32 %v2528
        %vm2536 = vmor %vm2534, %vm2535
        %v2537 = vsel %vm2536, %v2528, %v2533
        %v2538 = vmul.f32 %v2521, %v2537
        %v2539 = vmul.f32 %v850, %v2538
        %v2540 = vadd.f32 %v2539, %v852
        %2542 = vrot.lane.b32.xlu0 %v2245, 96
        %v2543 = vpop.permute.xlu0 %2542
        %v2545 = vsub.f32 %v2540, %v2543
        %v2546 = vmul.f32 %v850, %v2545
        %v2547 = vmul.f32 %v2546, 32.0
        %v2548 = vsel %vm521, %v2546, 0.0
        %2549 = vadd.xlane.f32.xlu0 %v2548
        %v2550 = vpop.xlane.xlu0 %2549
        %v2551 = vsub.f32 %v2547, %v2550
        %v2552 = vmul.f32 %v2546, %v2538
        %v2553 = vsel %vm521, %v2552, 0.0
        %2554 = vadd.xlane.f32.xlu0 %v2553
        %v2555 = vpop.xlane.xlu0 %2554
        %v2556 = vmul.f32 %v2538, %v2555
        %v2557 = vsub.f32 %v2551, %v2556
        %v2558 = vmul.f32 %v2537, 0.03125
        %v2559 = vmul.f32 %v2557, %v2558
        %v2560 = vperm.slane %v2489, 0
        %2561 = vrot.lane.b32.xlu0 %v2213, 96
        %v2562 = vpop.permute.xlu0 %2561
        %v2563 = vsel %vm521, %v2562, 0
        %2565 = vmatpush.xpose.msra.mxu0 0.0
        %2566 = vmatpush.xpose.msra.mxu0 0.0
        %2567 = vmatpush.xpose.msra.mxu0 0.0
        %2568 = vmatpush.xpose.msra.mxu0 0.0
        %2569 = vmatpush.xpose.msra.mxu0 0.0
        %2570 = vmatpush.xpose.msra.mxu0 0.0
        %2571 = vmatpush.xpose.msra.mxu0 0.0
        %2572 = vmatpush.xpose.msra.mxu0 0.0
        %2573 = vmatpush.xpose.msra.mxu0 0.0
        %2574 = vmatpush.xpose.msra.mxu0 0.0
        %2575 = vmatpush.xpose.msra.mxu0 0.0
        %2576 = vmatpush.xpose.msra.mxu0 0.0
        %2577 = vmatpush.xpose.msra.mxu0 0.0
        %2578 = vmatpush.xpose.msra.mxu0 0.0
        %2579 = vmatpush.xpose.msra.mxu0 0.0
        %2580 = vmatpush.xpose.msra.mxu0 %v2495
        %2581 = vmatmul.f32.gmra.mxu0 %v2563
        %v2582 = vpop.f32.mrf.mxu0
        %v2583 = vadd.f32 1.0, %v2582
        %2584 = vdwg.mxu0
        %v2585 = vmul.f32 %v2560, %v2583
        %v2586 = vsel %vm496, %v2585, 0.0
        %2587 = vmatpush.msra.mxu0 0.0
        %2588 = vmatpush.msra.mxu0 0.0
        %2589 = vmatpush.msra.mxu0 0.0
        %2590 = vmatpush.msra.mxu0 0.0
        %2591 = vmatpush.msra.mxu0 0.0
        %2592 = vmatpush.msra.mxu0 0.0
        %2593 = vmatpush.msra.mxu0 0.0
        %2594 = vmatpush.msra.mxu0 0.0
        %2595 = vmatpush.msra.mxu0 0.0
        %2596 = vmatpush.msra.mxu0 0.0
        %2597 = vmatpush.msra.mxu0 0.0
        %2598 = vmatpush.msra.mxu0 0.0
        %2599 = vmatpush.msra.mxu0 %v2171
        %2600 = vmatpush.msra.mxu0 %v2170
        %2601 = vmatpush.msra.mxu0 %v2169
        %2602 = vmatpush.msra.mxu0 %v2168
        %2603 = vmatmul.f32.gmra.mxu0 %v2563
        %v2604 = vpop.f32.mrf.mxu0
        %v2605 = vadd.f32 %v2491, %v2604
        %2606 = vdwg.mxu0
        %v2608 = vsel %vm640, %v2586, 0
        %2610 = vmatpush.msra.mxu0 0.0
        %2611 = vmatpush.msra.mxu0 0.0
        %2612 = vmatpush.msra.mxu0 0.0
        %2613 = vmatpush.msra.mxu0 0.0
        %2614 = vmatpush.msra.mxu0 0.0
        %2615 = vmatpush.msra.mxu0 0.0
        %2616 = vmatpush.msra.mxu0 0.0
        %2617 = vmatpush.msra.mxu0 0.0
        %2618 = vmatpush.msra.mxu0 0.0
        %2619 = vmatpush.msra.mxu0 0.0
        %2620 = vmatpush.msra.mxu0 0.0
        %2621 = vmatpush.msra.mxu0 0.0
        %2622 = vmatpush.msra.mxu0 0.0
        %2623 = vmatpush.msra.mxu0 0.0
        %2624 = vmatpush.msra.mxu0 0.0
        %2625 = vmatpush.msra.mxu0 %v2559
        %2626 = vmatmul.f32.gmra.mxu0 %v2608
        %v2627 = vpop.f32.mrf.mxu0
        %v2628 = vadd.f32 0.0, %v2627
        %2629 = vdwg.mxu0
        %v2630 = vsub.f32 %v2605, %v2628
        %v2631 = vsel %vm497, %v2560, 0.0
        %v2633 = vsel %vm640, %v2631, 0
        %2635 = vmatpush.msra.mxu0 0.0
        %2636 = vmatpush.msra.mxu0 0.0
        %2637 = vmatpush.msra.mxu0 0.0
        %2638 = vmatpush.msra.mxu0 0.0
        %2639 = vmatpush.msra.mxu0 0.0
        %2640 = vmatpush.msra.mxu0 0.0
        %2641 = vmatpush.msra.mxu0 0.0
        %2642 = vmatpush.msra.mxu0 0.0
        %2643 = vmatpush.msra.mxu0 0.0
        %2644 = vmatpush.msra.mxu0 0.0
        %2645 = vmatpush.msra.mxu0 0.0
        %2646 = vmatpush.msra.mxu0 0.0
        %2647 = vmatpush.msra.mxu0 0.0
        %2648 = vmatpush.msra.mxu0 0.0
        %2649 = vmatpush.msra.mxu0 0.0
        %2650 = vmatpush.msra.mxu0 %v2559
        %2651 = vmatmul.f32.gmra.mxu0 %v2633
        %v2652 = vpop.f32.mrf.mxu0
        %v2653 = vadd.f32 0.0, %v2652
        %2654 = vdwg.mxu0
        %2656 = vxpose.xlu0.b32.start [1/16] %v2494, 128
        %2657 = vxpose.xlu0.b32.cont [2/16] 0.0, 128
        %2658 = vxpose.xlu0.b32.cont [3/16] 0.0, 128
        %2659 = vxpose.xlu0.b32.cont [4/16] 0.0, 128
        %2660 = vxpose.xlu0.b32.cont [5/16] 0.0, 128
        %2661 = vxpose.xlu0.b32.cont [6/16] 0.0, 128
        %2662 = vxpose.xlu0.b32.cont [7/16] 0.0, 128
        %2663 = vxpose.xlu0.b32.cont [8/16] 0.0, 128
        %2664 = vxpose.xlu0.b32.cont [9/16] 0.0, 128
        %2665 = vxpose.xlu0.b32.cont [10/16] 0.0, 128
        %2666 = vxpose.xlu0.b32.cont [11/16] 0.0, 128
        %2667 = vxpose.xlu0.b32.cont [12/16] 0.0, 128
        %2668 = vxpose.xlu0.b32.cont [13/16] 0.0, 128
        %2669 = vxpose.xlu0.b32.cont [14/16] 0.0, 128
        %2670 = vxpose.xlu0.b32.cont [15/16] 0.0, 128
        %2671 = vxpose.xlu0.b32.end [16/16] 0.0, 128
        %v2672 = vpop.trf.xlu0
        %v2673 = vpop.trf.xlu0
        %v2674 = vpop.trf.xlu0
        %v2675 = vpop.trf.xlu0
        %v2676 = vpop.trf.xlu0
        %v2677 = vpop.trf.xlu0
        %v2678 = vpop.trf.xlu0
        %v2679 = vpop.trf.xlu0
        %v2680 = vpop.trf.xlu0
        %v2681 = vpop.trf.xlu0
        %v2682 = vpop.trf.xlu0
        %v2683 = vpop.trf.xlu0
        %v2684 = vpop.trf.xlu0
        %v2685 = vpop.trf.xlu0
        %v2686 = vpop.trf.xlu0
        %v2687 = vpop.trf.xlu0
        %v2689 = vsel %vm640, %v2672, 0
        %v2692 = vsel %vm640, %v2673, 0
        %v2695 = vsel %vm640, %v2674, 0
        %v2698 = vsel %vm640, %v2675, 0
        %2700 = vmatpush.msra.mxu0 0.0
        %2701 = vmatpush.msra.mxu0 0.0
        %2702 = vmatpush.msra.mxu0 0.0
        %2703 = vmatpush.msra.mxu0 0.0
        %2704 = vmatpush.msra.mxu0 0.0
        %2705 = vmatpush.msra.mxu0 0.0
        %2706 = vmatpush.msra.mxu0 0.0
        %2707 = vmatpush.msra.mxu0 0.0
        %2708 = vmatpush.msra.mxu0 0.0
        %2709 = vmatpush.msra.mxu0 0.0
        %2710 = vmatpush.msra.mxu0 0.0
        %2711 = vmatpush.msra.mxu0 0.0
        %2712 = vmatpush.msra.mxu0 0.0
        %2713 = vmatpush.msra.mxu0 0.0
        %2714 = vmatpush.msra.mxu0 0.0
        %2715 = vmatpush.msra.mxu0 %v2653
        %2716 = vmatmul.f32.gmra.mxu0 %v2689
        %v2717 = vpop.f32.mrf.mxu0
        %v2718 = vadd.f32 0.0, %v2717
        %2719 = vmatmul.f32.gmra.mxu0 %v2692
        %v2720 = vpop.f32.mrf.mxu0
        %v2721 = vadd.f32 0.0, %v2720
        %2722 = vmatmul.f32.gmra.mxu0 %v2695
        %v2723 = vpop.f32.mrf.mxu0
        %v2724 = vadd.f32 0.0, %v2723
        %2725 = vmatmul.f32.gmra.mxu0 %v2698
        %v2726 = vpop.f32.mrf.mxu0
        %v2727 = vadd.f32 0.0, %v2726
        %2728 = vdwg.mxu0
        %v2729 = vsub.f32 %v2168, %v2718
        %v2730 = vsub.f32 %v2169, %v2721
        %v2731 = vsub.f32 %v2170, %v2724
        %v2732 = vsub.f32 %v2171, %v2727
        %v2733 = vsel %vm521, %v2653, 0.0
        %v2734 = vrot.slane %v2733, 4
        %v2735 = vadd.f32 %v2733, %v2734
        %v2736 = vrot.slane %v2735, 2
        %v2737 = vadd.f32 %v2735, %v2736
        %v2738 = vrot.slane %v2737, 1
        %v2739 = vadd.f32 %v2737, %v2738
        %v2740 = vsub.f32 %v2179, %v2739
        %v2741 = vsel %vm521, %v2630, 0.0
        %2742 = vadd.xlane.f32.xlu0 %v2741
        %v2743 = vpop.xlane.xlu0 %2742
        %v2744 = vmul.f32 %v2743, %v555
        %v2745 = vsub.f32 %v2630, %v2744
        %v2746 = vmul.f32 %v2745, %v2745
        %v2747 = vsel %vm521, %v2746, 0.0
        %2748 = vadd.xlane.f32.xlu0 %v2747
        %v2749 = vpop.xlane.xlu0 %2748
        %v2750 = vmul.f32 %v2749, %v555
        %v2751 = vadd.f32 %v2750, 1e-06
        %v2752 = vrsqrt.pop %v2751
        %v2753 = vmul.f32 %v2752, %v2751
        %v2754 = vmul.f32 %v2753, %v2752
        %v2755 = vmul.f32 0.5, %v2754
        %v2756 = vsub.f32 1.5, %v2755
        %v2757 = vmul.f32 %v2752, %v2756
        %vm2758 = vweird.f32 %v2751
        %vm2759 = vweird.f32 %v2752
        %vm2760 = vmor %vm2758, %vm2759
        %v2761 = vsel %vm2760, %v2752, %v2757
        %v2762 = vmul.f32 %v2745, %v2761
        %v2763 = vmul.f32 %v850, %v2762
        %2765 = vrot.lane.b32.xlu0 %v2763, 32
        %v2766 = vpop.permute.xlu0 %2765
        %v2768 = vadd.f32 %v2213, %v2766
        %v2769 = vadd.f32 %v2768, %v1084
        %v2770 = vsel %vm521, %v2488, %v2769
        %s2771 = scalar_lea.vmem %s491, 24 [#allocation14]
        %2772 = vst.msk [vmem:[%s2771] sm:$0xff] %vm1088, %v2770
        %s2773 = scalar_lea.vmem %s413, 32 [#allocation8]
        %v2774 = vld [vmem:[%s2773] sm:$0xff]
        %s2775 = scalar_lea.vmem %s423, 32 [#allocation10]
        %v2776 = vld [vmem:[%s2775] sm:$0xff]
        %s2777 = scalar_lea.vmem %s433, 32 [#allocation11]
        %v2778 = vld [vmem:[%s2777] sm:$0xff]
        %v2779 = vld [vmem:[%s443 + $0x4] sm:$0x1]
        %v2781 = vperm.slane %v2463, 0
        %v2784 = vsel %vm521, %v2776, 0
        %2786 = vmatpush.msra.mxu0 0.0
        %2787 = vmatpush.msra.mxu0 0.0
        %2788 = vmatpush.msra.mxu0 0.0
        %2789 = vmatpush.msra.mxu0 0.0
        %2790 = vmatpush.msra.mxu0 0.0
        %2791 = vmatpush.msra.mxu0 0.0
        %2792 = vmatpush.msra.mxu0 0.0
        %2793 = vmatpush.msra.mxu0 0.0
        %2794 = vmatpush.msra.mxu0 0.0
        %2795 = vmatpush.msra.mxu0 0.0
        %2796 = vmatpush.msra.mxu0 0.0
        %2797 = vmatpush.msra.mxu0 0.0
        %2798 = vmatpush.msra.mxu0 %v2455
        %2799 = vmatpush.msra.mxu0 %v2454
        %2800 = vmatpush.msra.mxu0 %v2453
        %2801 = vmatpush.msra.mxu0 %v2452
        %2802 = vmatmul.f32.gmra.mxu0 %v2784
        %v2803 = vpop.f32.mrf.mxu0
        %v2804 = vadd.f32 %v2781, %v2803
        %2805 = vdwg.mxu0
        %v2806 = vsub.f32 %v2778, %v2776
        %v2807 = vsel %vm521, %v2804, 0.0
        %2808 = vadd.xlane.f32.xlu0 %v2807
        %v2809 = vpop.xlane.xlu0 %2808
        %v2810 = vmul.f32 %v2809, %v555
        %v2811 = vsub.f32 %v2804, %v2810
        %v2812 = vmul.f32 %v2811, %v2811
        %v2813 = vsel %vm521, %v2812, 0.0
        %2814 = vadd.xlane.f32.xlu0 %v2813
        %v2815 = vpop.xlane.xlu0 %2814
        %v2816 = vmul.f32 %v2815, %v555
        %v2817 = vadd.f32 %v2816, 1e-06
        %v2818 = vrsqrt.pop %v2817
        %v2819 = vmul.f32 %v2818, %v2817
        %v2820 = vmul.f32 %v2819, %v2818
        %v2821 = vmul.f32 0.5, %v2820
        %v2822 = vsub.f32 1.5, %v2821
        %v2823 = vmul.f32 %v2818, %v2822
        %vm2824 = vweird.f32 %v2817
        %vm2825 = vweird.f32 %v2818
        %vm2826 = vmor %vm2824, %vm2825
        %v2827 = vsel %vm2826, %v2818, %v2823
        %v2828 = vmul.f32 %v2811, %v2827
        %v2829 = vmul.f32 %v575, %v2828
        %v2830 = vadd.f32 %v2829, %v577
        %v2831 = vsub.f32 %v2830, %v2806
        %v2832 = vmul.f32 %v575, %v2831
        %v2833 = vmul.f32 %v2832, 32.0
        %v2834 = vsel %vm521, %v2832, 0.0
        %2835 = vadd.xlane.f32.xlu0 %v2834
        %v2836 = vpop.xlane.xlu0 %2835
        %v2837 = vsub.f32 %v2833, %v2836
        %v2838 = vmul.f32 %v2832, %v2828
        %v2839 = vsel %vm521, %v2838, 0.0
        %2840 = vadd.xlane.f32.xlu0 %v2839
        %v2841 = vpop.xlane.xlu0 %2840
        %v2842 = vmul.f32 %v2828, %v2841
        %v2843 = vsub.f32 %v2837, %v2842
        %v2844 = vmul.f32 %v2827, 0.03125
        %v2845 = vmul.f32 %v2843, %v2844
        %v2846 = vperm.slane %v2779, 0
        %v2848 = vsel %vm521, %v2774, 0
        %2850 = vmatpush.xpose.msra.mxu0 0.0
        %2851 = vmatpush.xpose.msra.mxu0 0.0
        %2852 = vmatpush.xpose.msra.mxu0 0.0
        %2853 = vmatpush.xpose.msra.mxu0 0.0
        %2854 = vmatpush.xpose.msra.mxu0 0.0
        %2855 = vmatpush.xpose.msra.mxu0 0.0
        %2856 = vmatpush.xpose.msra.mxu0 0.0
        %2857 = vmatpush.xpose.msra.mxu0 0.0
        %2858 = vmatpush.xpose.msra.mxu0 0.0
        %2859 = vmatpush.xpose.msra.mxu0 0.0
        %2860 = vmatpush.xpose.msra.mxu0 0.0
        %2861 = vmatpush.xpose.msra.mxu0 0.0
        %2862 = vmatpush.xpose.msra.mxu0 0.0
        %2863 = vmatpush.xpose.msra.mxu0 0.0
        %2864 = vmatpush.xpose.msra.mxu0 0.0
        %2865 = vmatpush.xpose.msra.mxu0 %v2784
        %2866 = vmatmul.f32.gmra.mxu0 %v2848
        %v2867 = vpop.f32.mrf.mxu0
        %v2868 = vadd.f32 1.0, %v2867
        %2869 = vdwg.mxu0
        %v2870 = vmul.f32 %v2846, %v2868
        %v2871 = vsel %vm496, %v2870, 0.0
        %2872 = vmatpush.msra.mxu0 0.0
        %2873 = vmatpush.msra.mxu0 0.0
        %2874 = vmatpush.msra.mxu0 0.0
        %2875 = vmatpush.msra.mxu0 0.0
        %2876 = vmatpush.msra.mxu0 0.0
        %2877 = vmatpush.msra.mxu0 0.0
        %2878 = vmatpush.msra.mxu0 0.0
        %2879 = vmatpush.msra.mxu0 0.0
        %2880 = vmatpush.msra.mxu0 0.0
        %2881 = vmatpush.msra.mxu0 0.0
        %2882 = vmatpush.msra.mxu0 0.0
        %2883 = vmatpush.msra.mxu0 0.0
        %2884 = vmatpush.msra.mxu0 %v2455
        %2885 = vmatpush.msra.mxu0 %v2454
        %2886 = vmatpush.msra.mxu0 %v2453
        %2887 = vmatpush.msra.mxu0 %v2452
        %2888 = vmatmul.f32.gmra.mxu0 %v2848
        %v2889 = vpop.f32.mrf.mxu0
        %v2890 = vadd.f32 %v2781, %v2889
        %2891 = vdwg.mxu0
        %v2893 = vsel %vm640, %v2871, 0
        %2895 = vmatpush.msra.mxu0 0.0
        %2896 = vmatpush.msra.mxu0 0.0
        %2897 = vmatpush.msra.mxu0 0.0
        %2898 = vmatpush.msra.mxu0 0.0
        %2899 = vmatpush.msra.mxu0 0.0
        %2900 = vmatpush.msra.mxu0 0.0
        %2901 = vmatpush.msra.mxu0 0.0
        %2902 = vmatpush.msra.mxu0 0.0
        %2903 = vmatpush.msra.mxu0 0.0
        %2904 = vmatpush.msra.mxu0 0.0
        %2905 = vmatpush.msra.mxu0 0.0
        %2906 = vmatpush.msra.mxu0 0.0
        %2907 = vmatpush.msra.mxu0 0.0
        %2908 = vmatpush.msra.mxu0 0.0
        %2909 = vmatpush.msra.mxu0 0.0
        %2910 = vmatpush.msra.mxu0 %v2845
        %2911 = vmatmul.f32.gmra.mxu0 %v2893
        %v2912 = vpop.f32.mrf.mxu0
        %v2913 = vadd.f32 0.0, %v2912
        %2914 = vdwg.mxu0
        %v2915 = vsub.f32 %v2890, %v2913
        %v2916 = vsel %vm497, %v2846, 0.0
        %v2918 = vsel %vm640, %v2916, 0
        %2920 = vmatpush.msra.mxu0 0.0
        %2921 = vmatpush.msra.mxu0 0.0
        %2922 = vmatpush.msra.mxu0 0.0
        %2923 = vmatpush.msra.mxu0 0.0
        %2924 = vmatpush.msra.mxu0 0.0
        %2925 = vmatpush.msra.mxu0 0.0
        %2926 = vmatpush.msra.mxu0 0.0
        %2927 = vmatpush.msra.mxu0 0.0
        %2928 = vmatpush.msra.mxu0 0.0
        %2929 = vmatpush.msra.mxu0 0.0
        %2930 = vmatpush.msra.mxu0 0.0
        %2931 = vmatpush.msra.mxu0 0.0
        %2932 = vmatpush.msra.mxu0 0.0
        %2933 = vmatpush.msra.mxu0 0.0
        %2934 = vmatpush.msra.mxu0 0.0
        %2935 = vmatpush.msra.mxu0 %v2845
        %2936 = vmatmul.f32.gmra.mxu0 %v2918
        %v2937 = vpop.f32.mrf.mxu0
        %v2938 = vadd.f32 0.0, %v2937
        %2939 = vdwg.mxu0
        %2940 = vxpose.xlu0.b32.start [1/16] %v2776, 128
        %2941 = vxpose.xlu0.b32.cont [2/16] 0.0, 128
        %2942 = vxpose.xlu0.b32.cont [3/16] 0.0, 128
        %2943 = vxpose.xlu0.b32.cont [4/16] 0.0, 128
        %2944 = vxpose.xlu0.b32.cont [5/16] 0.0, 128
        %2945 = vxpose.xlu0.b32.cont [6/16] 0.0, 128
        %2946 = vxpose.xlu0.b32.cont [7/16] 0.0, 128
        %2947 = vxpose.xlu0.b32.cont [8/16] 0.0, 128
        %2948 = vxpose.xlu0.b32.cont [9/16] 0.0, 128
        %2949 = vxpose.xlu0.b32.cont [10/16] 0.0, 128
        %2950 = vxpose.xlu0.b32.cont [11/16] 0.0, 128
        %2951 = vxpose.xlu0.b32.cont [12/16] 0.0, 128
        %2952 = vxpose.xlu0.b32.cont [13/16] 0.0, 128
        %2953 = vxpose.xlu0.b32.cont [14/16] 0.0, 128
        %2954 = vxpose.xlu0.b32.cont [15/16] 0.0, 128
        %2955 = vxpose.xlu0.b32.end [16/16] 0.0, 128
        %v2956 = vpop.trf.xlu0
        %v2957 = vpop.trf.xlu0
        %v2958 = vpop.trf.xlu0
        %v2959 = vpop.trf.xlu0
        %v2960 = vpop.trf.xlu0
        %v2961 = vpop.trf.xlu0
        %v2962 = vpop.trf.xlu0
        %v2963 = vpop.trf.xlu0
        %v2964 = vpop.trf.xlu0
        %v2965 = vpop.trf.xlu0
        %v2966 = vpop.trf.xlu0
        %v2967 = vpop.trf.xlu0
        %v2968 = vpop.trf.xlu0
        %v2969 = vpop.trf.xlu0
        %v2970 = vpop.trf.xlu0
        %v2971 = vpop.trf.xlu0
        %v2973 = vsel %vm640, %v2956, 0
        %v2976 = vsel %vm640, %v2957, 0
        %v2979 = vsel %vm640, %v2958, 0
        %v2982 = vsel %vm640, %v2959, 0
        %2984 = vmatpush.msra.mxu0 0.0
        %2985 = vmatpush.msra.mxu0 0.0
        %2986 = vmatpush.msra.mxu0 0.0
        %2987 = vmatpush.msra.mxu0 0.0
        %2988 = vmatpush.msra.mxu0 0.0
        %2989 = vmatpush.msra.mxu0 0.0
        %2990 = vmatpush.msra.mxu0 0.0
        %2991 = vmatpush.msra.mxu0 0.0
        %2992 = vmatpush.msra.mxu0 0.0
        %2993 = vmatpush.msra.mxu0 0.0
        %2994 = vmatpush.msra.mxu0 0.0
        %2995 = vmatpush.msra.mxu0 0.0
        %2996 = vmatpush.msra.mxu0 0.0
        %2997 = vmatpush.msra.mxu0 0.0
        %2998 = vmatpush.msra.mxu0 0.0
        %2999 = vmatpush.msra.mxu0 %v2938
        %3000 = vmatmul.f32.gmra.mxu0 %v2973
        %v3001 = vpop.f32.mrf.mxu0
        %v3002 = vadd.f32 0.0, %v3001
        %3003 = vmatmul.f32.gmra.mxu0 %v2976
        %v3004 = vpop.f32.mrf.mxu0
        %v3005 = vadd.f32 0.0, %v3004
        %3006 = vmatmul.f32.gmra.mxu0 %v2979
        %v3007 = vpop.f32.mrf.mxu0
        %v3008 = vadd.f32 0.0, %v3007
        %3009 = vmatmul.f32.gmra.mxu0 %v2982
        %v3010 = vpop.f32.mrf.mxu0
        %v3011 = vadd.f32 0.0, %v3010
        %3012 = vdwg.mxu0
        %v3013 = vsub.f32 %v2452, %v3002
        %v3014 = vsub.f32 %v2453, %v3005
        %v3015 = vsub.f32 %v2454, %v3008
        %v3016 = vsub.f32 %v2455, %v3011
        %v3017 = vsel %vm521, %v2938, 0.0
        %v3018 = vrot.slane %v3017, 4
        %v3019 = vadd.f32 %v3017, %v3018
        %v3020 = vrot.slane %v3019, 2
        %v3021 = vadd.f32 %v3019, %v3020
        %v3022 = vrot.slane %v3021, 1
        %v3023 = vadd.f32 %v3021, %v3022
        %v3024 = vsub.f32 %v2463, %v3023
        %v3025 = vsel %vm521, %v2915, 0.0
        %3026 = vadd.xlane.f32.xlu0 %v3025
        %v3027 = vpop.xlane.xlu0 %3026
        %v3028 = vmul.f32 %v3027, %v555
        %v3029 = vsub.f32 %v2915, %v3028
        %v3030 = vmul.f32 %v3029, %v3029
        %v3031 = vsel %vm521, %v3030, 0.0
        %3032 = vadd.xlane.f32.xlu0 %v3031
        %v3033 = vpop.xlane.xlu0 %3032
        %v3034 = vmul.f32 %v3033, %v555
        %v3035 = vadd.f32 %v3034, 1e-06
        %v3036 = vrsqrt.pop %v3035
        %v3037 = vmul.f32 %v3036, %v3035
        %v3038 = vmul.f32 %v3037, %v3036
        %v3039 = vmul.f32 0.5, %v3038
        %v3040 = vsub.f32 1.5, %v3039
        %v3041 = vmul.f32 %v3036, %v3040
        %vm3042 = vweird.f32 %v3035
        %vm3043 = vweird.f32 %v3036
        %vm3044 = vmor %vm3042, %vm3043
        %v3045 = vsel %vm3044, %v3036, %v3041
        %v3046 = vmul.f32 %v3029, %v3045
        %v3047 = vmul.f32 %v575, %v3046
        %v3048 = vadd.f32 %v2774, %v3047
        %v3049 = vadd.f32 %v3048, %v577
        %v3050 = vld [vmem:[%s799 + $0x4] sm:$0x1]
        %v3052 = vperm.slane %v2740, 0
        %3054 = vrot.lane.b32.xlu0 %v2776, 96
        %v3055 = vpop.permute.xlu0 %3054
        %v3056 = vsel %vm521, %v3055, 0
        %3058 = vmatpush.msra.mxu0 0.0
        %3059 = vmatpush.msra.mxu0 0.0
        %3060 = vmatpush.msra.mxu0 0.0
        %3061 = vmatpush.msra.mxu0 0.0
        %3062 = vmatpush.msra.mxu0 0.0
        %3063 = vmatpush.msra.mxu0 0.0
        %3064 = vmatpush.msra.mxu0 0.0
        %3065 = vmatpush.msra.mxu0 0.0
        %3066 = vmatpush.msra.mxu0 0.0
        %3067 = vmatpush.msra.mxu0 0.0
        %3068 = vmatpush.msra.mxu0 0.0
        %3069 = vmatpush.msra.mxu0 0.0
        %3070 = vmatpush.msra.mxu0 %v2732
        %3071 = vmatpush.msra.mxu0 %v2731
        %3072 = vmatpush.msra.mxu0 %v2730
        %3073 = vmatpush.msra.mxu0 %v2729
        %3074 = vmatmul.f32.gmra.mxu0 %v3056
        %v3075 = vpop.f32.mrf.mxu0
        %v3076 = vadd.f32 %v3052, %v3075
        %3077 = vdwg.mxu0
        %v3078 = vsel %vm521, %v3076, 0.0
        %3079 = vadd.xlane.f32.xlu0 %v3078
        %v3080 = vpop.xlane.xlu0 %3079
        %v3081 = vmul.f32 %v3080, %v555
        %v3082 = vsub.f32 %v3076, %v3081
        %v3083 = vmul.f32 %v3082, %v3082
        %v3084 = vsel %vm521, %v3083, 0.0
        %3085 = vadd.xlane.f32.xlu0 %v3084
        %v3086 = vpop.xlane.xlu0 %3085
        %v3087 = vmul.f32 %v3086, %v555
        %v3088 = vadd.f32 %v3087, 1e-06
        %v3089 = vrsqrt.pop %v3088
        %v3090 = vmul.f32 %v3089, %v3088
        %v3091 = vmul.f32 %v3090, %v3089
        %v3092 = vmul.f32 0.5, %v3091
        %v3093 = vsub.f32 1.5, %v3092
        %v3094 = vmul.f32 %v3089, %v3093
        %vm3095 = vweird.f32 %v3088
        %vm3096 = vweird.f32 %v3089
        %vm3097 = vmor %vm3095, %vm3096
        %v3098 = vsel %vm3097, %v3089, %v3094
        %v3099 = vmul.f32 %v3082, %v3098
        %v3100 = vmul.f32 %v850, %v3099
        %v3101 = vadd.f32 %v3100, %v852
        %3103 = vrot.lane.b32.xlu0 %v2806, 96
        %v3104 = vpop.permute.xlu0 %3103
        %v3106 = vsub.f32 %v3101, %v3104
        %v3107 = vmul.f32 %v850, %v3106
        %v3108 = vmul.f32 %v3107, 32.0
        %v3109 = vsel %vm521, %v3107, 0.0
        %3110 = vadd.xlane.f32.xlu0 %v3109
        %v3111 = vpop.xlane.xlu0 %3110
        %v3112 = vsub.f32 %v3108, %v3111
        %v3113 = vmul.f32 %v3107, %v3099
        %v3114 = vsel %vm521, %v3113, 0.0
        %3115 = vadd.xlane.f32.xlu0 %v3114
        %v3116 = vpop.xlane.xlu0 %3115
        %v3117 = vmul.f32 %v3099, %v3116
        %v3118 = vsub.f32 %v3112, %v3117
        %v3119 = vmul.f32 %v3098, 0.03125
        %v3120 = vmul.f32 %v3118, %v3119
        %v3121 = vperm.slane %v3050, 0
        %3122 = vrot.lane.b32.xlu0 %v2774, 96
        %v3123 = vpop.permute.xlu0 %3122
        %v3124 = vsel %vm521, %v3123, 0
        %3126 = vmatpush.xpose.msra.mxu0 0.0
        %3127 = vmatpush.xpose.msra.mxu0 0.0
        %3128 = vmatpush.xpose.msra.mxu0 0.0
        %3129 = vmatpush.xpose.msra.mxu0 0.0
        %3130 = vmatpush.xpose.msra.mxu0 0.0
        %3131 = vmatpush.xpose.msra.mxu0 0.0
        %3132 = vmatpush.xpose.msra.mxu0 0.0
        %3133 = vmatpush.xpose.msra.mxu0 0.0
        %3134 = vmatpush.xpose.msra.mxu0 0.0
        %3135 = vmatpush.xpose.msra.mxu0 0.0
        %3136 = vmatpush.xpose.msra.mxu0 0.0
        %3137 = vmatpush.xpose.msra.mxu0 0.0
        %3138 = vmatpush.xpose.msra.mxu0 0.0
        %3139 = vmatpush.xpose.msra.mxu0 0.0
        %3140 = vmatpush.xpose.msra.mxu0 0.0
        %3141 = vmatpush.xpose.msra.mxu0 %v3056
        %3142 = vmatmul.f32.gmra.mxu0 %v3124
        %v3143 = vpop.f32.mrf.mxu0
        %v3144 = vadd.f32 1.0, %v3143
        %3145 = vdwg.mxu0
        %v3146 = vmul.f32 %v3121, %v3144
        %v3147 = vsel %vm496, %v3146, 0.0
        %3148 = vmatpush.msra.mxu0 0.0
        %3149 = vmatpush.msra.mxu0 0.0
        %3150 = vmatpush.msra.mxu0 0.0
        %3151 = vmatpush.msra.mxu0 0.0
        %3152 = vmatpush.msra.mxu0 0.0
        %3153 = vmatpush.msra.mxu0 0.0
        %3154 = vmatpush.msra.mxu0 0.0
        %3155 = vmatpush.msra.mxu0 0.0
        %3156 = vmatpush.msra.mxu0 0.0
        %3157 = vmatpush.msra.mxu0 0.0
        %3158 = vmatpush.msra.mxu0 0.0
        %3159 = vmatpush.msra.mxu0 0.0
        %3160 = vmatpush.msra.mxu0 %v2732
        %3161 = vmatpush.msra.mxu0 %v2731
        %3162 = vmatpush.msra.mxu0 %v2730
        %3163 = vmatpush.msra.mxu0 %v2729
        %3164 = vmatmul.f32.gmra.mxu0 %v3124
        %v3165 = vpop.f32.mrf.mxu0
        %v3166 = vadd.f32 %v3052, %v3165
        %3167 = vdwg.mxu0
        %v3169 = vsel %vm640, %v3147, 0
        %3171 = vmatpush.msra.mxu0 0.0
        %3172 = vmatpush.msra.mxu0 0.0
        %3173 = vmatpush.msra.mxu0 0.0
        %3174 = vmatpush.msra.mxu0 0.0
        %3175 = vmatpush.msra.mxu0 0.0
        %3176 = vmatpush.msra.mxu0 0.0
        %3177 = vmatpush.msra.mxu0 0.0
        %3178 = vmatpush.msra.mxu0 0.0
        %3179 = vmatpush.msra.mxu0 0.0
        %3180 = vmatpush.msra.mxu0 0.0
        %3181 = vmatpush.msra.mxu0 0.0
        %3182 = vmatpush.msra.mxu0 0.0
        %3183 = vmatpush.msra.mxu0 0.0
        %3184 = vmatpush.msra.mxu0 0.0
        %3185 = vmatpush.msra.mxu0 0.0
        %3186 = vmatpush.msra.mxu0 %v3120
        %3187 = vmatmul.f32.gmra.mxu0 %v3169
        %v3188 = vpop.f32.mrf.mxu0
        %v3189 = vadd.f32 0.0, %v3188
        %3190 = vdwg.mxu0
        %v3191 = vsub.f32 %v3166, %v3189
        %v3192 = vsel %vm497, %v3121, 0.0
        %v3194 = vsel %vm640, %v3192, 0
        %3196 = vmatpush.msra.mxu0 0.0
        %3197 = vmatpush.msra.mxu0 0.0
        %3198 = vmatpush.msra.mxu0 0.0
        %3199 = vmatpush.msra.mxu0 0.0
        %3200 = vmatpush.msra.mxu0 0.0
        %3201 = vmatpush.msra.mxu0 0.0
        %3202 = vmatpush.msra.mxu0 0.0
        %3203 = vmatpush.msra.mxu0 0.0
        %3204 = vmatpush.msra.mxu0 0.0
        %3205 = vmatpush.msra.mxu0 0.0
        %3206 = vmatpush.msra.mxu0 0.0
        %3207 = vmatpush.msra.mxu0 0.0
        %3208 = vmatpush.msra.mxu0 0.0
        %3209 = vmatpush.msra.mxu0 0.0
        %3210 = vmatpush.msra.mxu0 0.0
        %3211 = vmatpush.msra.mxu0 %v3120
        %3212 = vmatmul.f32.gmra.mxu0 %v3194
        %v3213 = vpop.f32.mrf.mxu0
        %v3214 = vadd.f32 0.0, %v3213
        %3215 = vdwg.mxu0
        %3217 = vxpose.xlu0.b32.start [1/16] %v3055, 128
        %3218 = vxpose.xlu0.b32.cont [2/16] 0.0, 128
        %3219 = vxpose.xlu0.b32.cont [3/16] 0.0, 128
        %3220 = vxpose.xlu0.b32.cont [4/16] 0.0, 128
        %3221 = vxpose.xlu0.b32.cont [5/16] 0.0, 128
        %3222 = vxpose.xlu0.b32.cont [6/16] 0.0, 128
        %3223 = vxpose.xlu0.b32.cont [7/16] 0.0, 128
        %3224 = vxpose.xlu0.b32.cont [8/16] 0.0, 128
        %3225 = vxpose.xlu0.b32.cont [9/16] 0.0, 128
        %3226 = vxpose.xlu0.b32.cont [10/16] 0.0, 128
        %3227 = vxpose.xlu0.b32.cont [11/16] 0.0, 128
        %3228 = vxpose.xlu0.b32.cont [12/16] 0.0, 128
        %3229 = vxpose.xlu0.b32.cont [13/16] 0.0, 128
        %3230 = vxpose.xlu0.b32.cont [14/16] 0.0, 128
        %3231 = vxpose.xlu0.b32.cont [15/16] 0.0, 128
        %3232 = vxpose.xlu0.b32.end [16/16] 0.0, 128
        %v3233 = vpop.trf.xlu0
        %v3234 = vpop.trf.xlu0
        %v3235 = vpop.trf.xlu0
        %v3236 = vpop.trf.xlu0
        %v3237 = vpop.trf.xlu0
        %v3238 = vpop.trf.xlu0
        %v3239 = vpop.trf.xlu0
        %v3240 = vpop.trf.xlu0
        %v3241 = vpop.trf.xlu0
        %v3242 = vpop.trf.xlu0
        %v3243 = vpop.trf.xlu0
        %v3244 = vpop.trf.xlu0
        %v3245 = vpop.trf.xlu0
        %v3246 = vpop.trf.xlu0
        %v3247 = vpop.trf.xlu0
        %v3248 = vpop.trf.xlu0
        %v3250 = vsel %vm640, %v3233, 0
        %v3253 = vsel %vm640, %v3234, 0
        %v3256 = vsel %vm640, %v3235, 0
        %v3259 = vsel %vm640, %v3236, 0
        %3261 = vmatpush.msra.mxu0 0.0
        %3262 = vmatpush.msra.mxu0 0.0
        %3263 = vmatpush.msra.mxu0 0.0
        %3264 = vmatpush.msra.mxu0 0.0
        %3265 = vmatpush.msra.mxu0 0.0
        %3266 = vmatpush.msra.mxu0 0.0
        %3267 = vmatpush.msra.mxu0 0.0
        %3268 = vmatpush.msra.mxu0 0.0
        %3269 = vmatpush.msra.mxu0 0.0
        %3270 = vmatpush.msra.mxu0 0.0
        %3271 = vmatpush.msra.mxu0 0.0
        %3272 = vmatpush.msra.mxu0 0.0
        %3273 = vmatpush.msra.mxu0 0.0
        %3274 = vmatpush.msra.mxu0 0.0
        %3275 = vmatpush.msra.mxu0 0.0
        %3276 = vmatpush.msra.mxu0 %v3214
        %3277 = vmatmul.f32.gmra.mxu0 %v3250
        %v3278 = vpop.f32.mrf.mxu0
        %v3279 = vadd.f32 0.0, %v3278
        %3280 = vmatmul.f32.gmra.mxu0 %v3253
        %v3281 = vpop.f32.mrf.mxu0
        %v3282 = vadd.f32 0.0, %v3281
        %3283 = vmatmul.f32.gmra.mxu0 %v3256
        %v3284 = vpop.f32.mrf.mxu0
        %v3285 = vadd.f32 0.0, %v3284
        %3286 = vmatmul.f32.gmra.mxu0 %v3259
        %v3287 = vpop.f32.mrf.mxu0
        %v3288 = vadd.f32 0.0, %v3287
        %3289 = vdwg.mxu0
        %v3290 = vsub.f32 %v2729, %v3279
        %v3291 = vsub.f32 %v2730, %v3282
        %v3292 = vsub.f32 %v2731, %v3285
        %v3293 = vsub.f32 %v2732, %v3288
        %v3294 = vsel %vm521, %v3214, 0.0
        %v3295 = vrot.slane %v3294, 4
        %v3296 = vadd.f32 %v3294, %v3295
        %v3297 = vrot.slane %v3296, 2
        %v3298 = vadd.f32 %v3296, %v3297
        %v3299 = vrot.slane %v3298, 1
        %v3300 = vadd.f32 %v3298, %v3299
        %v3301 = vsub.f32 %v2740, %v3300
        %v3302 = vsel %vm521, %v3191, 0.0
        %3303 = vadd.xlane.f32.xlu0 %v3302
        %v3304 = vpop.xlane.xlu0 %3303
        %v3305 = vmul.f32 %v3304, %v555
        %v3306 = vsub.f32 %v3191, %v3305
        %v3307 = vmul.f32 %v3306, %v3306
        %v3308 = vsel %vm521, %v3307, 0.0
        %3309 = vadd.xlane.f32.xlu0 %v3308
        %v3310 = vpop.xlane.xlu0 %3309
        %v3311 = vmul.f32 %v3310, %v555
        %v3312 = vadd.f32 %v3311, 1e-06
        %v3313 = vrsqrt.pop %v3312
        %v3314 = vmul.f32 %v3313, %v3312
        %v3315 = vmul.f32 %v3314, %v3313
        %v3316 = vmul.f32 0.5, %v3315
        %v3317 = vsub.f32 1.5, %v3316
        %v3318 = vmul.f32 %v3313, %v3317
        %vm3319 = vweird.f32 %v3312
        %vm3320 = vweird.f32 %v3313
        %vm3321 = vmor %vm3319, %vm3320
        %v3322 = vsel %vm3321, %v3313, %v3318
        %v3323 = vmul.f32 %v3306, %v3322
        %v3324 = vmul.f32 %v850, %v3323
        %3326 = vrot.lane.b32.xlu0 %v3324, 32
        %v3327 = vpop.permute.xlu0 %3326
        %v3329 = vadd.f32 %v2774, %v3327
        %v3330 = vadd.f32 %v3329, %v1084
        %v3331 = vsel %vm521, %v3049, %v3330
        %s3332 = scalar_lea.vmem %s491, 32 [#allocation14]
        %3333 = vst.msk [vmem:[%s3332] sm:$0xff] %vm1088, %v3331
        %s3334 = scalar_lea.vmem %s413, 40 [#allocation8]
        %v3335 = vld [vmem:[%s3334] sm:$0xff]
        %s3336 = scalar_lea.vmem %s423, 40 [#allocation10]
        %v3337 = vld [vmem:[%s3336] sm:$0xff]
        %s3338 = scalar_lea.vmem %s433, 40 [#allocation11]
        %v3339 = vld [vmem:[%s3338] sm:$0xff]
        %v3340 = vld [vmem:[%s443 + $0x5] sm:$0x1]
        %v3342 = vperm.slane %v3024, 0
        %v3345 = vsel %vm521, %v3337, 0
        %3347 = vmatpush.msra.mxu0 0.0
        %3348 = vmatpush.msra.mxu0 0.0
        %3349 = vmatpush.msra.mxu0 0.0
        %3350 = vmatpush.msra.mxu0 0.0
        %3351 = vmatpush.msra.mxu0 0.0
        %3352 = vmatpush.msra.mxu0 0.0
        %3353 = vmatpush.msra.mxu0 0.0
        %3354 = vmatpush.msra.mxu0 0.0
        %3355 = vmatpush.msra.mxu0 0.0
        %3356 = vmatpush.msra.mxu0 0.0
        %3357 = vmatpush.msra.mxu0 0.0
        %3358 = vmatpush.msra.mxu0 0.0
        %3359 = vmatpush.msra.mxu0 %v3016
        %3360 = vmatpush.msra.mxu0 %v3015
        %3361 = vmatpush.msra.mxu0 %v3014
        %3362 = vmatpush.msra.mxu0 %v3013
        %3363 = vmatmul.f32.gmra.mxu0 %v3345
        %v3364 = vpop.f32.mrf.mxu0
        %v3365 = vadd.f32 %v3342, %v3364
        %3366 = vdwg.mxu0
        %v3367 = vsub.f32 %v3339, %v3337
        %v3368 = vsel %vm521, %v3365, 0.0
        %3369 = vadd.xlane.f32.xlu0 %v3368
        %v3370 = vpop.xlane.xlu0 %3369
        %v3371 = vmul.f32 %v3370, %v555
        %v3372 = vsub.f32 %v3365, %v3371
        %v3373 = vmul.f32 %v3372, %v3372
        %v3374 = vsel %vm521, %v3373, 0.0
        %3375 = vadd.xlane.f32.xlu0 %v3374
        %v3376 = vpop.xlane.xlu0 %3375
        %v3377 = vmul.f32 %v3376, %v555
        %v3378 = vadd.f32 %v3377, 1e-06
        %v3379 = vrsqrt.pop %v3378
        %v3380 = vmul.f32 %v3379, %v3378
        %v3381 = vmul.f32 %v3380, %v3379
        %v3382 = vmul.f32 0.5, %v3381
        %v3383 = vsub.f32 1.5, %v3382
        %v3384 = vmul.f32 %v3379, %v3383
        %vm3385 = vweird.f32 %v3378
        %vm3386 = vweird.f32 %v3379
        %vm3387 = vmor %vm3385, %vm3386
        %v3388 = vsel %vm3387, %v3379, %v3384
        %v3389 = vmul.f32 %v3372, %v3388
        %v3390 = vmul.f32 %v575, %v3389
        %v3391 = vadd.f32 %v3390, %v577
        %v3392 = vsub.f32 %v3391, %v3367
        %v3393 = vmul.f32 %v575, %v3392
        %v3394 = vmul.f32 %v3393, 32.0
        %v3395 = vsel %vm521, %v3393, 0.0
        %3396 = vadd.xlane.f32.xlu0 %v3395
        %v3397 = vpop.xlane.xlu0 %3396
        %v3398 = vsub.f32 %v3394, %v3397
        %v3399 = vmul.f32 %v3393, %v3389
        %v3400 = vsel %vm521, %v3399, 0.0
        %3401 = vadd.xlane.f32.xlu0 %v3400
        %v3402 = vpop.xlane.xlu0 %3401
        %v3403 = vmul.f32 %v3389, %v3402
        %v3404 = vsub.f32 %v3398, %v3403
        %v3405 = vmul.f32 %v3388, 0.03125
        %v3406 = vmul.f32 %v3404, %v3405
        %v3407 = vperm.slane %v3340, 0
        %v3409 = vsel %vm521, %v3335, 0
        %3411 = vmatpush.xpose.msra.mxu0 0.0
        %3412 = vmatpush.xpose.msra.mxu0 0.0
        %3413 = vmatpush.xpose.msra.mxu0 0.0
        %3414 = vmatpush.xpose.msra.mxu0 0.0
        %3415 = vmatpush.xpose.msra.mxu0 0.0
        %3416 = vmatpush.xpose.msra.mxu0 0.0
        %3417 = vmatpush.xpose.msra.mxu0 0.0
        %3418 = vmatpush.xpose.msra.mxu0 0.0
        %3419 = vmatpush.xpose.msra.mxu0 0.0
        %3420 = vmatpush.xpose.msra.mxu0 0.0
        %3421 = vmatpush.xpose.msra.mxu0 0.0
        %3422 = vmatpush.xpose.msra.mxu0 0.0
        %3423 = vmatpush.xpose.msra.mxu0 0.0
        %3424 = vmatpush.xpose.msra.mxu0 0.0
        %3425 = vmatpush.xpose.msra.mxu0 0.0
        %3426 = vmatpush.xpose.msra.mxu0 %v3345
        %3427 = vmatmul.f32.gmra.mxu0 %v3409
        %v3428 = vpop.f32.mrf.mxu0
        %v3429 = vadd.f32 1.0, %v3428
        %3430 = vdwg.mxu0
        %v3431 = vmul.f32 %v3407, %v3429
        %v3432 = vsel %vm496, %v3431, 0.0
        %3433 = vmatpush.msra.mxu0 0.0
        %3434 = vmatpush.msra.mxu0 0.0
        %3435 = vmatpush.msra.mxu0 0.0
        %3436 = vmatpush.msra.mxu0 0.0
        %3437 = vmatpush.msra.mxu0 0.0
        %3438 = vmatpush.msra.mxu0 0.0
        %3439 = vmatpush.msra.mxu0 0.0
        %3440 = vmatpush.msra.mxu0 0.0
        %3441 = vmatpush.msra.mxu0 0.0
        %3442 = vmatpush.msra.mxu0 0.0
        %3443 = vmatpush.msra.mxu0 0.0
        %3444 = vmatpush.msra.mxu0 0.0
        %3445 = vmatpush.msra.mxu0 %v3016
        %3446 = vmatpush.msra.mxu0 %v3015
        %3447 = vmatpush.msra.mxu0 %v3014
        %3448 = vmatpush.msra.mxu0 %v3013
        %3449 = vmatmul.f32.gmra.mxu0 %v3409
        %v3450 = vpop.f32.mrf.mxu0
        %v3451 = vadd.f32 %v3342, %v3450
        %3452 = vdwg.mxu0
        %v3454 = vsel %vm640, %v3432, 0
        %3456 = vmatpush.msra.mxu0 0.0
        %3457 = vmatpush.msra.mxu0 0.0
        %3458 = vmatpush.msra.mxu0 0.0
        %3459 = vmatpush.msra.mxu0 0.0
        %3460 = vmatpush.msra.mxu0 0.0
        %3461 = vmatpush.msra.mxu0 0.0
        %3462 = vmatpush.msra.mxu0 0.0
        %3463 = vmatpush.msra.mxu0 0.0
        %3464 = vmatpush.msra.mxu0 0.0
        %3465 = vmatpush.msra.mxu0 0.0
        %3466 = vmatpush.msra.mxu0 0.0
        %3467 = vmatpush.msra.mxu0 0.0
        %3468 = vmatpush.msra.mxu0 0.0
        %3469 = vmatpush.msra.mxu0 0.0
        %3470 = vmatpush.msra.mxu0 0.0
        %3471 = vmatpush.msra.mxu0 %v3406
        %3472 = vmatmul.f32.gmra.mxu0 %v3454
        %v3473 = vpop.f32.mrf.mxu0
        %v3474 = vadd.f32 0.0, %v3473
        %3475 = vdwg.mxu0
        %v3476 = vsub.f32 %v3451, %v3474
        %v3477 = vsel %vm497, %v3407, 0.0
        %v3479 = vsel %vm640, %v3477, 0
        %3481 = vmatpush.msra.mxu0 0.0
        %3482 = vmatpush.msra.mxu0 0.0
        %3483 = vmatpush.msra.mxu0 0.0
        %3484 = vmatpush.msra.mxu0 0.0
        %3485 = vmatpush.msra.mxu0 0.0
        %3486 = vmatpush.msra.mxu0 0.0
        %3487 = vmatpush.msra.mxu0 0.0
        %3488 = vmatpush.msra.mxu0 0.0
        %3489 = vmatpush.msra.mxu0 0.0
        %3490 = vmatpush.msra.mxu0 0.0
        %3491 = vmatpush.msra.mxu0 0.0
        %3492 = vmatpush.msra.mxu0 0.0
        %3493 = vmatpush.msra.mxu0 0.0
        %3494 = vmatpush.msra.mxu0 0.0
        %3495 = vmatpush.msra.mxu0 0.0
        %3496 = vmatpush.msra.mxu0 %v3406
        %3497 = vmatmul.f32.gmra.mxu0 %v3479
        %v3498 = vpop.f32.mrf.mxu0
        %v3499 = vadd.f32 0.0, %v3498
        %3500 = vdwg.mxu0
        %3501 = vxpose.xlu0.b32.start [1/16] %v3337, 128
        %3502 = vxpose.xlu0.b32.cont [2/16] 0.0, 128
        %3503 = vxpose.xlu0.b32.cont [3/16] 0.0, 128
        %3504 = vxpose.xlu0.b32.cont [4/16] 0.0, 128
        %3505 = vxpose.xlu0.b32.cont [5/16] 0.0, 128
        %3506 = vxpose.xlu0.b32.cont [6/16] 0.0, 128
        %3507 = vxpose.xlu0.b32.cont [7/16] 0.0, 128
        %3508 = vxpose.xlu0.b32.cont [8/16] 0.0, 128
        %3509 = vxpose.xlu0.b32.cont [9/16] 0.0, 128
        %3510 = vxpose.xlu0.b32.cont [10/16] 0.0, 128
        %3511 = vxpose.xlu0.b32.cont [11/16] 0.0, 128
        %3512 = vxpose.xlu0.b32.cont [12/16] 0.0, 128
        %3513 = vxpose.xlu0.b32.cont [13/16] 0.0, 128
        %3514 = vxpose.xlu0.b32.cont [14/16] 0.0, 128
        %3515 = vxpose.xlu0.b32.cont [15/16] 0.0, 128
        %3516 = vxpose.xlu0.b32.end [16/16] 0.0, 128
        %v3517 = vpop.trf.xlu0
        %v3518 = vpop.trf.xlu0
        %v3519 = vpop.trf.xlu0
        %v3520 = vpop.trf.xlu0
        %v3521 = vpop.trf.xlu0
        %v3522 = vpop.trf.xlu0
        %v3523 = vpop.trf.xlu0
        %v3524 = vpop.trf.xlu0
        %v3525 = vpop.trf.xlu0
        %v3526 = vpop.trf.xlu0
        %v3527 = vpop.trf.xlu0
        %v3528 = vpop.trf.xlu0
        %v3529 = vpop.trf.xlu0
        %v3530 = vpop.trf.xlu0
        %v3531 = vpop.trf.xlu0
        %v3532 = vpop.trf.xlu0
        %v3534 = vsel %vm640, %v3517, 0
        %v3537 = vsel %vm640, %v3518, 0
        %v3540 = vsel %vm640, %v3519, 0
        %v3543 = vsel %vm640, %v3520, 0
        %3545 = vmatpush.msra.mxu0 0.0
        %3546 = vmatpush.msra.mxu0 0.0
        %3547 = vmatpush.msra.mxu0 0.0
        %3548 = vmatpush.msra.mxu0 0.0
        %3549 = vmatpush.msra.mxu0 0.0
        %3550 = vmatpush.msra.mxu0 0.0
        %3551 = vmatpush.msra.mxu0 0.0
        %3552 = vmatpush.msra.mxu0 0.0
        %3553 = vmatpush.msra.mxu0 0.0
        %3554 = vmatpush.msra.mxu0 0.0
        %3555 = vmatpush.msra.mxu0 0.0
        %3556 = vmatpush.msra.mxu0 0.0
        %3557 = vmatpush.msra.mxu0 0.0
        %3558 = vmatpush.msra.mxu0 0.0
        %3559 = vmatpush.msra.mxu0 0.0
        %3560 = vmatpush.msra.mxu0 %v3499
        %3561 = vmatmul.f32.gmra.mxu0 %v3534
        %v3562 = vpop.f32.mrf.mxu0
        %v3563 = vadd.f32 0.0, %v3562
        %3564 = vmatmul.f32.gmra.mxu0 %v3537
        %v3565 = vpop.f32.mrf.mxu0
        %v3566 = vadd.f32 0.0, %v3565
        %3567 = vmatmul.f32.gmra.mxu0 %v3540
        %v3568 = vpop.f32.mrf.mxu0
        %v3569 = vadd.f32 0.0, %v3568
        %3570 = vmatmul.f32.gmra.mxu0 %v3543
        %v3571 = vpop.f32.mrf.mxu0
        %v3572 = vadd.f32 0.0, %v3571
        %3573 = vdwg.mxu0
        %v3574 = vsub.f32 %v3013, %v3563
        %v3575 = vsub.f32 %v3014, %v3566
        %v3576 = vsub.f32 %v3015, %v3569
        %v3577 = vsub.f32 %v3016, %v3572
        %v3578 = vsel %vm521, %v3499, 0.0
        %v3579 = vrot.slane %v3578, 4
        %v3580 = vadd.f32 %v3578, %v3579
        %v3581 = vrot.slane %v3580, 2
        %v3582 = vadd.f32 %v3580, %v3581
        %v3583 = vrot.slane %v3582, 1
        %v3584 = vadd.f32 %v3582, %v3583
        %v3585 = vsub.f32 %v3024, %v3584
        %v3586 = vsel %vm521, %v3476, 0.0
        %3587 = vadd.xlane.f32.xlu0 %v3586
        %v3588 = vpop.xlane.xlu0 %3587
        %v3589 = vmul.f32 %v3588, %v555
        %v3590 = vsub.f32 %v3476, %v3589
        %v3591 = vmul.f32 %v3590, %v3590
        %v3592 = vsel %vm521, %v3591, 0.0
        %3593 = vadd.xlane.f32.xlu0 %v3592
        %v3594 = vpop.xlane.xlu0 %3593
        %v3595 = vmul.f32 %v3594, %v555
        %v3596 = vadd.f32 %v3595, 1e-06
        %v3597 = vrsqrt.pop %v3596
        %v3598 = vmul.f32 %v3597, %v3596
        %v3599 = vmul.f32 %v3598, %v3597
        %v3600 = vmul.f32 0.5, %v3599
        %v3601 = vsub.f32 1.5, %v3600
        %v3602 = vmul.f32 %v3597, %v3601
        %vm3603 = vweird.f32 %v3596
        %vm3604 = vweird.f32 %v3597
        %vm3605 = vmor %vm3603, %vm3604
        %v3606 = vsel %vm3605, %v3597, %v3602
        %v3607 = vmul.f32 %v3590, %v3606
        %v3608 = vmul.f32 %v575, %v3607
        %v3609 = vadd.f32 %v3335, %v3608
        %v3610 = vadd.f32 %v3609, %v577
        %v3611 = vld [vmem:[%s799 + $0x5] sm:$0x1]
        %v3613 = vperm.slane %v3301, 0
        %3615 = vrot.lane.b32.xlu0 %v3337, 96
        %v3616 = vpop.permute.xlu0 %3615
        %v3617 = vsel %vm521, %v3616, 0
        %3619 = vmatpush.msra.mxu0 0.0
        %3620 = vmatpush.msra.mxu0 0.0
        %3621 = vmatpush.msra.mxu0 0.0
        %3622 = vmatpush.msra.mxu0 0.0
        %3623 = vmatpush.msra.mxu0 0.0
        %3624 = vmatpush.msra.mxu0 0.0
        %3625 = vmatpush.msra.mxu0 0.0
        %3626 = vmatpush.msra.mxu0 0.0
        %3627 = vmatpush.msra.mxu0 0.0
        %3628 = vmatpush.msra.mxu0 0.0
        %3629 = vmatpush.msra.mxu0 0.0
        %3630 = vmatpush.msra.mxu0 0.0
        %3631 = vmatpush.msra.mxu0 %v3293
        %3632 = vmatpush.msra.mxu0 %v3292
        %3633 = vmatpush.msra.mxu0 %v3291
        %3634 = vmatpush.msra.mxu0 %v3290
        %3635 = vmatmul.f32.gmra.mxu0 %v3617
        %v3636 = vpop.f32.mrf.mxu0
        %v3637 = vadd.f32 %v3613, %v3636
        %3638 = vdwg.mxu0
        %v3639 = vsel %vm521, %v3637, 0.0
        %3640 = vadd.xlane.f32.xlu0 %v3639
        %v3641 = vpop.xlane.xlu0 %3640
        %v3642 = vmul.f32 %v3641, %v555
        %v3643 = vsub.f32 %v3637, %v3642
        %v3644 = vmul.f32 %v3643, %v3643
        %v3645 = vsel %vm521, %v3644, 0.0
        %3646 = vadd.xlane.f32.xlu0 %v3645
        %v3647 = vpop.xlane.xlu0 %3646
        %v3648 = vmul.f32 %v3647, %v555
        %v3649 = vadd.f32 %v3648, 1e-06
        %v3650 = vrsqrt.pop %v3649
        %v3651 = vmul.f32 %v3650, %v3649
        %v3652 = vmul.f32 %v3651, %v3650
        %v3653 = vmul.f32 0.5, %v3652
        %v3654 = vsub.f32 1.5, %v3653
        %v3655 = vmul.f32 %v3650, %v3654
        %vm3656 = vweird.f32 %v3649
        %vm3657 = vweird.f32 %v3650
        %vm3658 = vmor %vm3656, %vm3657
        %v3659 = vsel %vm3658, %v3650, %v3655
        %v3660 = vmul.f32 %v3643, %v3659
        %v3661 = vmul.f32 %v850, %v3660
        %v3662 = vadd.f32 %v3661, %v852
        %3664 = vrot.lane.b32.xlu0 %v3367, 96
        %v3665 = vpop.permute.xlu0 %3664
        %v3667 = vsub.f32 %v3662, %v3665
        %v3668 = vmul.f32 %v850, %v3667
        %v3669 = vmul.f32 %v3668, 32.0
        %v3670 = vsel %vm521, %v3668, 0.0
        %3671 = vadd.xlane.f32.xlu0 %v3670
        %v3672 = vpop.xlane.xlu0 %3671
        %v3673 = vsub.f32 %v3669, %v3672
        %v3674 = vmul.f32 %v3668, %v3660
        %v3675 = vsel %vm521, %v3674, 0.0
        %3676 = vadd.xlane.f32.xlu0 %v3675
        %v3677 = vpop.xlane.xlu0 %3676
        %v3678 = vmul.f32 %v3660, %v3677
        %v3679 = vsub.f32 %v3673, %v3678
        %v3680 = vmul.f32 %v3659, 0.03125
        %v3681 = vmul.f32 %v3679, %v3680
        %v3682 = vperm.slane %v3611, 0
        %3683 = vrot.lane.b32.xlu0 %v3335, 96
        %v3684 = vpop.permute.xlu0 %3683
        %v3685 = vsel %vm521, %v3684, 0
        %3687 = vmatpush.xpose.msra.mxu0 0.0
        %3688 = vmatpush.xpose.msra.mxu0 0.0
        %3689 = vmatpush.xpose.msra.mxu0 0.0
        %3690 = vmatpush.xpose.msra.mxu0 0.0
        %3691 = vmatpush.xpose.msra.mxu0 0.0
        %3692 = vmatpush.xpose.msra.mxu0 0.0
        %3693 = vmatpush.xpose.msra.mxu0 0.0
        %3694 = vmatpush.xpose.msra.mxu0 0.0
        %3695 = vmatpush.xpose.msra.mxu0 0.0
        %3696 = vmatpush.xpose.msra.mxu0 0.0
        %3697 = vmatpush.xpose.msra.mxu0 0.0
        %3698 = vmatpush.xpose.msra.mxu0 0.0
        %3699 = vmatpush.xpose.msra.mxu0 0.0
        %3700 = vmatpush.xpose.msra.mxu0 0.0
        %3701 = vmatpush.xpose.msra.mxu0 0.0
        %3702 = vmatpush.xpose.msra.mxu0 %v3617
        %3703 = vmatmul.f32.gmra.mxu0 %v3685
        %v3704 = vpop.f32.mrf.mxu0
        %v3705 = vadd.f32 1.0, %v3704
        %3706 = vdwg.mxu0
        %v3707 = vmul.f32 %v3682, %v3705
        %v3708 = vsel %vm496, %v3707, 0.0
        %3709 = vmatpush.msra.mxu0 0.0
        %3710 = vmatpush.msra.mxu0 0.0
        %3711 = vmatpush.msra.mxu0 0.0
        %3712 = vmatpush.msra.mxu0 0.0
        %3713 = vmatpush.msra.mxu0 0.0
        %3714 = vmatpush.msra.mxu0 0.0
        %3715 = vmatpush.msra.mxu0 0.0
        %3716 = vmatpush.msra.mxu0 0.0
        %3717 = vmatpush.msra.mxu0 0.0
        %3718 = vmatpush.msra.mxu0 0.0
        %3719 = vmatpush.msra.mxu0 0.0
        %3720 = vmatpush.msra.mxu0 0.0
        %3721 = vmatpush.msra.mxu0 %v3293
        %3722 = vmatpush.msra.mxu0 %v3292
        %3723 = vmatpush.msra.mxu0 %v3291
        %3724 = vmatpush.msra.mxu0 %v3290
        %3725 = vmatmul.f32.gmra.mxu0 %v3685
        %v3726 = vpop.f32.mrf.mxu0
        %v3727 = vadd.f32 %v3613, %v3726
        %3728 = vdwg.mxu0
        %v3730 = vsel %vm640, %v3708, 0
        %3732 = vmatpush.msra.mxu0 0.0
        %3733 = vmatpush.msra.mxu0 0.0
        %3734 = vmatpush.msra.mxu0 0.0
        %3735 = vmatpush.msra.mxu0 0.0
        %3736 = vmatpush.msra.mxu0 0.0
        %3737 = vmatpush.msra.mxu0 0.0
        %3738 = vmatpush.msra.mxu0 0.0
        %3739 = vmatpush.msra.mxu0 0.0
        %3740 = vmatpush.msra.mxu0 0.0
        %3741 = vmatpush.msra.mxu0 0.0
        %3742 = vmatpush.msra.mxu0 0.0
        %3743 = vmatpush.msra.mxu0 0.0
        %3744 = vmatpush.msra.mxu0 0.0
        %3745 = vmatpush.msra.mxu0 0.0
        %3746 = vmatpush.msra.mxu0 0.0
        %3747 = vmatpush.msra.mxu0 %v3681
        %3748 = vmatmul.f32.gmra.mxu0 %v3730
        %v3749 = vpop.f32.mrf.mxu0
        %v3750 = vadd.f32 0.0, %v3749
        %3751 = vdwg.mxu0
        %v3752 = vsub.f32 %v3727, %v3750
        %v3753 = vsel %vm497, %v3682, 0.0
        %v3755 = vsel %vm640, %v3753, 0
        %3757 = vmatpush.msra.mxu0 0.0
        %3758 = vmatpush.msra.mxu0 0.0
        %3759 = vmatpush.msra.mxu0 0.0
        %3760 = vmatpush.msra.mxu0 0.0
        %3761 = vmatpush.msra.mxu0 0.0
        %3762 = vmatpush.msra.mxu0 0.0
        %3763 = vmatpush.msra.mxu0 0.0
        %3764 = vmatpush.msra.mxu0 0.0
        %3765 = vmatpush.msra.mxu0 0.0
        %3766 = vmatpush.msra.mxu0 0.0
        %3767 = vmatpush.msra.mxu0 0.0
        %3768 = vmatpush.msra.mxu0 0.0
        %3769 = vmatpush.msra.mxu0 0.0
        %3770 = vmatpush.msra.mxu0 0.0
        %3771 = vmatpush.msra.mxu0 0.0
        %3772 = vmatpush.msra.mxu0 %v3681
        %3773 = vmatmul.f32.gmra.mxu0 %v3755
        %v3774 = vpop.f32.mrf.mxu0
        %v3775 = vadd.f32 0.0, %v3774
        %3776 = vdwg.mxu0
        %3778 = vxpose.xlu0.b32.start [1/16] %v3616, 128
        %3779 = vxpose.xlu0.b32.cont [2/16] 0.0, 128
        %3780 = vxpose.xlu0.b32.cont [3/16] 0.0, 128
        %3781 = vxpose.xlu0.b32.cont [4/16] 0.0, 128
        %3782 = vxpose.xlu0.b32.cont [5/16] 0.0, 128
        %3783 = vxpose.xlu0.b32.cont [6/16] 0.0, 128
        %3784 = vxpose.xlu0.b32.cont [7/16] 0.0, 128
        %3785 = vxpose.xlu0.b32.cont [8/16] 0.0, 128
        %3786 = vxpose.xlu0.b32.cont [9/16] 0.0, 128
        %3787 = vxpose.xlu0.b32.cont [10/16] 0.0, 128
        %3788 = vxpose.xlu0.b32.cont [11/16] 0.0, 128
        %3789 = vxpose.xlu0.b32.cont [12/16] 0.0, 128
        %3790 = vxpose.xlu0.b32.cont [13/16] 0.0, 128
        %3791 = vxpose.xlu0.b32.cont [14/16] 0.0, 128
        %3792 = vxpose.xlu0.b32.cont [15/16] 0.0, 128
        %3793 = vxpose.xlu0.b32.end [16/16] 0.0, 128
        %v3794 = vpop.trf.xlu0
        %v3795 = vpop.trf.xlu0
        %v3796 = vpop.trf.xlu0
        %v3797 = vpop.trf.xlu0
        %v3798 = vpop.trf.xlu0
        %v3799 = vpop.trf.xlu0
        %v3800 = vpop.trf.xlu0
        %v3801 = vpop.trf.xlu0
        %v3802 = vpop.trf.xlu0
        %v3803 = vpop.trf.xlu0
        %v3804 = vpop.trf.xlu0
        %v3805 = vpop.trf.xlu0
        %v3806 = vpop.trf.xlu0
        %v3807 = vpop.trf.xlu0
        %v3808 = vpop.trf.xlu0
        %v3809 = vpop.trf.xlu0
        %v3811 = vsel %vm640, %v3794, 0
        %v3814 = vsel %vm640, %v3795, 0
        %v3817 = vsel %vm640, %v3796, 0
        %v3820 = vsel %vm640, %v3797, 0
        %3822 = vmatpush.msra.mxu0 0.0
        %3823 = vmatpush.msra.mxu0 0.0
        %3824 = vmatpush.msra.mxu0 0.0
        %3825 = vmatpush.msra.mxu0 0.0
        %3826 = vmatpush.msra.mxu0 0.0
        %3827 = vmatpush.msra.mxu0 0.0
        %3828 = vmatpush.msra.mxu0 0.0
        %3829 = vmatpush.msra.mxu0 0.0
        %3830 = vmatpush.msra.mxu0 0.0
        %3831 = vmatpush.msra.mxu0 0.0
        %3832 = vmatpush.msra.mxu0 0.0
        %3833 = vmatpush.msra.mxu0 0.0
        %3834 = vmatpush.msra.mxu0 0.0
        %3835 = vmatpush.msra.mxu0 0.0
        %3836 = vmatpush.msra.mxu0 0.0
        %3837 = vmatpush.msra.mxu0 %v3775
        %3838 = vmatmul.f32.gmra.mxu0 %v3811
        %v3839 = vpop.f32.mrf.mxu0
        %v3840 = vadd.f32 0.0, %v3839
        %3841 = vmatmul.f32.gmra.mxu0 %v3814
        %v3842 = vpop.f32.mrf.mxu0
        %v3843 = vadd.f32 0.0, %v3842
        %3844 = vmatmul.f32.gmra.mxu0 %v3817
        %v3845 = vpop.f32.mrf.mxu0
        %v3846 = vadd.f32 0.0, %v3845
        %3847 = vmatmul.f32.gmra.mxu0 %v3820
        %v3848 = vpop.f32.mrf.mxu0
        %v3849 = vadd.f32 0.0, %v3848
        %3850 = vdwg.mxu0
        %v3851 = vsub.f32 %v3290, %v3840
        %v3852 = vsub.f32 %v3291, %v3843
        %v3853 = vsub.f32 %v3292, %v3846
        %v3854 = vsub.f32 %v3293, %v3849
        %v3855 = vsel %vm521, %v3775, 0.0
        %v3856 = vrot.slane %v3855, 4
        %v3857 = vadd.f32 %v3855, %v3856
        %v3858 = vrot.slane %v3857, 2
        %v3859 = vadd.f32 %v3857, %v3858
        %v3860 = vrot.slane %v3859, 1
        %v3861 = vadd.f32 %v3859, %v3860
        %v3862 = vsub.f32 %v3301, %v3861
        %v3863 = vsel %vm521, %v3752, 0.0
        %3864 = vadd.xlane.f32.xlu0 %v3863
        %v3865 = vpop.xlane.xlu0 %3864
        %v3866 = vmul.f32 %v3865, %v555
        %v3867 = vsub.f32 %v3752, %v3866
        %v3868 = vmul.f32 %v3867, %v3867
        %v3869 = vsel %vm521, %v3868, 0.0
        %3870 = vadd.xlane.f32.xlu0 %v3869
        %v3871 = vpop.xlane.xlu0 %3870
        %v3872 = vmul.f32 %v3871, %v555
        %v3873 = vadd.f32 %v3872, 1e-06
        %v3874 = vrsqrt.pop %v3873
        %v3875 = vmul.f32 %v3874, %v3873
        %v3876 = vmul.f32 %v3875, %v3874
        %v3877 = vmul.f32 0.5, %v3876
        %v3878 = vsub.f32 1.5, %v3877
        %v3879 = vmul.f32 %v3874, %v3878
        %vm3880 = vweird.f32 %v3873
        %vm3881 = vweird.f32 %v3874
        %vm3882 = vmor %vm3880, %vm3881
        %v3883 = vsel %vm3882, %v3874, %v3879
        %v3884 = vmul.f32 %v3867, %v3883
        %v3885 = vmul.f32 %v850, %v3884
        %3887 = vrot.lane.b32.xlu0 %v3885, 32
        %v3888 = vpop.permute.xlu0 %3887
        %v3890 = vadd.f32 %v3335, %v3888
        %v3891 = vadd.f32 %v3890, %v1084
        %v3892 = vsel %vm521, %v3610, %v3891
        %s3893 = scalar_lea.vmem %s491, 40 [#allocation14]
        %3894 = vst.msk [vmem:[%s3893] sm:$0xff] %vm1088, %v3892
        %s3895 = scalar_lea.vmem %s413, 48 [#allocation8]
        %v3896 = vld [vmem:[%s3895] sm:$0xff]
        %s3897 = scalar_lea.vmem %s423, 48 [#allocation10]
        %v3898 = vld [vmem:[%s3897] sm:$0xff]
        %s3899 = scalar_lea.vmem %s433, 48 [#allocation11]
        %v3900 = vld [vmem:[%s3899] sm:$0xff]
        %v3901 = vld [vmem:[%s443 + $0x6] sm:$0x1]
        %v3903 = vperm.slane %v3585, 0
        %v3906 = vsel %vm521, %v3898, 0
        %3908 = vmatpush.msra.mxu0 0.0
        %3909 = vmatpush.msra.mxu0 0.0
        %3910 = vmatpush.msra.mxu0 0.0
        %3911 = vmatpush.msra.mxu0 0.0
        %3912 = vmatpush.msra.mxu0 0.0
        %3913 = vmatpush.msra.mxu0 0.0
        %3914 = vmatpush.msra.mxu0 0.0
        %3915 = vmatpush.msra.mxu0 0.0
        %3916 = vmatpush.msra.mxu0 0.0
        %3917 = vmatpush.msra.mxu0 0.0
        %3918 = vmatpush.msra.mxu0 0.0
        %3919 = vmatpush.msra.mxu0 0.0
        %3920 = vmatpush.msra.mxu0 %v3577
        %3921 = vmatpush.msra.mxu0 %v3576
        %3922 = vmatpush.msra.mxu0 %v3575
        %3923 = vmatpush.msra.mxu0 %v3574
        %3924 = vmatmul.f32.gmra.mxu0 %v3906
        %v3925 = vpop.f32.mrf.mxu0
        %v3926 = vadd.f32 %v3903, %v3925
        %3927 = vdwg.mxu0
        %v3928 = vsub.f32 %v3900, %v3898
        %v3929 = vsel %vm521, %v3926, 0.0
        %3930 = vadd.xlane.f32.xlu0 %v3929
        %v3931 = vpop.xlane.xlu0 %3930
        %v3932 = vmul.f32 %v3931, %v555
        %v3933 = vsub.f32 %v3926, %v3932
        %v3934 = vmul.f32 %v3933, %v3933
        %v3935 = vsel %vm521, %v3934, 0.0
        %3936 = vadd.xlane.f32.xlu0 %v3935
        %v3937 = vpop.xlane.xlu0 %3936
        %v3938 = vmul.f32 %v3937, %v555
        %v3939 = vadd.f32 %v3938, 1e-06
        %v3940 = vrsqrt.pop %v3939
        %v3941 = vmul.f32 %v3940, %v3939
        %v3942 = vmul.f32 %v3941, %v3940
        %v3943 = vmul.f32 0.5, %v3942
        %v3944 = vsub.f32 1.5, %v3943
        %v3945 = vmul.f32 %v3940, %v3944
        %vm3946 = vweird.f32 %v3939
        %vm3947 = vweird.f32 %v3940
        %vm3948 = vmor %vm3946, %vm3947
        %v3949 = vsel %vm3948, %v3940, %v3945
        %v3950 = vmul.f32 %v3933, %v3949
        %v3951 = vmul.f32 %v575, %v3950
        %v3952 = vadd.f32 %v3951, %v577
        %v3953 = vsub.f32 %v3952, %v3928
        %v3954 = vmul.f32 %v575, %v3953
        %v3955 = vmul.f32 %v3954, 32.0
        %v3956 = vsel %vm521, %v3954, 0.0
        %3957 = vadd.xlane.f32.xlu0 %v3956
        %v3958 = vpop.xlane.xlu0 %3957
        %v3959 = vsub.f32 %v3955, %v3958
        %v3960 = vmul.f32 %v3954, %v3950
        %v3961 = vsel %vm521, %v3960, 0.0
        %3962 = vadd.xlane.f32.xlu0 %v3961
        %v3963 = vpop.xlane.xlu0 %3962
        %v3964 = vmul.f32 %v3950, %v3963
        %v3965 = vsub.f32 %v3959, %v3964
        %v3966 = vmul.f32 %v3949, 0.03125
        %v3967 = vmul.f32 %v3965, %v3966
        %v3968 = vperm.slane %v3901, 0
        %v3970 = vsel %vm521, %v3896, 0
        %3972 = vmatpush.xpose.msra.mxu0 0.0
        %3973 = vmatpush.xpose.msra.mxu0 0.0
        %3974 = vmatpush.xpose.msra.mxu0 0.0
        %3975 = vmatpush.xpose.msra.mxu0 0.0
        %3976 = vmatpush.xpose.msra.mxu0 0.0
        %3977 = vmatpush.xpose.msra.mxu0 0.0
        %3978 = vmatpush.xpose.msra.mxu0 0.0
        %3979 = vmatpush.xpose.msra.mxu0 0.0
        %3980 = vmatpush.xpose.msra.mxu0 0.0
        %3981 = vmatpush.xpose.msra.mxu0 0.0
        %3982 = vmatpush.xpose.msra.mxu0 0.0
        %3983 = vmatpush.xpose.msra.mxu0 0.0
        %3984 = vmatpush.xpose.msra.mxu0 0.0
        %3985 = vmatpush.xpose.msra.mxu0 0.0
        %3986 = vmatpush.xpose.msra.mxu0 0.0
        %3987 = vmatpush.xpose.msra.mxu0 %v3906
        %3988 = vmatmul.f32.gmra.mxu0 %v3970
        %v3989 = vpop.f32.mrf.mxu0
        %v3990 = vadd.f32 1.0, %v3989
        %3991 = vdwg.mxu0
        %v3992 = vmul.f32 %v3968, %v3990
        %v3993 = vsel %vm496, %v3992, 0.0
        %3994 = vmatpush.msra.mxu0 0.0
        %3995 = vmatpush.msra.mxu0 0.0
        %3996 = vmatpush.msra.mxu0 0.0
        %3997 = vmatpush.msra.mxu0 0.0
        %3998 = vmatpush.msra.mxu0 0.0
        %3999 = vmatpush.msra.mxu0 0.0
        %4000 = vmatpush.msra.mxu0 0.0
        %4001 = vmatpush.msra.mxu0 0.0
        %4002 = vmatpush.msra.mxu0 0.0
        %4003 = vmatpush.msra.mxu0 0.0
        %4004 = vmatpush.msra.mxu0 0.0
        %4005 = vmatpush.msra.mxu0 0.0
        %4006 = vmatpush.msra.mxu0 %v3577
        %4007 = vmatpush.msra.mxu0 %v3576
        %4008 = vmatpush.msra.mxu0 %v3575
        %4009 = vmatpush.msra.mxu0 %v3574
        %4010 = vmatmul.f32.gmra.mxu0 %v3970
        %v4011 = vpop.f32.mrf.mxu0
        %v4012 = vadd.f32 %v3903, %v4011
        %4013 = vdwg.mxu0
        %v4015 = vsel %vm640, %v3993, 0
        %4017 = vmatpush.msra.mxu0 0.0
        %4018 = vmatpush.msra.mxu0 0.0
        %4019 = vmatpush.msra.mxu0 0.0
        %4020 = vmatpush.msra.mxu0 0.0
        %4021 = vmatpush.msra.mxu0 0.0
        %4022 = vmatpush.msra.mxu0 0.0
        %4023 = vmatpush.msra.mxu0 0.0
        %4024 = vmatpush.msra.mxu0 0.0
        %4025 = vmatpush.msra.mxu0 0.0
        %4026 = vmatpush.msra.mxu0 0.0
        %4027 = vmatpush.msra.mxu0 0.0
        %4028 = vmatpush.msra.mxu0 0.0
        %4029 = vmatpush.msra.mxu0 0.0
        %4030 = vmatpush.msra.mxu0 0.0
        %4031 = vmatpush.msra.mxu0 0.0
        %4032 = vmatpush.msra.mxu0 %v3967
        %4033 = vmatmul.f32.gmra.mxu0 %v4015
        %v4034 = vpop.f32.mrf.mxu0
        %v4035 = vadd.f32 0.0, %v4034
        %4036 = vdwg.mxu0
        %v4037 = vsub.f32 %v4012, %v4035
        %v4038 = vsel %vm497, %v3968, 0.0
        %v4040 = vsel %vm640, %v4038, 0
        %4042 = vmatpush.msra.mxu0 0.0
        %4043 = vmatpush.msra.mxu0 0.0
        %4044 = vmatpush.msra.mxu0 0.0
        %4045 = vmatpush.msra.mxu0 0.0
        %4046 = vmatpush.msra.mxu0 0.0
        %4047 = vmatpush.msra.mxu0 0.0
        %4048 = vmatpush.msra.mxu0 0.0
        %4049 = vmatpush.msra.mxu0 0.0
        %4050 = vmatpush.msra.mxu0 0.0
        %4051 = vmatpush.msra.mxu0 0.0
        %4052 = vmatpush.msra.mxu0 0.0
        %4053 = vmatpush.msra.mxu0 0.0
        %4054 = vmatpush.msra.mxu0 0.0
        %4055 = vmatpush.msra.mxu0 0.0
        %4056 = vmatpush.msra.mxu0 0.0
        %4057 = vmatpush.msra.mxu0 %v3967
        %4058 = vmatmul.f32.gmra.mxu0 %v4040
        %v4059 = vpop.f32.mrf.mxu0
        %v4060 = vadd.f32 0.0, %v4059
        %4061 = vdwg.mxu0
        %4062 = vxpose.xlu0.b32.start [1/16] %v3898, 128
        %4063 = vxpose.xlu0.b32.cont [2/16] 0.0, 128
        %4064 = vxpose.xlu0.b32.cont [3/16] 0.0, 128
        %4065 = vxpose.xlu0.b32.cont [4/16] 0.0, 128
        %4066 = vxpose.xlu0.b32.cont [5/16] 0.0, 128
        %4067 = vxpose.xlu0.b32.cont [6/16] 0.0, 128
        %4068 = vxpose.xlu0.b32.cont [7/16] 0.0, 128
        %4069 = vxpose.xlu0.b32.cont [8/16] 0.0, 128
        %4070 = vxpose.xlu0.b32.cont [9/16] 0.0, 128
        %4071 = vxpose.xlu0.b32.cont [10/16] 0.0, 128
        %4072 = vxpose.xlu0.b32.cont [11/16] 0.0, 128
        %4073 = vxpose.xlu0.b32.cont [12/16] 0.0, 128
        %4074 = vxpose.xlu0.b32.cont [13/16] 0.0, 128
        %4075 = vxpose.xlu0.b32.cont [14/16] 0.0, 128
        %4076 = vxpose.xlu0.b32.cont [15/16] 0.0, 128
        %4077 = vxpose.xlu0.b32.end [16/16] 0.0, 128
        %v4078 = vpop.trf.xlu0
        %v4079 = vpop.trf.xlu0
        %v4080 = vpop.trf.xlu0
        %v4081 = vpop.trf.xlu0
        %v4082 = vpop.trf.xlu0
        %v4083 = vpop.trf.xlu0
        %v4084 = vpop.trf.xlu0
        %v4085 = vpop.trf.xlu0
        %v4086 = vpop.trf.xlu0
        %v4087 = vpop.trf.xlu0
        %v4088 = vpop.trf.xlu0
        %v4089 = vpop.trf.xlu0
        %v4090 = vpop.trf.xlu0
        %v4091 = vpop.trf.xlu0
        %v4092 = vpop.trf.xlu0
        %v4093 = vpop.trf.xlu0
        %v4095 = vsel %vm640, %v4078, 0
        %v4098 = vsel %vm640, %v4079, 0
        %v4101 = vsel %vm640, %v4080, 0
        %v4104 = vsel %vm640, %v4081, 0
        %4106 = vmatpush.msra.mxu0 0.0
        %4107 = vmatpush.msra.mxu0 0.0
        %4108 = vmatpush.msra.mxu0 0.0
        %4109 = vmatpush.msra.mxu0 0.0
        %4110 = vmatpush.msra.mxu0 0.0
        %4111 = vmatpush.msra.mxu0 0.0
        %4112 = vmatpush.msra.mxu0 0.0
        %4113 = vmatpush.msra.mxu0 0.0
        %4114 = vmatpush.msra.mxu0 0.0
        %4115 = vmatpush.msra.mxu0 0.0
        %4116 = vmatpush.msra.mxu0 0.0
        %4117 = vmatpush.msra.mxu0 0.0
        %4118 = vmatpush.msra.mxu0 0.0
        %4119 = vmatpush.msra.mxu0 0.0
        %4120 = vmatpush.msra.mxu0 0.0
        %4121 = vmatpush.msra.mxu0 %v4060
        %4122 = vmatmul.f32.gmra.mxu0 %v4095
        %v4123 = vpop.f32.mrf.mxu0
        %v4124 = vadd.f32 0.0, %v4123
        %4125 = vmatmul.f32.gmra.mxu0 %v4098
        %v4126 = vpop.f32.mrf.mxu0
        %v4127 = vadd.f32 0.0, %v4126
        %4128 = vmatmul.f32.gmra.mxu0 %v4101
        %v4129 = vpop.f32.mrf.mxu0
        %v4130 = vadd.f32 0.0, %v4129
        %4131 = vmatmul.f32.gmra.mxu0 %v4104
        %v4132 = vpop.f32.mrf.mxu0
        %v4133 = vadd.f32 0.0, %v4132
        %4134 = vdwg.mxu0
        %v4135 = vsub.f32 %v3574, %v4124
        %v4136 = vsub.f32 %v3575, %v4127
        %v4137 = vsub.f32 %v3576, %v4130
        %v4138 = vsub.f32 %v3577, %v4133
        %v4139 = vsel %vm521, %v4060, 0.0
        %v4140 = vrot.slane %v4139, 4
        %v4141 = vadd.f32 %v4139, %v4140
        %v4142 = vrot.slane %v4141, 2
        %v4143 = vadd.f32 %v4141, %v4142
        %v4144 = vrot.slane %v4143, 1
        %v4145 = vadd.f32 %v4143, %v4144
        %v4146 = vsub.f32 %v3585, %v4145
        %v4147 = vsel %vm521, %v4037, 0.0
        %4148 = vadd.xlane.f32.xlu0 %v4147
        %v4149 = vpop.xlane.xlu0 %4148
        %v4150 = vmul.f32 %v4149, %v555
        %v4151 = vsub.f32 %v4037, %v4150
        %v4152 = vmul.f32 %v4151, %v4151
        %v4153 = vsel %vm521, %v4152, 0.0
        %4154 = vadd.xlane.f32.xlu0 %v4153
        %v4155 = vpop.xlane.xlu0 %4154
        %v4156 = vmul.f32 %v4155, %v555
        %v4157 = vadd.f32 %v4156, 1e-06
        %v4158 = vrsqrt.pop %v4157
        %v4159 = vmul.f32 %v4158, %v4157
        %v4160 = vmul.f32 %v4159, %v4158
        %v4161 = vmul.f32 0.5, %v4160
        %v4162 = vsub.f32 1.5, %v4161
        %v4163 = vmul.f32 %v4158, %v4162
        %vm4164 = vweird.f32 %v4157
        %vm4165 = vweird.f32 %v4158
        %vm4166 = vmor %vm4164, %vm4165
        %v4167 = vsel %vm4166, %v4158, %v4163
        %v4168 = vmul.f32 %v4151, %v4167
        %v4169 = vmul.f32 %v575, %v4168
        %v4170 = vadd.f32 %v3896, %v4169
        %v4171 = vadd.f32 %v4170, %v577
        %v4172 = vld [vmem:[%s799 + $0x6] sm:$0x1]
        %v4174 = vperm.slane %v3862, 0
        %4176 = vrot.lane.b32.xlu0 %v3898, 96
        %v4177 = vpop.permute.xlu0 %4176
        %v4178 = vsel %vm521, %v4177, 0
        %4180 = vmatpush.msra.mxu0 0.0
        %4181 = vmatpush.msra.mxu0 0.0
        %4182 = vmatpush.msra.mxu0 0.0
        %4183 = vmatpush.msra.mxu0 0.0
        %4184 = vmatpush.msra.mxu0 0.0
        %4185 = vmatpush.msra.mxu0 0.0
        %4186 = vmatpush.msra.mxu0 0.0
        %4187 = vmatpush.msra.mxu0 0.0
        %4188 = vmatpush.msra.mxu0 0.0
        %4189 = vmatpush.msra.mxu0 0.0
        %4190 = vmatpush.msra.mxu0 0.0
        %4191 = vmatpush.msra.mxu0 0.0
        %4192 = vmatpush.msra.mxu0 %v3854
        %4193 = vmatpush.msra.mxu0 %v3853
        %4194 = vmatpush.msra.mxu0 %v3852
        %4195 = vmatpush.msra.mxu0 %v3851
        %4196 = vmatmul.f32.gmra.mxu0 %v4178
        %v4197 = vpop.f32.mrf.mxu0
        %v4198 = vadd.f32 %v4174, %v4197
        %4199 = vdwg.mxu0
        %v4200 = vsel %vm521, %v4198, 0.0
        %4201 = vadd.xlane.f32.xlu0 %v4200
        %v4202 = vpop.xlane.xlu0 %4201
        %v4203 = vmul.f32 %v4202, %v555
        %v4204 = vsub.f32 %v4198, %v4203
        %v4205 = vmul.f32 %v4204, %v4204
        %v4206 = vsel %vm521, %v4205, 0.0
        %4207 = vadd.xlane.f32.xlu0 %v4206
        %v4208 = vpop.xlane.xlu0 %4207
        %v4209 = vmul.f32 %v4208, %v555
        %v4210 = vadd.f32 %v4209, 1e-06
        %v4211 = vrsqrt.pop %v4210
        %v4212 = vmul.f32 %v4211, %v4210
        %v4213 = vmul.f32 %v4212, %v4211
        %v4214 = vmul.f32 0.5, %v4213
        %v4215 = vsub.f32 1.5, %v4214
        %v4216 = vmul.f32 %v4211, %v4215
        %vm4217 = vweird.f32 %v4210
        %vm4218 = vweird.f32 %v4211
        %vm4219 = vmor %vm4217, %vm4218
        %v4220 = vsel %vm4219, %v4211, %v4216
        %v4221 = vmul.f32 %v4204, %v4220
        %v4222 = vmul.f32 %v850, %v4221
        %v4223 = vadd.f32 %v4222, %v852
        %4225 = vrot.lane.b32.xlu0 %v3928, 96
        %v4226 = vpop.permute.xlu0 %4225
        %v4228 = vsub.f32 %v4223, %v4226
        %v4229 = vmul.f32 %v850, %v4228
        %v4230 = vmul.f32 %v4229, 32.0
        %v4231 = vsel %vm521, %v4229, 0.0
        %4232 = vadd.xlane.f32.xlu0 %v4231
        %v4233 = vpop.xlane.xlu0 %4232
        %v4234 = vsub.f32 %v4230, %v4233
        %v4235 = vmul.f32 %v4229, %v4221
        %v4236 = vsel %vm521, %v4235, 0.0
        %4237 = vadd.xlane.f32.xlu0 %v4236
        %v4238 = vpop.xlane.xlu0 %4237
        %v4239 = vmul.f32 %v4221, %v4238
        %v4240 = vsub.f32 %v4234, %v4239
        %v4241 = vmul.f32 %v4220, 0.03125
        %v4242 = vmul.f32 %v4240, %v4241
        %v4243 = vperm.slane %v4172, 0
        %4244 = vrot.lane.b32.xlu0 %v3896, 96
        %v4245 = vpop.permute.xlu0 %4244
        %v4246 = vsel %vm521, %v4245, 0
        %4248 = vmatpush.xpose.msra.mxu0 0.0
        %4249 = vmatpush.xpose.msra.mxu0 0.0
        %4250 = vmatpush.xpose.msra.mxu0 0.0
        %4251 = vmatpush.xpose.msra.mxu0 0.0
        %4252 = vmatpush.xpose.msra.mxu0 0.0
        %4253 = vmatpush.xpose.msra.mxu0 0.0
        %4254 = vmatpush.xpose.msra.mxu0 0.0
        %4255 = vmatpush.xpose.msra.mxu0 0.0
        %4256 = vmatpush.xpose.msra.mxu0 0.0
        %4257 = vmatpush.xpose.msra.mxu0 0.0
        %4258 = vmatpush.xpose.msra.mxu0 0.0
        %4259 = vmatpush.xpose.msra.mxu0 0.0
        %4260 = vmatpush.xpose.msra.mxu0 0.0
        %4261 = vmatpush.xpose.msra.mxu0 0.0
        %4262 = vmatpush.xpose.msra.mxu0 0.0
        %4263 = vmatpush.xpose.msra.mxu0 %v4178
        %4264 = vmatmul.f32.gmra.mxu0 %v4246
        %v4265 = vpop.f32.mrf.mxu0
        %v4266 = vadd.f32 1.0, %v4265
        %4267 = vdwg.mxu0
        %v4268 = vmul.f32 %v4243, %v4266
        %v4269 = vsel %vm496, %v4268, 0.0
        %4270 = vmatpush.msra.mxu0 0.0
        %4271 = vmatpush.msra.mxu0 0.0
        %4272 = vmatpush.msra.mxu0 0.0
        %4273 = vmatpush.msra.mxu0 0.0
        %4274 = vmatpush.msra.mxu0 0.0
        %4275 = vmatpush.msra.mxu0 0.0
        %4276 = vmatpush.msra.mxu0 0.0
        %4277 = vmatpush.msra.mxu0 0.0
        %4278 = vmatpush.msra.mxu0 0.0
        %4279 = vmatpush.msra.mxu0 0.0
        %4280 = vmatpush.msra.mxu0 0.0
        %4281 = vmatpush.msra.mxu0 0.0
        %4282 = vmatpush.msra.mxu0 %v3854
        %4283 = vmatpush.msra.mxu0 %v3853
        %4284 = vmatpush.msra.mxu0 %v3852
        %4285 = vmatpush.msra.mxu0 %v3851
        %4286 = vmatmul.f32.gmra.mxu0 %v4246
        %v4287 = vpop.f32.mrf.mxu0
        %v4288 = vadd.f32 %v4174, %v4287
        %4289 = vdwg.mxu0
        %v4291 = vsel %vm640, %v4269, 0
        %4293 = vmatpush.msra.mxu0 0.0
        %4294 = vmatpush.msra.mxu0 0.0
        %4295 = vmatpush.msra.mxu0 0.0
        %4296 = vmatpush.msra.mxu0 0.0
        %4297 = vmatpush.msra.mxu0 0.0
        %4298 = vmatpush.msra.mxu0 0.0
        %4299 = vmatpush.msra.mxu0 0.0
        %4300 = vmatpush.msra.mxu0 0.0
        %4301 = vmatpush.msra.mxu0 0.0
        %4302 = vmatpush.msra.mxu0 0.0
        %4303 = vmatpush.msra.mxu0 0.0
        %4304 = vmatpush.msra.mxu0 0.0
        %4305 = vmatpush.msra.mxu0 0.0
        %4306 = vmatpush.msra.mxu0 0.0
        %4307 = vmatpush.msra.mxu0 0.0
        %4308 = vmatpush.msra.mxu0 %v4242
        %4309 = vmatmul.f32.gmra.mxu0 %v4291
        %v4310 = vpop.f32.mrf.mxu0
        %v4311 = vadd.f32 0.0, %v4310
        %4312 = vdwg.mxu0
        %v4313 = vsub.f32 %v4288, %v4311
        %v4314 = vsel %vm497, %v4243, 0.0
        %v4316 = vsel %vm640, %v4314, 0
        %4318 = vmatpush.msra.mxu0 0.0
        %4319 = vmatpush.msra.mxu0 0.0
        %4320 = vmatpush.msra.mxu0 0.0
        %4321 = vmatpush.msra.mxu0 0.0
        %4322 = vmatpush.msra.mxu0 0.0
        %4323 = vmatpush.msra.mxu0 0.0
        %4324 = vmatpush.msra.mxu0 0.0
        %4325 = vmatpush.msra.mxu0 0.0
        %4326 = vmatpush.msra.mxu0 0.0
        %4327 = vmatpush.msra.mxu0 0.0
        %4328 = vmatpush.msra.mxu0 0.0
        %4329 = vmatpush.msra.mxu0 0.0
        %4330 = vmatpush.msra.mxu0 0.0
        %4331 = vmatpush.msra.mxu0 0.0
        %4332 = vmatpush.msra.mxu0 0.0
        %4333 = vmatpush.msra.mxu0 %v4242
        %4334 = vmatmul.f32.gmra.mxu0 %v4316
        %v4335 = vpop.f32.mrf.mxu0
        %v4336 = vadd.f32 0.0, %v4335
        %4337 = vdwg.mxu0
        %4339 = vxpose.xlu0.b32.start [1/16] %v4177, 128
        %4340 = vxpose.xlu0.b32.cont [2/16] 0.0, 128
        %4341 = vxpose.xlu0.b32.cont [3/16] 0.0, 128
        %4342 = vxpose.xlu0.b32.cont [4/16] 0.0, 128
        %4343 = vxpose.xlu0.b32.cont [5/16] 0.0, 128
        %4344 = vxpose.xlu0.b32.cont [6/16] 0.0, 128
        %4345 = vxpose.xlu0.b32.cont [7/16] 0.0, 128
        %4346 = vxpose.xlu0.b32.cont [8/16] 0.0, 128
        %4347 = vxpose.xlu0.b32.cont [9/16] 0.0, 128
        %4348 = vxpose.xlu0.b32.cont [10/16] 0.0, 128
        %4349 = vxpose.xlu0.b32.cont [11/16] 0.0, 128
        %4350 = vxpose.xlu0.b32.cont [12/16] 0.0, 128
        %4351 = vxpose.xlu0.b32.cont [13/16] 0.0, 128
        %4352 = vxpose.xlu0.b32.cont [14/16] 0.0, 128
        %4353 = vxpose.xlu0.b32.cont [15/16] 0.0, 128
        %4354 = vxpose.xlu0.b32.end [16/16] 0.0, 128
        %v4355 = vpop.trf.xlu0
        %v4356 = vpop.trf.xlu0
        %v4357 = vpop.trf.xlu0
        %v4358 = vpop.trf.xlu0
        %v4359 = vpop.trf.xlu0
        %v4360 = vpop.trf.xlu0
        %v4361 = vpop.trf.xlu0
        %v4362 = vpop.trf.xlu0
        %v4363 = vpop.trf.xlu0
        %v4364 = vpop.trf.xlu0
        %v4365 = vpop.trf.xlu0
        %v4366 = vpop.trf.xlu0
        %v4367 = vpop.trf.xlu0
        %v4368 = vpop.trf.xlu0
        %v4369 = vpop.trf.xlu0
        %v4370 = vpop.trf.xlu0
        %v4372 = vsel %vm640, %v4355, 0
        %v4375 = vsel %vm640, %v4356, 0
        %v4378 = vsel %vm640, %v4357, 0
        %v4381 = vsel %vm640, %v4358, 0
        %4383 = vmatpush.msra.mxu0 0.0
        %4384 = vmatpush.msra.mxu0 0.0
        %4385 = vmatpush.msra.mxu0 0.0
        %4386 = vmatpush.msra.mxu0 0.0
        %4387 = vmatpush.msra.mxu0 0.0
        %4388 = vmatpush.msra.mxu0 0.0
        %4389 = vmatpush.msra.mxu0 0.0
        %4390 = vmatpush.msra.mxu0 0.0
        %4391 = vmatpush.msra.mxu0 0.0
        %4392 = vmatpush.msra.mxu0 0.0
        %4393 = vmatpush.msra.mxu0 0.0
        %4394 = vmatpush.msra.mxu0 0.0
        %4395 = vmatpush.msra.mxu0 0.0
        %4396 = vmatpush.msra.mxu0 0.0
        %4397 = vmatpush.msra.mxu0 0.0
        %4398 = vmatpush.msra.mxu0 %v4336
        %4399 = vmatmul.f32.gmra.mxu0 %v4372
        %v4400 = vpop.f32.mrf.mxu0
        %v4401 = vadd.f32 0.0, %v4400
        %4402 = vmatmul.f32.gmra.mxu0 %v4375
        %v4403 = vpop.f32.mrf.mxu0
        %v4404 = vadd.f32 0.0, %v4403
        %4405 = vmatmul.f32.gmra.mxu0 %v4378
        %v4406 = vpop.f32.mrf.mxu0
        %v4407 = vadd.f32 0.0, %v4406
        %4408 = vmatmul.f32.gmra.mxu0 %v4381
        %v4409 = vpop.f32.mrf.mxu0
        %v4410 = vadd.f32 0.0, %v4409
        %4411 = vdwg.mxu0
        %v4412 = vsub.f32 %v3851, %v4401
        %v4413 = vsub.f32 %v3852, %v4404
        %v4414 = vsub.f32 %v3853, %v4407
        %v4415 = vsub.f32 %v3854, %v4410
        %v4416 = vsel %vm521, %v4336, 0.0
        %v4417 = vrot.slane %v4416, 4
        %v4418 = vadd.f32 %v4416, %v4417
        %v4419 = vrot.slane %v4418, 2
        %v4420 = vadd.f32 %v4418, %v4419
        %v4421 = vrot.slane %v4420, 1
        %v4422 = vadd.f32 %v4420, %v4421
        %v4423 = vsub.f32 %v3862, %v4422
        %v4424 = vsel %vm521, %v4313, 0.0
        %4425 = vadd.xlane.f32.xlu0 %v4424
        %v4426 = vpop.xlane.xlu0 %4425
        %v4427 = vmul.f32 %v4426, %v555
        %v4428 = vsub.f32 %v4313, %v4427
        %v4429 = vmul.f32 %v4428, %v4428
        %v4430 = vsel %vm521, %v4429, 0.0
        %4431 = vadd.xlane.f32.xlu0 %v4430
        %v4432 = vpop.xlane.xlu0 %4431
        %v4433 = vmul.f32 %v4432, %v555
        %v4434 = vadd.f32 %v4433, 1e-06
        %v4435 = vrsqrt.pop %v4434
        %v4436 = vmul.f32 %v4435, %v4434
        %v4437 = vmul.f32 %v4436, %v4435
        %v4438 = vmul.f32 0.5, %v4437
        %v4439 = vsub.f32 1.5, %v4438
        %v4440 = vmul.f32 %v4435, %v4439
        %vm4441 = vweird.f32 %v4434
        %vm4442 = vweird.f32 %v4435
        %vm4443 = vmor %vm4441, %vm4442
        %v4444 = vsel %vm4443, %v4435, %v4440
        %v4445 = vmul.f32 %v4428, %v4444
        %v4446 = vmul.f32 %v850, %v4445
        %4448 = vrot.lane.b32.xlu0 %v4446, 32
        %v4449 = vpop.permute.xlu0 %4448
        %v4451 = vadd.f32 %v3896, %v4449
        %v4452 = vadd.f32 %v4451, %v1084
        %v4453 = vsel %vm521, %v4171, %v4452
        %s4454 = scalar_lea.vmem %s491, 48 [#allocation14]
        %4455 = vst.msk [vmem:[%s4454] sm:$0xff] %vm1088, %v4453
        %s4456 = scalar_lea.vmem %s413, 56 [#allocation8]
        %v4457 = vld [vmem:[%s4456] sm:$0xff]
        %s4458 = scalar_lea.vmem %s423, 56 [#allocation10]
        %v4459 = vld [vmem:[%s4458] sm:$0xff]
        %s4460 = scalar_lea.vmem %s433, 56 [#allocation11]
        %v4461 = vld [vmem:[%s4460] sm:$0xff]
        %v4462 = vld [vmem:[%s443 + $0x7] sm:$0x1]
        %v4464 = vperm.slane %v4146, 0
        %v4467 = vsel %vm521, %v4459, 0
        %4469 = vmatpush.msra.mxu0 0.0
        %4470 = vmatpush.msra.mxu0 0.0
        %4471 = vmatpush.msra.mxu0 0.0
        %4472 = vmatpush.msra.mxu0 0.0
        %4473 = vmatpush.msra.mxu0 0.0
        %4474 = vmatpush.msra.mxu0 0.0
        %4475 = vmatpush.msra.mxu0 0.0
        %4476 = vmatpush.msra.mxu0 0.0
        %4477 = vmatpush.msra.mxu0 0.0
        %4478 = vmatpush.msra.mxu0 0.0
        %4479 = vmatpush.msra.mxu0 0.0
        %4480 = vmatpush.msra.mxu0 0.0
        %4481 = vmatpush.msra.mxu0 %v4138
        %4482 = vmatpush.msra.mxu0 %v4137
        %4483 = vmatpush.msra.mxu0 %v4136
        %4484 = vmatpush.msra.mxu0 %v4135
        %4485 = vmatmul.f32.gmra.mxu0 %v4467
        %v4486 = vpop.f32.mrf.mxu0
        %v4487 = vadd.f32 %v4464, %v4486
        %4488 = vdwg.mxu0
        %v4489 = vsub.f32 %v4461, %v4459
        %v4490 = vsel %vm521, %v4487, 0.0
        %4491 = vadd.xlane.f32.xlu0 %v4490
        %v4492 = vpop.xlane.xlu0 %4491
        %v4493 = vmul.f32 %v4492, %v555
        %v4494 = vsub.f32 %v4487, %v4493
        %v4495 = vmul.f32 %v4494, %v4494
        %v4496 = vsel %vm521, %v4495, 0.0
        %4497 = vadd.xlane.f32.xlu0 %v4496
        %v4498 = vpop.xlane.xlu0 %4497
        %v4499 = vmul.f32 %v4498, %v555
        %v4500 = vadd.f32 %v4499, 1e-06
        %v4501 = vrsqrt.pop %v4500
        %v4502 = vmul.f32 %v4501, %v4500
        %v4503 = vmul.f32 %v4502, %v4501
        %v4504 = vmul.f32 0.5, %v4503
        %v4505 = vsub.f32 1.5, %v4504
        %v4506 = vmul.f32 %v4501, %v4505
        %vm4507 = vweird.f32 %v4500
        %vm4508 = vweird.f32 %v4501
        %vm4509 = vmor %vm4507, %vm4508
        %v4510 = vsel %vm4509, %v4501, %v4506
        %v4511 = vmul.f32 %v4494, %v4510
        %v4512 = vmul.f32 %v575, %v4511
        %v4513 = vadd.f32 %v4512, %v577
        %v4514 = vsub.f32 %v4513, %v4489
        %v4515 = vmul.f32 %v575, %v4514
        %v4516 = vmul.f32 %v4515, 32.0
        %v4517 = vsel %vm521, %v4515, 0.0
        %4518 = vadd.xlane.f32.xlu0 %v4517
        %v4519 = vpop.xlane.xlu0 %4518
        %v4520 = vsub.f32 %v4516, %v4519
        %v4521 = vmul.f32 %v4515, %v4511
        %v4522 = vsel %vm521, %v4521, 0.0
        %4523 = vadd.xlane.f32.xlu0 %v4522
        %v4524 = vpop.xlane.xlu0 %4523
        %v4525 = vmul.f32 %v4511, %v4524
        %v4526 = vsub.f32 %v4520, %v4525
        %v4527 = vmul.f32 %v4510, 0.03125
        %v4528 = vmul.f32 %v4526, %v4527
        %v4529 = vperm.slane %v4462, 0
        %v4531 = vsel %vm521, %v4457, 0
        %4533 = vmatpush.xpose.msra.mxu0 0.0
        %4534 = vmatpush.xpose.msra.mxu0 0.0
        %4535 = vmatpush.xpose.msra.mxu0 0.0
        %4536 = vmatpush.xpose.msra.mxu0 0.0
        %4537 = vmatpush.xpose.msra.mxu0 0.0
        %4538 = vmatpush.xpose.msra.mxu0 0.0
        %4539 = vmatpush.xpose.msra.mxu0 0.0
        %4540 = vmatpush.xpose.msra.mxu0 0.0
        %4541 = vmatpush.xpose.msra.mxu0 0.0
        %4542 = vmatpush.xpose.msra.mxu0 0.0
        %4543 = vmatpush.xpose.msra.mxu0 0.0
        %4544 = vmatpush.xpose.msra.mxu0 0.0
        %4545 = vmatpush.xpose.msra.mxu0 0.0
        %4546 = vmatpush.xpose.msra.mxu0 0.0
        %4547 = vmatpush.xpose.msra.mxu0 0.0
        %4548 = vmatpush.xpose.msra.mxu0 %v4467
        %4549 = vmatmul.f32.gmra.mxu0 %v4531
        %v4550 = vpop.f32.mrf.mxu0
        %v4551 = vadd.f32 1.0, %v4550
        %4552 = vdwg.mxu0
        %v4553 = vmul.f32 %v4529, %v4551
        %v4554 = vsel %vm496, %v4553, 0.0
        %4555 = vmatpush.msra.mxu0 0.0
        %4556 = vmatpush.msra.mxu0 0.0
        %4557 = vmatpush.msra.mxu0 0.0
        %4558 = vmatpush.msra.mxu0 0.0
        %4559 = vmatpush.msra.mxu0 0.0
        %4560 = vmatpush.msra.mxu0 0.0
        %4561 = vmatpush.msra.mxu0 0.0
        %4562 = vmatpush.msra.mxu0 0.0
        %4563 = vmatpush.msra.mxu0 0.0
        %4564 = vmatpush.msra.mxu0 0.0
        %4565 = vmatpush.msra.mxu0 0.0
        %4566 = vmatpush.msra.mxu0 0.0
        %4567 = vmatpush.msra.mxu0 %v4138
        %4568 = vmatpush.msra.mxu0 %v4137
        %4569 = vmatpush.msra.mxu0 %v4136
        %4570 = vmatpush.msra.mxu0 %v4135
        %4571 = vmatmul.f32.gmra.mxu0 %v4531
        %v4572 = vpop.f32.mrf.mxu0
        %v4573 = vadd.f32 %v4464, %v4572
        %4574 = vdwg.mxu0
        %v4576 = vsel %vm640, %v4554, 0
        %4578 = vmatpush.msra.mxu0 0.0
        %4579 = vmatpush.msra.mxu0 0.0
        %4580 = vmatpush.msra.mxu0 0.0
        %4581 = vmatpush.msra.mxu0 0.0
        %4582 = vmatpush.msra.mxu0 0.0
        %4583 = vmatpush.msra.mxu0 0.0
        %4584 = vmatpush.msra.mxu0 0.0
        %4585 = vmatpush.msra.mxu0 0.0
        %4586 = vmatpush.msra.mxu0 0.0
        %4587 = vmatpush.msra.mxu0 0.0
        %4588 = vmatpush.msra.mxu0 0.0
        %4589 = vmatpush.msra.mxu0 0.0
        %4590 = vmatpush.msra.mxu0 0.0
        %4591 = vmatpush.msra.mxu0 0.0
        %4592 = vmatpush.msra.mxu0 0.0
        %4593 = vmatpush.msra.mxu0 %v4528
        %4594 = vmatmul.f32.gmra.mxu0 %v4576
        %v4595 = vpop.f32.mrf.mxu0
        %v4596 = vadd.f32 0.0, %v4595
        %4597 = vdwg.mxu0
        %v4598 = vsub.f32 %v4573, %v4596
        %v4599 = vsel %vm521, %v4598, 0.0
        %4600 = vadd.xlane.f32.xlu0 %v4599
        %v4601 = vpop.xlane.xlu0 %4600
        %v4602 = vmul.f32 %v4601, %v555
        %v4603 = vsub.f32 %v4598, %v4602
        %v4604 = vmul.f32 %v4603, %v4603
        %v4605 = vsel %vm521, %v4604, 0.0
        %4606 = vadd.xlane.f32.xlu0 %v4605
        %v4607 = vpop.xlane.xlu0 %4606
        %v4608 = vmul.f32 %v4607, %v555
        %v4609 = vadd.f32 %v4608, 1e-06
        %v4610 = vrsqrt.pop %v4609
        %v4611 = vmul.f32 %v4610, %v4609
        %v4612 = vmul.f32 %v4611, %v4610
        %v4613 = vmul.f32 0.5, %v4612
        %v4614 = vsub.f32 1.5, %v4613
        %v4615 = vmul.f32 %v4610, %v4614
        %vm4616 = vweird.f32 %v4609
        %vm4617 = vweird.f32 %v4610
        %vm4618 = vmor %vm4616, %vm4617
        %v4619 = vsel %vm4618, %v4610, %v4615
        %v4620 = vmul.f32 %v4603, %v4619
        %v4621 = vmul.f32 %v575, %v4620
        %v4622 = vadd.f32 %v4457, %v4621
        %v4623 = vadd.f32 %v4622, %v577
        %v4624 = vld [vmem:[%s799 + $0x7] sm:$0x1]
        %v4626 = vperm.slane %v4423, 0
        %4628 = vrot.lane.b32.xlu0 %v4459, 96
        %v4629 = vpop.permute.xlu0 %4628
        %v4630 = vsel %vm521, %v4629, 0
        %4632 = vmatpush.msra.mxu0 0.0
        %4633 = vmatpush.msra.mxu0 0.0
        %4634 = vmatpush.msra.mxu0 0.0
        %4635 = vmatpush.msra.mxu0 0.0
        %4636 = vmatpush.msra.mxu0 0.0
        %4637 = vmatpush.msra.mxu0 0.0
        %4638 = vmatpush.msra.mxu0 0.0
        %4639 = vmatpush.msra.mxu0 0.0
        %4640 = vmatpush.msra.mxu0 0.0
        %4641 = vmatpush.msra.mxu0 0.0
        %4642 = vmatpush.msra.mxu0 0.0
        %4643 = vmatpush.msra.mxu0 0.0
        %4644 = vmatpush.msra.mxu0 %v4415
        %4645 = vmatpush.msra.mxu0 %v4414
        %4646 = vmatpush.msra.mxu0 %v4413
        %4647 = vmatpush.msra.mxu0 %v4412
        %4648 = vmatmul.f32.gmra.mxu0 %v4630
        %v4649 = vpop.f32.mrf.mxu0
        %v4650 = vadd.f32 %v4626, %v4649
        %4651 = vdwg.mxu0
        %v4652 = vsel %vm521, %v4650, 0.0
        %4653 = vadd.xlane.f32.xlu0 %v4652
        %v4654 = vpop.xlane.xlu0 %4653
        %v4655 = vmul.f32 %v4654, %v555
        %v4656 = vsub.f32 %v4650, %v4655
        %v4657 = vmul.f32 %v4656, %v4656
        %v4658 = vsel %vm521, %v4657, 0.0
        %4659 = vadd.xlane.f32.xlu0 %v4658
        %v4660 = vpop.xlane.xlu0 %4659
        %v4661 = vmul.f32 %v4660, %v555
        %v4662 = vadd.f32 %v4661, 1e-06
        %v4663 = vrsqrt.pop %v4662
        %v4664 = vmul.f32 %v4663, %v4662
        %v4665 = vmul.f32 %v4664, %v4663
        %v4666 = vmul.f32 0.5, %v4665
        %v4667 = vsub.f32 1.5, %v4666
        %v4668 = vmul.f32 %v4663, %v4667
        %vm4669 = vweird.f32 %v4662
        %vm4670 = vweird.f32 %v4663
        %vm4671 = vmor %vm4669, %vm4670
        %v4672 = vsel %vm4671, %v4663, %v4668
        %v4673 = vmul.f32 %v4656, %v4672
        %v4674 = vmul.f32 %v850, %v4673
        %v4675 = vadd.f32 %v4674, %v852
        %4677 = vrot.lane.b32.xlu0 %v4489, 96
        %v4678 = vpop.permute.xlu0 %4677
        %v4680 = vsub.f32 %v4675, %v4678
        %v4681 = vmul.f32 %v850, %v4680
        %v4682 = vmul.f32 %v4681, 32.0
        %v4683 = vsel %vm521, %v4681, 0.0
        %4684 = vadd.xlane.f32.xlu0 %v4683
        %v4685 = vpop.xlane.xlu0 %4684
        %v4686 = vsub.f32 %v4682, %v4685
        %v4687 = vmul.f32 %v4681, %v4673
        %v4688 = vsel %vm521, %v4687, 0.0
        %4689 = vadd.xlane.f32.xlu0 %v4688
        %v4690 = vpop.xlane.xlu0 %4689
        %v4691 = vmul.f32 %v4673, %v4690
        %v4692 = vsub.f32 %v4686, %v4691
        %v4693 = vmul.f32 %v4672, 0.03125
        %v4694 = vmul.f32 %v4692, %v4693
        %v4695 = vperm.slane %v4624, 0
        %4696 = vrot.lane.b32.xlu0 %v4457, 96
        %v4697 = vpop.permute.xlu0 %4696
        %v4698 = vsel %vm521, %v4697, 0
        %4700 = vmatpush.xpose.msra.mxu0 0.0
        %4701 = vmatpush.xpose.msra.mxu0 0.0
        %4702 = vmatpush.xpose.msra.mxu0 0.0
        %4703 = vmatpush.xpose.msra.mxu0 0.0
        %4704 = vmatpush.xpose.msra.mxu0 0.0
        %4705 = vmatpush.xpose.msra.mxu0 0.0
        %4706 = vmatpush.xpose.msra.mxu0 0.0
        %4707 = vmatpush.xpose.msra.mxu0 0.0
        %4708 = vmatpush.xpose.msra.mxu0 0.0
        %4709 = vmatpush.xpose.msra.mxu0 0.0
        %4710 = vmatpush.xpose.msra.mxu0 0.0
        %4711 = vmatpush.xpose.msra.mxu0 0.0
        %4712 = vmatpush.xpose.msra.mxu0 0.0
        %4713 = vmatpush.xpose.msra.mxu0 0.0
        %4714 = vmatpush.xpose.msra.mxu0 0.0
        %4715 = vmatpush.xpose.msra.mxu0 %v4630
        %4716 = vmatmul.f32.gmra.mxu0 %v4698
        %v4717 = vpop.f32.mrf.mxu0
        %v4718 = vadd.f32 1.0, %v4717
        %4719 = vdwg.mxu0
        %v4720 = vmul.f32 %v4695, %v4718
        %v4721 = vsel %vm496, %v4720, 0.0
        %4722 = vmatpush.msra.mxu0 0.0
        %4723 = vmatpush.msra.mxu0 0.0
        %4724 = vmatpush.msra.mxu0 0.0
        %4725 = vmatpush.msra.mxu0 0.0
        %4726 = vmatpush.msra.mxu0 0.0
        %4727 = vmatpush.msra.mxu0 0.0
        %4728 = vmatpush.msra.mxu0 0.0
        %4729 = vmatpush.msra.mxu0 0.0
        %4730 = vmatpush.msra.mxu0 0.0
        %4731 = vmatpush.msra.mxu0 0.0
        %4732 = vmatpush.msra.mxu0 0.0
        %4733 = vmatpush.msra.mxu0 0.0
        %4734 = vmatpush.msra.mxu0 %v4415
        %4735 = vmatpush.msra.mxu0 %v4414
        %4736 = vmatpush.msra.mxu0 %v4413
        %4737 = vmatpush.msra.mxu0 %v4412
        %4738 = vmatmul.f32.gmra.mxu0 %v4698
        %v4739 = vpop.f32.mrf.mxu0
        %v4740 = vadd.f32 %v4626, %v4739
        %4741 = vdwg.mxu0
        %v4743 = vsel %vm640, %v4721, 0
        %4745 = vmatpush.msra.mxu0 0.0
        %4746 = vmatpush.msra.mxu0 0.0
        %4747 = vmatpush.msra.mxu0 0.0
        %4748 = vmatpush.msra.mxu0 0.0
        %4749 = vmatpush.msra.mxu0 0.0
        %4750 = vmatpush.msra.mxu0 0.0
        %4751 = vmatpush.msra.mxu0 0.0
        %4752 = vmatpush.msra.mxu0 0.0
        %4753 = vmatpush.msra.mxu0 0.0
        %4754 = vmatpush.msra.mxu0 0.0
        %4755 = vmatpush.msra.mxu0 0.0
        %4756 = vmatpush.msra.mxu0 0.0
        %4757 = vmatpush.msra.mxu0 0.0
        %4758 = vmatpush.msra.mxu0 0.0
        %4759 = vmatpush.msra.mxu0 0.0
        %4760 = vmatpush.msra.mxu0 %v4694
        %4761 = vmatmul.f32.gmra.mxu0 %v4743
        %v4762 = vpop.f32.mrf.mxu0
        %v4763 = vadd.f32 0.0, %v4762
        %4764 = vdwg.mxu0
        %v4765 = vsub.f32 %v4740, %v4763
        %v4766 = vsel %vm521, %v4765, 0.0
        %4767 = vadd.xlane.f32.xlu0 %v4766
        %v4768 = vpop.xlane.xlu0 %4767
        %v4769 = vmul.f32 %v4768, %v555
        %v4770 = vsub.f32 %v4765, %v4769
        %v4771 = vmul.f32 %v4770, %v4770
        %v4772 = vsel %vm521, %v4771, 0.0
        %4773 = vadd.xlane.f32.xlu0 %v4772
        %v4774 = vpop.xlane.xlu0 %4773
        %v4775 = vmul.f32 %v4774, %v555
        %v4776 = vadd.f32 %v4775, 1e-06
        %v4777 = vrsqrt.pop %v4776
        %v4778 = vmul.f32 %v4777, %v4776
        %v4779 = vmul.f32 %v4778, %v4777
        %v4780 = vmul.f32 0.5, %v4779
        %v4781 = vsub.f32 1.5, %v4780
        %v4782 = vmul.f32 %v4777, %v4781
        %vm4783 = vweird.f32 %v4776
        %vm4784 = vweird.f32 %v4777
        %vm4785 = vmor %vm4783, %vm4784
        %v4786 = vsel %vm4785, %v4777, %v4782
        %v4787 = vmul.f32 %v4770, %v4786
        %v4788 = vmul.f32 %v850, %v4787
        %4790 = vrot.lane.b32.xlu0 %v4788, 32
        %v4791 = vpop.permute.xlu0 %4790
        %v4793 = vadd.f32 %v4457, %v4791
        %v4794 = vadd.f32 %v4793, %v1084
        %v4795 = vsel %vm521, %v4623, %v4794
        %s4796 = scalar_lea.vmem %s491, 56 [#allocation14]
        %4797 = vst.msk [vmem:[%s4796] sm:$0xff] %vm1088, %v4795
        %s4798 = sand.u32 %s226, 1
        %s4799 = scalar_lea.sflag [#allocation4], %s4798
        %s4800 = sand.u32 %s226, 1
        %s4801 = smul.addr %s4800, 64
        %s4802 = scalar_lea.vmem [#allocation14], %s4801
        // Predicated region
        $region81: #{tpu_custom_call.1} parent=51 // pred_check
          %p4803 = pneg %p236
        $region82: #{tpu_custom_call.1} parent=51 // pred_check_branch
          %4805 = sbr.rel (%p4803) target = $region84
        $region83: #{tpu_custom_call.1} parent=51 // pred_region
          %4807 = vsyncadd %s4799, 0
          %s4808 = smul.addr %s30, 8
          %s4809 = smul.addr %s4808, 8
          %s4810 = scalar_lea.hbm %s8, %s4809
          %s4811 = sshll.u32 %s4802, 4
          %s4812 = int_to_ptr.vmem [resolvable:$true] %s4811
          %s4813 = sshll.u32 %s4810, 4
          %s4814 = int_to_ptr.hbm [resolvable:$true] %s4813
          %4819 = dma.vmem_to_hbm [thread:$0]  %s4812, 1024, %s4814, %s4799, 128, 128, 8
        $region84: #{tpu_custom_call.1} parent=51 // pred_fallthru
          _
      $region52: #{tpu_custom_call.1} parent=5 // pred_fallthru
        _
      %p4820 = scmp.le.s32.totalorder 2, %s25
      // Predicated region
      $region85: #{tpu_custom_call.1} parent=5 // pred_check
        %p4821 = pneg %p4820
      $region86: #{tpu_custom_call.1} parent=5 // pred_check_branch
        %4823 = sbr.rel (%p4821) target = $region88
      $region87: #{tpu_custom_call.1} parent=5 // pred_region
        %s4824 = ssub.s32 %s25, 2
        // Predicated region
        $region89: #{tpu_custom_call.1} parent=87 // pred_check
          %p4825 = pneg %p242
        $region90: #{tpu_custom_call.1} parent=87 // pred_check_branch
          %4827 = sbr.rel (%p4825) target = $region92
        $region91: #{tpu_custom_call.1} parent=87 // pred_region
          %s4828 = sand.u32 %s227, 1
          %s4829 = scalar_lea.sflag [#allocation4], %s4828
          %s4830 = sand.u32 %s227, 1
          %s4831 = smul.addr %s4830, 64
          %s4832 = scalar_lea.vmem [#allocation14], %s4831
          %4834 = dma.done %s4829, 1024
        $region92: #{tpu_custom_call.1} parent=87 // pred_fallthru
          _
      $region88: #{tpu_custom_call.1} parent=5 // pred_fallthru
        _
    $region6: #{tpu_custom_call.1} parent=1 // loop_footer
      %s29 = sadd.s32 1, %s25
    $region7: #{tpu_custom_call.1} parent=1 // loop_footer_branch
      %24 = sbr.rel target = $region3
    $region8: #{tpu_custom_call.1} parent=1 // loop_exit
      _
    %4835 = vsyncpa [#allocation3], 1
    %s4836 = scalar_lea.sflag [#allocation3], 1
    %4837 = vsyncpa %s4836, 1
    %4838 = vsyncpa [#allocation6], 1
    %4839 = vsyncpa [#allocation9], 1
    %s4840 = scalar_lea.sflag [#allocation9], 1
    %4841 = vsyncpa %s4840, 1
    %4842 = vsyncpa [#allocation12], 1
    %s4843 = scalar_lea.sflag [#allocation12], 1
    %4844 = vsyncpa %s4843, 1
    %4845 = vsyncpa [#allocation4], 1
    %s4846 = scalar_lea.sflag [#allocation4], 1
    %4847 = vsyncpa %s4846, 1

</llo_original>
